<compile_context>
chip_gen: v7x
topology: tpu7x:2x2x1
jax: 0.10.0
libtpu: 0.0.40
codegen_flags: <defaults>
</compile_context>

<pallas_src>
import functools

import jax
import jax.numpy as jnp
from jax.experimental import pallas as pl
from jax.experimental.pallas import tpu as pltpu

# --- model dims (from the torch module) ---
IN_DIM = 784 * 3          # 2352
H1 = 512
H2 = 256
N_LAT = 3                 # latent_dim
K_CAT = 20                # categorical_dim
LAT = N_LAT * K_CAT       # 60
TEMP = 1.0                # module-level `temp`
GUMBEL_EPS = 1e-10        # eps actually reaching sample_gumbel via gumbel_softmax

# --- padded dims for lane/sublane-dense TPU layout ---
IN_PAD = 2432             # 19 * 128
LAT_PAD = 128


def dvae_kernel(x_ref, g_ref,
                w1_ref, b1_ref, w2_ref, b2_ref, w3_ref, b3_ref,
                w4_ref, b4_ref, w5_ref, b5_ref, w6_ref, b6_ref,
                recon_ref, qsoft_ref, *, temp):
    x = x_ref[...]                                                   # (Bp, 2432) f32

    # ---------------- encoder ----------------
    # big matmul in bf16 (f32 accumulation) -> halves weight DMA bytes
    h1 = jnp.dot(x.astype(jnp.bfloat16), w1_ref[...],
                 preferred_element_type=jnp.float32) + b1_ref[...]
    h1 = jnp.maximum(h1, 0.0)                                        # (Bp, 512)
    h2 = jnp.maximum(
        jnp.dot(h1, w2_ref[...], preferred_element_type=jnp.float32) + b2_ref[...],
        0.0)                                                         # (Bp, 256)
    q = jnp.maximum(
        jnp.dot(h2, w3_ref[...], preferred_element_type=jnp.float32) + b3_ref[...],
        0.0)                                                         # (Bp, 128); lanes>=60 are 0

    # ---------------- grouped (per-K) softmax over lane groups ----------------
    lane = jax.lax.broadcasted_iota(jnp.int32, q.shape, 1)

    def grouped_softmax(y):
        out = jnp.zeros_like(y)
        for grp in range(N_LAT):                                     # unrolled, N_LAT=3
            mask = (lane >= grp * K_CAT) & (lane < (grp + 1) * K_CAT)
            ym = jnp.where(mask, y, -jnp.inf)
            m = jnp.max(ym, axis=-1, keepdims=True)
            e = jnp.where(mask, jnp.exp(y - m), 0.0)
            s = jnp.sum(e, axis=-1, keepdims=True)
            out = out + jnp.where(mask, e / s, 0.0)
        return out

    # gumbel-softmax (soft path, hard=False): softmax((q + g)/temp) per group
    z = grouped_softmax((q + g_ref[...]) / temp)                     # (Bp, 128)
    # second forward output: softmax(q_y, dim=-1)
    qsoft_ref[...] = grouped_softmax(q)

    # ---------------- decoder ----------------
    h4 = jnp.maximum(
        jnp.dot(z, w4_ref[...], preferred_element_type=jnp.float32) + b4_ref[...],
        0.0)                                                         # (Bp, 256)
    h5 = jnp.maximum(
        jnp.dot(h4, w5_ref[...], preferred_element_type=jnp.float32) + b5_ref[...],
        0.0)                                                         # (Bp, 512)
    logits = jnp.dot(h5.astype(jnp.bfloat16), w6_ref[...],
                     preferred_element_type=jnp.float32) + b6_ref[...]
    recon_ref[...] = jax.nn.sigmoid(logits)                          # (Bp, 2432)


def init_params(key):
    """Deterministic PyTorch-style (uniform +-1/sqrt(fan_in)) Linear init.
    The two large weights (fc1, fc6) are stored in bf16."""
    ks = jax.random.split(key, 12)

    def lin(kw, kb, fan_in, fan_out, w_dtype=jnp.float32):
        bound = 1.0 / float(fan_in) ** 0.5
        w = jax.random.uniform(kw, (fan_in, fan_out), jnp.float32, -bound, bound)
        b = jax.random.uniform(kb, (1, fan_out), jnp.float32, -bound, bound)
        return w.astype(w_dtype), b

    w1, b1 = lin(ks[0], ks[1], IN_DIM, H1, jnp.bfloat16)    # fc1
    w2, b2 = lin(ks[2], ks[3], H1, H2)                      # fc2
    w3, b3 = lin(ks[4], ks[5], H2, LAT)                     # fc3
    w4, b4 = lin(ks[6], ks[7], LAT, H2)                     # fc4
    w5, b5 = lin(ks[8], ks[9], H2, H1)                      # fc5
    w6, b6 = lin(ks[10], ks[11], H1, IN_DIM, jnp.bfloat16)  # fc6
    return dict(w1=w1, b1=b1, w2=w2, b2=b2, w3=w3, b3=b3,
                w4=w4, b4=b4, w5=w5, b5=b5, w6=w6, b6=b6)


def discrete_vae_forward(x, g, params, temp=TEMP):
    """Returns (reconstruction (B, 2352), softmax(q_y) reshaped to (B*N, K))."""
    B = x.shape[0]
    B_pad = ((B + 7) // 8) * 8

    x_flat = x.reshape(B, IN_DIM)
    x_pad = jnp.pad(x_flat, ((0, B_pad - B), (0, IN_PAD - IN_DIM)))
    g_pad = jnp.pad(g.reshape(B, LAT), ((0, B_pad - B), (0, LAT_PAD - LAT)))

    # zero-pad weights/biases to lane-dense shapes (padding contributes exact zeros)
    w1p = jnp.pad(params["w1"], ((0, IN_PAD - IN_DIM), (0, 0)))
    w3p = jnp.pad(params["w3"], ((0, 0), (0, LAT_PAD - LAT)))
    b3p = jnp.pad(params["b3"], ((0, 0), (0, LAT_PAD - LAT)))
    w4p = jnp.pad(params["w4"], ((0, LAT_PAD - LAT), (0, 0)))
    w6p = jnp.pad(params["w6"], ((0, 0), (0, IN_PAD - IN_DIM)))
    b6p = jnp.pad(params["b6"], ((0, 0), (0, IN_PAD - IN_DIM)))

    vmem = pl.BlockSpec(memory_space=pltpu.MemorySpace.VMEM)
    kernel = functools.partial(dvae_kernel, temp=temp)

    recon_pad, qsoft_pad = pl.pallas_call(
        kernel,
        out_shape=(jax.ShapeDtypeStruct((B_pad, IN_PAD), jnp.float32),
                   jax.ShapeDtypeStruct((B_pad, LAT_PAD), jnp.float32)),
        in_specs=[vmem] * 14,
        out_specs=(vmem, vmem),
        compiler_params=pltpu.CompilerParams(vmem_limit_bytes=32 << 20),
    )(x_pad, g_pad,
      w1p, params["b1"], params["w2"], params["b2"], w3p, b3p,
      w4p, params["b4"], params["w5"], params["b5"], w6p, b6p)

    recon = recon_pad[:B, :IN_DIM]
    qsoft = qsoft_pad[:B, :LAT].reshape(B * N_LAT, K_CAT)
    return recon, qsoft


def discrete_vae_ref(x, g, params, temp=TEMP):
    """Pure-JAX reference of the torch forward (same bf16 weights for fc1/fc6)."""
    B = x.shape[0]
    xf = x.reshape(B, IN_DIM)
    h1 = jnp.maximum(
        jnp.dot(xf.astype(jnp.bfloat16), params["w1"],
                preferred_element_type=jnp.float32) + params["b1"], 0.0)
    h2 = jnp.maximum(h1 @ params["w2"] + params["b2"], 0.0)
    q = jnp.maximum(h2 @ params["w3"] + params["b3"], 0.0)          # (B, 60)
    q_y = q.reshape(B, N_LAT, K_CAT)
    y = (q_y + g.reshape(B, N_LAT, K_CAT)) / temp
    z = jax.nn.softmax(y, axis=-1).reshape(B, LAT)
    h4 = jnp.maximum(z @ params["w4"] + params["b4"], 0.0)
    h5 = jnp.maximum(h4 @ params["w5"] + params["b5"], 0.0)
    recon = jax.nn.sigmoid(
        jnp.dot(h5.astype(jnp.bfloat16), params["w6"],
                preferred_element_type=jnp.float32) + params["b6"])
    qsoft = jax.nn.softmax(q_y, axis=-1).reshape(B * N_LAT, K_CAT)
    return recon, qsoft


if __name__ == "__main__":
    key = jax.random.PRNGKey(0)
    kp, kx, kg = jax.random.split(key, 3)
    params = init_params(kp)

    B = 2
    x = jax.random.uniform(kx, (B, 3, 28, 28), dtype=jnp.float32)    # NCHW input
    # deterministic gumbel noise reproducing sample_gumbel(torch.rand(...), eps=1e-10)
    U = jax.random.uniform(kg, (B, LAT), dtype=jnp.float32)
    g = -jnp.log(GUMBEL_EPS - jnp.log(U + GUMBEL_EPS))

    recon, qsoft = discrete_vae_forward(x, g, params, temp=TEMP)
    jax.block_until_ready((recon, qsoft))

    assert recon.shape == (B, IN_DIM), recon.shape
    assert qsoft.shape == (B * N_LAT, K_CAT), qsoft.shape

    recon_ref, qsoft_ref = discrete_vae_ref(x, g, params, temp=TEMP)
    assert jnp.allclose(recon, recon_ref, atol=2e-4, rtol=2e-4)
    assert jnp.allclose(qsoft, qsoft_ref, atol=2e-4, rtol=2e-4)

    print("KERNEL_OK")
</pallas_src>

<mosaic_0001>
module attributes {stable_mosaic.version = 11 : i64} {
  func.func @dvae_kernel(%arg0: memref<8x2432xf32, #tpu.memory_space<vmem>>, %arg1: memref<8x128xf32, #tpu.memory_space<vmem>>, %arg2: memref<2432x512xbf16, #tpu.memory_space<vmem>>, %arg3: memref<1x512xf32, #tpu.memory_space<vmem>>, %arg4: memref<512x256xf32, #tpu.memory_space<vmem>>, %arg5: memref<1x256xf32, #tpu.memory_space<vmem>>, %arg6: memref<256x128xf32, #tpu.memory_space<vmem>>, %arg7: memref<1x128xf32, #tpu.memory_space<vmem>>, %arg8: memref<128x256xf32, #tpu.memory_space<vmem>>, %arg9: memref<1x256xf32, #tpu.memory_space<vmem>>, %arg10: memref<256x512xf32, #tpu.memory_space<vmem>>, %arg11: memref<1x512xf32, #tpu.memory_space<vmem>>, %arg12: memref<512x2432xbf16, #tpu.memory_space<vmem>>, %arg13: memref<1x2432xf32, #tpu.memory_space<vmem>>, %arg14: memref<8x2432xf32, #tpu.memory_space<vmem>>, %arg15: memref<8x128xf32, #tpu.memory_space<vmem>>) attributes {dimension_semantics = [], scalar_prefetch = 0 : i64, scratch_operands = 0 : i64, tpu.core_type = #tpu.core_type<tc>} {
    %c0 = arith.constant 0 : index
    %c0_0 = arith.constant 0 : index
    %0 = vector.load %arg0[%c0, %c0_0] : memref<8x2432xf32, #tpu.memory_space<vmem>>, vector<8x2432xf32>
    %1 = arith.truncf %0 : vector<8x2432xf32> to vector<8x2432xbf16>
    %c0_1 = arith.constant 0 : index
    %c0_2 = arith.constant 0 : index
    %2 = vector.load %arg2[%c0_1, %c0_2] : memref<2432x512xbf16, #tpu.memory_space<vmem>>, vector<2432x512xbf16>
    %cst = arith.constant dense<0.000000e+00> : vector<8x512xf32>
    %3 = tpu.matmul %1, %2, %cst {dimension_numbers = #tpu.dot_dimension_numbers<[1], [0], [0], [1], [0, 0, 1, 1], [], []>} : vector<8x2432xbf16>, vector<2432x512xbf16>, vector<8x512xf32> -> vector<8x512xf32>
    %c0_3 = arith.constant 0 : index
    %c0_4 = arith.constant 0 : index
    %4 = vector.load %arg3[%c0_3, %c0_4] : memref<1x512xf32, #tpu.memory_space<vmem>>, vector<1x512xf32>
    %5 = vector.broadcast %4 : vector<1x512xf32> to vector<8x512xf32>
    %6 = arith.addf %3, %5 : vector<8x512xf32>
    %cst_5 = arith.constant 0.000000e+00 : f32
    %7 = vector.broadcast %cst_5 : f32 to vector<8x512xf32>
    %8 = arith.maximumf %6, %7 : vector<8x512xf32>
    %c0_6 = arith.constant 0 : index
    %c0_7 = arith.constant 0 : index
    %9 = vector.load %arg4[%c0_6, %c0_7] : memref<512x256xf32, #tpu.memory_space<vmem>>, vector<512x256xf32>
    %cst_8 = arith.constant dense<0.000000e+00> : vector<8x256xf32>
    %10 = tpu.matmul %8, %9, %cst_8 {dimension_numbers = #tpu.dot_dimension_numbers<[1], [0], [0], [1], [0, 0, 1, 1], [], []>} : vector<8x512xf32>, vector<512x256xf32>, vector<8x256xf32> -> vector<8x256xf32>
    %c0_9 = arith.constant 0 : index
    %c0_10 = arith.constant 0 : index
    %11 = vector.load %arg5[%c0_9, %c0_10] : memref<1x256xf32, #tpu.memory_space<vmem>>, vector<1x256xf32>
    %12 = vector.broadcast %11 : vector<1x256xf32> to vector<8x256xf32>
    %13 = arith.addf %10, %12 : vector<8x256xf32>
    %cst_11 = arith.constant 0.000000e+00 : f32
    %14 = vector.broadcast %cst_11 : f32 to vector<8x256xf32>
    %15 = arith.maximumf %13, %14 : vector<8x256xf32>
    %c0_12 = arith.constant 0 : index
    %c0_13 = arith.constant 0 : index
    %16 = vector.load %arg6[%c0_12, %c0_13] : memref<256x128xf32, #tpu.memory_space<vmem>>, vector<256x128xf32>
    %cst_14 = arith.constant dense<0.000000e+00> : vector<8x128xf32>
    %17 = tpu.matmul %15, %16, %cst_14 {dimension_numbers = #tpu.dot_dimension_numbers<[1], [0], [0], [1], [0, 0, 1, 1], [], []>} : vector<8x256xf32>, vector<256x128xf32>, vector<8x128xf32> -> vector<8x128xf32>
    %c0_15 = arith.constant 0 : index
    %c0_16 = arith.constant 0 : index
    %18 = vector.load %arg7[%c0_15, %c0_16] : memref<1x128xf32, #tpu.memory_space<vmem>>, vector<1x128xf32>
    %19 = vector.broadcast %18 : vector<1x128xf32> to vector<8x128xf32>
    %20 = arith.addf %17, %19 : vector<8x128xf32>
    %cst_17 = arith.constant 0.000000e+00 : f32
    %21 = vector.broadcast %cst_17 : f32 to vector<8x128xf32>
    %22 = arith.maximumf %20, %21 : vector<8x128xf32>
    %23 = tpu.iota {dimensions = array<i32: 1>} : vector<8x128xi32>
    %c0_18 = arith.constant 0 : index
    %c0_19 = arith.constant 0 : index
    %24 = vector.load %arg1[%c0_18, %c0_19] : memref<8x128xf32, #tpu.memory_space<vmem>>, vector<8x128xf32>
    %25 = arith.addf %22, %24 : vector<8x128xf32>
    %cst_20 = arith.constant 1.000000e+00 : f32
    %26 = vector.broadcast %cst_20 : f32 to vector<8x128xf32>
    %27 = arith.divf %25, %26 : vector<8x128xf32>
    %cst_21 = arith.constant 0.000000e+00 : f32
    %28 = vector.broadcast %cst_21 : f32 to vector<8x128xf32>
    %c0_i32 = arith.constant 0 : i32
    %29 = vector.broadcast %c0_i32 : i32 to vector<8x128xi32>
    %30 = arith.cmpi sge, %23, %29 : vector<8x128xi32>
    %c20_i32 = arith.constant 20 : i32
    %31 = vector.broadcast %c20_i32 : i32 to vector<8x128xi32>
    %32 = arith.cmpi slt, %23, %31 : vector<8x128xi32>
    %33 = arith.andi %30, %32 : vector<8x128xi1>
    %cst_22 = arith.constant 0xFF800000 : f32
    %34 = vector.broadcast %cst_22 : f32 to vector<8x128xf32>
    %35 = arith.select %33, %27, %34 : vector<8x128xi1>, vector<8x128xf32>
    %cst_23 = arith.constant dense<0xFF800000> : vector<8xf32>
    %36 = vector.multi_reduction <maximumf>, %35, %cst_23 [1] : vector<8x128xf32> to vector<8xf32>
    %37 = vector.shape_cast %36 : vector<8xf32> to vector<8x1xf32>
    %38 = vector.broadcast %37 : vector<8x1xf32> to vector<8x128xf32>
    %39 = arith.subf %27, %38 : vector<8x128xf32>
    %40 = math.exp %39 : vector<8x128xf32>
    %cst_24 = arith.constant 0.000000e+00 : f32
    %41 = vector.broadcast %cst_24 : f32 to vector<8x128xf32>
    %42 = arith.select %33, %40, %41 : vector<8x128xi1>, vector<8x128xf32>
    %cst_25 = arith.constant dense<0.000000e+00> : vector<8xf32>
    %43 = vector.multi_reduction <add>, %42, %cst_25 [1] : vector<8x128xf32> to vector<8xf32>
    %44 = vector.shape_cast %43 : vector<8xf32> to vector<8x1xf32>
    %45 = vector.broadcast %44 : vector<8x1xf32> to vector<8x128xf32>
    %46 = arith.divf %42, %45 : vector<8x128xf32>
    %cst_26 = arith.constant 0.000000e+00 : f32
    %47 = vector.broadcast %cst_26 : f32 to vector<8x128xf32>
    %48 = arith.select %33, %46, %47 : vector<8x128xi1>, vector<8x128xf32>
    %49 = arith.addf %28, %48 : vector<8x128xf32>
    %c20_i32_27 = arith.constant 20 : i32
    %50 = vector.broadcast %c20_i32_27 : i32 to vector<8x128xi32>
    %51 = arith.cmpi sge, %23, %50 : vector<8x128xi32>
    %c40_i32 = arith.constant 40 : i32
    %52 = vector.broadcast %c40_i32 : i32 to vector<8x128xi32>
    %53 = arith.cmpi slt, %23, %52 : vector<8x128xi32>
    %54 = arith.andi %51, %53 : vector<8x128xi1>
    %cst_28 = arith.constant 0xFF800000 : f32
    %55 = vector.broadcast %cst_28 : f32 to vector<8x128xf32>
    %56 = arith.select %54, %27, %55 : vector<8x128xi1>, vector<8x128xf32>
    %cst_29 = arith.constant dense<0xFF800000> : vector<8xf32>
    %57 = vector.multi_reduction <maximumf>, %56, %cst_29 [1] : vector<8x128xf32> to vector<8xf32>
    %58 = vector.shape_cast %57 : vector<8xf32> to vector<8x1xf32>
    %59 = vector.broadcast %58 : vector<8x1xf32> to vector<8x128xf32>
    %60 = arith.subf %27, %59 : vector<8x128xf32>
    %61 = math.exp %60 : vector<8x128xf32>
    %cst_30 = arith.constant 0.000000e+00 : f32
    %62 = vector.broadcast %cst_30 : f32 to vector<8x128xf32>
    %63 = arith.select %54, %61, %62 : vector<8x128xi1>, vector<8x128xf32>
    %cst_31 = arith.constant dense<0.000000e+00> : vector<8xf32>
    %64 = vector.multi_reduction <add>, %63, %cst_31 [1] : vector<8x128xf32> to vector<8xf32>
    %65 = vector.shape_cast %64 : vector<8xf32> to vector<8x1xf32>
    %66 = vector.broadcast %65 : vector<8x1xf32> to vector<8x128xf32>
    %67 = arith.divf %63, %66 : vector<8x128xf32>
    %cst_32 = arith.constant 0.000000e+00 : f32
    %68 = vector.broadcast %cst_32 : f32 to vector<8x128xf32>
    %69 = arith.select %54, %67, %68 : vector<8x128xi1>, vector<8x128xf32>
    %70 = arith.addf %49, %69 : vector<8x128xf32>
    %c40_i32_33 = arith.constant 40 : i32
    %71 = vector.broadcast %c40_i32_33 : i32 to vector<8x128xi32>
    %72 = arith.cmpi sge, %23, %71 : vector<8x128xi32>
    %c60_i32 = arith.constant 60 : i32
    %73 = vector.broadcast %c60_i32 : i32 to vector<8x128xi32>
    %74 = arith.cmpi slt, %23, %73 : vector<8x128xi32>
    %75 = arith.andi %72, %74 : vector<8x128xi1>
    %cst_34 = arith.constant 0xFF800000 : f32
    %76 = vector.broadcast %cst_34 : f32 to vector<8x128xf32>
    %77 = arith.select %75, %27, %76 : vector<8x128xi1>, vector<8x128xf32>
    %cst_35 = arith.constant dense<0xFF800000> : vector<8xf32>
    %78 = vector.multi_reduction <maximumf>, %77, %cst_35 [1] : vector<8x128xf32> to vector<8xf32>
    %79 = vector.shape_cast %78 : vector<8xf32> to vector<8x1xf32>
    %80 = vector.broadcast %79 : vector<8x1xf32> to vector<8x128xf32>
    %81 = arith.subf %27, %80 : vector<8x128xf32>
    %82 = math.exp %81 : vector<8x128xf32>
    %cst_36 = arith.constant 0.000000e+00 : f32
    %83 = vector.broadcast %cst_36 : f32 to vector<8x128xf32>
    %84 = arith.select %75, %82, %83 : vector<8x128xi1>, vector<8x128xf32>
    %cst_37 = arith.constant dense<0.000000e+00> : vector<8xf32>
    %85 = vector.multi_reduction <add>, %84, %cst_37 [1] : vector<8x128xf32> to vector<8xf32>
    %86 = vector.shape_cast %85 : vector<8xf32> to vector<8x1xf32>
    %87 = vector.broadcast %86 : vector<8x1xf32> to vector<8x128xf32>
    %88 = arith.divf %84, %87 : vector<8x128xf32>
    %cst_38 = arith.constant 0.000000e+00 : f32
    %89 = vector.broadcast %cst_38 : f32 to vector<8x128xf32>
    %90 = arith.select %75, %88, %89 : vector<8x128xi1>, vector<8x128xf32>
    %91 = arith.addf %70, %90 : vector<8x128xf32>
    %cst_39 = arith.constant 0.000000e+00 : f32
    %92 = vector.broadcast %cst_39 : f32 to vector<8x128xf32>
    %c0_i32_40 = arith.constant 0 : i32
    %93 = vector.broadcast %c0_i32_40 : i32 to vector<8x128xi32>
    %94 = arith.cmpi sge, %23, %93 : vector<8x128xi32>
    %c20_i32_41 = arith.constant 20 : i32
    %95 = vector.broadcast %c20_i32_41 : i32 to vector<8x128xi32>
    %96 = arith.cmpi slt, %23, %95 : vector<8x128xi32>
    %97 = arith.andi %94, %96 : vector<8x128xi1>
    %cst_42 = arith.constant 0xFF800000 : f32
    %98 = vector.broadcast %cst_42 : f32 to vector<8x128xf32>
    %99 = arith.select %97, %22, %98 : vector<8x128xi1>, vector<8x128xf32>
    %cst_43 = arith.constant dense<0xFF800000> : vector<8xf32>
    %100 = vector.multi_reduction <maximumf>, %99, %cst_43 [1] : vector<8x128xf32> to vector<8xf32>
    %101 = vector.shape_cast %100 : vector<8xf32> to vector<8x1xf32>
    %102 = vector.broadcast %101 : vector<8x1xf32> to vector<8x128xf32>
    %103 = arith.subf %22, %102 : vector<8x128xf32>
    %104 = math.exp %103 : vector<8x128xf32>
    %cst_44 = arith.constant 0.000000e+00 : f32
    %105 = vector.broadcast %cst_44 : f32 to vector<8x128xf32>
    %106 = arith.select %97, %104, %105 : vector<8x128xi1>, vector<8x128xf32>
    %cst_45 = arith.constant dense<0.000000e+00> : vector<8xf32>
    %107 = vector.multi_reduction <add>, %106, %cst_45 [1] : vector<8x128xf32> to vector<8xf32>
    %108 = vector.shape_cast %107 : vector<8xf32> to vector<8x1xf32>
    %109 = vector.broadcast %108 : vector<8x1xf32> to vector<8x128xf32>
    %110 = arith.divf %106, %109 : vector<8x128xf32>
    %cst_46 = arith.constant 0.000000e+00 : f32
    %111 = vector.broadcast %cst_46 : f32 to vector<8x128xf32>
    %112 = arith.select %97, %110, %111 : vector<8x128xi1>, vector<8x128xf32>
    %113 = arith.addf %92, %112 : vector<8x128xf32>
    %c20_i32_47 = arith.constant 20 : i32
    %114 = vector.broadcast %c20_i32_47 : i32 to vector<8x128xi32>
    %115 = arith.cmpi sge, %23, %114 : vector<8x128xi32>
    %c40_i32_48 = arith.constant 40 : i32
    %116 = vector.broadcast %c40_i32_48 : i32 to vector<8x128xi32>
    %117 = arith.cmpi slt, %23, %116 : vector<8x128xi32>
    %118 = arith.andi %115, %117 : vector<8x128xi1>
    %cst_49 = arith.constant 0xFF800000 : f32
    %119 = vector.broadcast %cst_49 : f32 to vector<8x128xf32>
    %120 = arith.select %118, %22, %119 : vector<8x128xi1>, vector<8x128xf32>
    %cst_50 = arith.constant dense<0xFF800000> : vector<8xf32>
    %121 = vector.multi_reduction <maximumf>, %120, %cst_50 [1] : vector<8x128xf32> to vector<8xf32>
    %122 = vector.shape_cast %121 : vector<8xf32> to vector<8x1xf32>
    %123 = vector.broadcast %122 : vector<8x1xf32> to vector<8x128xf32>
    %124 = arith.subf %22, %123 : vector<8x128xf32>
    %125 = math.exp %124 : vector<8x128xf32>
    %cst_51 = arith.constant 0.000000e+00 : f32
    %126 = vector.broadcast %cst_51 : f32 to vector<8x128xf32>
    %127 = arith.select %118, %125, %126 : vector<8x128xi1>, vector<8x128xf32>
    %cst_52 = arith.constant dense<0.000000e+00> : vector<8xf32>
    %128 = vector.multi_reduction <add>, %127, %cst_52 [1] : vector<8x128xf32> to vector<8xf32>
    %129 = vector.shape_cast %128 : vector<8xf32> to vector<8x1xf32>
    %130 = vector.broadcast %129 : vector<8x1xf32> to vector<8x128xf32>
    %131 = arith.divf %127, %130 : vector<8x128xf32>
    %cst_53 = arith.constant 0.000000e+00 : f32
    %132 = vector.broadcast %cst_53 : f32 to vector<8x128xf32>
    %133 = arith.select %118, %131, %132 : vector<8x128xi1>, vector<8x128xf32>
    %134 = arith.addf %113, %133 : vector<8x128xf32>
    %c40_i32_54 = arith.constant 40 : i32
    %135 = vector.broadcast %c40_i32_54 : i32 to vector<8x128xi32>
    %136 = arith.cmpi sge, %23, %135 : vector<8x128xi32>
    %c60_i32_55 = arith.constant 60 : i32
    %137 = vector.broadcast %c60_i32_55 : i32 to vector<8x128xi32>
    %138 = arith.cmpi slt, %23, %137 : vector<8x128xi32>
    %139 = arith.andi %136, %138 : vector<8x128xi1>
    %cst_56 = arith.constant 0xFF800000 : f32
    %140 = vector.broadcast %cst_56 : f32 to vector<8x128xf32>
    %141 = arith.select %139, %22, %140 : vector<8x128xi1>, vector<8x128xf32>
    %cst_57 = arith.constant dense<0xFF800000> : vector<8xf32>
    %142 = vector.multi_reduction <maximumf>, %141, %cst_57 [1] : vector<8x128xf32> to vector<8xf32>
    %143 = vector.shape_cast %142 : vector<8xf32> to vector<8x1xf32>
    %144 = vector.broadcast %143 : vector<8x1xf32> to vector<8x128xf32>
    %145 = arith.subf %22, %144 : vector<8x128xf32>
    %146 = math.exp %145 : vector<8x128xf32>
    %cst_58 = arith.constant 0.000000e+00 : f32
    %147 = vector.broadcast %cst_58 : f32 to vector<8x128xf32>
    %148 = arith.select %139, %146, %147 : vector<8x128xi1>, vector<8x128xf32>
    %cst_59 = arith.constant dense<0.000000e+00> : vector<8xf32>
    %149 = vector.multi_reduction <add>, %148, %cst_59 [1] : vector<8x128xf32> to vector<8xf32>
    %150 = vector.shape_cast %149 : vector<8xf32> to vector<8x1xf32>
    %151 = vector.broadcast %150 : vector<8x1xf32> to vector<8x128xf32>
    %152 = arith.divf %148, %151 : vector<8x128xf32>
    %cst_60 = arith.constant 0.000000e+00 : f32
    %153 = vector.broadcast %cst_60 : f32 to vector<8x128xf32>
    %154 = arith.select %139, %152, %153 : vector<8x128xi1>, vector<8x128xf32>
    %155 = arith.addf %134, %154 : vector<8x128xf32>
    %c0_61 = arith.constant 0 : index
    %c0_62 = arith.constant 0 : index
    %156 = vector.load %arg15[%c0_61, %c0_62] : memref<8x128xf32, #tpu.memory_space<vmem>>, vector<8x128xf32>
    tpu.vector_store %arg15[%c0_61, %c0_62], %155 {strides = array<i32>} : memref<8x128xf32, #tpu.memory_space<vmem>>, vector<8x128xf32>,
    %c0_63 = arith.constant 0 : index
    %c0_64 = arith.constant 0 : index
    %157 = vector.load %arg8[%c0_63, %c0_64] : memref<128x256xf32, #tpu.memory_space<vmem>>, vector<128x256xf32>
    %cst_65 = arith.constant dense<0.000000e+00> : vector<8x256xf32>
    %158 = tpu.matmul %91, %157, %cst_65 {dimension_numbers = #tpu.dot_dimension_numbers<[1], [0], [0], [1], [0, 0, 1, 1], [], []>} : vector<8x128xf32>, vector<128x256xf32>, vector<8x256xf32> -> vector<8x256xf32>
    %c0_66 = arith.constant 0 : index
    %c0_67 = arith.constant 0 : index
    %159 = vector.load %arg9[%c0_66, %c0_67] : memref<1x256xf32, #tpu.memory_space<vmem>>, vector<1x256xf32>
    %160 = vector.broadcast %159 : vector<1x256xf32> to vector<8x256xf32>
    %161 = arith.addf %158, %160 : vector<8x256xf32>
    %cst_68 = arith.constant 0.000000e+00 : f32
    %162 = vector.broadcast %cst_68 : f32 to vector<8x256xf32>
    %163 = arith.maximumf %161, %162 : vector<8x256xf32>
    %c0_69 = arith.constant 0 : index
    %c0_70 = arith.constant 0 : index
    %164 = vector.load %arg10[%c0_69, %c0_70] : memref<256x512xf32, #tpu.memory_space<vmem>>, vector<256x512xf32>
    %cst_71 = arith.constant dense<0.000000e+00> : vector<8x512xf32>
    %165 = tpu.matmul %163, %164, %cst_71 {dimension_numbers = #tpu.dot_dimension_numbers<[1], [0], [0], [1], [0, 0, 1, 1], [], []>} : vector<8x256xf32>, vector<256x512xf32>, vector<8x512xf32> -> vector<8x512xf32>
    %c0_72 = arith.constant 0 : index
    %c0_73 = arith.constant 0 : index
    %166 = vector.load %arg11[%c0_72, %c0_73] : memref<1x512xf32, #tpu.memory_space<vmem>>, vector<1x512xf32>
    %167 = vector.broadcast %166 : vector<1x512xf32> to vector<8x512xf32>
    %168 = arith.addf %165, %167 : vector<8x512xf32>
    %cst_74 = arith.constant 0.000000e+00 : f32
    %169 = vector.broadcast %cst_74 : f32 to vector<8x512xf32>
    %170 = arith.maximumf %168, %169 : vector<8x512xf32>
    %171 = arith.truncf %170 : vector<8x512xf32> to vector<8x512xbf16>
    %c0_75 = arith.constant 0 : index
    %c0_76 = arith.constant 0 : index
    %172 = vector.load %arg12[%c0_75, %c0_76] : memref<512x2432xbf16, #tpu.memory_space<vmem>>, vector<512x2432xbf16>
    %cst_77 = arith.constant dense<0.000000e+00> : vector<8x2432xf32>
    %173 = tpu.matmul %171, %172, %cst_77 {dimension_numbers = #tpu.dot_dimension_numbers<[1], [0], [0], [1], [0, 0, 1, 1], [], []>} : vector<8x512xbf16>, vector<512x2432xbf16>, vector<8x2432xf32> -> vector<8x2432xf32>
    %c0_78 = arith.constant 0 : index
    %c0_79 = arith.constant 0 : index
    %174 = vector.load %arg13[%c0_78, %c0_79] : memref<1x2432xf32, #tpu.memory_space<vmem>>, vector<1x2432xf32>
    %175 = vector.broadcast %174 : vector<1x2432xf32> to vector<8x2432xf32>
    %176 = arith.addf %173, %175 : vector<8x2432xf32>
    %177 = arith.negf %176 : vector<8x2432xf32>
    %178 = math.exp %177 : vector<8x2432xf32>
    %cst_80 = arith.constant 1.000000e+00 : f32
    %179 = vector.broadcast %cst_80 : f32 to vector<8x2432xf32>
    %180 = arith.addf %179, %178 : vector<8x2432xf32>
    %181 = arith.divf %179, %180 : vector<8x2432xf32>
    %c0_81 = arith.constant 0 : index
    %c0_82 = arith.constant 0 : index
    %182 = vector.load %arg14[%c0_81, %c0_82] : memref<8x2432xf32, #tpu.memory_space<vmem>>, vector<8x2432xf32>
    tpu.vector_store %arg14[%c0_81, %c0_82], %181 {strides = array<i32>} : memref<8x2432xf32, #tpu.memory_space<vmem>>, vector<8x2432xf32>,
    return
  }
}

</mosaic_0001>

<llo_original>
// kernel: tpu_custom_call.1
$region0: #{tpu_custom_call.1}
  #allocation0 [shape = 'u32[]', space=smem, size = 0x4, offset = 0x4, fixed_abs, tag = 'smem constant byte address 0x4 - core index']
  #allocation1 [shape = 'u32[144,128]{1,0:T(1,128)}', space=vmem, size = 0x12000, scoped, tag = 'internal scratch']
  %s0 = inlined_call_operand.hbm [shape: f32[8,2432], index: 0, kind: input, shape index: {}]
  %s1 = inlined_call_operand.hbm [shape: f32[8,128], index: 1, kind: input, shape index: {}]
  %s2 = inlined_call_operand.hbm [shape: bf16[2432,512], index: 2, kind: input, shape index: {}]
  %s3 = inlined_call_operand.hbm [shape: f32[1,512], index: 3, kind: input, shape index: {}]
  %s4 = inlined_call_operand.hbm [shape: f32[512,256], index: 4, kind: input, shape index: {}]
  %s5 = inlined_call_operand.hbm [shape: f32[1,256], index: 5, kind: input, shape index: {}]
  %s6 = inlined_call_operand.hbm [shape: f32[256,128], index: 6, kind: input, shape index: {}]
  %s7 = inlined_call_operand.hbm [shape: f32[1,128], index: 7, kind: input, shape index: {}]
  %s8 = inlined_call_operand.hbm [shape: f32[128,256], index: 8, kind: input, shape index: {}]
  %s9 = inlined_call_operand.hbm [shape: f32[1,256], index: 9, kind: input, shape index: {}]
  %s10 = inlined_call_operand.hbm [shape: f32[256,512], index: 10, kind: input, shape index: {}]
  %s11 = inlined_call_operand.hbm [shape: f32[1,512], index: 11, kind: input, shape index: {}]
  %s12 = inlined_call_operand.hbm [shape: bf16[512,2432], index: 12, kind: input, shape index: {}]
  %s13 = inlined_call_operand.hbm [shape: f32[1,2432], index: 13, kind: input, shape index: {}]
  %s14 = inlined_call_operand.hbm [shape: f32[8,2432], index: 14, kind: output, shape index: {0}]
  %s15 = inlined_call_operand.hbm [shape: f32[8,128], index: 15, kind: output, shape index: {1}]
  %16 = xla_tuple %s14, %s15
  %s17 = sld [smem:[#allocation0]]
  $region130: #{tpu_custom_call.1} parent=0
    _
  %s19 = ssub.s32 1, %s17
  %s20 = scalar_select 0, %s19, %s17
  $region1: #{tpu_custom_call.1} parent=0
    #allocation2 [shape = 'u8[77824]{0}', space=vmem, size = 0x13000, scoped, tag = 'input window, operand 0, single buffered']
    #allocation3 [shape = 's32[1]{0}', space=sflag, size = 0x4, scoped, tag = 'scoped memory for tpu_custom_call.1']
    #allocation4 [shape = 's32[1]{0}', space=sflag, size = 0x4, scoped, tag = 'scoped memory for tpu_custom_call.1']
    #allocation5 [shape = 'u8[4096]{0}', space=vmem, size = 0x1000, scoped, tag = 'input window, operand 1, single buffered']
    #allocation6 [shape = 's32[1]{0}', space=sflag, size = 0x4, scoped, tag = 'scoped memory for tpu_custom_call.1']
    #allocation7 [shape = 'u8[2490368]{0}', space=vmem, size = 0x260000, scoped, tag = 'input window, operand 2, single buffered']
    #allocation8 [shape = 'u8[2048]{0}', space=vmem, size = 0x800, scoped, tag = 'input window, operand 3, single buffered']
    #allocation9 [shape = 's32[1]{0}', space=sflag, size = 0x4, scoped, tag = 'scoped memory for tpu_custom_call.1']
    #allocation10 [shape = 'u8[524288]{0}', space=vmem, size = 0x80000, scoped, tag = 'input window, operand 4, single buffered']
    #allocation11 [shape = 'u8[1024]{0}', space=vmem, size = 0x400, scoped, tag = 'input window, operand 5, single buffered']
    #allocation12 [shape = 's32[1]{0}', space=sflag, size = 0x4, scoped, tag = 'scoped memory for tpu_custom_call.1']
    #allocation13 [shape = 'u8[131072]{0}', space=vmem, size = 0x20000, scoped, tag = 'input window, operand 6, single buffered']
    #allocation14 [shape = 'u8[512]{0}', space=vmem, size = 0x400, scoped, tag = 'input window, operand 7, single buffered']
    #allocation15 [shape = 's32[1]{0}', space=sflag, size = 0x4, scoped, tag = 'scoped memory for tpu_custom_call.1']
    #allocation16 [shape = 'u8[131072]{0}', space=vmem, size = 0x20000, scoped, tag = 'input window, operand 8, single buffered']
    #allocation17 [shape = 'u8[1024]{0}', space=vmem, size = 0x400, scoped, tag = 'input window, operand 9, single buffered']
    #allocation18 [shape = 's32[1]{0}', space=sflag, size = 0x4, scoped, tag = 'scoped memory for tpu_custom_call.1']
    #allocation19 [shape = 'u8[524288]{0}', space=vmem, size = 0x80000, scoped, tag = 'input window, operand 10, single buffered']
    #allocation20 [shape = 'u8[2048]{0}', space=vmem, size = 0x800, scoped, tag = 'input window, operand 11, single buffered']
    #allocation21 [shape = 's32[1]{0}', space=sflag, size = 0x4, scoped, tag = 'scoped memory for tpu_custom_call.1']
    #allocation22 [shape = 'u8[2490368]{0}', space=vmem, size = 0x260000, scoped, tag = 'input window, operand 12, single buffered']
    #allocation23 [shape = 'u8[9728]{0}', space=vmem, size = 0x2800, scoped, tag = 'input window, operand 13, single buffered']
    #allocation24 [shape = 's32[1]{0}', space=sflag, size = 0x4, scoped, tag = 'scoped memory for tpu_custom_call.1']
    #allocation25 [shape = 'u8[77824]{0}', space=vmem, size = 0x13000, scoped, tag = 'output window, operand 0, single buffered']
    #allocation26 [shape = 'u8[4096]{0}', space=vmem, size = 0x1000, scoped, tag = 'output window, operand 1, single buffered']
    #allocation27 [shape = 's32[1]{0}', space=sflag, size = 0x4, scoped, tag = 'scoped memory for tpu_custom_call.1']
    %21 = vsyncpa [#allocation3], 0
    %22 = vsyncpa [#allocation6], 0
    %23 = vsyncpa [#allocation9], 0
    %24 = vsyncpa [#allocation12], 0
    %25 = vsyncpa [#allocation15], 0
    %26 = vsyncpa [#allocation18], 0
    %27 = vsyncpa [#allocation21], 0
    %28 = vsyncpa [#allocation24], 0
    %29 = vsyncpa [#allocation4], 0
    %30 = vsyncpa [#allocation27], 0
    // Predicated region
    $region2: #{tpu_custom_call.1} parent=1 // pred_check
      _
    $region3: #{tpu_custom_call.1} parent=1 // pred_check_branch
      %32 = sbr.rel (0) target = $region5
    $region4: #{tpu_custom_call.1} parent=1 // pred_region
      %s34 = ssub.s32 2432, 2432
      %35 = vsyncadd [#allocation3], %s34
      %s37 = sshll.u32 [#allocation2], 4
      %s38 = int_to_ptr.vmem [resolvable:$true] %s37
      %40 = dma.hbm_to_vmem [thread:$0]  %s0, 2432, %s38, [#allocation3]
    $region5: #{tpu_custom_call.1} parent=1 // pred_fallthru
      _
    // Predicated region
    $region6: #{tpu_custom_call.1} parent=1 // pred_check
      _
    $region7: #{tpu_custom_call.1} parent=1 // pred_check_branch
      %42 = sbr.rel (0) target = $region9
    $region8: #{tpu_custom_call.1} parent=1 // pred_region
      %s44 = ssub.s32 128, 128
      %45 = vsyncadd [#allocation6], %s44
      %s47 = sshll.u32 [#allocation5], 4
      %s48 = int_to_ptr.vmem [resolvable:$true] %s47
      %50 = dma.hbm_to_vmem [thread:$0]  %s1, 128, %s48, [#allocation6]
    $region9: #{tpu_custom_call.1} parent=1 // pred_fallthru
      _
    // Predicated region
    $region10: #{tpu_custom_call.1} parent=1 // pred_check
      _
    $region11: #{tpu_custom_call.1} parent=1 // pred_check_branch
      %52 = sbr.rel (0) target = $region13
    $region12: #{tpu_custom_call.1} parent=1 // pred_region
      %s54 = ssub.s32 77824, 77824
      %55 = vsyncadd [#allocation6], %s54
      %s56 = sshll.u32 [#allocation7], 4
      %s57 = int_to_ptr.vmem [resolvable:$true] %s56
      %62 = dma.hbm_to_vmem [thread:$0]  %s2, 77824, %s57, [#allocation6], 256, 256, 16
    $region13: #{tpu_custom_call.1} parent=1 // pred_fallthru
      _
    // Predicated region
    $region14: #{tpu_custom_call.1} parent=1 // pred_check
      _
    $region15: #{tpu_custom_call.1} parent=1 // pred_check_branch
      %64 = sbr.rel (0) target = $region17
    $region16: #{tpu_custom_call.1} parent=1 // pred_region
      %s66 = ssub.s32 64, 64
      %67 = vsyncadd [#allocation9], %s66
      %s69 = sshll.u32 [#allocation8], 4
      %s70 = int_to_ptr.vmem [resolvable:$true] %s69
      %72 = dma.hbm_to_vmem [thread:$0]  %s3, 64, %s70, [#allocation9]
    $region17: #{tpu_custom_call.1} parent=1 // pred_fallthru
      _
    // Predicated region
    $region18: #{tpu_custom_call.1} parent=1 // pred_check
      _
    $region19: #{tpu_custom_call.1} parent=1 // pred_check_branch
      %74 = sbr.rel (0) target = $region21
    $region20: #{tpu_custom_call.1} parent=1 // pred_region
      %s76 = ssub.s32 16384, 16384
      %77 = vsyncadd [#allocation9], %s76
      %s78 = sshll.u32 [#allocation10], 4
      %s79 = int_to_ptr.vmem [resolvable:$true] %s78
      %84 = dma.hbm_to_vmem [thread:$0]  %s4, 16384, %s79, [#allocation9], 256, 256, 16
    $region21: #{tpu_custom_call.1} parent=1 // pred_fallthru
      _
    // Predicated region
    $region22: #{tpu_custom_call.1} parent=1 // pred_check
      _
    $region23: #{tpu_custom_call.1} parent=1 // pred_check_branch
      %86 = sbr.rel (0) target = $region25
    $region24: #{tpu_custom_call.1} parent=1 // pred_region
      %s88 = ssub.s32 32, 32
      %89 = vsyncadd [#allocation12], %s88
      %s91 = sshll.u32 [#allocation11], 4
      %s92 = int_to_ptr.vmem [resolvable:$true] %s91
      %94 = dma.hbm_to_vmem [thread:$0]  %s5, 32, %s92, [#allocation12]
    $region25: #{tpu_custom_call.1} parent=1 // pred_fallthru
      _
    // Predicated region
    $region26: #{tpu_custom_call.1} parent=1 // pred_check
      _
    $region27: #{tpu_custom_call.1} parent=1 // pred_check_branch
      %96 = sbr.rel (0) target = $region29
    $region28: #{tpu_custom_call.1} parent=1 // pred_region
      %s98 = ssub.s32 4096, 4096
      %99 = vsyncadd [#allocation12], %s98
      %s100 = sshll.u32 [#allocation13], 4
      %s101 = int_to_ptr.vmem [resolvable:$true] %s100
      %106 = dma.hbm_to_vmem [thread:$0]  %s6, 4096, %s101, [#allocation12], 128, 128, 8
    $region29: #{tpu_custom_call.1} parent=1 // pred_fallthru
      _
    // Predicated region
    $region30: #{tpu_custom_call.1} parent=1 // pred_check
      _
    $region31: #{tpu_custom_call.1} parent=1 // pred_check_branch
      %108 = sbr.rel (0) target = $region33
    $region32: #{tpu_custom_call.1} parent=1 // pred_region
      %s110 = ssub.s32 16, 16
      %111 = vsyncadd [#allocation15], %s110
      %s113 = sshll.u32 [#allocation14], 4
      %s114 = int_to_ptr.vmem [resolvable:$true] %s113
      %116 = dma.hbm_to_vmem [thread:$0]  %s7, 16, %s114, [#allocation15]
    $region33: #{tpu_custom_call.1} parent=1 // pred_fallthru
      _
    // Predicated region
    $region34: #{tpu_custom_call.1} parent=1 // pred_check
      _
    $region35: #{tpu_custom_call.1} parent=1 // pred_check_branch
      %118 = sbr.rel (0) target = $region37
    $region36: #{tpu_custom_call.1} parent=1 // pred_region
      %s120 = ssub.s32 4096, 4096
      %121 = vsyncadd [#allocation15], %s120
      %s122 = sshll.u32 [#allocation16], 4
      %s123 = int_to_ptr.vmem [resolvable:$true] %s122
      %128 = dma.hbm_to_vmem [thread:$0]  %s8, 4096, %s123, [#allocation15], 256, 256, 16
    $region37: #{tpu_custom_call.1} parent=1 // pred_fallthru
      _
    // Predicated region
    $region38: #{tpu_custom_call.1} parent=1 // pred_check
      _
    $region39: #{tpu_custom_call.1} parent=1 // pred_check_branch
      %130 = sbr.rel (0) target = $region41
    $region40: #{tpu_custom_call.1} parent=1 // pred_region
      %s132 = ssub.s32 32, 32
      %133 = vsyncadd [#allocation18], %s132
      %s135 = sshll.u32 [#allocation17], 4
      %s136 = int_to_ptr.vmem [resolvable:$true] %s135
      %138 = dma.hbm_to_vmem [thread:$0]  %s9, 32, %s136, [#allocation18]
    $region41: #{tpu_custom_call.1} parent=1 // pred_fallthru
      _
    // Predicated region
    $region42: #{tpu_custom_call.1} parent=1 // pred_check
      _
    $region43: #{tpu_custom_call.1} parent=1 // pred_check_branch
      %140 = sbr.rel (0) target = $region45
    $region44: #{tpu_custom_call.1} parent=1 // pred_region
      %s142 = ssub.s32 16384, 16384
      %143 = vsyncadd [#allocation18], %s142
      %s144 = sshll.u32 [#allocation19], 4
      %s145 = int_to_ptr.vmem [resolvable:$true] %s144
      %150 = dma.hbm_to_vmem [thread:$0]  %s10, 16384, %s145, [#allocation18], 512, 512, 32
    $region45: #{tpu_custom_call.1} parent=1 // pred_fallthru
      _
    // Predicated region
    $region46: #{tpu_custom_call.1} parent=1 // pred_check
      _
    $region47: #{tpu_custom_call.1} parent=1 // pred_check_branch
      %152 = sbr.rel (0) target = $region49
    $region48: #{tpu_custom_call.1} parent=1 // pred_region
      %s154 = ssub.s32 64, 64
      %155 = vsyncadd [#allocation21], %s154
      %s157 = sshll.u32 [#allocation20], 4
      %s158 = int_to_ptr.vmem [resolvable:$true] %s157
      %160 = dma.hbm_to_vmem [thread:$0]  %s11, 64, %s158, [#allocation21]
    $region49: #{tpu_custom_call.1} parent=1 // pred_fallthru
      _
    // Predicated region
    $region50: #{tpu_custom_call.1} parent=1 // pred_check
      _
    $region51: #{tpu_custom_call.1} parent=1 // pred_check_branch
      %162 = sbr.rel (0) target = $region53
    $region52: #{tpu_custom_call.1} parent=1 // pred_region
      %s164 = ssub.s32 77824, 77824
      %165 = vsyncadd [#allocation21], %s164
      %s166 = sshll.u32 [#allocation22], 4
      %s167 = int_to_ptr.vmem [resolvable:$true] %s166
      %172 = dma.hbm_to_vmem [thread:$0]  %s12, 77824, %s167, [#allocation21], 1216, 1216, 76
    $region53: #{tpu_custom_call.1} parent=1 // pred_fallthru
      _
    // Predicated region
    $region54: #{tpu_custom_call.1} parent=1 // pred_check
      _
    $region55: #{tpu_custom_call.1} parent=1 // pred_check_branch
      %174 = sbr.rel (0) target = $region57
    $region56: #{tpu_custom_call.1} parent=1 // pred_region
      %s176 = ssub.s32 304, 304
      %177 = vsyncadd [#allocation24], %s176
      %s179 = sshll.u32 [#allocation23], 4
      %s180 = int_to_ptr.vmem [resolvable:$true] %s179
      %182 = dma.hbm_to_vmem [thread:$0]  %s13, 304, %s180, [#allocation24]
    $region57: #{tpu_custom_call.1} parent=1 // pred_fallthru
      _
    // Predicated region
    $region58: #{tpu_custom_call.1} parent=1 // pred_check
      _
    $region59: #{tpu_custom_call.1} parent=1 // pred_check_branch
      %184 = sbr.rel (0) target = $region61
    $region60: #{tpu_custom_call.1} parent=1 // pred_region
      %185 = dma.done [#allocation3], 2432
    $region61: #{tpu_custom_call.1} parent=1 // pred_fallthru
      _
    // Predicated region
    $region62: #{tpu_custom_call.1} parent=1 // pred_check
      _
    $region63: #{tpu_custom_call.1} parent=1 // pred_check_branch
      %187 = sbr.rel (0) target = $region65
    $region64: #{tpu_custom_call.1} parent=1 // pred_region
      %188 = dma.done [#allocation6], 128
    $region65: #{tpu_custom_call.1} parent=1 // pred_fallthru
      _
    // Predicated region
    $region66: #{tpu_custom_call.1} parent=1 // pred_check
      _
    $region67: #{tpu_custom_call.1} parent=1 // pred_check_branch
      %190 = sbr.rel (0) target = $region69
    $region68: #{tpu_custom_call.1} parent=1 // pred_region
      %191 = dma.done [#allocation6], 77824
    $region69: #{tpu_custom_call.1} parent=1 // pred_fallthru
      _
    // Predicated region
    $region70: #{tpu_custom_call.1} parent=1 // pred_check
      _
    $region71: #{tpu_custom_call.1} parent=1 // pred_check_branch
      %193 = sbr.rel (0) target = $region73
    $region72: #{tpu_custom_call.1} parent=1 // pred_region
      %194 = dma.done [#allocation9], 64
    $region73: #{tpu_custom_call.1} parent=1 // pred_fallthru
      _
    // Predicated region
    $region74: #{tpu_custom_call.1} parent=1 // pred_check
      _
    $region75: #{tpu_custom_call.1} parent=1 // pred_check_branch
      %196 = sbr.rel (0) target = $region77
    $region76: #{tpu_custom_call.1} parent=1 // pred_region
      %197 = dma.done [#allocation9], 16384
    $region77: #{tpu_custom_call.1} parent=1 // pred_fallthru
      _
    // Predicated region
    $region78: #{tpu_custom_call.1} parent=1 // pred_check
      _
    $region79: #{tpu_custom_call.1} parent=1 // pred_check_branch
      %199 = sbr.rel (0) target = $region81
    $region80: #{tpu_custom_call.1} parent=1 // pred_region
      %200 = dma.done [#allocation12], 32
    $region81: #{tpu_custom_call.1} parent=1 // pred_fallthru
      _
    // Predicated region
    $region82: #{tpu_custom_call.1} parent=1 // pred_check
      _
    $region83: #{tpu_custom_call.1} parent=1 // pred_check_branch
      %202 = sbr.rel (0) target = $region85
    $region84: #{tpu_custom_call.1} parent=1 // pred_region
      %203 = dma.done [#allocation12], 4096
    $region85: #{tpu_custom_call.1} parent=1 // pred_fallthru
      _
    // Predicated region
    $region86: #{tpu_custom_call.1} parent=1 // pred_check
      _
    $region87: #{tpu_custom_call.1} parent=1 // pred_check_branch
      %205 = sbr.rel (0) target = $region89
    $region88: #{tpu_custom_call.1} parent=1 // pred_region
      %206 = dma.done [#allocation15], 16
    $region89: #{tpu_custom_call.1} parent=1 // pred_fallthru
      _
    // Predicated region
    $region90: #{tpu_custom_call.1} parent=1 // pred_check
      _
    $region91: #{tpu_custom_call.1} parent=1 // pred_check_branch
      %208 = sbr.rel (0) target = $region93
    $region92: #{tpu_custom_call.1} parent=1 // pred_region
      %209 = dma.done [#allocation15], 4096
    $region93: #{tpu_custom_call.1} parent=1 // pred_fallthru
      _
    // Predicated region
    $region94: #{tpu_custom_call.1} parent=1 // pred_check
      _
    $region95: #{tpu_custom_call.1} parent=1 // pred_check_branch
      %211 = sbr.rel (0) target = $region97
    $region96: #{tpu_custom_call.1} parent=1 // pred_region
      %212 = dma.done [#allocation18], 32
    $region97: #{tpu_custom_call.1} parent=1 // pred_fallthru
      _
    // Predicated region
    $region98: #{tpu_custom_call.1} parent=1 // pred_check
      _
    $region99: #{tpu_custom_call.1} parent=1 // pred_check_branch
      %214 = sbr.rel (0) target = $region101
    $region100: #{tpu_custom_call.1} parent=1 // pred_region
      %215 = dma.done [#allocation18], 16384
    $region101: #{tpu_custom_call.1} parent=1 // pred_fallthru
      _
    // Predicated region
    $region102: #{tpu_custom_call.1} parent=1 // pred_check
      _
    $region103: #{tpu_custom_call.1} parent=1 // pred_check_branch
      %217 = sbr.rel (0) target = $region105
    $region104: #{tpu_custom_call.1} parent=1 // pred_region
      %218 = dma.done [#allocation21], 64
    $region105: #{tpu_custom_call.1} parent=1 // pred_fallthru
      _
    // Predicated region
    $region106: #{tpu_custom_call.1} parent=1 // pred_check
      _
    $region107: #{tpu_custom_call.1} parent=1 // pred_check_branch
      %220 = sbr.rel (0) target = $region109
    $region108: #{tpu_custom_call.1} parent=1 // pred_region
      %221 = dma.done [#allocation21], 77824
    $region109: #{tpu_custom_call.1} parent=1 // pred_fallthru
      _
    // Predicated region
    $region110: #{tpu_custom_call.1} parent=1 // pred_check
      _
    $region111: #{tpu_custom_call.1} parent=1 // pred_check_branch
      %223 = sbr.rel (0) target = $region113
    $region112: #{tpu_custom_call.1} parent=1 // pred_region
      %224 = dma.done [#allocation24], 304
    $region113: #{tpu_custom_call.1} parent=1 // pred_fallthru
      _
    %v226 = vld [vmem:[#allocation2] sm:$0xff]
    %v227 = vld [vmem:[#allocation2 + $0x8] sm:$0xff]
    %v228 = vld [vmem:[#allocation2 + $0x10] sm:$0xff]
    %v229 = vld [vmem:[#allocation2 + $0x18] sm:$0xff]
    %v230 = vld [vmem:[#allocation2 + $0x20] sm:$0xff]
    %v231 = vld [vmem:[#allocation2 + $0x28] sm:$0xff]
    %v232 = vld [vmem:[#allocation2 + $0x30] sm:$0xff]
    %v233 = vld [vmem:[#allocation2 + $0x38] sm:$0xff]
    %v234 = vld [vmem:[#allocation2 + $0x40] sm:$0xff]
    %v235 = vld [vmem:[#allocation2 + $0x48] sm:$0xff]
    %v236 = vld [vmem:[#allocation2 + $0x50] sm:$0xff]
    %v237 = vld [vmem:[#allocation2 + $0x58] sm:$0xff]
    %v238 = vld [vmem:[#allocation2 + $0x60] sm:$0xff]
    %v239 = vld [vmem:[#allocation2 + $0x68] sm:$0xff]
    %v240 = vld [vmem:[#allocation2 + $0x70] sm:$0xff]
    %v241 = vld [vmem:[#allocation2 + $0x78] sm:$0xff]
    %v242 = vld [vmem:[#allocation2 + $0x80] sm:$0xff]
    %v243 = vld [vmem:[#allocation2 + $0x88] sm:$0xff]
    %v244 = vld [vmem:[#allocation2 + $0x90] sm:$0xff]
    %v245 = vpack.c.bf16 %v226, %v226
    %v246 = vpack.c.bf16 %v227, %v227
    %v247 = vpack.c.bf16 %v228, %v228
    %v248 = vpack.c.bf16 %v229, %v229
    %v249 = vpack.c.bf16 %v230, %v230
    %v250 = vpack.c.bf16 %v231, %v231
    %v251 = vpack.c.bf16 %v232, %v232
    %v252 = vpack.c.bf16 %v233, %v233
    %v253 = vpack.c.bf16 %v234, %v234
    %v254 = vpack.c.bf16 %v235, %v235
    %v255 = vpack.c.bf16 %v236, %v236
    %v256 = vpack.c.bf16 %v237, %v237
    %v257 = vpack.c.bf16 %v238, %v238
    %v258 = vpack.c.bf16 %v239, %v239
    %v259 = vpack.c.bf16 %v240, %v240
    %v260 = vpack.c.bf16 %v241, %v241
    %v261 = vpack.c.bf16 %v242, %v242
    %v262 = vpack.c.bf16 %v243, %v243
    %v263 = vpack.c.bf16 %v244, %v244
    %v264 = vld [vmem:[#allocation7] sm:$0xff]
    %v265 = vld [vmem:[#allocation7 + $0x8] sm:$0xff]
    %v266 = vld [vmem:[#allocation7 + $0x10] sm:$0xff]
    %v267 = vld [vmem:[#allocation7 + $0x18] sm:$0xff]
    %v268 = vld [vmem:[#allocation7 + $0x20] sm:$0xff]
    %v269 = vld [vmem:[#allocation7 + $0x28] sm:$0xff]
    %v270 = vld [vmem:[#allocation7 + $0x30] sm:$0xff]
    %v271 = vld [vmem:[#allocation7 + $0x38] sm:$0xff]
    %v272 = vld [vmem:[#allocation7 + $0x40] sm:$0xff]
    %v273 = vld [vmem:[#allocation7 + $0x48] sm:$0xff]
    %v274 = vld [vmem:[#allocation7 + $0x50] sm:$0xff]
    %v275 = vld [vmem:[#allocation7 + $0x58] sm:$0xff]
    %v276 = vld [vmem:[#allocation7 + $0x60] sm:$0xff]
    %v277 = vld [vmem:[#allocation7 + $0x68] sm:$0xff]
    %v278 = vld [vmem:[#allocation7 + $0x70] sm:$0xff]
    %v279 = vld [vmem:[#allocation7 + $0x78] sm:$0xff]
    %v280 = vld [vmem:[#allocation7 + $0x80] sm:$0xff]
    %v281 = vld [vmem:[#allocation7 + $0x88] sm:$0xff]
    %v282 = vld [vmem:[#allocation7 + $0x90] sm:$0xff]
    %v283 = vld [vmem:[#allocation7 + $0x98] sm:$0xff]
    %v284 = vld [vmem:[#allocation7 + $0xa0] sm:$0xff]
    %v285 = vld [vmem:[#allocation7 + $0xa8] sm:$0xff]
    %v286 = vld [vmem:[#allocation7 + $0xb0] sm:$0xff]
    %v287 = vld [vmem:[#allocation7 + $0xb8] sm:$0xff]
    %v288 = vld [vmem:[#allocation7 + $0xc0] sm:$0xff]
    %v289 = vld [vmem:[#allocation7 + $0xc8] sm:$0xff]
    %v290 = vld [vmem:[#allocation7 + $0xd0] sm:$0xff]
    %v291 = vld [vmem:[#allocation7 + $0xd8] sm:$0xff]
    %v292 = vld [vmem:[#allocation7 + $0xe0] sm:$0xff]
    %v293 = vld [vmem:[#allocation7 + $0xe8] sm:$0xff]
    %v294 = vld [vmem:[#allocation7 + $0xf0] sm:$0xff]
    %v295 = vld [vmem:[#allocation7 + $0xf8] sm:$0xff]
    %v296 = vld [vmem:[#allocation7 + $0x100] sm:$0xff]
    %v297 = vld [vmem:[#allocation7 + $0x108] sm:$0xff]
    %v298 = vld [vmem:[#allocation7 + $0x110] sm:$0xff]
    %v299 = vld [vmem:[#allocation7 + $0x118] sm:$0xff]
    %v300 = vld [vmem:[#allocation7 + $0x120] sm:$0xff]
    %v301 = vld [vmem:[#allocation7 + $0x128] sm:$0xff]
    %v302 = vld [vmem:[#allocation7 + $0x130] sm:$0xff]
    %v303 = vld [vmem:[#allocation7 + $0x138] sm:$0xff]
    %v304 = vld [vmem:[#allocation7 + $0x140] sm:$0xff]
    %v305 = vld [vmem:[#allocation7 + $0x148] sm:$0xff]
    %v306 = vld [vmem:[#allocation7 + $0x150] sm:$0xff]
    %v307 = vld [vmem:[#allocation7 + $0x158] sm:$0xff]
    %v308 = vld [vmem:[#allocation7 + $0x160] sm:$0xff]
    %v309 = vld [vmem:[#allocation7 + $0x168] sm:$0xff]
    %v310 = vld [vmem:[#allocation7 + $0x170] sm:$0xff]
    %v311 = vld [vmem:[#allocation7 + $0x178] sm:$0xff]
    %v312 = vld [vmem:[#allocation7 + $0x180] sm:$0xff]
    %v313 = vld [vmem:[#allocation7 + $0x188] sm:$0xff]
    %v314 = vld [vmem:[#allocation7 + $0x190] sm:$0xff]
    %v315 = vld [vmem:[#allocation7 + $0x198] sm:$0xff]
    %v316 = vld [vmem:[#allocation7 + $0x1a0] sm:$0xff]
    %v317 = vld [vmem:[#allocation7 + $0x1a8] sm:$0xff]
    %v318 = vld [vmem:[#allocation7 + $0x1b0] sm:$0xff]
    %v319 = vld [vmem:[#allocation7 + $0x1b8] sm:$0xff]
    %v320 = vld [vmem:[#allocation7 + $0x1c0] sm:$0xff]
    %v321 = vld [vmem:[#allocation7 + $0x1c8] sm:$0xff]
    %v322 = vld [vmem:[#allocation7 + $0x1d0] sm:$0xff]
    %v323 = vld [vmem:[#allocation7 + $0x1d8] sm:$0xff]
    %v324 = vld [vmem:[#allocation7 + $0x1e0] sm:$0xff]
    %v325 = vld [vmem:[#allocation7 + $0x1e8] sm:$0xff]
    %v326 = vld [vmem:[#allocation7 + $0x1f0] sm:$0xff]
    %v327 = vld [vmem:[#allocation7 + $0x1f8] sm:$0xff]
    %v328 = vld [vmem:[#allocation7 + $0x200] sm:$0xff]
    %v329 = vld [vmem:[#allocation7 + $0x208] sm:$0xff]
    %v330 = vld [vmem:[#allocation7 + $0x210] sm:$0xff]
    %v331 = vld [vmem:[#allocation7 + $0x218] sm:$0xff]
    %v332 = vld [vmem:[#allocation7 + $0x220] sm:$0xff]
    %v333 = vld [vmem:[#allocation7 + $0x228] sm:$0xff]
    %v334 = vld [vmem:[#allocation7 + $0x230] sm:$0xff]
    %v335 = vld [vmem:[#allocation7 + $0x238] sm:$0xff]
    %v336 = vld [vmem:[#allocation7 + $0x240] sm:$0xff]
    %v337 = vld [vmem:[#allocation7 + $0x248] sm:$0xff]
    %v338 = vld [vmem:[#allocation7 + $0x250] sm:$0xff]
    %v339 = vld [vmem:[#allocation7 + $0x258] sm:$0xff]
    %v340 = vld [vmem:[#allocation7 + $0x260] sm:$0xff]
    %v341 = vld [vmem:[#allocation7 + $0x268] sm:$0xff]
    %v342 = vld [vmem:[#allocation7 + $0x270] sm:$0xff]
    %v343 = vld [vmem:[#allocation7 + $0x278] sm:$0xff]
    %v344 = vld [vmem:[#allocation7 + $0x280] sm:$0xff]
    %v345 = vld [vmem:[#allocation7 + $0x288] sm:$0xff]
    %v346 = vld [vmem:[#allocation7 + $0x290] sm:$0xff]
    %v347 = vld [vmem:[#allocation7 + $0x298] sm:$0xff]
    %v348 = vld [vmem:[#allocation7 + $0x2a0] sm:$0xff]
    %v349 = vld [vmem:[#allocation7 + $0x2a8] sm:$0xff]
    %v350 = vld [vmem:[#allocation7 + $0x2b0] sm:$0xff]
    %v351 = vld [vmem:[#allocation7 + $0x2b8] sm:$0xff]
    %v352 = vld [vmem:[#allocation7 + $0x2c0] sm:$0xff]
    %v353 = vld [vmem:[#allocation7 + $0x2c8] sm:$0xff]
    %v354 = vld [vmem:[#allocation7 + $0x2d0] sm:$0xff]
    %v355 = vld [vmem:[#allocation7 + $0x2d8] sm:$0xff]
    %v356 = vld [vmem:[#allocation7 + $0x2e0] sm:$0xff]
    %v357 = vld [vmem:[#allocation7 + $0x2e8] sm:$0xff]
    %v358 = vld [vmem:[#allocation7 + $0x2f0] sm:$0xff]
    %v359 = vld [vmem:[#allocation7 + $0x2f8] sm:$0xff]
    %v360 = vld [vmem:[#allocation7 + $0x300] sm:$0xff]
    %v361 = vld [vmem:[#allocation7 + $0x308] sm:$0xff]
    %v362 = vld [vmem:[#allocation7 + $0x310] sm:$0xff]
    %v363 = vld [vmem:[#allocation7 + $0x318] sm:$0xff]
    %v364 = vld [vmem:[#allocation7 + $0x320] sm:$0xff]
    %v365 = vld [vmem:[#allocation7 + $0x328] sm:$0xff]
    %v366 = vld [vmem:[#allocation7 + $0x330] sm:$0xff]
    %v367 = vld [vmem:[#allocation7 + $0x338] sm:$0xff]
    %v368 = vld [vmem:[#allocation7 + $0x340] sm:$0xff]
    %v369 = vld [vmem:[#allocation7 + $0x348] sm:$0xff]
    %v370 = vld [vmem:[#allocation7 + $0x350] sm:$0xff]
    %v371 = vld [vmem:[#allocation7 + $0x358] sm:$0xff]
    %v372 = vld [vmem:[#allocation7 + $0x360] sm:$0xff]
    %v373 = vld [vmem:[#allocation7 + $0x368] sm:$0xff]
    %v374 = vld [vmem:[#allocation7 + $0x370] sm:$0xff]
    %v375 = vld [vmem:[#allocation7 + $0x378] sm:$0xff]
    %v376 = vld [vmem:[#allocation7 + $0x380] sm:$0xff]
    %v377 = vld [vmem:[#allocation7 + $0x388] sm:$0xff]
    %v378 = vld [vmem:[#allocation7 + $0x390] sm:$0xff]
    %v379 = vld [vmem:[#allocation7 + $0x398] sm:$0xff]
    %v380 = vld [vmem:[#allocation7 + $0x3a0] sm:$0xff]
    %v381 = vld [vmem:[#allocation7 + $0x3a8] sm:$0xff]
    %v382 = vld [vmem:[#allocation7 + $0x3b0] sm:$0xff]
    %v383 = vld [vmem:[#allocation7 + $0x3b8] sm:$0xff]
    %v384 = vld [vmem:[#allocation7 + $0x3c0] sm:$0xff]
    %v385 = vld [vmem:[#allocation7 + $0x3c8] sm:$0xff]
    %v386 = vld [vmem:[#allocation7 + $0x3d0] sm:$0xff]
    %v387 = vld [vmem:[#allocation7 + $0x3d8] sm:$0xff]
    %v388 = vld [vmem:[#allocation7 + $0x3e0] sm:$0xff]
    %v389 = vld [vmem:[#allocation7 + $0x3e8] sm:$0xff]
    %v390 = vld [vmem:[#allocation7 + $0x3f0] sm:$0xff]
    %v391 = vld [vmem:[#allocation7 + $0x3f8] sm:$0xff]
    %v392 = vld [vmem:[#allocation7 + $0x400] sm:$0xff]
    %v393 = vld [vmem:[#allocation7 + $0x408] sm:$0xff]
    %v394 = vld [vmem:[#allocation7 + $0x410] sm:$0xff]
    %v395 = vld [vmem:[#allocation7 + $0x418] sm:$0xff]
    %v396 = vld [vmem:[#allocation7 + $0x420] sm:$0xff]
    %v397 = vld [vmem:[#allocation7 + $0x428] sm:$0xff]
    %v398 = vld [vmem:[#allocation7 + $0x430] sm:$0xff]
    %v399 = vld [vmem:[#allocation7 + $0x438] sm:$0xff]
    %v400 = vld [vmem:[#allocation7 + $0x440] sm:$0xff]
    %v401 = vld [vmem:[#allocation7 + $0x448] sm:$0xff]
    %v402 = vld [vmem:[#allocation7 + $0x450] sm:$0xff]
    %v403 = vld [vmem:[#allocation7 + $0x458] sm:$0xff]
    %v404 = vld [vmem:[#allocation7 + $0x460] sm:$0xff]
    %v405 = vld [vmem:[#allocation7 + $0x468] sm:$0xff]
    %v406 = vld [vmem:[#allocation7 + $0x470] sm:$0xff]
    %v407 = vld [vmem:[#allocation7 + $0x478] sm:$0xff]
    %v408 = vld [vmem:[#allocation7 + $0x480] sm:$0xff]
    %v409 = vld [vmem:[#allocation7 + $0x488] sm:$0xff]
    %v410 = vld [vmem:[#allocation7 + $0x490] sm:$0xff]
    %v411 = vld [vmem:[#allocation7 + $0x498] sm:$0xff]
    %v412 = vld [vmem:[#allocation7 + $0x4a0] sm:$0xff]
    %v413 = vld [vmem:[#allocation7 + $0x4a8] sm:$0xff]
    %v414 = vld [vmem:[#allocation7 + $0x4b0] sm:$0xff]
    %v415 = vld [vmem:[#allocation7 + $0x4b8] sm:$0xff]
    %v416 = vld [vmem:[#allocation7 + $0x4c0] sm:$0xff]
    %v417 = vld [vmem:[#allocation7 + $0x4c8] sm:$0xff]
    %v418 = vld [vmem:[#allocation7 + $0x4d0] sm:$0xff]
    %v419 = vld [vmem:[#allocation7 + $0x4d8] sm:$0xff]
    %v420 = vld [vmem:[#allocation7 + $0x4e0] sm:$0xff]
    %v421 = vld [vmem:[#allocation7 + $0x4e8] sm:$0xff]
    %v422 = vld [vmem:[#allocation7 + $0x4f0] sm:$0xff]
    %v423 = vld [vmem:[#allocation7 + $0x4f8] sm:$0xff]
    %v424 = vld [vmem:[#allocation7 + $0x500] sm:$0xff]
    %v425 = vld [vmem:[#allocation7 + $0x508] sm:$0xff]
    %v426 = vld [vmem:[#allocation7 + $0x510] sm:$0xff]
    %v427 = vld [vmem:[#allocation7 + $0x518] sm:$0xff]
    %v428 = vld [vmem:[#allocation7 + $0x520] sm:$0xff]
    %v429 = vld [vmem:[#allocation7 + $0x528] sm:$0xff]
    %v430 = vld [vmem:[#allocation7 + $0x530] sm:$0xff]
    %v431 = vld [vmem:[#allocation7 + $0x538] sm:$0xff]
    %v432 = vld [vmem:[#allocation7 + $0x540] sm:$0xff]
    %v433 = vld [vmem:[#allocation7 + $0x548] sm:$0xff]
    %v434 = vld [vmem:[#allocation7 + $0x550] sm:$0xff]
    %v435 = vld [vmem:[#allocation7 + $0x558] sm:$0xff]
    %v436 = vld [vmem:[#allocation7 + $0x560] sm:$0xff]
    %v437 = vld [vmem:[#allocation7 + $0x568] sm:$0xff]
    %v438 = vld [vmem:[#allocation7 + $0x570] sm:$0xff]
    %v439 = vld [vmem:[#allocation7 + $0x578] sm:$0xff]
    %v440 = vld [vmem:[#allocation7 + $0x580] sm:$0xff]
    %v441 = vld [vmem:[#allocation7 + $0x588] sm:$0xff]
    %v442 = vld [vmem:[#allocation7 + $0x590] sm:$0xff]
    %v443 = vld [vmem:[#allocation7 + $0x598] sm:$0xff]
    %v444 = vld [vmem:[#allocation7 + $0x5a0] sm:$0xff]
    %v445 = vld [vmem:[#allocation7 + $0x5a8] sm:$0xff]
    %v446 = vld [vmem:[#allocation7 + $0x5b0] sm:$0xff]
    %v447 = vld [vmem:[#allocation7 + $0x5b8] sm:$0xff]
    %v448 = vld [vmem:[#allocation7 + $0x5c0] sm:$0xff]
    %v449 = vld [vmem:[#allocation7 + $0x5c8] sm:$0xff]
    %v450 = vld [vmem:[#allocation7 + $0x5d0] sm:$0xff]
    %v451 = vld [vmem:[#allocation7 + $0x5d8] sm:$0xff]
    %v452 = vld [vmem:[#allocation7 + $0x5e0] sm:$0xff]
    %v453 = vld [vmem:[#allocation7 + $0x5e8] sm:$0xff]
    %v454 = vld [vmem:[#allocation7 + $0x5f0] sm:$0xff]
    %v455 = vld [vmem:[#allocation7 + $0x5f8] sm:$0xff]
    %v456 = vld [vmem:[#allocation7 + $0x600] sm:$0xff]
    %v457 = vld [vmem:[#allocation7 + $0x608] sm:$0xff]
    %v458 = vld [vmem:[#allocation7 + $0x610] sm:$0xff]
    %v459 = vld [vmem:[#allocation7 + $0x618] sm:$0xff]
    %v460 = vld [vmem:[#allocation7 + $0x620] sm:$0xff]
    %v461 = vld [vmem:[#allocation7 + $0x628] sm:$0xff]
    %v462 = vld [vmem:[#allocation7 + $0x630] sm:$0xff]
    %v463 = vld [vmem:[#allocation7 + $0x638] sm:$0xff]
    %v464 = vld [vmem:[#allocation7 + $0x640] sm:$0xff]
    %v465 = vld [vmem:[#allocation7 + $0x648] sm:$0xff]
    %v466 = vld [vmem:[#allocation7 + $0x650] sm:$0xff]
    %v467 = vld [vmem:[#allocation7 + $0x658] sm:$0xff]
    %v468 = vld [vmem:[#allocation7 + $0x660] sm:$0xff]
    %v469 = vld [vmem:[#allocation7 + $0x668] sm:$0xff]
    %v470 = vld [vmem:[#allocation7 + $0x670] sm:$0xff]
    %v471 = vld [vmem:[#allocation7 + $0x678] sm:$0xff]
    %v472 = vld [vmem:[#allocation7 + $0x680] sm:$0xff]
    %v473 = vld [vmem:[#allocation7 + $0x688] sm:$0xff]
    %v474 = vld [vmem:[#allocation7 + $0x690] sm:$0xff]
    %v475 = vld [vmem:[#allocation7 + $0x698] sm:$0xff]
    %v476 = vld [vmem:[#allocation7 + $0x6a0] sm:$0xff]
    %v477 = vld [vmem:[#allocation7 + $0x6a8] sm:$0xff]
    %v478 = vld [vmem:[#allocation7 + $0x6b0] sm:$0xff]
    %v479 = vld [vmem:[#allocation7 + $0x6b8] sm:$0xff]
    %v480 = vld [vmem:[#allocation7 + $0x6c0] sm:$0xff]
    %v481 = vld [vmem:[#allocation7 + $0x6c8] sm:$0xff]
    %v482 = vld [vmem:[#allocation7 + $0x6d0] sm:$0xff]
    %v483 = vld [vmem:[#allocation7 + $0x6d8] sm:$0xff]
    %v484 = vld [vmem:[#allocation7 + $0x6e0] sm:$0xff]
    %v485 = vld [vmem:[#allocation7 + $0x6e8] sm:$0xff]
    %v486 = vld [vmem:[#allocation7 + $0x6f0] sm:$0xff]
    %v487 = vld [vmem:[#allocation7 + $0x6f8] sm:$0xff]
    %v488 = vld [vmem:[#allocation7 + $0x700] sm:$0xff]
    %v489 = vld [vmem:[#allocation7 + $0x708] sm:$0xff]
    %v490 = vld [vmem:[#allocation7 + $0x710] sm:$0xff]
    %v491 = vld [vmem:[#allocation7 + $0x718] sm:$0xff]
    %v492 = vld [vmem:[#allocation7 + $0x720] sm:$0xff]
    %v493 = vld [vmem:[#allocation7 + $0x728] sm:$0xff]
    %v494 = vld [vmem:[#allocation7 + $0x730] sm:$0xff]
    %v495 = vld [vmem:[#allocation7 + $0x738] sm:$0xff]
    %v496 = vld [vmem:[#allocation7 + $0x740] sm:$0xff]
    %v497 = vld [vmem:[#allocation7 + $0x748] sm:$0xff]
    %v498 = vld [vmem:[#allocation7 + $0x750] sm:$0xff]
    %v499 = vld [vmem:[#allocation7 + $0x758] sm:$0xff]
    %v500 = vld [vmem:[#allocation7 + $0x760] sm:$0xff]
    %v501 = vld [vmem:[#allocation7 + $0x768] sm:$0xff]
    %v502 = vld [vmem:[#allocation7 + $0x770] sm:$0xff]
    %v503 = vld [vmem:[#allocation7 + $0x778] sm:$0xff]
    %v504 = vld [vmem:[#allocation7 + $0x780] sm:$0xff]
    %v505 = vld [vmem:[#allocation7 + $0x788] sm:$0xff]
    %v506 = vld [vmem:[#allocation7 + $0x790] sm:$0xff]
    %v507 = vld [vmem:[#allocation7 + $0x798] sm:$0xff]
    %v508 = vld [vmem:[#allocation7 + $0x7a0] sm:$0xff]
    %v509 = vld [vmem:[#allocation7 + $0x7a8] sm:$0xff]
    %v510 = vld [vmem:[#allocation7 + $0x7b0] sm:$0xff]
    %v511 = vld [vmem:[#allocation7 + $0x7b8] sm:$0xff]
    %v512 = vld [vmem:[#allocation7 + $0x7c0] sm:$0xff]
    %v513 = vld [vmem:[#allocation7 + $0x7c8] sm:$0xff]
    %v514 = vld [vmem:[#allocation7 + $0x7d0] sm:$0xff]
    %v515 = vld [vmem:[#allocation7 + $0x7d8] sm:$0xff]
    %v516 = vld [vmem:[#allocation7 + $0x7e0] sm:$0xff]
    %v517 = vld [vmem:[#allocation7 + $0x7e8] sm:$0xff]
    %v518 = vld [vmem:[#allocation7 + $0x7f0] sm:$0xff]
    %v519 = vld [vmem:[#allocation7 + $0x7f8] sm:$0xff]
    %v520 = vld [vmem:[#allocation7 + $0x800] sm:$0xff]
    %v521 = vld [vmem:[#allocation7 + $0x808] sm:$0xff]
    %v522 = vld [vmem:[#allocation7 + $0x810] sm:$0xff]
    %v523 = vld [vmem:[#allocation7 + $0x818] sm:$0xff]
    %v524 = vld [vmem:[#allocation7 + $0x820] sm:$0xff]
    %v525 = vld [vmem:[#allocation7 + $0x828] sm:$0xff]
    %v526 = vld [vmem:[#allocation7 + $0x830] sm:$0xff]
    %v527 = vld [vmem:[#allocation7 + $0x838] sm:$0xff]
    %v528 = vld [vmem:[#allocation7 + $0x840] sm:$0xff]
    %v529 = vld [vmem:[#allocation7 + $0x848] sm:$0xff]
    %v530 = vld [vmem:[#allocation7 + $0x850] sm:$0xff]
    %v531 = vld [vmem:[#allocation7 + $0x858] sm:$0xff]
    %v532 = vld [vmem:[#allocation7 + $0x860] sm:$0xff]
    %v533 = vld [vmem:[#allocation7 + $0x868] sm:$0xff]
    %v534 = vld [vmem:[#allocation7 + $0x870] sm:$0xff]
    %v535 = vld [vmem:[#allocation7 + $0x878] sm:$0xff]
    %v536 = vld [vmem:[#allocation7 + $0x880] sm:$0xff]
    %v537 = vld [vmem:[#allocation7 + $0x888] sm:$0xff]
    %v538 = vld [vmem:[#allocation7 + $0x890] sm:$0xff]
    %v539 = vld [vmem:[#allocation7 + $0x898] sm:$0xff]
    %v540 = vld [vmem:[#allocation7 + $0x8a0] sm:$0xff]
    %v541 = vld [vmem:[#allocation7 + $0x8a8] sm:$0xff]
    %v542 = vld [vmem:[#allocation7 + $0x8b0] sm:$0xff]
    %v543 = vld [vmem:[#allocation7 + $0x8b8] sm:$0xff]
    %v544 = vld [vmem:[#allocation7 + $0x8c0] sm:$0xff]
    %v545 = vld [vmem:[#allocation7 + $0x8c8] sm:$0xff]
    %v546 = vld [vmem:[#allocation7 + $0x8d0] sm:$0xff]
    %v547 = vld [vmem:[#allocation7 + $0x8d8] sm:$0xff]
    %v548 = vld [vmem:[#allocation7 + $0x8e0] sm:$0xff]
    %v549 = vld [vmem:[#allocation7 + $0x8e8] sm:$0xff]
    %v550 = vld [vmem:[#allocation7 + $0x8f0] sm:$0xff]
    %v551 = vld [vmem:[#allocation7 + $0x8f8] sm:$0xff]
    %v552 = vld [vmem:[#allocation7 + $0x900] sm:$0xff]
    %v553 = vld [vmem:[#allocation7 + $0x908] sm:$0xff]
    %v554 = vld [vmem:[#allocation7 + $0x910] sm:$0xff]
    %v555 = vld [vmem:[#allocation7 + $0x918] sm:$0xff]
    %v556 = vld [vmem:[#allocation7 + $0x920] sm:$0xff]
    %v557 = vld [vmem:[#allocation7 + $0x928] sm:$0xff]
    %v558 = vld [vmem:[#allocation7 + $0x930] sm:$0xff]
    %v559 = vld [vmem:[#allocation7 + $0x938] sm:$0xff]
    %v560 = vld [vmem:[#allocation7 + $0x940] sm:$0xff]
    %v561 = vld [vmem:[#allocation7 + $0x948] sm:$0xff]
    %v562 = vld [vmem:[#allocation7 + $0x950] sm:$0xff]
    %v563 = vld [vmem:[#allocation7 + $0x958] sm:$0xff]
    %v564 = vld [vmem:[#allocation7 + $0x960] sm:$0xff]
    %v565 = vld [vmem:[#allocation7 + $0x968] sm:$0xff]
    %v566 = vld [vmem:[#allocation7 + $0x970] sm:$0xff]
    %v567 = vld [vmem:[#allocation7 + $0x978] sm:$0xff]
    %v568 = vld [vmem:[#allocation7 + $0x980] sm:$0xff]
    %v569 = vld [vmem:[#allocation7 + $0x988] sm:$0xff]
    %v570 = vld [vmem:[#allocation7 + $0x990] sm:$0xff]
    %v571 = vld [vmem:[#allocation7 + $0x998] sm:$0xff]
    %v572 = vld [vmem:[#allocation7 + $0x9a0] sm:$0xff]
    %v573 = vld [vmem:[#allocation7 + $0x9a8] sm:$0xff]
    %v574 = vld [vmem:[#allocation7 + $0x9b0] sm:$0xff]
    %v575 = vld [vmem:[#allocation7 + $0x9b8] sm:$0xff]
    %v576 = vld [vmem:[#allocation7 + $0x9c0] sm:$0xff]
    %v577 = vld [vmem:[#allocation7 + $0x9c8] sm:$0xff]
    %v578 = vld [vmem:[#allocation7 + $0x9d0] sm:$0xff]
    %v579 = vld [vmem:[#allocation7 + $0x9d8] sm:$0xff]
    %v580 = vld [vmem:[#allocation7 + $0x9e0] sm:$0xff]
    %v581 = vld [vmem:[#allocation7 + $0x9e8] sm:$0xff]
    %v582 = vld [vmem:[#allocation7 + $0x9f0] sm:$0xff]
    %v583 = vld [vmem:[#allocation7 + $0x9f8] sm:$0xff]
    %v584 = vld [vmem:[#allocation7 + $0xa00] sm:$0xff]
    %v585 = vld [vmem:[#allocation7 + $0xa08] sm:$0xff]
    %v586 = vld [vmem:[#allocation7 + $0xa10] sm:$0xff]
    %v587 = vld [vmem:[#allocation7 + $0xa18] sm:$0xff]
    %v588 = vld [vmem:[#allocation7 + $0xa20] sm:$0xff]
    %v589 = vld [vmem:[#allocation7 + $0xa28] sm:$0xff]
    %v590 = vld [vmem:[#allocation7 + $0xa30] sm:$0xff]
    %v591 = vld [vmem:[#allocation7 + $0xa38] sm:$0xff]
    %v592 = vld [vmem:[#allocation7 + $0xa40] sm:$0xff]
    %v593 = vld [vmem:[#allocation7 + $0xa48] sm:$0xff]
    %v594 = vld [vmem:[#allocation7 + $0xa50] sm:$0xff]
    %v595 = vld [vmem:[#allocation7 + $0xa58] sm:$0xff]
    %v596 = vld [vmem:[#allocation7 + $0xa60] sm:$0xff]
    %v597 = vld [vmem:[#allocation7 + $0xa68] sm:$0xff]
    %v598 = vld [vmem:[#allocation7 + $0xa70] sm:$0xff]
    %v599 = vld [vmem:[#allocation7 + $0xa78] sm:$0xff]
    %v600 = vld [vmem:[#allocation7 + $0xa80] sm:$0xff]
    %v601 = vld [vmem:[#allocation7 + $0xa88] sm:$0xff]
    %v602 = vld [vmem:[#allocation7 + $0xa90] sm:$0xff]
    %v603 = vld [vmem:[#allocation7 + $0xa98] sm:$0xff]
    %v604 = vld [vmem:[#allocation7 + $0xaa0] sm:$0xff]
    %v605 = vld [vmem:[#allocation7 + $0xaa8] sm:$0xff]
    %v606 = vld [vmem:[#allocation7 + $0xab0] sm:$0xff]
    %v607 = vld [vmem:[#allocation7 + $0xab8] sm:$0xff]
    %v608 = vld [vmem:[#allocation7 + $0xac0] sm:$0xff]
    %v609 = vld [vmem:[#allocation7 + $0xac8] sm:$0xff]
    %v610 = vld [vmem:[#allocation7 + $0xad0] sm:$0xff]
    %v611 = vld [vmem:[#allocation7 + $0xad8] sm:$0xff]
    %v612 = vld [vmem:[#allocation7 + $0xae0] sm:$0xff]
    %v613 = vld [vmem:[#allocation7 + $0xae8] sm:$0xff]
    %v614 = vld [vmem:[#allocation7 + $0xaf0] sm:$0xff]
    %v615 = vld [vmem:[#allocation7 + $0xaf8] sm:$0xff]
    %v616 = vld [vmem:[#allocation7 + $0xb00] sm:$0xff]
    %v617 = vld [vmem:[#allocation7 + $0xb08] sm:$0xff]
    %v618 = vld [vmem:[#allocation7 + $0xb10] sm:$0xff]
    %v619 = vld [vmem:[#allocation7 + $0xb18] sm:$0xff]
    %v620 = vld [vmem:[#allocation7 + $0xb20] sm:$0xff]
    %v621 = vld [vmem:[#allocation7 + $0xb28] sm:$0xff]
    %v622 = vld [vmem:[#allocation7 + $0xb30] sm:$0xff]
    %v623 = vld [vmem:[#allocation7 + $0xb38] sm:$0xff]
    %v624 = vld [vmem:[#allocation7 + $0xb40] sm:$0xff]
    %v625 = vld [vmem:[#allocation7 + $0xb48] sm:$0xff]
    %v626 = vld [vmem:[#allocation7 + $0xb50] sm:$0xff]
    %v627 = vld [vmem:[#allocation7 + $0xb58] sm:$0xff]
    %v628 = vld [vmem:[#allocation7 + $0xb60] sm:$0xff]
    %v629 = vld [vmem:[#allocation7 + $0xb68] sm:$0xff]
    %v630 = vld [vmem:[#allocation7 + $0xb70] sm:$0xff]
    %v631 = vld [vmem:[#allocation7 + $0xb78] sm:$0xff]
    %v632 = vld [vmem:[#allocation7 + $0xb80] sm:$0xff]
    %v633 = vld [vmem:[#allocation7 + $0xb88] sm:$0xff]
    %v634 = vld [vmem:[#allocation7 + $0xb90] sm:$0xff]
    %v635 = vld [vmem:[#allocation7 + $0xb98] sm:$0xff]
    %v636 = vld [vmem:[#allocation7 + $0xba0] sm:$0xff]
    %v637 = vld [vmem:[#allocation7 + $0xba8] sm:$0xff]
    %v638 = vld [vmem:[#allocation7 + $0xbb0] sm:$0xff]
    %v639 = vld [vmem:[#allocation7 + $0xbb8] sm:$0xff]
    %v640 = vld [vmem:[#allocation7 + $0xbc0] sm:$0xff]
    %v641 = vld [vmem:[#allocation7 + $0xbc8] sm:$0xff]
    %v642 = vld [vmem:[#allocation7 + $0xbd0] sm:$0xff]
    %v643 = vld [vmem:[#allocation7 + $0xbd8] sm:$0xff]
    %v644 = vld [vmem:[#allocation7 + $0xbe0] sm:$0xff]
    %v645 = vld [vmem:[#allocation7 + $0xbe8] sm:$0xff]
    %v646 = vld [vmem:[#allocation7 + $0xbf0] sm:$0xff]
    %v647 = vld [vmem:[#allocation7 + $0xbf8] sm:$0xff]
    %v648 = vld [vmem:[#allocation7 + $0xc00] sm:$0xff]
    %v649 = vld [vmem:[#allocation7 + $0xc08] sm:$0xff]
    %v650 = vld [vmem:[#allocation7 + $0xc10] sm:$0xff]
    %v651 = vld [vmem:[#allocation7 + $0xc18] sm:$0xff]
    %v652 = vld [vmem:[#allocation7 + $0xc20] sm:$0xff]
    %v653 = vld [vmem:[#allocation7 + $0xc28] sm:$0xff]
    %v654 = vld [vmem:[#allocation7 + $0xc30] sm:$0xff]
    %v655 = vld [vmem:[#allocation7 + $0xc38] sm:$0xff]
    %v656 = vld [vmem:[#allocation7 + $0xc40] sm:$0xff]
    %v657 = vld [vmem:[#allocation7 + $0xc48] sm:$0xff]
    %v658 = vld [vmem:[#allocation7 + $0xc50] sm:$0xff]
    %v659 = vld [vmem:[#allocation7 + $0xc58] sm:$0xff]
    %v660 = vld [vmem:[#allocation7 + $0xc60] sm:$0xff]
    %v661 = vld [vmem:[#allocation7 + $0xc68] sm:$0xff]
    %v662 = vld [vmem:[#allocation7 + $0xc70] sm:$0xff]
    %v663 = vld [vmem:[#allocation7 + $0xc78] sm:$0xff]
    %v664 = vld [vmem:[#allocation7 + $0xc80] sm:$0xff]
    %v665 = vld [vmem:[#allocation7 + $0xc88] sm:$0xff]
    %v666 = vld [vmem:[#allocation7 + $0xc90] sm:$0xff]
    %v667 = vld [vmem:[#allocation7 + $0xc98] sm:$0xff]
    %v668 = vld [vmem:[#allocation7 + $0xca0] sm:$0xff]
    %v669 = vld [vmem:[#allocation7 + $0xca8] sm:$0xff]
    %v670 = vld [vmem:[#allocation7 + $0xcb0] sm:$0xff]
    %v671 = vld [vmem:[#allocation7 + $0xcb8] sm:$0xff]
    %v672 = vld [vmem:[#allocation7 + $0xcc0] sm:$0xff]
    %v673 = vld [vmem:[#allocation7 + $0xcc8] sm:$0xff]
    %v674 = vld [vmem:[#allocation7 + $0xcd0] sm:$0xff]
    %v675 = vld [vmem:[#allocation7 + $0xcd8] sm:$0xff]
    %v676 = vld [vmem:[#allocation7 + $0xce0] sm:$0xff]
    %v677 = vld [vmem:[#allocation7 + $0xce8] sm:$0xff]
    %v678 = vld [vmem:[#allocation7 + $0xcf0] sm:$0xff]
    %v679 = vld [vmem:[#allocation7 + $0xcf8] sm:$0xff]
    %v680 = vld [vmem:[#allocation7 + $0xd00] sm:$0xff]
    %v681 = vld [vmem:[#allocation7 + $0xd08] sm:$0xff]
    %v682 = vld [vmem:[#allocation7 + $0xd10] sm:$0xff]
    %v683 = vld [vmem:[#allocation7 + $0xd18] sm:$0xff]
    %v684 = vld [vmem:[#allocation7 + $0xd20] sm:$0xff]
    %v685 = vld [vmem:[#allocation7 + $0xd28] sm:$0xff]
    %v686 = vld [vmem:[#allocation7 + $0xd30] sm:$0xff]
    %v687 = vld [vmem:[#allocation7 + $0xd38] sm:$0xff]
    %v688 = vld [vmem:[#allocation7 + $0xd40] sm:$0xff]
    %v689 = vld [vmem:[#allocation7 + $0xd48] sm:$0xff]
    %v690 = vld [vmem:[#allocation7 + $0xd50] sm:$0xff]
    %v691 = vld [vmem:[#allocation7 + $0xd58] sm:$0xff]
    %v692 = vld [vmem:[#allocation7 + $0xd60] sm:$0xff]
    %v693 = vld [vmem:[#allocation7 + $0xd68] sm:$0xff]
    %v694 = vld [vmem:[#allocation7 + $0xd70] sm:$0xff]
    %v695 = vld [vmem:[#allocation7 + $0xd78] sm:$0xff]
    %v696 = vld [vmem:[#allocation7 + $0xd80] sm:$0xff]
    %v697 = vld [vmem:[#allocation7 + $0xd88] sm:$0xff]
    %v698 = vld [vmem:[#allocation7 + $0xd90] sm:$0xff]
    %v699 = vld [vmem:[#allocation7 + $0xd98] sm:$0xff]
    %v700 = vld [vmem:[#allocation7 + $0xda0] sm:$0xff]
    %v701 = vld [vmem:[#allocation7 + $0xda8] sm:$0xff]
    %v702 = vld [vmem:[#allocation7 + $0xdb0] sm:$0xff]
    %v703 = vld [vmem:[#allocation7 + $0xdb8] sm:$0xff]
    %v704 = vld [vmem:[#allocation7 + $0xdc0] sm:$0xff]
    %v705 = vld [vmem:[#allocation7 + $0xdc8] sm:$0xff]
    %v706 = vld [vmem:[#allocation7 + $0xdd0] sm:$0xff]
    %v707 = vld [vmem:[#allocation7 + $0xdd8] sm:$0xff]
    %v708 = vld [vmem:[#allocation7 + $0xde0] sm:$0xff]
    %v709 = vld [vmem:[#allocation7 + $0xde8] sm:$0xff]
    %v710 = vld [vmem:[#allocation7 + $0xdf0] sm:$0xff]
    %v711 = vld [vmem:[#allocation7 + $0xdf8] sm:$0xff]
    %v712 = vld [vmem:[#allocation7 + $0xe00] sm:$0xff]
    %v713 = vld [vmem:[#allocation7 + $0xe08] sm:$0xff]
    %v714 = vld [vmem:[#allocation7 + $0xe10] sm:$0xff]
    %v715 = vld [vmem:[#allocation7 + $0xe18] sm:$0xff]
    %v716 = vld [vmem:[#allocation7 + $0xe20] sm:$0xff]
    %v717 = vld [vmem:[#allocation7 + $0xe28] sm:$0xff]
    %v718 = vld [vmem:[#allocation7 + $0xe30] sm:$0xff]
    %v719 = vld [vmem:[#allocation7 + $0xe38] sm:$0xff]
    %v720 = vld [vmem:[#allocation7 + $0xe40] sm:$0xff]
    %v721 = vld [vmem:[#allocation7 + $0xe48] sm:$0xff]
    %v722 = vld [vmem:[#allocation7 + $0xe50] sm:$0xff]
    %v723 = vld [vmem:[#allocation7 + $0xe58] sm:$0xff]
    %v724 = vld [vmem:[#allocation7 + $0xe60] sm:$0xff]
    %v725 = vld [vmem:[#allocation7 + $0xe68] sm:$0xff]
    %v726 = vld [vmem:[#allocation7 + $0xe70] sm:$0xff]
    %v727 = vld [vmem:[#allocation7 + $0xe78] sm:$0xff]
    %v728 = vld [vmem:[#allocation7 + $0xe80] sm:$0xff]
    %v729 = vld [vmem:[#allocation7 + $0xe88] sm:$0xff]
    %v730 = vld [vmem:[#allocation7 + $0xe90] sm:$0xff]
    %v731 = vld [vmem:[#allocation7 + $0xe98] sm:$0xff]
    %v732 = vld [vmem:[#allocation7 + $0xea0] sm:$0xff]
    %v733 = vld [vmem:[#allocation7 + $0xea8] sm:$0xff]
    %v734 = vld [vmem:[#allocation7 + $0xeb0] sm:$0xff]
    %v735 = vld [vmem:[#allocation7 + $0xeb8] sm:$0xff]
    %v736 = vld [vmem:[#allocation7 + $0xec0] sm:$0xff]
    %v737 = vld [vmem:[#allocation7 + $0xec8] sm:$0xff]
    %v738 = vld [vmem:[#allocation7 + $0xed0] sm:$0xff]
    %v739 = vld [vmem:[#allocation7 + $0xed8] sm:$0xff]
    %v740 = vld [vmem:[#allocation7 + $0xee0] sm:$0xff]
    %v741 = vld [vmem:[#allocation7 + $0xee8] sm:$0xff]
    %v742 = vld [vmem:[#allocation7 + $0xef0] sm:$0xff]
    %v743 = vld [vmem:[#allocation7 + $0xef8] sm:$0xff]
    %v744 = vld [vmem:[#allocation7 + $0xf00] sm:$0xff]
    %v745 = vld [vmem:[#allocation7 + $0xf08] sm:$0xff]
    %v746 = vld [vmem:[#allocation7 + $0xf10] sm:$0xff]
    %v747 = vld [vmem:[#allocation7 + $0xf18] sm:$0xff]
    %v748 = vld [vmem:[#allocation7 + $0xf20] sm:$0xff]
    %v749 = vld [vmem:[#allocation7 + $0xf28] sm:$0xff]
    %v750 = vld [vmem:[#allocation7 + $0xf30] sm:$0xff]
    %v751 = vld [vmem:[#allocation7 + $0xf38] sm:$0xff]
    %v752 = vld [vmem:[#allocation7 + $0xf40] sm:$0xff]
    %v753 = vld [vmem:[#allocation7 + $0xf48] sm:$0xff]
    %v754 = vld [vmem:[#allocation7 + $0xf50] sm:$0xff]
    %v755 = vld [vmem:[#allocation7 + $0xf58] sm:$0xff]
    %v756 = vld [vmem:[#allocation7 + $0xf60] sm:$0xff]
    %v757 = vld [vmem:[#allocation7 + $0xf68] sm:$0xff]
    %v758 = vld [vmem:[#allocation7 + $0xf70] sm:$0xff]
    %v759 = vld [vmem:[#allocation7 + $0xf78] sm:$0xff]
    %v760 = vld [vmem:[#allocation7 + $0xf80] sm:$0xff]
    %v761 = vld [vmem:[#allocation7 + $0xf88] sm:$0xff]
    %v762 = vld [vmem:[#allocation7 + $0xf90] sm:$0xff]
    %v763 = vld [vmem:[#allocation7 + $0xf98] sm:$0xff]
    %v764 = vld [vmem:[#allocation7 + $0xfa0] sm:$0xff]
    %v765 = vld [vmem:[#allocation7 + $0xfa8] sm:$0xff]
    %v766 = vld [vmem:[#allocation7 + $0xfb0] sm:$0xff]
    %v767 = vld [vmem:[#allocation7 + $0xfb8] sm:$0xff]
    %v768 = vld [vmem:[#allocation7 + $0xfc0] sm:$0xff]
    %v769 = vld [vmem:[#allocation7 + $0xfc8] sm:$0xff]
    %v770 = vld [vmem:[#allocation7 + $0xfd0] sm:$0xff]
    %v771 = vld [vmem:[#allocation7 + $0xfd8] sm:$0xff]
    %v772 = vld [vmem:[#allocation7 + $0xfe0] sm:$0xff]
    %v773 = vld [vmem:[#allocation7 + $0xfe8] sm:$0xff]
    %v774 = vld [vmem:[#allocation7 + $0xff0] sm:$0xff]
    %v775 = vld [vmem:[#allocation7 + $0xff8] sm:$0xff]
    %v776 = vld [vmem:[#allocation7 + $0x1000] sm:$0xff]
    %v777 = vld [vmem:[#allocation7 + $0x1008] sm:$0xff]
    %v778 = vld [vmem:[#allocation7 + $0x1010] sm:$0xff]
    %v779 = vld [vmem:[#allocation7 + $0x1018] sm:$0xff]
    %v780 = vld [vmem:[#allocation7 + $0x1020] sm:$0xff]
    %v781 = vld [vmem:[#allocation7 + $0x1028] sm:$0xff]
    %v782 = vld [vmem:[#allocation7 + $0x1030] sm:$0xff]
    %v783 = vld [vmem:[#allocation7 + $0x1038] sm:$0xff]
    %v784 = vld [vmem:[#allocation7 + $0x1040] sm:$0xff]
    %v785 = vld [vmem:[#allocation7 + $0x1048] sm:$0xff]
    %v786 = vld [vmem:[#allocation7 + $0x1050] sm:$0xff]
    %v787 = vld [vmem:[#allocation7 + $0x1058] sm:$0xff]
    %v788 = vld [vmem:[#allocation7 + $0x1060] sm:$0xff]
    %v789 = vld [vmem:[#allocation7 + $0x1068] sm:$0xff]
    %v790 = vld [vmem:[#allocation7 + $0x1070] sm:$0xff]
    %v791 = vld [vmem:[#allocation7 + $0x1078] sm:$0xff]
    %v792 = vld [vmem:[#allocation7 + $0x1080] sm:$0xff]
    %v793 = vld [vmem:[#allocation7 + $0x1088] sm:$0xff]
    %v794 = vld [vmem:[#allocation7 + $0x1090] sm:$0xff]
    %v795 = vld [vmem:[#allocation7 + $0x1098] sm:$0xff]
    %v796 = vld [vmem:[#allocation7 + $0x10a0] sm:$0xff]
    %v797 = vld [vmem:[#allocation7 + $0x10a8] sm:$0xff]
    %v798 = vld [vmem:[#allocation7 + $0x10b0] sm:$0xff]
    %v799 = vld [vmem:[#allocation7 + $0x10b8] sm:$0xff]
    %v800 = vld [vmem:[#allocation7 + $0x10c0] sm:$0xff]
    %v801 = vld [vmem:[#allocation7 + $0x10c8] sm:$0xff]
    %v802 = vld [vmem:[#allocation7 + $0x10d0] sm:$0xff]
    %v803 = vld [vmem:[#allocation7 + $0x10d8] sm:$0xff]
    %v804 = vld [vmem:[#allocation7 + $0x10e0] sm:$0xff]
    %v805 = vld [vmem:[#allocation7 + $0x10e8] sm:$0xff]
    %v806 = vld [vmem:[#allocation7 + $0x10f0] sm:$0xff]
    %v807 = vld [vmem:[#allocation7 + $0x10f8] sm:$0xff]
    %v808 = vld [vmem:[#allocation7 + $0x1100] sm:$0xff]
    %v809 = vld [vmem:[#allocation7 + $0x1108] sm:$0xff]
    %v810 = vld [vmem:[#allocation7 + $0x1110] sm:$0xff]
    %v811 = vld [vmem:[#allocation7 + $0x1118] sm:$0xff]
    %v812 = vld [vmem:[#allocation7 + $0x1120] sm:$0xff]
    %v813 = vld [vmem:[#allocation7 + $0x1128] sm:$0xff]
    %v814 = vld [vmem:[#allocation7 + $0x1130] sm:$0xff]
    %v815 = vld [vmem:[#allocation7 + $0x1138] sm:$0xff]
    %v816 = vld [vmem:[#allocation7 + $0x1140] sm:$0xff]
    %v817 = vld [vmem:[#allocation7 + $0x1148] sm:$0xff]
    %v818 = vld [vmem:[#allocation7 + $0x1150] sm:$0xff]
    %v819 = vld [vmem:[#allocation7 + $0x1158] sm:$0xff]
    %v820 = vld [vmem:[#allocation7 + $0x1160] sm:$0xff]
    %v821 = vld [vmem:[#allocation7 + $0x1168] sm:$0xff]
    %v822 = vld [vmem:[#allocation7 + $0x1170] sm:$0xff]
    %v823 = vld [vmem:[#allocation7 + $0x1178] sm:$0xff]
    %v824 = vld [vmem:[#allocation7 + $0x1180] sm:$0xff]
    %v825 = vld [vmem:[#allocation7 + $0x1188] sm:$0xff]
    %v826 = vld [vmem:[#allocation7 + $0x1190] sm:$0xff]
    %v827 = vld [vmem:[#allocation7 + $0x1198] sm:$0xff]
    %v828 = vld [vmem:[#allocation7 + $0x11a0] sm:$0xff]
    %v829 = vld [vmem:[#allocation7 + $0x11a8] sm:$0xff]
    %v830 = vld [vmem:[#allocation7 + $0x11b0] sm:$0xff]
    %v831 = vld [vmem:[#allocation7 + $0x11b8] sm:$0xff]
    %v832 = vld [vmem:[#allocation7 + $0x11c0] sm:$0xff]
    %v833 = vld [vmem:[#allocation7 + $0x11c8] sm:$0xff]
    %v834 = vld [vmem:[#allocation7 + $0x11d0] sm:$0xff]
    %v835 = vld [vmem:[#allocation7 + $0x11d8] sm:$0xff]
    %v836 = vld [vmem:[#allocation7 + $0x11e0] sm:$0xff]
    %v837 = vld [vmem:[#allocation7 + $0x11e8] sm:$0xff]
    %v838 = vld [vmem:[#allocation7 + $0x11f0] sm:$0xff]
    %v839 = vld [vmem:[#allocation7 + $0x11f8] sm:$0xff]
    %v840 = vld [vmem:[#allocation7 + $0x1200] sm:$0xff]
    %v841 = vld [vmem:[#allocation7 + $0x1208] sm:$0xff]
    %v842 = vld [vmem:[#allocation7 + $0x1210] sm:$0xff]
    %v843 = vld [vmem:[#allocation7 + $0x1218] sm:$0xff]
    %v844 = vld [vmem:[#allocation7 + $0x1220] sm:$0xff]
    %v845 = vld [vmem:[#allocation7 + $0x1228] sm:$0xff]
    %v846 = vld [vmem:[#allocation7 + $0x1230] sm:$0xff]
    %v847 = vld [vmem:[#allocation7 + $0x1238] sm:$0xff]
    %v848 = vld [vmem:[#allocation7 + $0x1240] sm:$0xff]
    %v849 = vld [vmem:[#allocation7 + $0x1248] sm:$0xff]
    %v850 = vld [vmem:[#allocation7 + $0x1250] sm:$0xff]
    %v851 = vld [vmem:[#allocation7 + $0x1258] sm:$0xff]
    %v852 = vld [vmem:[#allocation7 + $0x1260] sm:$0xff]
    %v853 = vld [vmem:[#allocation7 + $0x1268] sm:$0xff]
    %v854 = vld [vmem:[#allocation7 + $0x1270] sm:$0xff]
    %v855 = vld [vmem:[#allocation7 + $0x1278] sm:$0xff]
    %v856 = vld [vmem:[#allocation7 + $0x1280] sm:$0xff]
    %v857 = vld [vmem:[#allocation7 + $0x1288] sm:$0xff]
    %v858 = vld [vmem:[#allocation7 + $0x1290] sm:$0xff]
    %v859 = vld [vmem:[#allocation7 + $0x1298] sm:$0xff]
    %v860 = vld [vmem:[#allocation7 + $0x12a0] sm:$0xff]
    %v861 = vld [vmem:[#allocation7 + $0x12a8] sm:$0xff]
    %v862 = vld [vmem:[#allocation7 + $0x12b0] sm:$0xff]
    %v863 = vld [vmem:[#allocation7 + $0x12b8] sm:$0xff]
    %v864 = vld [vmem:[#allocation7 + $0x12c0] sm:$0xff]
    %v865 = vld [vmem:[#allocation7 + $0x12c8] sm:$0xff]
    %v866 = vld [vmem:[#allocation7 + $0x12d0] sm:$0xff]
    %v867 = vld [vmem:[#allocation7 + $0x12d8] sm:$0xff]
    %v868 = vld [vmem:[#allocation7 + $0x12e0] sm:$0xff]
    %v869 = vld [vmem:[#allocation7 + $0x12e8] sm:$0xff]
    %v870 = vld [vmem:[#allocation7 + $0x12f0] sm:$0xff]
    %v871 = vld [vmem:[#allocation7 + $0x12f8] sm:$0xff]
    %v872 = vld [vmem:[#allocation8] sm:$0xf]
    %v874 = vlaneseq
    %v875 = vshrl.u32 %v874, 7
    %v876 = vsub.s32 0, %v875
    %v877 = vrot.slane %v872, %v876
    %v878 = vlaneseq
    %v879 = vshrl.u32 %v878, 7
    %v880 = vsub.s32 1, %v879
    %v881 = vrot.slane %v872, %v880
    %v882 = vlaneseq
    %v883 = vshrl.u32 %v882, 7
    %v884 = vsub.s32 2, %v883
    %v885 = vrot.slane %v872, %v884
    %v886 = vlaneseq
    %v887 = vshrl.u32 %v886, 7
    %v888 = vsub.s32 3, %v887
    %v889 = vrot.slane %v872, %v888
    %v1502 = vunpack.c.l.b16 %v264
    %v1503 = vunpack.c.h.b16 %v264
    %v1504 = vunpack.c.l.b16 %v265
    %v1505 = vunpack.c.h.b16 %v265
    %v1506 = vunpack.c.l.b16 %v266
    %v1507 = vunpack.c.h.b16 %v266
    %v1508 = vunpack.c.l.b16 %v267
    %v1509 = vunpack.c.h.b16 %v267
    %v1510 = vunpack.c.l.b16 %v268
    %v1511 = vunpack.c.h.b16 %v268
    %v1512 = vunpack.c.l.b16 %v269
    %v1513 = vunpack.c.h.b16 %v269
    %v1514 = vunpack.c.l.b16 %v270
    %v1515 = vunpack.c.h.b16 %v270
    %v1516 = vunpack.c.l.b16 %v271
    %v1517 = vunpack.c.h.b16 %v271
    %v1518 = vunpack.c.l.b16 %v272
    %v1519 = vunpack.c.h.b16 %v272
    %v1520 = vunpack.c.l.b16 %v273
    %v1521 = vunpack.c.h.b16 %v273
    %v1522 = vunpack.c.l.b16 %v274
    %v1523 = vunpack.c.h.b16 %v274
    %v1524 = vunpack.c.l.b16 %v275
    %v1525 = vunpack.c.h.b16 %v275
    %v1526 = vunpack.c.l.b16 %v276
    %v1527 = vunpack.c.h.b16 %v276
    %v1528 = vunpack.c.l.b16 %v277
    %v1529 = vunpack.c.h.b16 %v277
    %v1530 = vunpack.c.l.b16 %v278
    %v1531 = vunpack.c.h.b16 %v278
    %v1532 = vunpack.c.l.b16 %v279
    %v1533 = vunpack.c.h.b16 %v279
    %v1534 = vunpack.c.l.b16 %v280
    %v1535 = vunpack.c.h.b16 %v280
    %v1536 = vunpack.c.l.b16 %v281
    %v1537 = vunpack.c.h.b16 %v281
    %v1538 = vunpack.c.l.b16 %v282
    %v1539 = vunpack.c.h.b16 %v282
    %v1540 = vunpack.c.l.b16 %v283
    %v1541 = vunpack.c.h.b16 %v283
    %v1542 = vunpack.c.l.b16 %v284
    %v1543 = vunpack.c.h.b16 %v284
    %v1544 = vunpack.c.l.b16 %v285
    %v1545 = vunpack.c.h.b16 %v285
    %v1546 = vunpack.c.l.b16 %v286
    %v1547 = vunpack.c.h.b16 %v286
    %v1548 = vunpack.c.l.b16 %v287
    %v1549 = vunpack.c.h.b16 %v287
    %v1550 = vunpack.c.l.b16 %v288
    %v1551 = vunpack.c.h.b16 %v288
    %v1552 = vunpack.c.l.b16 %v289
    %v1553 = vunpack.c.h.b16 %v289
    %v1554 = vunpack.c.l.b16 %v290
    %v1555 = vunpack.c.h.b16 %v290
    %v1556 = vunpack.c.l.b16 %v291
    %v1557 = vunpack.c.h.b16 %v291
    %v1558 = vunpack.c.l.b16 %v292
    %v1559 = vunpack.c.h.b16 %v292
    %v1560 = vunpack.c.l.b16 %v293
    %v1561 = vunpack.c.h.b16 %v293
    %v1562 = vunpack.c.l.b16 %v294
    %v1563 = vunpack.c.h.b16 %v294
    %v1564 = vunpack.c.l.b16 %v295
    %v1565 = vunpack.c.h.b16 %v295
    %v1566 = vunpack.c.l.b16 %v296
    %v1567 = vunpack.c.h.b16 %v296
    %v1568 = vunpack.c.l.b16 %v297
    %v1569 = vunpack.c.h.b16 %v297
    %v1570 = vunpack.c.l.b16 %v298
    %v1571 = vunpack.c.h.b16 %v298
    %v1572 = vunpack.c.l.b16 %v299
    %v1573 = vunpack.c.h.b16 %v299
    %v1574 = vunpack.c.l.b16 %v300
    %v1575 = vunpack.c.h.b16 %v300
    %v1576 = vunpack.c.l.b16 %v301
    %v1577 = vunpack.c.h.b16 %v301
    %v1578 = vunpack.c.l.b16 %v302
    %v1579 = vunpack.c.h.b16 %v302
    %v1580 = vunpack.c.l.b16 %v303
    %v1581 = vunpack.c.h.b16 %v303
    %v1582 = vunpack.c.l.b16 %v304
    %v1583 = vunpack.c.h.b16 %v304
    %v1584 = vunpack.c.l.b16 %v305
    %v1585 = vunpack.c.h.b16 %v305
    %v1586 = vunpack.c.l.b16 %v306
    %v1587 = vunpack.c.h.b16 %v306
    %v1588 = vunpack.c.l.b16 %v307
    %v1589 = vunpack.c.h.b16 %v307
    %v1590 = vunpack.c.l.b16 %v308
    %v1591 = vunpack.c.h.b16 %v308
    %v1592 = vunpack.c.l.b16 %v309
    %v1593 = vunpack.c.h.b16 %v309
    %v1594 = vunpack.c.l.b16 %v310
    %v1595 = vunpack.c.h.b16 %v310
    %v1596 = vunpack.c.l.b16 %v311
    %v1597 = vunpack.c.h.b16 %v311
    %v1598 = vunpack.c.l.b16 %v312
    %v1599 = vunpack.c.h.b16 %v312
    %v1600 = vunpack.c.l.b16 %v313
    %v1601 = vunpack.c.h.b16 %v313
    %v1602 = vunpack.c.l.b16 %v314
    %v1603 = vunpack.c.h.b16 %v314
    %v1604 = vunpack.c.l.b16 %v315
    %v1605 = vunpack.c.h.b16 %v315
    %v1606 = vunpack.c.l.b16 %v316
    %v1607 = vunpack.c.h.b16 %v316
    %v1608 = vunpack.c.l.b16 %v317
    %v1609 = vunpack.c.h.b16 %v317
    %v1610 = vunpack.c.l.b16 %v318
    %v1611 = vunpack.c.h.b16 %v318
    %v1612 = vunpack.c.l.b16 %v319
    %v1613 = vunpack.c.h.b16 %v319
    %v1614 = vunpack.c.l.b16 %v320
    %v1615 = vunpack.c.h.b16 %v320
    %v1616 = vunpack.c.l.b16 %v321
    %v1617 = vunpack.c.h.b16 %v321
    %v1618 = vunpack.c.l.b16 %v322
    %v1619 = vunpack.c.h.b16 %v322
    %v1620 = vunpack.c.l.b16 %v323
    %v1621 = vunpack.c.h.b16 %v323
    %v1622 = vunpack.c.l.b16 %v324
    %v1623 = vunpack.c.h.b16 %v324
    %v1624 = vunpack.c.l.b16 %v325
    %v1625 = vunpack.c.h.b16 %v325
    %v1626 = vunpack.c.l.b16 %v326
    %v1627 = vunpack.c.h.b16 %v326
    %v1628 = vunpack.c.l.b16 %v327
    %v1629 = vunpack.c.h.b16 %v327
    %v1630 = vunpack.c.l.b16 %v328
    %v1631 = vunpack.c.h.b16 %v328
    %v1632 = vunpack.c.l.b16 %v329
    %v1633 = vunpack.c.h.b16 %v329
    %v1634 = vunpack.c.l.b16 %v330
    %v1635 = vunpack.c.h.b16 %v330
    %v1636 = vunpack.c.l.b16 %v331
    %v1637 = vunpack.c.h.b16 %v331
    %v1638 = vunpack.c.l.b16 %v332
    %v1639 = vunpack.c.h.b16 %v332
    %v1640 = vunpack.c.l.b16 %v333
    %v1641 = vunpack.c.h.b16 %v333
    %v1642 = vunpack.c.l.b16 %v334
    %v1643 = vunpack.c.h.b16 %v334
    %v1644 = vunpack.c.l.b16 %v335
    %v1645 = vunpack.c.h.b16 %v335
    %v1646 = vunpack.c.l.b16 %v336
    %v1647 = vunpack.c.h.b16 %v336
    %v1648 = vunpack.c.l.b16 %v337
    %v1649 = vunpack.c.h.b16 %v337
    %v1650 = vunpack.c.l.b16 %v338
    %v1651 = vunpack.c.h.b16 %v338
    %v1652 = vunpack.c.l.b16 %v339
    %v1653 = vunpack.c.h.b16 %v339
    %v1654 = vunpack.c.l.b16 %v340
    %v1655 = vunpack.c.h.b16 %v340
    %v1656 = vunpack.c.l.b16 %v341
    %v1657 = vunpack.c.h.b16 %v341
    %v1658 = vunpack.c.l.b16 %v342
    %v1659 = vunpack.c.h.b16 %v342
    %v1660 = vunpack.c.l.b16 %v343
    %v1661 = vunpack.c.h.b16 %v343
    %v1662 = vunpack.c.l.b16 %v344
    %v1663 = vunpack.c.h.b16 %v344
    %v1664 = vunpack.c.l.b16 %v345
    %v1665 = vunpack.c.h.b16 %v345
    %v1666 = vunpack.c.l.b16 %v346
    %v1667 = vunpack.c.h.b16 %v346
    %v1668 = vunpack.c.l.b16 %v347
    %v1669 = vunpack.c.h.b16 %v347
    %v1670 = vunpack.c.l.b16 %v348
    %v1671 = vunpack.c.h.b16 %v348
    %v1672 = vunpack.c.l.b16 %v349
    %v1673 = vunpack.c.h.b16 %v349
    %v1674 = vunpack.c.l.b16 %v350
    %v1675 = vunpack.c.h.b16 %v350
    %v1676 = vunpack.c.l.b16 %v351
    %v1677 = vunpack.c.h.b16 %v351
    %v1678 = vunpack.c.l.b16 %v352
    %v1679 = vunpack.c.h.b16 %v352
    %v1680 = vunpack.c.l.b16 %v353
    %v1681 = vunpack.c.h.b16 %v353
    %v1682 = vunpack.c.l.b16 %v354
    %v1683 = vunpack.c.h.b16 %v354
    %v1684 = vunpack.c.l.b16 %v355
    %v1685 = vunpack.c.h.b16 %v355
    %v1686 = vunpack.c.l.b16 %v356
    %v1687 = vunpack.c.h.b16 %v356
    %v1688 = vunpack.c.l.b16 %v357
    %v1689 = vunpack.c.h.b16 %v357
    %v1690 = vunpack.c.l.b16 %v358
    %v1691 = vunpack.c.h.b16 %v358
    %v1692 = vunpack.c.l.b16 %v359
    %v1693 = vunpack.c.h.b16 %v359
    %v1694 = vunpack.c.l.b16 %v360
    %v1695 = vunpack.c.h.b16 %v360
    %v1696 = vunpack.c.l.b16 %v361
    %v1697 = vunpack.c.h.b16 %v361
    %v1698 = vunpack.c.l.b16 %v362
    %v1699 = vunpack.c.h.b16 %v362
    %v1700 = vunpack.c.l.b16 %v363
    %v1701 = vunpack.c.h.b16 %v363
    %v1702 = vunpack.c.l.b16 %v364
    %v1703 = vunpack.c.h.b16 %v364
    %v1704 = vunpack.c.l.b16 %v365
    %v1705 = vunpack.c.h.b16 %v365
    %v1706 = vunpack.c.l.b16 %v366
    %v1707 = vunpack.c.h.b16 %v366
    %v1708 = vunpack.c.l.b16 %v367
    %v1709 = vunpack.c.h.b16 %v367
    %v1710 = vunpack.c.l.b16 %v368
    %v1711 = vunpack.c.h.b16 %v368
    %v1712 = vunpack.c.l.b16 %v369
    %v1713 = vunpack.c.h.b16 %v369
    %v1714 = vunpack.c.l.b16 %v370
    %v1715 = vunpack.c.h.b16 %v370
    %v1716 = vunpack.c.l.b16 %v371
    %v1717 = vunpack.c.h.b16 %v371
    %v1718 = vunpack.c.l.b16 %v372
    %v1719 = vunpack.c.h.b16 %v372
    %v1720 = vunpack.c.l.b16 %v373
    %v1721 = vunpack.c.h.b16 %v373
    %v1722 = vunpack.c.l.b16 %v374
    %v1723 = vunpack.c.h.b16 %v374
    %v1724 = vunpack.c.l.b16 %v375
    %v1725 = vunpack.c.h.b16 %v375
    %v1726 = vunpack.c.l.b16 %v376
    %v1727 = vunpack.c.h.b16 %v376
    %v1728 = vunpack.c.l.b16 %v377
    %v1729 = vunpack.c.h.b16 %v377
    %v1730 = vunpack.c.l.b16 %v378
    %v1731 = vunpack.c.h.b16 %v378
    %v1732 = vunpack.c.l.b16 %v379
    %v1733 = vunpack.c.h.b16 %v379
    %v1734 = vunpack.c.l.b16 %v380
    %v1735 = vunpack.c.h.b16 %v380
    %v1736 = vunpack.c.l.b16 %v381
    %v1737 = vunpack.c.h.b16 %v381
    %v1738 = vunpack.c.l.b16 %v382
    %v1739 = vunpack.c.h.b16 %v382
    %v1740 = vunpack.c.l.b16 %v383
    %v1741 = vunpack.c.h.b16 %v383
    %v1742 = vunpack.c.l.b16 %v384
    %v1743 = vunpack.c.h.b16 %v384
    %v1744 = vunpack.c.l.b16 %v385
    %v1745 = vunpack.c.h.b16 %v385
    %v1746 = vunpack.c.l.b16 %v386
    %v1747 = vunpack.c.h.b16 %v386
    %v1748 = vunpack.c.l.b16 %v387
    %v1749 = vunpack.c.h.b16 %v387
    %v1750 = vunpack.c.l.b16 %v388
    %v1751 = vunpack.c.h.b16 %v388
    %v1752 = vunpack.c.l.b16 %v389
    %v1753 = vunpack.c.h.b16 %v389
    %v1754 = vunpack.c.l.b16 %v390
    %v1755 = vunpack.c.h.b16 %v390
    %v1756 = vunpack.c.l.b16 %v391
    %v1757 = vunpack.c.h.b16 %v391
    %v1758 = vunpack.c.l.b16 %v392
    %v1759 = vunpack.c.h.b16 %v392
    %v1760 = vunpack.c.l.b16 %v393
    %v1761 = vunpack.c.h.b16 %v393
    %v1762 = vunpack.c.l.b16 %v394
    %v1763 = vunpack.c.h.b16 %v394
    %v1764 = vunpack.c.l.b16 %v395
    %v1765 = vunpack.c.h.b16 %v395
    %v1766 = vunpack.c.l.b16 %v396
    %v1767 = vunpack.c.h.b16 %v396
    %v1768 = vunpack.c.l.b16 %v397
    %v1769 = vunpack.c.h.b16 %v397
    %v1770 = vunpack.c.l.b16 %v398
    %v1771 = vunpack.c.h.b16 %v398
    %v1772 = vunpack.c.l.b16 %v399
    %v1773 = vunpack.c.h.b16 %v399
    %v1774 = vunpack.c.l.b16 %v400
    %v1775 = vunpack.c.h.b16 %v400
    %v1776 = vunpack.c.l.b16 %v401
    %v1777 = vunpack.c.h.b16 %v401
    %v1778 = vunpack.c.l.b16 %v402
    %v1779 = vunpack.c.h.b16 %v402
    %v1780 = vunpack.c.l.b16 %v403
    %v1781 = vunpack.c.h.b16 %v403
    %v1782 = vunpack.c.l.b16 %v404
    %v1783 = vunpack.c.h.b16 %v404
    %v1784 = vunpack.c.l.b16 %v405
    %v1785 = vunpack.c.h.b16 %v405
    %v1786 = vunpack.c.l.b16 %v406
    %v1787 = vunpack.c.h.b16 %v406
    %v1788 = vunpack.c.l.b16 %v407
    %v1789 = vunpack.c.h.b16 %v407
    %v1790 = vunpack.c.l.b16 %v408
    %v1791 = vunpack.c.h.b16 %v408
    %v1792 = vunpack.c.l.b16 %v409
    %v1793 = vunpack.c.h.b16 %v409
    %v1794 = vunpack.c.l.b16 %v410
    %v1795 = vunpack.c.h.b16 %v410
    %v1796 = vunpack.c.l.b16 %v411
    %v1797 = vunpack.c.h.b16 %v411
    %v1798 = vunpack.c.l.b16 %v412
    %v1799 = vunpack.c.h.b16 %v412
    %v1800 = vunpack.c.l.b16 %v413
    %v1801 = vunpack.c.h.b16 %v413
    %v1802 = vunpack.c.l.b16 %v414
    %v1803 = vunpack.c.h.b16 %v414
    %v1804 = vunpack.c.l.b16 %v415
    %v1805 = vunpack.c.h.b16 %v415
    %v1806 = vunpack.c.l.b16 %v416
    %v1807 = vunpack.c.h.b16 %v416
    %v1808 = vunpack.c.l.b16 %v417
    %v1809 = vunpack.c.h.b16 %v417
    %v1810 = vunpack.c.l.b16 %v418
    %v1811 = vunpack.c.h.b16 %v418
    %v1812 = vunpack.c.l.b16 %v419
    %v1813 = vunpack.c.h.b16 %v419
    %v1814 = vunpack.c.l.b16 %v420
    %v1815 = vunpack.c.h.b16 %v420
    %v1816 = vunpack.c.l.b16 %v421
    %v1817 = vunpack.c.h.b16 %v421
    %v1818 = vunpack.c.l.b16 %v422
    %v1819 = vunpack.c.h.b16 %v422
    %v1820 = vunpack.c.l.b16 %v423
    %v1821 = vunpack.c.h.b16 %v423
    %v1822 = vunpack.c.l.b16 %v424
    %v1823 = vunpack.c.h.b16 %v424
    %v1824 = vunpack.c.l.b16 %v425
    %v1825 = vunpack.c.h.b16 %v425
    %v1826 = vunpack.c.l.b16 %v426
    %v1827 = vunpack.c.h.b16 %v426
    %v1828 = vunpack.c.l.b16 %v427
    %v1829 = vunpack.c.h.b16 %v427
    %v1830 = vunpack.c.l.b16 %v428
    %v1831 = vunpack.c.h.b16 %v428
    %v1832 = vunpack.c.l.b16 %v429
    %v1833 = vunpack.c.h.b16 %v429
    %v1834 = vunpack.c.l.b16 %v430
    %v1835 = vunpack.c.h.b16 %v430
    %v1836 = vunpack.c.l.b16 %v431
    %v1837 = vunpack.c.h.b16 %v431
    %v1838 = vunpack.c.l.b16 %v432
    %v1839 = vunpack.c.h.b16 %v432
    %v1840 = vunpack.c.l.b16 %v433
    %v1841 = vunpack.c.h.b16 %v433
    %v1842 = vunpack.c.l.b16 %v434
    %v1843 = vunpack.c.h.b16 %v434
    %v1844 = vunpack.c.l.b16 %v435
    %v1845 = vunpack.c.h.b16 %v435
    %v1846 = vunpack.c.l.b16 %v436
    %v1847 = vunpack.c.h.b16 %v436
    %v1848 = vunpack.c.l.b16 %v437
    %v1849 = vunpack.c.h.b16 %v437
    %v1850 = vunpack.c.l.b16 %v438
    %v1851 = vunpack.c.h.b16 %v438
    %v1852 = vunpack.c.l.b16 %v439
    %v1853 = vunpack.c.h.b16 %v439
    %v1854 = vunpack.c.l.b16 %v440
    %v1855 = vunpack.c.h.b16 %v440
    %v1856 = vunpack.c.l.b16 %v441
    %v1857 = vunpack.c.h.b16 %v441
    %v1858 = vunpack.c.l.b16 %v442
    %v1859 = vunpack.c.h.b16 %v442
    %v1860 = vunpack.c.l.b16 %v443
    %v1861 = vunpack.c.h.b16 %v443
    %v1862 = vunpack.c.l.b16 %v444
    %v1863 = vunpack.c.h.b16 %v444
    %v1864 = vunpack.c.l.b16 %v445
    %v1865 = vunpack.c.h.b16 %v445
    %v1866 = vunpack.c.l.b16 %v446
    %v1867 = vunpack.c.h.b16 %v446
    %v1868 = vunpack.c.l.b16 %v447
    %v1869 = vunpack.c.h.b16 %v447
    %v1870 = vunpack.c.l.b16 %v448
    %v1871 = vunpack.c.h.b16 %v448
    %v1872 = vunpack.c.l.b16 %v449
    %v1873 = vunpack.c.h.b16 %v449
    %v1874 = vunpack.c.l.b16 %v450
    %v1875 = vunpack.c.h.b16 %v450
    %v1876 = vunpack.c.l.b16 %v451
    %v1877 = vunpack.c.h.b16 %v451
    %v1878 = vunpack.c.l.b16 %v452
    %v1879 = vunpack.c.h.b16 %v452
    %v1880 = vunpack.c.l.b16 %v453
    %v1881 = vunpack.c.h.b16 %v453
    %v1882 = vunpack.c.l.b16 %v454
    %v1883 = vunpack.c.h.b16 %v454
    %v1884 = vunpack.c.l.b16 %v455
    %v1885 = vunpack.c.h.b16 %v455
    %v1886 = vunpack.c.l.b16 %v456
    %v1887 = vunpack.c.h.b16 %v456
    %v1888 = vunpack.c.l.b16 %v457
    %v1889 = vunpack.c.h.b16 %v457
    %v1890 = vunpack.c.l.b16 %v458
    %v1891 = vunpack.c.h.b16 %v458
    %v1892 = vunpack.c.l.b16 %v459
    %v1893 = vunpack.c.h.b16 %v459
    %v1894 = vunpack.c.l.b16 %v460
    %v1895 = vunpack.c.h.b16 %v460
    %v1896 = vunpack.c.l.b16 %v461
    %v1897 = vunpack.c.h.b16 %v461
    %v1898 = vunpack.c.l.b16 %v462
    %v1899 = vunpack.c.h.b16 %v462
    %v1900 = vunpack.c.l.b16 %v463
    %v1901 = vunpack.c.h.b16 %v463
    %v1902 = vunpack.c.l.b16 %v464
    %v1903 = vunpack.c.h.b16 %v464
    %v1904 = vunpack.c.l.b16 %v465
    %v1905 = vunpack.c.h.b16 %v465
    %v1906 = vunpack.c.l.b16 %v466
    %v1907 = vunpack.c.h.b16 %v466
    %v1908 = vunpack.c.l.b16 %v467
    %v1909 = vunpack.c.h.b16 %v467
    %v1910 = vunpack.c.l.b16 %v468
    %v1911 = vunpack.c.h.b16 %v468
    %v1912 = vunpack.c.l.b16 %v469
    %v1913 = vunpack.c.h.b16 %v469
    %v1914 = vunpack.c.l.b16 %v470
    %v1915 = vunpack.c.h.b16 %v470
    %v1916 = vunpack.c.l.b16 %v471
    %v1917 = vunpack.c.h.b16 %v471
    %v1918 = vunpack.c.l.b16 %v472
    %v1919 = vunpack.c.h.b16 %v472
    %v1920 = vunpack.c.l.b16 %v473
    %v1921 = vunpack.c.h.b16 %v473
    %v1922 = vunpack.c.l.b16 %v474
    %v1923 = vunpack.c.h.b16 %v474
    %v1924 = vunpack.c.l.b16 %v475
    %v1925 = vunpack.c.h.b16 %v475
    %v1926 = vunpack.c.l.b16 %v476
    %v1927 = vunpack.c.h.b16 %v476
    %v1928 = vunpack.c.l.b16 %v477
    %v1929 = vunpack.c.h.b16 %v477
    %v1930 = vunpack.c.l.b16 %v478
    %v1931 = vunpack.c.h.b16 %v478
    %v1932 = vunpack.c.l.b16 %v479
    %v1933 = vunpack.c.h.b16 %v479
    %v1934 = vunpack.c.l.b16 %v480
    %v1935 = vunpack.c.h.b16 %v480
    %v1936 = vunpack.c.l.b16 %v481
    %v1937 = vunpack.c.h.b16 %v481
    %v1938 = vunpack.c.l.b16 %v482
    %v1939 = vunpack.c.h.b16 %v482
    %v1940 = vunpack.c.l.b16 %v483
    %v1941 = vunpack.c.h.b16 %v483
    %v1942 = vunpack.c.l.b16 %v484
    %v1943 = vunpack.c.h.b16 %v484
    %v1944 = vunpack.c.l.b16 %v485
    %v1945 = vunpack.c.h.b16 %v485
    %v1946 = vunpack.c.l.b16 %v486
    %v1947 = vunpack.c.h.b16 %v486
    %v1948 = vunpack.c.l.b16 %v487
    %v1949 = vunpack.c.h.b16 %v487
    %v1950 = vunpack.c.l.b16 %v488
    %v1951 = vunpack.c.h.b16 %v488
    %v1952 = vunpack.c.l.b16 %v489
    %v1953 = vunpack.c.h.b16 %v489
    %v1954 = vunpack.c.l.b16 %v490
    %v1955 = vunpack.c.h.b16 %v490
    %v1956 = vunpack.c.l.b16 %v491
    %v1957 = vunpack.c.h.b16 %v491
    %v1958 = vunpack.c.l.b16 %v492
    %v1959 = vunpack.c.h.b16 %v492
    %v1960 = vunpack.c.l.b16 %v493
    %v1961 = vunpack.c.h.b16 %v493
    %v1962 = vunpack.c.l.b16 %v494
    %v1963 = vunpack.c.h.b16 %v494
    %v1964 = vunpack.c.l.b16 %v495
    %v1965 = vunpack.c.h.b16 %v495
    %v1966 = vunpack.c.l.b16 %v496
    %v1967 = vunpack.c.h.b16 %v496
    %v1968 = vunpack.c.l.b16 %v497
    %v1969 = vunpack.c.h.b16 %v497
    %v1970 = vunpack.c.l.b16 %v498
    %v1971 = vunpack.c.h.b16 %v498
    %v1972 = vunpack.c.l.b16 %v499
    %v1973 = vunpack.c.h.b16 %v499
    %v1974 = vunpack.c.l.b16 %v500
    %v1975 = vunpack.c.h.b16 %v500
    %v1976 = vunpack.c.l.b16 %v501
    %v1977 = vunpack.c.h.b16 %v501
    %v1978 = vunpack.c.l.b16 %v502
    %v1979 = vunpack.c.h.b16 %v502
    %v1980 = vunpack.c.l.b16 %v503
    %v1981 = vunpack.c.h.b16 %v503
    %v1982 = vunpack.c.l.b16 %v504
    %v1983 = vunpack.c.h.b16 %v504
    %v1984 = vunpack.c.l.b16 %v505
    %v1985 = vunpack.c.h.b16 %v505
    %v1986 = vunpack.c.l.b16 %v506
    %v1987 = vunpack.c.h.b16 %v506
    %v1988 = vunpack.c.l.b16 %v507
    %v1989 = vunpack.c.h.b16 %v507
    %v1990 = vunpack.c.l.b16 %v508
    %v1991 = vunpack.c.h.b16 %v508
    %v1992 = vunpack.c.l.b16 %v509
    %v1993 = vunpack.c.h.b16 %v509
    %v1994 = vunpack.c.l.b16 %v510
    %v1995 = vunpack.c.h.b16 %v510
    %v1996 = vunpack.c.l.b16 %v511
    %v1997 = vunpack.c.h.b16 %v511
    %v1998 = vunpack.c.l.b16 %v512
    %v1999 = vunpack.c.h.b16 %v512
    %v2000 = vunpack.c.l.b16 %v513
    %v2001 = vunpack.c.h.b16 %v513
    %v2002 = vunpack.c.l.b16 %v514
    %v2003 = vunpack.c.h.b16 %v514
    %v2004 = vunpack.c.l.b16 %v515
    %v2005 = vunpack.c.h.b16 %v515
    %v2006 = vunpack.c.l.b16 %v516
    %v2007 = vunpack.c.h.b16 %v516
    %v2008 = vunpack.c.l.b16 %v517
    %v2009 = vunpack.c.h.b16 %v517
    %v2010 = vunpack.c.l.b16 %v518
    %v2011 = vunpack.c.h.b16 %v518
    %v2012 = vunpack.c.l.b16 %v519
    %v2013 = vunpack.c.h.b16 %v519
    %v2014 = vunpack.c.l.b16 %v520
    %v2015 = vunpack.c.h.b16 %v520
    %v2016 = vunpack.c.l.b16 %v521
    %v2017 = vunpack.c.h.b16 %v521
    %v2018 = vunpack.c.l.b16 %v522
    %v2019 = vunpack.c.h.b16 %v522
    %v2020 = vunpack.c.l.b16 %v523
    %v2021 = vunpack.c.h.b16 %v523
    %v2022 = vunpack.c.l.b16 %v524
    %v2023 = vunpack.c.h.b16 %v524
    %v2024 = vunpack.c.l.b16 %v525
    %v2025 = vunpack.c.h.b16 %v525
    %v2026 = vunpack.c.l.b16 %v526
    %v2027 = vunpack.c.h.b16 %v526
    %v2028 = vunpack.c.l.b16 %v527
    %v2029 = vunpack.c.h.b16 %v527
    %v2030 = vunpack.c.l.b16 %v528
    %v2031 = vunpack.c.h.b16 %v528
    %v2032 = vunpack.c.l.b16 %v529
    %v2033 = vunpack.c.h.b16 %v529
    %v2034 = vunpack.c.l.b16 %v530
    %v2035 = vunpack.c.h.b16 %v530
    %v2036 = vunpack.c.l.b16 %v531
    %v2037 = vunpack.c.h.b16 %v531
    %v2038 = vunpack.c.l.b16 %v532
    %v2039 = vunpack.c.h.b16 %v532
    %v2040 = vunpack.c.l.b16 %v533
    %v2041 = vunpack.c.h.b16 %v533
    %v2042 = vunpack.c.l.b16 %v534
    %v2043 = vunpack.c.h.b16 %v534
    %v2044 = vunpack.c.l.b16 %v535
    %v2045 = vunpack.c.h.b16 %v535
    %v2046 = vunpack.c.l.b16 %v536
    %v2047 = vunpack.c.h.b16 %v536
    %v2048 = vunpack.c.l.b16 %v537
    %v2049 = vunpack.c.h.b16 %v537
    %v2050 = vunpack.c.l.b16 %v538
    %v2051 = vunpack.c.h.b16 %v538
    %v2052 = vunpack.c.l.b16 %v539
    %v2053 = vunpack.c.h.b16 %v539
    %v2054 = vunpack.c.l.b16 %v540
    %v2055 = vunpack.c.h.b16 %v540
    %v2056 = vunpack.c.l.b16 %v541
    %v2057 = vunpack.c.h.b16 %v541
    %v2058 = vunpack.c.l.b16 %v542
    %v2059 = vunpack.c.h.b16 %v542
    %v2060 = vunpack.c.l.b16 %v543
    %v2061 = vunpack.c.h.b16 %v543
    %v2062 = vunpack.c.l.b16 %v544
    %v2063 = vunpack.c.h.b16 %v544
    %v2064 = vunpack.c.l.b16 %v545
    %v2065 = vunpack.c.h.b16 %v545
    %v2066 = vunpack.c.l.b16 %v546
    %v2067 = vunpack.c.h.b16 %v546
    %v2068 = vunpack.c.l.b16 %v547
    %v2069 = vunpack.c.h.b16 %v547
    %v2070 = vunpack.c.l.b16 %v548
    %v2071 = vunpack.c.h.b16 %v548
    %v2072 = vunpack.c.l.b16 %v549
    %v2073 = vunpack.c.h.b16 %v549
    %v2074 = vunpack.c.l.b16 %v550
    %v2075 = vunpack.c.h.b16 %v550
    %v2076 = vunpack.c.l.b16 %v551
    %v2077 = vunpack.c.h.b16 %v551
    %v2078 = vunpack.c.l.b16 %v552
    %v2079 = vunpack.c.h.b16 %v552
    %v2080 = vunpack.c.l.b16 %v553
    %v2081 = vunpack.c.h.b16 %v553
    %v2082 = vunpack.c.l.b16 %v554
    %v2083 = vunpack.c.h.b16 %v554
    %v2084 = vunpack.c.l.b16 %v555
    %v2085 = vunpack.c.h.b16 %v555
    %v2086 = vunpack.c.l.b16 %v556
    %v2087 = vunpack.c.h.b16 %v556
    %v2088 = vunpack.c.l.b16 %v557
    %v2089 = vunpack.c.h.b16 %v557
    %v2090 = vunpack.c.l.b16 %v558
    %v2091 = vunpack.c.h.b16 %v558
    %v2092 = vunpack.c.l.b16 %v559
    %v2093 = vunpack.c.h.b16 %v559
    %v2094 = vunpack.c.l.b16 %v560
    %v2095 = vunpack.c.h.b16 %v560
    %v2096 = vunpack.c.l.b16 %v561
    %v2097 = vunpack.c.h.b16 %v561
    %v2098 = vunpack.c.l.b16 %v562
    %v2099 = vunpack.c.h.b16 %v562
    %v2100 = vunpack.c.l.b16 %v563
    %v2101 = vunpack.c.h.b16 %v563
    %v2102 = vunpack.c.l.b16 %v564
    %v2103 = vunpack.c.h.b16 %v564
    %v2104 = vunpack.c.l.b16 %v565
    %v2105 = vunpack.c.h.b16 %v565
    %v2106 = vunpack.c.l.b16 %v566
    %v2107 = vunpack.c.h.b16 %v566
    %v2108 = vunpack.c.l.b16 %v567
    %v2109 = vunpack.c.h.b16 %v567
    %v2110 = vunpack.c.l.b16 %v568
    %v2111 = vunpack.c.h.b16 %v568
    %v2112 = vunpack.c.l.b16 %v569
    %v2113 = vunpack.c.h.b16 %v569
    %v2114 = vunpack.c.l.b16 %v570
    %v2115 = vunpack.c.h.b16 %v570
    %v2116 = vunpack.c.l.b16 %v571
    %v2117 = vunpack.c.h.b16 %v571
    %v2118 = vunpack.c.l.b16 %v572
    %v2119 = vunpack.c.h.b16 %v572
    %v2120 = vunpack.c.l.b16 %v573
    %v2121 = vunpack.c.h.b16 %v573
    %v2122 = vunpack.c.l.b16 %v574
    %v2123 = vunpack.c.h.b16 %v574
    %v2124 = vunpack.c.l.b16 %v575
    %v2125 = vunpack.c.h.b16 %v575
    %v2126 = vunpack.c.l.b16 %v576
    %v2127 = vunpack.c.h.b16 %v576
    %v2128 = vunpack.c.l.b16 %v577
    %v2129 = vunpack.c.h.b16 %v577
    %v2130 = vunpack.c.l.b16 %v578
    %v2131 = vunpack.c.h.b16 %v578
    %v2132 = vunpack.c.l.b16 %v579
    %v2133 = vunpack.c.h.b16 %v579
    %v2134 = vunpack.c.l.b16 %v580
    %v2135 = vunpack.c.h.b16 %v580
    %v2136 = vunpack.c.l.b16 %v581
    %v2137 = vunpack.c.h.b16 %v581
    %v2138 = vunpack.c.l.b16 %v582
    %v2139 = vunpack.c.h.b16 %v582
    %v2140 = vunpack.c.l.b16 %v583
    %v2141 = vunpack.c.h.b16 %v583
    %v2142 = vunpack.c.l.b16 %v584
    %v2143 = vunpack.c.h.b16 %v584
    %v2144 = vunpack.c.l.b16 %v585
    %v2145 = vunpack.c.h.b16 %v585
    %v2146 = vunpack.c.l.b16 %v586
    %v2147 = vunpack.c.h.b16 %v586
    %v2148 = vunpack.c.l.b16 %v587
    %v2149 = vunpack.c.h.b16 %v587
    %v2150 = vunpack.c.l.b16 %v588
    %v2151 = vunpack.c.h.b16 %v588
    %v2152 = vunpack.c.l.b16 %v589
    %v2153 = vunpack.c.h.b16 %v589
    %v2154 = vunpack.c.l.b16 %v590
    %v2155 = vunpack.c.h.b16 %v590
    %v2156 = vunpack.c.l.b16 %v591
    %v2157 = vunpack.c.h.b16 %v591
    %v2158 = vunpack.c.l.b16 %v592
    %v2159 = vunpack.c.h.b16 %v592
    %v2160 = vunpack.c.l.b16 %v593
    %v2161 = vunpack.c.h.b16 %v593
    %v2162 = vunpack.c.l.b16 %v594
    %v2163 = vunpack.c.h.b16 %v594
    %v2164 = vunpack.c.l.b16 %v595
    %v2165 = vunpack.c.h.b16 %v595
    %v2166 = vunpack.c.l.b16 %v596
    %v2167 = vunpack.c.h.b16 %v596
    %v2168 = vunpack.c.l.b16 %v597
    %v2169 = vunpack.c.h.b16 %v597
    %v2170 = vunpack.c.l.b16 %v598
    %v2171 = vunpack.c.h.b16 %v598
    %v2172 = vunpack.c.l.b16 %v599
    %v2173 = vunpack.c.h.b16 %v599
    %v2174 = vunpack.c.l.b16 %v600
    %v2175 = vunpack.c.h.b16 %v600
    %v2176 = vunpack.c.l.b16 %v601
    %v2177 = vunpack.c.h.b16 %v601
    %v2178 = vunpack.c.l.b16 %v602
    %v2179 = vunpack.c.h.b16 %v602
    %v2180 = vunpack.c.l.b16 %v603
    %v2181 = vunpack.c.h.b16 %v603
    %v2182 = vunpack.c.l.b16 %v604
    %v2183 = vunpack.c.h.b16 %v604
    %v2184 = vunpack.c.l.b16 %v605
    %v2185 = vunpack.c.h.b16 %v605
    %v2186 = vunpack.c.l.b16 %v606
    %v2187 = vunpack.c.h.b16 %v606
    %v2188 = vunpack.c.l.b16 %v607
    %v2189 = vunpack.c.h.b16 %v607
    %v2190 = vunpack.c.l.b16 %v608
    %v2191 = vunpack.c.h.b16 %v608
    %v2192 = vunpack.c.l.b16 %v609
    %v2193 = vunpack.c.h.b16 %v609
    %v2194 = vunpack.c.l.b16 %v610
    %v2195 = vunpack.c.h.b16 %v610
    %v2196 = vunpack.c.l.b16 %v611
    %v2197 = vunpack.c.h.b16 %v611
    %v2198 = vunpack.c.l.b16 %v612
    %v2199 = vunpack.c.h.b16 %v612
    %v2200 = vunpack.c.l.b16 %v613
    %v2201 = vunpack.c.h.b16 %v613
    %v2202 = vunpack.c.l.b16 %v614
    %v2203 = vunpack.c.h.b16 %v614
    %v2204 = vunpack.c.l.b16 %v615
    %v2205 = vunpack.c.h.b16 %v615
    %v2206 = vunpack.c.l.b16 %v616
    %v2207 = vunpack.c.h.b16 %v616
    %v2208 = vunpack.c.l.b16 %v617
    %v2209 = vunpack.c.h.b16 %v617
    %v2210 = vunpack.c.l.b16 %v618
    %v2211 = vunpack.c.h.b16 %v618
    %v2212 = vunpack.c.l.b16 %v619
    %v2213 = vunpack.c.h.b16 %v619
    %v2214 = vunpack.c.l.b16 %v620
    %v2215 = vunpack.c.h.b16 %v620
    %v2216 = vunpack.c.l.b16 %v621
    %v2217 = vunpack.c.h.b16 %v621
    %v2218 = vunpack.c.l.b16 %v622
    %v2219 = vunpack.c.h.b16 %v622
    %v2220 = vunpack.c.l.b16 %v623
    %v2221 = vunpack.c.h.b16 %v623
    %v2222 = vunpack.c.l.b16 %v624
    %v2223 = vunpack.c.h.b16 %v624
    %v2224 = vunpack.c.l.b16 %v625
    %v2225 = vunpack.c.h.b16 %v625
    %v2226 = vunpack.c.l.b16 %v626
    %v2227 = vunpack.c.h.b16 %v626
    %v2228 = vunpack.c.l.b16 %v627
    %v2229 = vunpack.c.h.b16 %v627
    %v2230 = vunpack.c.l.b16 %v628
    %v2231 = vunpack.c.h.b16 %v628
    %v2232 = vunpack.c.l.b16 %v629
    %v2233 = vunpack.c.h.b16 %v629
    %v2234 = vunpack.c.l.b16 %v630
    %v2235 = vunpack.c.h.b16 %v630
    %v2236 = vunpack.c.l.b16 %v631
    %v2237 = vunpack.c.h.b16 %v631
    %v2238 = vunpack.c.l.b16 %v632
    %v2239 = vunpack.c.h.b16 %v632
    %v2240 = vunpack.c.l.b16 %v633
    %v2241 = vunpack.c.h.b16 %v633
    %v2242 = vunpack.c.l.b16 %v634
    %v2243 = vunpack.c.h.b16 %v634
    %v2244 = vunpack.c.l.b16 %v635
    %v2245 = vunpack.c.h.b16 %v635
    %v2246 = vunpack.c.l.b16 %v636
    %v2247 = vunpack.c.h.b16 %v636
    %v2248 = vunpack.c.l.b16 %v637
    %v2249 = vunpack.c.h.b16 %v637
    %v2250 = vunpack.c.l.b16 %v638
    %v2251 = vunpack.c.h.b16 %v638
    %v2252 = vunpack.c.l.b16 %v639
    %v2253 = vunpack.c.h.b16 %v639
    %v2254 = vunpack.c.l.b16 %v640
    %v2255 = vunpack.c.h.b16 %v640
    %v2256 = vunpack.c.l.b16 %v641
    %v2257 = vunpack.c.h.b16 %v641
    %v2258 = vunpack.c.l.b16 %v642
    %v2259 = vunpack.c.h.b16 %v642
    %v2260 = vunpack.c.l.b16 %v643
    %v2261 = vunpack.c.h.b16 %v643
    %v2262 = vunpack.c.l.b16 %v644
    %v2263 = vunpack.c.h.b16 %v644
    %v2264 = vunpack.c.l.b16 %v645
    %v2265 = vunpack.c.h.b16 %v645
    %v2266 = vunpack.c.l.b16 %v646
    %v2267 = vunpack.c.h.b16 %v646
    %v2268 = vunpack.c.l.b16 %v647
    %v2269 = vunpack.c.h.b16 %v647
    %v2270 = vunpack.c.l.b16 %v648
    %v2271 = vunpack.c.h.b16 %v648
    %v2272 = vunpack.c.l.b16 %v649
    %v2273 = vunpack.c.h.b16 %v649
    %v2274 = vunpack.c.l.b16 %v650
    %v2275 = vunpack.c.h.b16 %v650
    %v2276 = vunpack.c.l.b16 %v651
    %v2277 = vunpack.c.h.b16 %v651
    %v2278 = vunpack.c.l.b16 %v652
    %v2279 = vunpack.c.h.b16 %v652
    %v2280 = vunpack.c.l.b16 %v653
    %v2281 = vunpack.c.h.b16 %v653
    %v2282 = vunpack.c.l.b16 %v654
    %v2283 = vunpack.c.h.b16 %v654
    %v2284 = vunpack.c.l.b16 %v655
    %v2285 = vunpack.c.h.b16 %v655
    %v2286 = vunpack.c.l.b16 %v656
    %v2287 = vunpack.c.h.b16 %v656
    %v2288 = vunpack.c.l.b16 %v657
    %v2289 = vunpack.c.h.b16 %v657
    %v2290 = vunpack.c.l.b16 %v658
    %v2291 = vunpack.c.h.b16 %v658
    %v2292 = vunpack.c.l.b16 %v659
    %v2293 = vunpack.c.h.b16 %v659
    %v2294 = vunpack.c.l.b16 %v660
    %v2295 = vunpack.c.h.b16 %v660
    %v2296 = vunpack.c.l.b16 %v661
    %v2297 = vunpack.c.h.b16 %v661
    %v2298 = vunpack.c.l.b16 %v662
    %v2299 = vunpack.c.h.b16 %v662
    %v2300 = vunpack.c.l.b16 %v663
    %v2301 = vunpack.c.h.b16 %v663
    %v2302 = vunpack.c.l.b16 %v664
    %v2303 = vunpack.c.h.b16 %v664
    %v2304 = vunpack.c.l.b16 %v665
    %v2305 = vunpack.c.h.b16 %v665
    %v2306 = vunpack.c.l.b16 %v666
    %v2307 = vunpack.c.h.b16 %v666
    %v2308 = vunpack.c.l.b16 %v667
    %v2309 = vunpack.c.h.b16 %v667
    %v2310 = vunpack.c.l.b16 %v668
    %v2311 = vunpack.c.h.b16 %v668
    %v2312 = vunpack.c.l.b16 %v669
    %v2313 = vunpack.c.h.b16 %v669
    %v2314 = vunpack.c.l.b16 %v670
    %v2315 = vunpack.c.h.b16 %v670
    %v2316 = vunpack.c.l.b16 %v671
    %v2317 = vunpack.c.h.b16 %v671
    %v2318 = vunpack.c.l.b16 %v672
    %v2319 = vunpack.c.h.b16 %v672
    %v2320 = vunpack.c.l.b16 %v673
    %v2321 = vunpack.c.h.b16 %v673
    %v2322 = vunpack.c.l.b16 %v674
    %v2323 = vunpack.c.h.b16 %v674
    %v2324 = vunpack.c.l.b16 %v675
    %v2325 = vunpack.c.h.b16 %v675
    %v2326 = vunpack.c.l.b16 %v676
    %v2327 = vunpack.c.h.b16 %v676
    %v2328 = vunpack.c.l.b16 %v677
    %v2329 = vunpack.c.h.b16 %v677
    %v2330 = vunpack.c.l.b16 %v678
    %v2331 = vunpack.c.h.b16 %v678
    %v2332 = vunpack.c.l.b16 %v679
    %v2333 = vunpack.c.h.b16 %v679
    %v2334 = vunpack.c.l.b16 %v680
    %v2335 = vunpack.c.h.b16 %v680
    %v2336 = vunpack.c.l.b16 %v681
    %v2337 = vunpack.c.h.b16 %v681
    %v2338 = vunpack.c.l.b16 %v682
    %v2339 = vunpack.c.h.b16 %v682
    %v2340 = vunpack.c.l.b16 %v683
    %v2341 = vunpack.c.h.b16 %v683
    %v2342 = vunpack.c.l.b16 %v684
    %v2343 = vunpack.c.h.b16 %v684
    %v2344 = vunpack.c.l.b16 %v685
    %v2345 = vunpack.c.h.b16 %v685
    %v2346 = vunpack.c.l.b16 %v686
    %v2347 = vunpack.c.h.b16 %v686
    %v2348 = vunpack.c.l.b16 %v687
    %v2349 = vunpack.c.h.b16 %v687
    %v2350 = vunpack.c.l.b16 %v688
    %v2351 = vunpack.c.h.b16 %v688
    %v2352 = vunpack.c.l.b16 %v689
    %v2353 = vunpack.c.h.b16 %v689
    %v2354 = vunpack.c.l.b16 %v690
    %v2355 = vunpack.c.h.b16 %v690
    %v2356 = vunpack.c.l.b16 %v691
    %v2357 = vunpack.c.h.b16 %v691
    %v2358 = vunpack.c.l.b16 %v692
    %v2359 = vunpack.c.h.b16 %v692
    %v2360 = vunpack.c.l.b16 %v693
    %v2361 = vunpack.c.h.b16 %v693
    %v2362 = vunpack.c.l.b16 %v694
    %v2363 = vunpack.c.h.b16 %v694
    %v2364 = vunpack.c.l.b16 %v695
    %v2365 = vunpack.c.h.b16 %v695
    %v2366 = vunpack.c.l.b16 %v696
    %v2367 = vunpack.c.h.b16 %v696
    %v2368 = vunpack.c.l.b16 %v697
    %v2369 = vunpack.c.h.b16 %v697
    %v2370 = vunpack.c.l.b16 %v698
    %v2371 = vunpack.c.h.b16 %v698
    %v2372 = vunpack.c.l.b16 %v699
    %v2373 = vunpack.c.h.b16 %v699
    %v2374 = vunpack.c.l.b16 %v700
    %v2375 = vunpack.c.h.b16 %v700
    %v2376 = vunpack.c.l.b16 %v701
    %v2377 = vunpack.c.h.b16 %v701
    %v2378 = vunpack.c.l.b16 %v702
    %v2379 = vunpack.c.h.b16 %v702
    %v2380 = vunpack.c.l.b16 %v703
    %v2381 = vunpack.c.h.b16 %v703
    %v2382 = vunpack.c.l.b16 %v704
    %v2383 = vunpack.c.h.b16 %v704
    %v2384 = vunpack.c.l.b16 %v705
    %v2385 = vunpack.c.h.b16 %v705
    %v2386 = vunpack.c.l.b16 %v706
    %v2387 = vunpack.c.h.b16 %v706
    %v2388 = vunpack.c.l.b16 %v707
    %v2389 = vunpack.c.h.b16 %v707
    %v2390 = vunpack.c.l.b16 %v708
    %v2391 = vunpack.c.h.b16 %v708
    %v2392 = vunpack.c.l.b16 %v709
    %v2393 = vunpack.c.h.b16 %v709
    %v2394 = vunpack.c.l.b16 %v710
    %v2395 = vunpack.c.h.b16 %v710
    %v2396 = vunpack.c.l.b16 %v711
    %v2397 = vunpack.c.h.b16 %v711
    %v2398 = vunpack.c.l.b16 %v712
    %v2399 = vunpack.c.h.b16 %v712
    %v2400 = vunpack.c.l.b16 %v713
    %v2401 = vunpack.c.h.b16 %v713
    %v2402 = vunpack.c.l.b16 %v714
    %v2403 = vunpack.c.h.b16 %v714
    %v2404 = vunpack.c.l.b16 %v715
    %v2405 = vunpack.c.h.b16 %v715
    %v2406 = vunpack.c.l.b16 %v716
    %v2407 = vunpack.c.h.b16 %v716
    %v2408 = vunpack.c.l.b16 %v717
    %v2409 = vunpack.c.h.b16 %v717
    %v2410 = vunpack.c.l.b16 %v718
    %v2411 = vunpack.c.h.b16 %v718
    %v2412 = vunpack.c.l.b16 %v719
    %v2413 = vunpack.c.h.b16 %v719
    %v2414 = vunpack.c.l.b16 %v720
    %v2415 = vunpack.c.h.b16 %v720
    %v2416 = vunpack.c.l.b16 %v721
    %v2417 = vunpack.c.h.b16 %v721
    %v2418 = vunpack.c.l.b16 %v722
    %v2419 = vunpack.c.h.b16 %v722
    %v2420 = vunpack.c.l.b16 %v723
    %v2421 = vunpack.c.h.b16 %v723
    %v2422 = vunpack.c.l.b16 %v724
    %v2423 = vunpack.c.h.b16 %v724
    %v2424 = vunpack.c.l.b16 %v725
    %v2425 = vunpack.c.h.b16 %v725
    %v2426 = vunpack.c.l.b16 %v726
    %v2427 = vunpack.c.h.b16 %v726
    %v2428 = vunpack.c.l.b16 %v727
    %v2429 = vunpack.c.h.b16 %v727
    %v2430 = vunpack.c.l.b16 %v728
    %v2431 = vunpack.c.h.b16 %v728
    %v2432 = vunpack.c.l.b16 %v729
    %v2433 = vunpack.c.h.b16 %v729
    %v2434 = vunpack.c.l.b16 %v730
    %v2435 = vunpack.c.h.b16 %v730
    %v2436 = vunpack.c.l.b16 %v731
    %v2437 = vunpack.c.h.b16 %v731
    %v2438 = vunpack.c.l.b16 %v732
    %v2439 = vunpack.c.h.b16 %v732
    %v2440 = vunpack.c.l.b16 %v733
    %v2441 = vunpack.c.h.b16 %v733
    %v2442 = vunpack.c.l.b16 %v734
    %v2443 = vunpack.c.h.b16 %v734
    %v2444 = vunpack.c.l.b16 %v735
    %v2445 = vunpack.c.h.b16 %v735
    %v2446 = vunpack.c.l.b16 %v736
    %v2447 = vunpack.c.h.b16 %v736
    %v2448 = vunpack.c.l.b16 %v737
    %v2449 = vunpack.c.h.b16 %v737
    %v2450 = vunpack.c.l.b16 %v738
    %v2451 = vunpack.c.h.b16 %v738
    %v2452 = vunpack.c.l.b16 %v739
    %v2453 = vunpack.c.h.b16 %v739
    %v2454 = vunpack.c.l.b16 %v740
    %v2455 = vunpack.c.h.b16 %v740
    %v2456 = vunpack.c.l.b16 %v741
    %v2457 = vunpack.c.h.b16 %v741
    %v2458 = vunpack.c.l.b16 %v742
    %v2459 = vunpack.c.h.b16 %v742
    %v2460 = vunpack.c.l.b16 %v743
    %v2461 = vunpack.c.h.b16 %v743
    %v2462 = vunpack.c.l.b16 %v744
    %v2463 = vunpack.c.h.b16 %v744
    %v2464 = vunpack.c.l.b16 %v745
    %v2465 = vunpack.c.h.b16 %v745
    %v2466 = vunpack.c.l.b16 %v746
    %v2467 = vunpack.c.h.b16 %v746
    %v2468 = vunpack.c.l.b16 %v747
    %v2469 = vunpack.c.h.b16 %v747
    %v2470 = vunpack.c.l.b16 %v748
    %v2471 = vunpack.c.h.b16 %v748
    %v2472 = vunpack.c.l.b16 %v749
    %v2473 = vunpack.c.h.b16 %v749
    %v2474 = vunpack.c.l.b16 %v750
    %v2475 = vunpack.c.h.b16 %v750
    %v2476 = vunpack.c.l.b16 %v751
    %v2477 = vunpack.c.h.b16 %v751
    %v2478 = vunpack.c.l.b16 %v752
    %v2479 = vunpack.c.h.b16 %v752
    %v2480 = vunpack.c.l.b16 %v753
    %v2481 = vunpack.c.h.b16 %v753
    %v2482 = vunpack.c.l.b16 %v754
    %v2483 = vunpack.c.h.b16 %v754
    %v2484 = vunpack.c.l.b16 %v755
    %v2485 = vunpack.c.h.b16 %v755
    %v2486 = vunpack.c.l.b16 %v756
    %v2487 = vunpack.c.h.b16 %v756
    %v2488 = vunpack.c.l.b16 %v757
    %v2489 = vunpack.c.h.b16 %v757
    %v2490 = vunpack.c.l.b16 %v758
    %v2491 = vunpack.c.h.b16 %v758
    %v2492 = vunpack.c.l.b16 %v759
    %v2493 = vunpack.c.h.b16 %v759
    %v2494 = vunpack.c.l.b16 %v760
    %v2495 = vunpack.c.h.b16 %v760
    %v2496 = vunpack.c.l.b16 %v761
    %v2497 = vunpack.c.h.b16 %v761
    %v2498 = vunpack.c.l.b16 %v762
    %v2499 = vunpack.c.h.b16 %v762
    %v2500 = vunpack.c.l.b16 %v763
    %v2501 = vunpack.c.h.b16 %v763
    %v2502 = vunpack.c.l.b16 %v764
    %v2503 = vunpack.c.h.b16 %v764
    %v2504 = vunpack.c.l.b16 %v765
    %v2505 = vunpack.c.h.b16 %v765
    %v2506 = vunpack.c.l.b16 %v766
    %v2507 = vunpack.c.h.b16 %v766
    %v2508 = vunpack.c.l.b16 %v767
    %v2509 = vunpack.c.h.b16 %v767
    %v2510 = vunpack.c.l.b16 %v768
    %v2511 = vunpack.c.h.b16 %v768
    %v2512 = vunpack.c.l.b16 %v769
    %v2513 = vunpack.c.h.b16 %v769
    %v2514 = vunpack.c.l.b16 %v770
    %v2515 = vunpack.c.h.b16 %v770
    %v2516 = vunpack.c.l.b16 %v771
    %v2517 = vunpack.c.h.b16 %v771
    %v2518 = vunpack.c.l.b16 %v772
    %v2519 = vunpack.c.h.b16 %v772
    %v2520 = vunpack.c.l.b16 %v773
    %v2521 = vunpack.c.h.b16 %v773
    %v2522 = vunpack.c.l.b16 %v774
    %v2523 = vunpack.c.h.b16 %v774
    %v2524 = vunpack.c.l.b16 %v775
    %v2525 = vunpack.c.h.b16 %v775
    %v2526 = vunpack.c.l.b16 %v776
    %v2527 = vunpack.c.h.b16 %v776
    %v2528 = vunpack.c.l.b16 %v777
    %v2529 = vunpack.c.h.b16 %v777
    %v2530 = vunpack.c.l.b16 %v778
    %v2531 = vunpack.c.h.b16 %v778
    %v2532 = vunpack.c.l.b16 %v779
    %v2533 = vunpack.c.h.b16 %v779
    %v2534 = vunpack.c.l.b16 %v780
    %v2535 = vunpack.c.h.b16 %v780
    %v2536 = vunpack.c.l.b16 %v781
    %v2537 = vunpack.c.h.b16 %v781
    %v2538 = vunpack.c.l.b16 %v782
    %v2539 = vunpack.c.h.b16 %v782
    %v2540 = vunpack.c.l.b16 %v783
    %v2541 = vunpack.c.h.b16 %v783
    %v2542 = vunpack.c.l.b16 %v784
    %v2543 = vunpack.c.h.b16 %v784
    %v2544 = vunpack.c.l.b16 %v785
    %v2545 = vunpack.c.h.b16 %v785
    %v2546 = vunpack.c.l.b16 %v786
    %v2547 = vunpack.c.h.b16 %v786
    %v2548 = vunpack.c.l.b16 %v787
    %v2549 = vunpack.c.h.b16 %v787
    %v2550 = vunpack.c.l.b16 %v788
    %v2551 = vunpack.c.h.b16 %v788
    %v2552 = vunpack.c.l.b16 %v789
    %v2553 = vunpack.c.h.b16 %v789
    %v2554 = vunpack.c.l.b16 %v790
    %v2555 = vunpack.c.h.b16 %v790
    %v2556 = vunpack.c.l.b16 %v791
    %v2557 = vunpack.c.h.b16 %v791
    %v2558 = vunpack.c.l.b16 %v792
    %v2559 = vunpack.c.h.b16 %v792
    %v2560 = vunpack.c.l.b16 %v793
    %v2561 = vunpack.c.h.b16 %v793
    %v2562 = vunpack.c.l.b16 %v794
    %v2563 = vunpack.c.h.b16 %v794
    %v2564 = vunpack.c.l.b16 %v795
    %v2565 = vunpack.c.h.b16 %v795
    %v2566 = vunpack.c.l.b16 %v796
    %v2567 = vunpack.c.h.b16 %v796
    %v2568 = vunpack.c.l.b16 %v797
    %v2569 = vunpack.c.h.b16 %v797
    %v2570 = vunpack.c.l.b16 %v798
    %v2571 = vunpack.c.h.b16 %v798
    %v2572 = vunpack.c.l.b16 %v799
    %v2573 = vunpack.c.h.b16 %v799
    %v2574 = vunpack.c.l.b16 %v800
    %v2575 = vunpack.c.h.b16 %v800
    %v2576 = vunpack.c.l.b16 %v801
    %v2577 = vunpack.c.h.b16 %v801
    %v2578 = vunpack.c.l.b16 %v802
    %v2579 = vunpack.c.h.b16 %v802
    %v2580 = vunpack.c.l.b16 %v803
    %v2581 = vunpack.c.h.b16 %v803
    %v2582 = vunpack.c.l.b16 %v804
    %v2583 = vunpack.c.h.b16 %v804
    %v2584 = vunpack.c.l.b16 %v805
    %v2585 = vunpack.c.h.b16 %v805
    %v2586 = vunpack.c.l.b16 %v806
    %v2587 = vunpack.c.h.b16 %v806
    %v2588 = vunpack.c.l.b16 %v807
    %v2589 = vunpack.c.h.b16 %v807
    %v2590 = vunpack.c.l.b16 %v808
    %v2591 = vunpack.c.h.b16 %v808
    %v2592 = vunpack.c.l.b16 %v809
    %v2593 = vunpack.c.h.b16 %v809
    %v2594 = vunpack.c.l.b16 %v810
    %v2595 = vunpack.c.h.b16 %v810
    %v2596 = vunpack.c.l.b16 %v811
    %v2597 = vunpack.c.h.b16 %v811
    %v2598 = vunpack.c.l.b16 %v812
    %v2599 = vunpack.c.h.b16 %v812
    %v2600 = vunpack.c.l.b16 %v813
    %v2601 = vunpack.c.h.b16 %v813
    %v2602 = vunpack.c.l.b16 %v814
    %v2603 = vunpack.c.h.b16 %v814
    %v2604 = vunpack.c.l.b16 %v815
    %v2605 = vunpack.c.h.b16 %v815
    %v2606 = vunpack.c.l.b16 %v816
    %v2607 = vunpack.c.h.b16 %v816
    %v2608 = vunpack.c.l.b16 %v817
    %v2609 = vunpack.c.h.b16 %v817
    %v2610 = vunpack.c.l.b16 %v818
    %v2611 = vunpack.c.h.b16 %v818
    %v2612 = vunpack.c.l.b16 %v819
    %v2613 = vunpack.c.h.b16 %v819
    %v2614 = vunpack.c.l.b16 %v820
    %v2615 = vunpack.c.h.b16 %v820
    %v2616 = vunpack.c.l.b16 %v821
    %v2617 = vunpack.c.h.b16 %v821
    %v2618 = vunpack.c.l.b16 %v822
    %v2619 = vunpack.c.h.b16 %v822
    %v2620 = vunpack.c.l.b16 %v823
    %v2621 = vunpack.c.h.b16 %v823
    %v2622 = vunpack.c.l.b16 %v824
    %v2623 = vunpack.c.h.b16 %v824
    %v2624 = vunpack.c.l.b16 %v825
    %v2625 = vunpack.c.h.b16 %v825
    %v2626 = vunpack.c.l.b16 %v826
    %v2627 = vunpack.c.h.b16 %v826
    %v2628 = vunpack.c.l.b16 %v827
    %v2629 = vunpack.c.h.b16 %v827
    %v2630 = vunpack.c.l.b16 %v828
    %v2631 = vunpack.c.h.b16 %v828
    %v2632 = vunpack.c.l.b16 %v829
    %v2633 = vunpack.c.h.b16 %v829
    %v2634 = vunpack.c.l.b16 %v830
    %v2635 = vunpack.c.h.b16 %v830
    %v2636 = vunpack.c.l.b16 %v831
    %v2637 = vunpack.c.h.b16 %v831
    %v2638 = vunpack.c.l.b16 %v832
    %v2639 = vunpack.c.h.b16 %v832
    %v2640 = vunpack.c.l.b16 %v833
    %v2641 = vunpack.c.h.b16 %v833
    %v2642 = vunpack.c.l.b16 %v834
    %v2643 = vunpack.c.h.b16 %v834
    %v2644 = vunpack.c.l.b16 %v835
    %v2645 = vunpack.c.h.b16 %v835
    %v2646 = vunpack.c.l.b16 %v836
    %v2647 = vunpack.c.h.b16 %v836
    %v2648 = vunpack.c.l.b16 %v837
    %v2649 = vunpack.c.h.b16 %v837
    %v2650 = vunpack.c.l.b16 %v838
    %v2651 = vunpack.c.h.b16 %v838
    %v2652 = vunpack.c.l.b16 %v839
    %v2653 = vunpack.c.h.b16 %v839
    %v2654 = vunpack.c.l.b16 %v840
    %v2655 = vunpack.c.h.b16 %v840
    %v2656 = vunpack.c.l.b16 %v841
    %v2657 = vunpack.c.h.b16 %v841
    %v2658 = vunpack.c.l.b16 %v842
    %v2659 = vunpack.c.h.b16 %v842
    %v2660 = vunpack.c.l.b16 %v843
    %v2661 = vunpack.c.h.b16 %v843
    %v2662 = vunpack.c.l.b16 %v844
    %v2663 = vunpack.c.h.b16 %v844
    %v2664 = vunpack.c.l.b16 %v845
    %v2665 = vunpack.c.h.b16 %v845
    %v2666 = vunpack.c.l.b16 %v846
    %v2667 = vunpack.c.h.b16 %v846
    %v2668 = vunpack.c.l.b16 %v847
    %v2669 = vunpack.c.h.b16 %v847
    %v2670 = vunpack.c.l.b16 %v848
    %v2671 = vunpack.c.h.b16 %v848
    %v2672 = vunpack.c.l.b16 %v849
    %v2673 = vunpack.c.h.b16 %v849
    %v2674 = vunpack.c.l.b16 %v850
    %v2675 = vunpack.c.h.b16 %v850
    %v2676 = vunpack.c.l.b16 %v851
    %v2677 = vunpack.c.h.b16 %v851
    %v2678 = vunpack.c.l.b16 %v852
    %v2679 = vunpack.c.h.b16 %v852
    %v2680 = vunpack.c.l.b16 %v853
    %v2681 = vunpack.c.h.b16 %v853
    %v2682 = vunpack.c.l.b16 %v854
    %v2683 = vunpack.c.h.b16 %v854
    %v2684 = vunpack.c.l.b16 %v855
    %v2685 = vunpack.c.h.b16 %v855
    %v2686 = vunpack.c.l.b16 %v856
    %v2687 = vunpack.c.h.b16 %v856
    %v2688 = vunpack.c.l.b16 %v857
    %v2689 = vunpack.c.h.b16 %v857
    %v2690 = vunpack.c.l.b16 %v858
    %v2691 = vunpack.c.h.b16 %v858
    %v2692 = vunpack.c.l.b16 %v859
    %v2693 = vunpack.c.h.b16 %v859
    %v2694 = vunpack.c.l.b16 %v860
    %v2695 = vunpack.c.h.b16 %v860
    %v2696 = vunpack.c.l.b16 %v861
    %v2697 = vunpack.c.h.b16 %v861
    %v2698 = vunpack.c.l.b16 %v862
    %v2699 = vunpack.c.h.b16 %v862
    %v2700 = vunpack.c.l.b16 %v863
    %v2701 = vunpack.c.h.b16 %v863
    %v2702 = vunpack.c.l.b16 %v864
    %v2703 = vunpack.c.h.b16 %v864
    %v2704 = vunpack.c.l.b16 %v865
    %v2705 = vunpack.c.h.b16 %v865
    %v2706 = vunpack.c.l.b16 %v866
    %v2707 = vunpack.c.h.b16 %v866
    %v2708 = vunpack.c.l.b16 %v867
    %v2709 = vunpack.c.h.b16 %v867
    %v2710 = vunpack.c.l.b16 %v868
    %v2711 = vunpack.c.h.b16 %v868
    %v2712 = vunpack.c.l.b16 %v869
    %v2713 = vunpack.c.h.b16 %v869
    %v2714 = vunpack.c.l.b16 %v870
    %v2715 = vunpack.c.h.b16 %v870
    %v2716 = vunpack.c.l.b16 %v871
    %v2717 = vunpack.c.h.b16 %v871
    %v2718 = vpack.c.b16 %v1506, %v1502
    %v2719 = vpack.c.b16 %v1507, %v1503
    %v2720 = vpack.c.b16 %v1508, %v1504
    %v2721 = vpack.c.b16 %v1509, %v1505
    %v2722 = vpack.c.b16 %v1514, %v1510
    %v2723 = vpack.c.b16 %v1515, %v1511
    %v2724 = vpack.c.b16 %v1516, %v1512
    %v2725 = vpack.c.b16 %v1517, %v1513
    %v2726 = vpack.c.b16 %v1522, %v1518
    %v2727 = vpack.c.b16 %v1523, %v1519
    %v2728 = vpack.c.b16 %v1524, %v1520
    %v2729 = vpack.c.b16 %v1525, %v1521
    %v2730 = vpack.c.b16 %v1530, %v1526
    %v2731 = vpack.c.b16 %v1531, %v1527
    %v2732 = vpack.c.b16 %v1532, %v1528
    %v2733 = vpack.c.b16 %v1533, %v1529
    %v2734 = vpack.c.b16 %v1538, %v1534
    %v2735 = vpack.c.b16 %v1539, %v1535
    %v2736 = vpack.c.b16 %v1540, %v1536
    %v2737 = vpack.c.b16 %v1541, %v1537
    %v2738 = vpack.c.b16 %v1546, %v1542
    %v2739 = vpack.c.b16 %v1547, %v1543
    %v2740 = vpack.c.b16 %v1548, %v1544
    %v2741 = vpack.c.b16 %v1549, %v1545
    %v2742 = vpack.c.b16 %v1554, %v1550
    %v2743 = vpack.c.b16 %v1555, %v1551
    %v2744 = vpack.c.b16 %v1556, %v1552
    %v2745 = vpack.c.b16 %v1557, %v1553
    %v2746 = vpack.c.b16 %v1562, %v1558
    %v2747 = vpack.c.b16 %v1563, %v1559
    %v2748 = vpack.c.b16 %v1564, %v1560
    %v2749 = vpack.c.b16 %v1565, %v1561
    %v2750 = vpack.c.b16 %v1570, %v1566
    %v2751 = vpack.c.b16 %v1571, %v1567
    %v2752 = vpack.c.b16 %v1572, %v1568
    %v2753 = vpack.c.b16 %v1573, %v1569
    %v2754 = vpack.c.b16 %v1578, %v1574
    %v2755 = vpack.c.b16 %v1579, %v1575
    %v2756 = vpack.c.b16 %v1580, %v1576
    %v2757 = vpack.c.b16 %v1581, %v1577
    %v2758 = vpack.c.b16 %v1586, %v1582
    %v2759 = vpack.c.b16 %v1587, %v1583
    %v2760 = vpack.c.b16 %v1588, %v1584
    %v2761 = vpack.c.b16 %v1589, %v1585
    %v2762 = vpack.c.b16 %v1594, %v1590
    %v2763 = vpack.c.b16 %v1595, %v1591
    %v2764 = vpack.c.b16 %v1596, %v1592
    %v2765 = vpack.c.b16 %v1597, %v1593
    %v2766 = vpack.c.b16 %v1602, %v1598
    %v2767 = vpack.c.b16 %v1603, %v1599
    %v2768 = vpack.c.b16 %v1604, %v1600
    %v2769 = vpack.c.b16 %v1605, %v1601
    %v2770 = vpack.c.b16 %v1610, %v1606
    %v2771 = vpack.c.b16 %v1611, %v1607
    %v2772 = vpack.c.b16 %v1612, %v1608
    %v2773 = vpack.c.b16 %v1613, %v1609
    %v2774 = vpack.c.b16 %v1618, %v1614
    %v2775 = vpack.c.b16 %v1619, %v1615
    %v2776 = vpack.c.b16 %v1620, %v1616
    %v2777 = vpack.c.b16 %v1621, %v1617
    %v2778 = vpack.c.b16 %v1626, %v1622
    %v2779 = vpack.c.b16 %v1627, %v1623
    %v2780 = vpack.c.b16 %v1628, %v1624
    %v2781 = vpack.c.b16 %v1629, %v1625
    %v2782 = vpack.c.b16 %v1634, %v1630
    %v2783 = vpack.c.b16 %v1635, %v1631
    %v2784 = vpack.c.b16 %v1636, %v1632
    %v2785 = vpack.c.b16 %v1637, %v1633
    %v2786 = vpack.c.b16 %v1642, %v1638
    %v2787 = vpack.c.b16 %v1643, %v1639
    %v2788 = vpack.c.b16 %v1644, %v1640
    %v2789 = vpack.c.b16 %v1645, %v1641
    %v2790 = vpack.c.b16 %v1650, %v1646
    %v2791 = vpack.c.b16 %v1651, %v1647
    %v2792 = vpack.c.b16 %v1652, %v1648
    %v2793 = vpack.c.b16 %v1653, %v1649
    %v2794 = vpack.c.b16 %v1658, %v1654
    %v2795 = vpack.c.b16 %v1659, %v1655
    %v2796 = vpack.c.b16 %v1660, %v1656
    %v2797 = vpack.c.b16 %v1661, %v1657
    %v2798 = vpack.c.b16 %v1666, %v1662
    %v2799 = vpack.c.b16 %v1667, %v1663
    %v2800 = vpack.c.b16 %v1668, %v1664
    %v2801 = vpack.c.b16 %v1669, %v1665
    %v2802 = vpack.c.b16 %v1674, %v1670
    %v2803 = vpack.c.b16 %v1675, %v1671
    %v2804 = vpack.c.b16 %v1676, %v1672
    %v2805 = vpack.c.b16 %v1677, %v1673
    %v2806 = vpack.c.b16 %v1682, %v1678
    %v2807 = vpack.c.b16 %v1683, %v1679
    %v2808 = vpack.c.b16 %v1684, %v1680
    %v2809 = vpack.c.b16 %v1685, %v1681
    %v2810 = vpack.c.b16 %v1690, %v1686
    %v2811 = vpack.c.b16 %v1691, %v1687
    %v2812 = vpack.c.b16 %v1692, %v1688
    %v2813 = vpack.c.b16 %v1693, %v1689
    %v2814 = vpack.c.b16 %v1698, %v1694
    %v2815 = vpack.c.b16 %v1699, %v1695
    %v2816 = vpack.c.b16 %v1700, %v1696
    %v2817 = vpack.c.b16 %v1701, %v1697
    %v2818 = vpack.c.b16 %v1706, %v1702
    %v2819 = vpack.c.b16 %v1707, %v1703
    %v2820 = vpack.c.b16 %v1708, %v1704
    %v2821 = vpack.c.b16 %v1709, %v1705
    %v2822 = vpack.c.b16 %v1714, %v1710
    %v2823 = vpack.c.b16 %v1715, %v1711
    %v2824 = vpack.c.b16 %v1716, %v1712
    %v2825 = vpack.c.b16 %v1717, %v1713
    %v2826 = vpack.c.b16 %v1722, %v1718
    %v2827 = vpack.c.b16 %v1723, %v1719
    %v2828 = vpack.c.b16 %v1724, %v1720
    %v2829 = vpack.c.b16 %v1725, %v1721
    %v2830 = vpack.c.b16 %v1730, %v1726
    %v2831 = vpack.c.b16 %v1731, %v1727
    %v2832 = vpack.c.b16 %v1732, %v1728
    %v2833 = vpack.c.b16 %v1733, %v1729
    %v2834 = vpack.c.b16 %v1738, %v1734
    %v2835 = vpack.c.b16 %v1739, %v1735
    %v2836 = vpack.c.b16 %v1740, %v1736
    %v2837 = vpack.c.b16 %v1741, %v1737
    %v2838 = vpack.c.b16 %v1746, %v1742
    %v2839 = vpack.c.b16 %v1747, %v1743
    %v2840 = vpack.c.b16 %v1748, %v1744
    %v2841 = vpack.c.b16 %v1749, %v1745
    %v2842 = vpack.c.b16 %v1754, %v1750
    %v2843 = vpack.c.b16 %v1755, %v1751
    %v2844 = vpack.c.b16 %v1756, %v1752
    %v2845 = vpack.c.b16 %v1757, %v1753
    %v2846 = vpack.c.b16 %v1762, %v1758
    %v2847 = vpack.c.b16 %v1763, %v1759
    %v2848 = vpack.c.b16 %v1764, %v1760
    %v2849 = vpack.c.b16 %v1765, %v1761
    %v2850 = vpack.c.b16 %v1770, %v1766
    %v2851 = vpack.c.b16 %v1771, %v1767
    %v2852 = vpack.c.b16 %v1772, %v1768
    %v2853 = vpack.c.b16 %v1773, %v1769
    %v2854 = vpack.c.b16 %v1778, %v1774
    %v2855 = vpack.c.b16 %v1779, %v1775
    %v2856 = vpack.c.b16 %v1780, %v1776
    %v2857 = vpack.c.b16 %v1781, %v1777
    %v2858 = vpack.c.b16 %v1786, %v1782
    %v2859 = vpack.c.b16 %v1787, %v1783
    %v2860 = vpack.c.b16 %v1788, %v1784
    %v2861 = vpack.c.b16 %v1789, %v1785
    %v2862 = vpack.c.b16 %v1794, %v1790
    %v2863 = vpack.c.b16 %v1795, %v1791
    %v2864 = vpack.c.b16 %v1796, %v1792
    %v2865 = vpack.c.b16 %v1797, %v1793
    %v2866 = vpack.c.b16 %v1802, %v1798
    %v2867 = vpack.c.b16 %v1803, %v1799
    %v2868 = vpack.c.b16 %v1804, %v1800
    %v2869 = vpack.c.b16 %v1805, %v1801
    %v2870 = vpack.c.b16 %v1810, %v1806
    %v2871 = vpack.c.b16 %v1811, %v1807
    %v2872 = vpack.c.b16 %v1812, %v1808
    %v2873 = vpack.c.b16 %v1813, %v1809
    %v2874 = vpack.c.b16 %v1818, %v1814
    %v2875 = vpack.c.b16 %v1819, %v1815
    %v2876 = vpack.c.b16 %v1820, %v1816
    %v2877 = vpack.c.b16 %v1821, %v1817
    %v2878 = vpack.c.b16 %v1826, %v1822
    %v2879 = vpack.c.b16 %v1827, %v1823
    %v2880 = vpack.c.b16 %v1828, %v1824
    %v2881 = vpack.c.b16 %v1829, %v1825
    %v2882 = vpack.c.b16 %v1834, %v1830
    %v2883 = vpack.c.b16 %v1835, %v1831
    %v2884 = vpack.c.b16 %v1836, %v1832
    %v2885 = vpack.c.b16 %v1837, %v1833
    %v2886 = vpack.c.b16 %v1842, %v1838
    %v2887 = vpack.c.b16 %v1843, %v1839
    %v2888 = vpack.c.b16 %v1844, %v1840
    %v2889 = vpack.c.b16 %v1845, %v1841
    %v2890 = vpack.c.b16 %v1850, %v1846
    %v2891 = vpack.c.b16 %v1851, %v1847
    %v2892 = vpack.c.b16 %v1852, %v1848
    %v2893 = vpack.c.b16 %v1853, %v1849
    %v2894 = vpack.c.b16 %v1858, %v1854
    %v2895 = vpack.c.b16 %v1859, %v1855
    %v2896 = vpack.c.b16 %v1860, %v1856
    %v2897 = vpack.c.b16 %v1861, %v1857
    %v2898 = vpack.c.b16 %v1866, %v1862
    %v2899 = vpack.c.b16 %v1867, %v1863
    %v2900 = vpack.c.b16 %v1868, %v1864
    %v2901 = vpack.c.b16 %v1869, %v1865
    %v2902 = vpack.c.b16 %v1874, %v1870
    %v2903 = vpack.c.b16 %v1875, %v1871
    %v2904 = vpack.c.b16 %v1876, %v1872
    %v2905 = vpack.c.b16 %v1877, %v1873
    %v2906 = vpack.c.b16 %v1882, %v1878
    %v2907 = vpack.c.b16 %v1883, %v1879
    %v2908 = vpack.c.b16 %v1884, %v1880
    %v2909 = vpack.c.b16 %v1885, %v1881
    %v2910 = vpack.c.b16 %v1890, %v1886
    %v2911 = vpack.c.b16 %v1891, %v1887
    %v2912 = vpack.c.b16 %v1892, %v1888
    %v2913 = vpack.c.b16 %v1893, %v1889
    %v2914 = vpack.c.b16 %v1898, %v1894
    %v2915 = vpack.c.b16 %v1899, %v1895
    %v2916 = vpack.c.b16 %v1900, %v1896
    %v2917 = vpack.c.b16 %v1901, %v1897
    %v2918 = vpack.c.b16 %v1906, %v1902
    %v2919 = vpack.c.b16 %v1907, %v1903
    %v2920 = vpack.c.b16 %v1908, %v1904
    %v2921 = vpack.c.b16 %v1909, %v1905
    %v2922 = vpack.c.b16 %v1914, %v1910
    %v2923 = vpack.c.b16 %v1915, %v1911
    %v2924 = vpack.c.b16 %v1916, %v1912
    %v2925 = vpack.c.b16 %v1917, %v1913
    %v2926 = vpack.c.b16 %v1922, %v1918
    %v2927 = vpack.c.b16 %v1923, %v1919
    %v2928 = vpack.c.b16 %v1924, %v1920
    %v2929 = vpack.c.b16 %v1925, %v1921
    %v2930 = vpack.c.b16 %v1930, %v1926
    %v2931 = vpack.c.b16 %v1931, %v1927
    %v2932 = vpack.c.b16 %v1932, %v1928
    %v2933 = vpack.c.b16 %v1933, %v1929
    %v2934 = vpack.c.b16 %v1938, %v1934
    %v2935 = vpack.c.b16 %v1939, %v1935
    %v2936 = vpack.c.b16 %v1940, %v1936
    %v2937 = vpack.c.b16 %v1941, %v1937
    %v2938 = vpack.c.b16 %v1946, %v1942
    %v2939 = vpack.c.b16 %v1947, %v1943
    %v2940 = vpack.c.b16 %v1948, %v1944
    %v2941 = vpack.c.b16 %v1949, %v1945
    %v2942 = vpack.c.b16 %v1954, %v1950
    %v2943 = vpack.c.b16 %v1955, %v1951
    %v2944 = vpack.c.b16 %v1956, %v1952
    %v2945 = vpack.c.b16 %v1957, %v1953
    %v2946 = vpack.c.b16 %v1962, %v1958
    %v2947 = vpack.c.b16 %v1963, %v1959
    %v2948 = vpack.c.b16 %v1964, %v1960
    %v2949 = vpack.c.b16 %v1965, %v1961
    %v2950 = vpack.c.b16 %v1970, %v1966
    %v2951 = vpack.c.b16 %v1971, %v1967
    %v2952 = vpack.c.b16 %v1972, %v1968
    %v2953 = vpack.c.b16 %v1973, %v1969
    %v2954 = vpack.c.b16 %v1978, %v1974
    %v2955 = vpack.c.b16 %v1979, %v1975
    %v2956 = vpack.c.b16 %v1980, %v1976
    %v2957 = vpack.c.b16 %v1981, %v1977
    %v2958 = vpack.c.b16 %v1986, %v1982
    %v2959 = vpack.c.b16 %v1987, %v1983
    %v2960 = vpack.c.b16 %v1988, %v1984
    %v2961 = vpack.c.b16 %v1989, %v1985
    %v2962 = vpack.c.b16 %v1994, %v1990
    %v2963 = vpack.c.b16 %v1995, %v1991
    %v2964 = vpack.c.b16 %v1996, %v1992
    %v2965 = vpack.c.b16 %v1997, %v1993
    %v2966 = vpack.c.b16 %v2002, %v1998
    %v2967 = vpack.c.b16 %v2003, %v1999
    %v2968 = vpack.c.b16 %v2004, %v2000
    %v2969 = vpack.c.b16 %v2005, %v2001
    %v2970 = vpack.c.b16 %v2010, %v2006
    %v2971 = vpack.c.b16 %v2011, %v2007
    %v2972 = vpack.c.b16 %v2012, %v2008
    %v2973 = vpack.c.b16 %v2013, %v2009
    %v2974 = vpack.c.b16 %v2018, %v2014
    %v2975 = vpack.c.b16 %v2019, %v2015
    %v2976 = vpack.c.b16 %v2020, %v2016
    %v2977 = vpack.c.b16 %v2021, %v2017
    %v2978 = vpack.c.b16 %v2026, %v2022
    %v2979 = vpack.c.b16 %v2027, %v2023
    %v2980 = vpack.c.b16 %v2028, %v2024
    %v2981 = vpack.c.b16 %v2029, %v2025
    %v2982 = vpack.c.b16 %v2034, %v2030
    %v2983 = vpack.c.b16 %v2035, %v2031
    %v2984 = vpack.c.b16 %v2036, %v2032
    %v2985 = vpack.c.b16 %v2037, %v2033
    %v2986 = vpack.c.b16 %v2042, %v2038
    %v2987 = vpack.c.b16 %v2043, %v2039
    %v2988 = vpack.c.b16 %v2044, %v2040
    %v2989 = vpack.c.b16 %v2045, %v2041
    %v2990 = vpack.c.b16 %v2050, %v2046
    %v2991 = vpack.c.b16 %v2051, %v2047
    %v2992 = vpack.c.b16 %v2052, %v2048
    %v2993 = vpack.c.b16 %v2053, %v2049
    %v2994 = vpack.c.b16 %v2058, %v2054
    %v2995 = vpack.c.b16 %v2059, %v2055
    %v2996 = vpack.c.b16 %v2060, %v2056
    %v2997 = vpack.c.b16 %v2061, %v2057
    %v2998 = vpack.c.b16 %v2066, %v2062
    %v2999 = vpack.c.b16 %v2067, %v2063
    %v3000 = vpack.c.b16 %v2068, %v2064
    %v3001 = vpack.c.b16 %v2069, %v2065
    %v3002 = vpack.c.b16 %v2074, %v2070
    %v3003 = vpack.c.b16 %v2075, %v2071
    %v3004 = vpack.c.b16 %v2076, %v2072
    %v3005 = vpack.c.b16 %v2077, %v2073
    %v3006 = vpack.c.b16 %v2082, %v2078
    %v3007 = vpack.c.b16 %v2083, %v2079
    %v3008 = vpack.c.b16 %v2084, %v2080
    %v3009 = vpack.c.b16 %v2085, %v2081
    %v3010 = vpack.c.b16 %v2090, %v2086
    %v3011 = vpack.c.b16 %v2091, %v2087
    %v3012 = vpack.c.b16 %v2092, %v2088
    %v3013 = vpack.c.b16 %v2093, %v2089
    %v3014 = vpack.c.b16 %v2098, %v2094
    %v3015 = vpack.c.b16 %v2099, %v2095
    %v3016 = vpack.c.b16 %v2100, %v2096
    %v3017 = vpack.c.b16 %v2101, %v2097
    %v3018 = vpack.c.b16 %v2106, %v2102
    %v3019 = vpack.c.b16 %v2107, %v2103
    %v3020 = vpack.c.b16 %v2108, %v2104
    %v3021 = vpack.c.b16 %v2109, %v2105
    %v3022 = vpack.c.b16 %v2114, %v2110
    %v3023 = vpack.c.b16 %v2115, %v2111
    %v3024 = vpack.c.b16 %v2116, %v2112
    %v3025 = vpack.c.b16 %v2117, %v2113
    %v3026 = vpack.c.b16 %v2122, %v2118
    %v3027 = vpack.c.b16 %v2123, %v2119
    %v3028 = vpack.c.b16 %v2124, %v2120
    %v3029 = vpack.c.b16 %v2125, %v2121
    %v3030 = vpack.c.b16 %v2130, %v2126
    %v3031 = vpack.c.b16 %v2131, %v2127
    %v3032 = vpack.c.b16 %v2132, %v2128
    %v3033 = vpack.c.b16 %v2133, %v2129
    %v3034 = vpack.c.b16 %v2138, %v2134
    %v3035 = vpack.c.b16 %v2139, %v2135
    %v3036 = vpack.c.b16 %v2140, %v2136
    %v3037 = vpack.c.b16 %v2141, %v2137
    %v3038 = vpack.c.b16 %v2146, %v2142
    %v3039 = vpack.c.b16 %v2147, %v2143
    %v3040 = vpack.c.b16 %v2148, %v2144
    %v3041 = vpack.c.b16 %v2149, %v2145
    %v3042 = vpack.c.b16 %v2154, %v2150
    %v3043 = vpack.c.b16 %v2155, %v2151
    %v3044 = vpack.c.b16 %v2156, %v2152
    %v3045 = vpack.c.b16 %v2157, %v2153
    %v3046 = vpack.c.b16 %v2162, %v2158
    %v3047 = vpack.c.b16 %v2163, %v2159
    %v3048 = vpack.c.b16 %v2164, %v2160
    %v3049 = vpack.c.b16 %v2165, %v2161
    %v3050 = vpack.c.b16 %v2170, %v2166
    %v3051 = vpack.c.b16 %v2171, %v2167
    %v3052 = vpack.c.b16 %v2172, %v2168
    %v3053 = vpack.c.b16 %v2173, %v2169
    %v3054 = vpack.c.b16 %v2178, %v2174
    %v3055 = vpack.c.b16 %v2179, %v2175
    %v3056 = vpack.c.b16 %v2180, %v2176
    %v3057 = vpack.c.b16 %v2181, %v2177
    %v3058 = vpack.c.b16 %v2186, %v2182
    %v3059 = vpack.c.b16 %v2187, %v2183
    %v3060 = vpack.c.b16 %v2188, %v2184
    %v3061 = vpack.c.b16 %v2189, %v2185
    %v3062 = vpack.c.b16 %v2194, %v2190
    %v3063 = vpack.c.b16 %v2195, %v2191
    %v3064 = vpack.c.b16 %v2196, %v2192
    %v3065 = vpack.c.b16 %v2197, %v2193
    %v3066 = vpack.c.b16 %v2202, %v2198
    %v3067 = vpack.c.b16 %v2203, %v2199
    %v3068 = vpack.c.b16 %v2204, %v2200
    %v3069 = vpack.c.b16 %v2205, %v2201
    %v3070 = vpack.c.b16 %v2210, %v2206
    %v3071 = vpack.c.b16 %v2211, %v2207
    %v3072 = vpack.c.b16 %v2212, %v2208
    %v3073 = vpack.c.b16 %v2213, %v2209
    %v3074 = vpack.c.b16 %v2218, %v2214
    %v3075 = vpack.c.b16 %v2219, %v2215
    %v3076 = vpack.c.b16 %v2220, %v2216
    %v3077 = vpack.c.b16 %v2221, %v2217
    %v3078 = vpack.c.b16 %v2226, %v2222
    %v3079 = vpack.c.b16 %v2227, %v2223
    %v3080 = vpack.c.b16 %v2228, %v2224
    %v3081 = vpack.c.b16 %v2229, %v2225
    %v3082 = vpack.c.b16 %v2234, %v2230
    %v3083 = vpack.c.b16 %v2235, %v2231
    %v3084 = vpack.c.b16 %v2236, %v2232
    %v3085 = vpack.c.b16 %v2237, %v2233
    %v3086 = vpack.c.b16 %v2242, %v2238
    %v3087 = vpack.c.b16 %v2243, %v2239
    %v3088 = vpack.c.b16 %v2244, %v2240
    %v3089 = vpack.c.b16 %v2245, %v2241
    %v3090 = vpack.c.b16 %v2250, %v2246
    %v3091 = vpack.c.b16 %v2251, %v2247
    %v3092 = vpack.c.b16 %v2252, %v2248
    %v3093 = vpack.c.b16 %v2253, %v2249
    %v3094 = vpack.c.b16 %v2258, %v2254
    %v3095 = vpack.c.b16 %v2259, %v2255
    %v3096 = vpack.c.b16 %v2260, %v2256
    %v3097 = vpack.c.b16 %v2261, %v2257
    %v3098 = vpack.c.b16 %v2266, %v2262
    %v3099 = vpack.c.b16 %v2267, %v2263
    %v3100 = vpack.c.b16 %v2268, %v2264
    %v3101 = vpack.c.b16 %v2269, %v2265
    %v3102 = vpack.c.b16 %v2274, %v2270
    %v3103 = vpack.c.b16 %v2275, %v2271
    %v3104 = vpack.c.b16 %v2276, %v2272
    %v3105 = vpack.c.b16 %v2277, %v2273
    %v3106 = vpack.c.b16 %v2282, %v2278
    %v3107 = vpack.c.b16 %v2283, %v2279
    %v3108 = vpack.c.b16 %v2284, %v2280
    %v3109 = vpack.c.b16 %v2285, %v2281
    %v3110 = vpack.c.b16 %v2290, %v2286
    %v3111 = vpack.c.b16 %v2291, %v2287
    %v3112 = vpack.c.b16 %v2292, %v2288
    %v3113 = vpack.c.b16 %v2293, %v2289
    %v3114 = vpack.c.b16 %v2298, %v2294
    %v3115 = vpack.c.b16 %v2299, %v2295
    %v3116 = vpack.c.b16 %v2300, %v2296
    %v3117 = vpack.c.b16 %v2301, %v2297
    %v3118 = vpack.c.b16 %v2306, %v2302
    %v3119 = vpack.c.b16 %v2307, %v2303
    %v3120 = vpack.c.b16 %v2308, %v2304
    %v3121 = vpack.c.b16 %v2309, %v2305
    %v3122 = vpack.c.b16 %v2314, %v2310
    %v3123 = vpack.c.b16 %v2315, %v2311
    %v3124 = vpack.c.b16 %v2316, %v2312
    %v3125 = vpack.c.b16 %v2317, %v2313
    %v3126 = vpack.c.b16 %v2322, %v2318
    %v3127 = vpack.c.b16 %v2323, %v2319
    %v3128 = vpack.c.b16 %v2324, %v2320
    %v3129 = vpack.c.b16 %v2325, %v2321
    %v3130 = vpack.c.b16 %v2330, %v2326
    %v3131 = vpack.c.b16 %v2331, %v2327
    %v3132 = vpack.c.b16 %v2332, %v2328
    %v3133 = vpack.c.b16 %v2333, %v2329
    %v3134 = vpack.c.b16 %v2338, %v2334
    %v3135 = vpack.c.b16 %v2339, %v2335
    %v3136 = vpack.c.b16 %v2340, %v2336
    %v3137 = vpack.c.b16 %v2341, %v2337
    %v3138 = vpack.c.b16 %v2346, %v2342
    %v3139 = vpack.c.b16 %v2347, %v2343
    %v3140 = vpack.c.b16 %v2348, %v2344
    %v3141 = vpack.c.b16 %v2349, %v2345
    %v3142 = vpack.c.b16 %v2354, %v2350
    %v3143 = vpack.c.b16 %v2355, %v2351
    %v3144 = vpack.c.b16 %v2356, %v2352
    %v3145 = vpack.c.b16 %v2357, %v2353
    %v3146 = vpack.c.b16 %v2362, %v2358
    %v3147 = vpack.c.b16 %v2363, %v2359
    %v3148 = vpack.c.b16 %v2364, %v2360
    %v3149 = vpack.c.b16 %v2365, %v2361
    %v3150 = vpack.c.b16 %v2370, %v2366
    %v3151 = vpack.c.b16 %v2371, %v2367
    %v3152 = vpack.c.b16 %v2372, %v2368
    %v3153 = vpack.c.b16 %v2373, %v2369
    %v3154 = vpack.c.b16 %v2378, %v2374
    %v3155 = vpack.c.b16 %v2379, %v2375
    %v3156 = vpack.c.b16 %v2380, %v2376
    %v3157 = vpack.c.b16 %v2381, %v2377
    %v3158 = vpack.c.b16 %v2386, %v2382
    %v3159 = vpack.c.b16 %v2387, %v2383
    %v3160 = vpack.c.b16 %v2388, %v2384
    %v3161 = vpack.c.b16 %v2389, %v2385
    %v3162 = vpack.c.b16 %v2394, %v2390
    %v3163 = vpack.c.b16 %v2395, %v2391
    %v3164 = vpack.c.b16 %v2396, %v2392
    %v3165 = vpack.c.b16 %v2397, %v2393
    %v3166 = vpack.c.b16 %v2402, %v2398
    %v3167 = vpack.c.b16 %v2403, %v2399
    %v3168 = vpack.c.b16 %v2404, %v2400
    %v3169 = vpack.c.b16 %v2405, %v2401
    %v3170 = vpack.c.b16 %v2410, %v2406
    %v3171 = vpack.c.b16 %v2411, %v2407
    %v3172 = vpack.c.b16 %v2412, %v2408
    %v3173 = vpack.c.b16 %v2413, %v2409
    %v3174 = vpack.c.b16 %v2418, %v2414
    %v3175 = vpack.c.b16 %v2419, %v2415
    %v3176 = vpack.c.b16 %v2420, %v2416
    %v3177 = vpack.c.b16 %v2421, %v2417
    %v3178 = vpack.c.b16 %v2426, %v2422
    %v3179 = vpack.c.b16 %v2427, %v2423
    %v3180 = vpack.c.b16 %v2428, %v2424
    %v3181 = vpack.c.b16 %v2429, %v2425
    %v3182 = vpack.c.b16 %v2434, %v2430
    %v3183 = vpack.c.b16 %v2435, %v2431
    %v3184 = vpack.c.b16 %v2436, %v2432
    %v3185 = vpack.c.b16 %v2437, %v2433
    %v3186 = vpack.c.b16 %v2442, %v2438
    %v3187 = vpack.c.b16 %v2443, %v2439
    %v3188 = vpack.c.b16 %v2444, %v2440
    %v3189 = vpack.c.b16 %v2445, %v2441
    %v3190 = vpack.c.b16 %v2450, %v2446
    %v3191 = vpack.c.b16 %v2451, %v2447
    %v3192 = vpack.c.b16 %v2452, %v2448
    %v3193 = vpack.c.b16 %v2453, %v2449
    %v3194 = vpack.c.b16 %v2458, %v2454
    %v3195 = vpack.c.b16 %v2459, %v2455
    %v3196 = vpack.c.b16 %v2460, %v2456
    %v3197 = vpack.c.b16 %v2461, %v2457
    %v3198 = vpack.c.b16 %v2466, %v2462
    %v3199 = vpack.c.b16 %v2467, %v2463
    %v3200 = vpack.c.b16 %v2468, %v2464
    %v3201 = vpack.c.b16 %v2469, %v2465
    %v3202 = vpack.c.b16 %v2474, %v2470
    %v3203 = vpack.c.b16 %v2475, %v2471
    %v3204 = vpack.c.b16 %v2476, %v2472
    %v3205 = vpack.c.b16 %v2477, %v2473
    %v3206 = vpack.c.b16 %v2482, %v2478
    %v3207 = vpack.c.b16 %v2483, %v2479
    %v3208 = vpack.c.b16 %v2484, %v2480
    %v3209 = vpack.c.b16 %v2485, %v2481
    %v3210 = vpack.c.b16 %v2490, %v2486
    %v3211 = vpack.c.b16 %v2491, %v2487
    %v3212 = vpack.c.b16 %v2492, %v2488
    %v3213 = vpack.c.b16 %v2493, %v2489
    %v3214 = vpack.c.b16 %v2498, %v2494
    %v3215 = vpack.c.b16 %v2499, %v2495
    %v3216 = vpack.c.b16 %v2500, %v2496
    %v3217 = vpack.c.b16 %v2501, %v2497
    %v3218 = vpack.c.b16 %v2506, %v2502
    %v3219 = vpack.c.b16 %v2507, %v2503
    %v3220 = vpack.c.b16 %v2508, %v2504
    %v3221 = vpack.c.b16 %v2509, %v2505
    %v3222 = vpack.c.b16 %v2514, %v2510
    %v3223 = vpack.c.b16 %v2515, %v2511
    %v3224 = vpack.c.b16 %v2516, %v2512
    %v3225 = vpack.c.b16 %v2517, %v2513
    %v3226 = vpack.c.b16 %v2522, %v2518
    %v3227 = vpack.c.b16 %v2523, %v2519
    %v3228 = vpack.c.b16 %v2524, %v2520
    %v3229 = vpack.c.b16 %v2525, %v2521
    %v3230 = vpack.c.b16 %v2530, %v2526
    %v3231 = vpack.c.b16 %v2531, %v2527
    %v3232 = vpack.c.b16 %v2532, %v2528
    %v3233 = vpack.c.b16 %v2533, %v2529
    %v3234 = vpack.c.b16 %v2538, %v2534
    %v3235 = vpack.c.b16 %v2539, %v2535
    %v3236 = vpack.c.b16 %v2540, %v2536
    %v3237 = vpack.c.b16 %v2541, %v2537
    %v3238 = vpack.c.b16 %v2546, %v2542
    %v3239 = vpack.c.b16 %v2547, %v2543
    %v3240 = vpack.c.b16 %v2548, %v2544
    %v3241 = vpack.c.b16 %v2549, %v2545
    %v3242 = vpack.c.b16 %v2554, %v2550
    %v3243 = vpack.c.b16 %v2555, %v2551
    %v3244 = vpack.c.b16 %v2556, %v2552
    %v3245 = vpack.c.b16 %v2557, %v2553
    %v3246 = vpack.c.b16 %v2562, %v2558
    %v3247 = vpack.c.b16 %v2563, %v2559
    %v3248 = vpack.c.b16 %v2564, %v2560
    %v3249 = vpack.c.b16 %v2565, %v2561
    %v3250 = vpack.c.b16 %v2570, %v2566
    %v3251 = vpack.c.b16 %v2571, %v2567
    %v3252 = vpack.c.b16 %v2572, %v2568
    %v3253 = vpack.c.b16 %v2573, %v2569
    %v3254 = vpack.c.b16 %v2578, %v2574
    %v3255 = vpack.c.b16 %v2579, %v2575
    %v3256 = vpack.c.b16 %v2580, %v2576
    %v3257 = vpack.c.b16 %v2581, %v2577
    %v3258 = vpack.c.b16 %v2586, %v2582
    %v3259 = vpack.c.b16 %v2587, %v2583
    %v3260 = vpack.c.b16 %v2588, %v2584
    %v3261 = vpack.c.b16 %v2589, %v2585
    %v3262 = vpack.c.b16 %v2594, %v2590
    %v3263 = vpack.c.b16 %v2595, %v2591
    %v3264 = vpack.c.b16 %v2596, %v2592
    %v3265 = vpack.c.b16 %v2597, %v2593
    %v3266 = vpack.c.b16 %v2602, %v2598
    %v3267 = vpack.c.b16 %v2603, %v2599
    %v3268 = vpack.c.b16 %v2604, %v2600
    %v3269 = vpack.c.b16 %v2605, %v2601
    %v3270 = vpack.c.b16 %v2610, %v2606
    %v3271 = vpack.c.b16 %v2611, %v2607
    %v3272 = vpack.c.b16 %v2612, %v2608
    %v3273 = vpack.c.b16 %v2613, %v2609
    %v3274 = vpack.c.b16 %v2618, %v2614
    %v3275 = vpack.c.b16 %v2619, %v2615
    %v3276 = vpack.c.b16 %v2620, %v2616
    %v3277 = vpack.c.b16 %v2621, %v2617
    %v3278 = vpack.c.b16 %v2626, %v2622
    %v3279 = vpack.c.b16 %v2627, %v2623
    %v3280 = vpack.c.b16 %v2628, %v2624
    %v3281 = vpack.c.b16 %v2629, %v2625
    %v3282 = vpack.c.b16 %v2634, %v2630
    %v3283 = vpack.c.b16 %v2635, %v2631
    %v3284 = vpack.c.b16 %v2636, %v2632
    %v3285 = vpack.c.b16 %v2637, %v2633
    %v3286 = vpack.c.b16 %v2642, %v2638
    %v3287 = vpack.c.b16 %v2643, %v2639
    %v3288 = vpack.c.b16 %v2644, %v2640
    %v3289 = vpack.c.b16 %v2645, %v2641
    %v3290 = vpack.c.b16 %v2650, %v2646
    %v3291 = vpack.c.b16 %v2651, %v2647
    %v3292 = vpack.c.b16 %v2652, %v2648
    %v3293 = vpack.c.b16 %v2653, %v2649
    %v3294 = vpack.c.b16 %v2658, %v2654
    %v3295 = vpack.c.b16 %v2659, %v2655
    %v3296 = vpack.c.b16 %v2660, %v2656
    %v3297 = vpack.c.b16 %v2661, %v2657
    %v3298 = vpack.c.b16 %v2666, %v2662
    %v3299 = vpack.c.b16 %v2667, %v2663
    %v3300 = vpack.c.b16 %v2668, %v2664
    %v3301 = vpack.c.b16 %v2669, %v2665
    %v3302 = vpack.c.b16 %v2674, %v2670
    %v3303 = vpack.c.b16 %v2675, %v2671
    %v3304 = vpack.c.b16 %v2676, %v2672
    %v3305 = vpack.c.b16 %v2677, %v2673
    %v3306 = vpack.c.b16 %v2682, %v2678
    %v3307 = vpack.c.b16 %v2683, %v2679
    %v3308 = vpack.c.b16 %v2684, %v2680
    %v3309 = vpack.c.b16 %v2685, %v2681
    %v3310 = vpack.c.b16 %v2690, %v2686
    %v3311 = vpack.c.b16 %v2691, %v2687
    %v3312 = vpack.c.b16 %v2692, %v2688
    %v3313 = vpack.c.b16 %v2693, %v2689
    %v3314 = vpack.c.b16 %v2698, %v2694
    %v3315 = vpack.c.b16 %v2699, %v2695
    %v3316 = vpack.c.b16 %v2700, %v2696
    %v3317 = vpack.c.b16 %v2701, %v2697
    %v3318 = vpack.c.b16 %v2706, %v2702
    %v3319 = vpack.c.b16 %v2707, %v2703
    %v3320 = vpack.c.b16 %v2708, %v2704
    %v3321 = vpack.c.b16 %v2709, %v2705
    %v3322 = vpack.c.b16 %v2714, %v2710
    %v3323 = vpack.c.b16 %v2715, %v2711
    %v3324 = vpack.c.b16 %v2716, %v2712
    %v3325 = vpack.c.b16 %v2717, %v2713
    %3934 = vmatprep.subr.bf16.mxu0 %v2719
    %3935 = vmatpush1.bf16.msra.mxu0 %v2718
    %3936 = vmatprep.subr.bf16.mxu0 %v2723
    %3937 = vmatpush1.bf16.msra.mxu0 %v2722
    %3938 = vmatprep.subr.bf16.mxu0 %v2727
    %3939 = vmatpush1.bf16.msra.mxu0 %v2726
    %3940 = vmatprep.subr.bf16.mxu0 %v2731
    %3941 = vmatpush1.bf16.msra.mxu0 %v2730
    %3942 = vmatprep.subr.bf16.mxu0 %v2735
    %3943 = vmatpush1.bf16.msra.mxu0 %v2734
    %3944 = vmatprep.subr.bf16.mxu0 %v2739
    %3945 = vmatpush1.bf16.msra.mxu0 %v2738
    %3946 = vmatprep.subr.bf16.mxu0 %v2743
    %3947 = vmatpush1.bf16.msra.mxu0 %v2742
    %3948 = vmatprep.subr.bf16.mxu0 %v2747
    %3949 = vmatpush1.bf16.msra.mxu0 %v2746
    %3950 = vmatprep.subr.bf16.mxu0 %v2751
    %3951 = vmatpush1.bf16.msra.mxu0 %v2750
    %3952 = vmatprep.subr.bf16.mxu0 %v2755
    %3953 = vmatpush1.bf16.msra.mxu0 %v2754
    %3954 = vmatprep.subr.bf16.mxu0 %v2759
    %3955 = vmatpush1.bf16.msra.mxu0 %v2758
    %3956 = vmatprep.subr.bf16.mxu0 %v2763
    %3957 = vmatpush1.bf16.msra.mxu0 %v2762
    %3958 = vmatprep.subr.bf16.mxu0 %v2767
    %3959 = vmatpush1.bf16.msra.mxu0 %v2766
    %3960 = vmatprep.subr.bf16.mxu0 %v2771
    %3961 = vmatpush1.bf16.msra.mxu0 %v2770
    %3962 = vmatprep.subr.bf16.mxu0 %v2775
    %3963 = vmatpush1.bf16.msra.mxu0 %v2774
    %3964 = vmatprep.subr.bf16.mxu0 %v2779
    %3965 = vmatpush1.bf16.msra.mxu0 %v2778
    %3966 = vmatprep.mubr.bf16.mxu0 %v246
    %3967 = vmatmul.mubr.bf16.gmra.mrb[0].mxu0 %v245
    %v3968 = vpop.f32.mrb[0].mxu0
    %v3969 = vadd.f32 %v877, %v3968
    %v3970 = vpop.f32.mrb[0].mxu0
    %v3971 = vadd.f32 %v881, %v3970
    %v3972 = vpop.f32.mrb[0].mxu0
    %v3973 = vpop.f32.mrb[0].mxu0
    %3974 = vdwg.mxu0
    %3975 = vmatprep.subr.bf16.mxu0 %v2783
    %3976 = vmatpush1.bf16.msra.mxu0 %v2782
    %3977 = vmatprep.subr.bf16.mxu0 %v2787
    %3978 = vmatpush1.bf16.msra.mxu0 %v2786
    %3979 = vmatprep.subr.bf16.mxu0 %v2791
    %3980 = vmatpush1.bf16.msra.mxu0 %v2790
    %3981 = vmatprep.subr.bf16.mxu0 %v2795
    %3982 = vmatpush1.bf16.msra.mxu0 %v2794
    %3983 = vmatprep.subr.bf16.mxu0 %v2799
    %3984 = vmatpush1.bf16.msra.mxu0 %v2798
    %3985 = vmatprep.subr.bf16.mxu0 %v2803
    %3986 = vmatpush1.bf16.msra.mxu0 %v2802
    %3987 = vmatprep.subr.bf16.mxu0 %v2807
    %3988 = vmatpush1.bf16.msra.mxu0 %v2806
    %3989 = vmatprep.subr.bf16.mxu0 %v2811
    %3990 = vmatpush1.bf16.msra.mxu0 %v2810
    %3991 = vmatprep.subr.bf16.mxu0 %v2815
    %3992 = vmatpush1.bf16.msra.mxu0 %v2814
    %3993 = vmatprep.subr.bf16.mxu0 %v2819
    %3994 = vmatpush1.bf16.msra.mxu0 %v2818
    %3995 = vmatprep.subr.bf16.mxu0 %v2823
    %3996 = vmatpush1.bf16.msra.mxu0 %v2822
    %3997 = vmatprep.subr.bf16.mxu0 %v2827
    %3998 = vmatpush1.bf16.msra.mxu0 %v2826
    %3999 = vmatprep.subr.bf16.mxu0 %v2831
    %4000 = vmatpush1.bf16.msra.mxu0 %v2830
    %4001 = vmatprep.subr.bf16.mxu0 %v2835
    %4002 = vmatpush1.bf16.msra.mxu0 %v2834
    %4003 = vmatprep.subr.bf16.mxu0 %v2839
    %4004 = vmatpush1.bf16.msra.mxu0 %v2838
    %4005 = vmatprep.subr.bf16.mxu0 %v2843
    %4006 = vmatpush1.bf16.msra.mxu0 %v2842
    %4007 = vmatprep.mubr.bf16.mxu0 %v248
    %4008 = vmatmul.mubr.bf16.gmra.mrb[0].mxu0 %v247
    %v4009 = vpop.f32.mrb[0].mxu0
    %v4010 = vadd.f32 %v3969, %v4009
    %v4011 = vpop.f32.mrb[0].mxu0
    %v4012 = vadd.f32 %v3971, %v4011
    %v4013 = vpop.f32.mrb[0].mxu0
    %v4014 = vpop.f32.mrb[0].mxu0
    %4015 = vdwg.mxu0
    %4016 = vmatprep.subr.bf16.mxu0 %v2847
    %4017 = vmatpush1.bf16.msra.mxu0 %v2846
    %4018 = vmatprep.subr.bf16.mxu0 %v2851
    %4019 = vmatpush1.bf16.msra.mxu0 %v2850
    %4020 = vmatprep.subr.bf16.mxu0 %v2855
    %4021 = vmatpush1.bf16.msra.mxu0 %v2854
    %4022 = vmatprep.subr.bf16.mxu0 %v2859
    %4023 = vmatpush1.bf16.msra.mxu0 %v2858
    %4024 = vmatprep.subr.bf16.mxu0 %v2863
    %4025 = vmatpush1.bf16.msra.mxu0 %v2862
    %4026 = vmatprep.subr.bf16.mxu0 %v2867
    %4027 = vmatpush1.bf16.msra.mxu0 %v2866
    %4028 = vmatprep.subr.bf16.mxu0 %v2871
    %4029 = vmatpush1.bf16.msra.mxu0 %v2870
    %4030 = vmatprep.subr.bf16.mxu0 %v2875
    %4031 = vmatpush1.bf16.msra.mxu0 %v2874
    %4032 = vmatprep.subr.bf16.mxu0 %v2879
    %4033 = vmatpush1.bf16.msra.mxu0 %v2878
    %4034 = vmatprep.subr.bf16.mxu0 %v2883
    %4035 = vmatpush1.bf16.msra.mxu0 %v2882
    %4036 = vmatprep.subr.bf16.mxu0 %v2887
    %4037 = vmatpush1.bf16.msra.mxu0 %v2886
    %4038 = vmatprep.subr.bf16.mxu0 %v2891
    %4039 = vmatpush1.bf16.msra.mxu0 %v2890
    %4040 = vmatprep.subr.bf16.mxu0 %v2895
    %4041 = vmatpush1.bf16.msra.mxu0 %v2894
    %4042 = vmatprep.subr.bf16.mxu0 %v2899
    %4043 = vmatpush1.bf16.msra.mxu0 %v2898
    %4044 = vmatprep.subr.bf16.mxu0 %v2903
    %4045 = vmatpush1.bf16.msra.mxu0 %v2902
    %4046 = vmatprep.subr.bf16.mxu0 %v2907
    %4047 = vmatpush1.bf16.msra.mxu0 %v2906
    %4048 = vmatprep.mubr.bf16.mxu0 %v250
    %4049 = vmatmul.mubr.bf16.gmra.mrb[0].mxu0 %v249
    %v4050 = vpop.f32.mrb[0].mxu0
    %v4051 = vadd.f32 %v4010, %v4050
    %v4052 = vpop.f32.mrb[0].mxu0
    %v4053 = vadd.f32 %v4012, %v4052
    %v4054 = vpop.f32.mrb[0].mxu0
    %v4055 = vpop.f32.mrb[0].mxu0
    %4056 = vdwg.mxu0
    %4057 = vmatprep.subr.bf16.mxu0 %v2911
    %4058 = vmatpush1.bf16.msra.mxu0 %v2910
    %4059 = vmatprep.subr.bf16.mxu0 %v2915
    %4060 = vmatpush1.bf16.msra.mxu0 %v2914
    %4061 = vmatprep.subr.bf16.mxu0 %v2919
    %4062 = vmatpush1.bf16.msra.mxu0 %v2918
    %4063 = vmatprep.subr.bf16.mxu0 %v2923
    %4064 = vmatpush1.bf16.msra.mxu0 %v2922
    %4065 = vmatprep.subr.bf16.mxu0 %v2927
    %4066 = vmatpush1.bf16.msra.mxu0 %v2926
    %4067 = vmatprep.subr.bf16.mxu0 %v2931
    %4068 = vmatpush1.bf16.msra.mxu0 %v2930
    %4069 = vmatprep.subr.bf16.mxu0 %v2935
    %4070 = vmatpush1.bf16.msra.mxu0 %v2934
    %4071 = vmatprep.subr.bf16.mxu0 %v2939
    %4072 = vmatpush1.bf16.msra.mxu0 %v2938
    %4073 = vmatprep.subr.bf16.mxu0 %v2943
    %4074 = vmatpush1.bf16.msra.mxu0 %v2942
    %4075 = vmatprep.subr.bf16.mxu0 %v2947
    %4076 = vmatpush1.bf16.msra.mxu0 %v2946
    %4077 = vmatprep.subr.bf16.mxu0 %v2951
    %4078 = vmatpush1.bf16.msra.mxu0 %v2950
    %4079 = vmatprep.subr.bf16.mxu0 %v2955
    %4080 = vmatpush1.bf16.msra.mxu0 %v2954
    %4081 = vmatprep.subr.bf16.mxu0 %v2959
    %4082 = vmatpush1.bf16.msra.mxu0 %v2958
    %4083 = vmatprep.subr.bf16.mxu0 %v2963
    %4084 = vmatpush1.bf16.msra.mxu0 %v2962
    %4085 = vmatprep.subr.bf16.mxu0 %v2967
    %4086 = vmatpush1.bf16.msra.mxu0 %v2966
    %4087 = vmatprep.subr.bf16.mxu0 %v2971
    %4088 = vmatpush1.bf16.msra.mxu0 %v2970
    %4089 = vmatprep.mubr.bf16.mxu0 %v252
    %4090 = vmatmul.mubr.bf16.gmra.mrb[0].mxu0 %v251
    %v4091 = vpop.f32.mrb[0].mxu0
    %v4092 = vadd.f32 %v4051, %v4091
    %v4093 = vpop.f32.mrb[0].mxu0
    %v4094 = vadd.f32 %v4053, %v4093
    %v4095 = vpop.f32.mrb[0].mxu0
    %v4096 = vpop.f32.mrb[0].mxu0
    %4097 = vdwg.mxu0
    %4098 = vmatprep.subr.bf16.mxu0 %v2975
    %4099 = vmatpush1.bf16.msra.mxu0 %v2974
    %4100 = vmatprep.subr.bf16.mxu0 %v2979
    %4101 = vmatpush1.bf16.msra.mxu0 %v2978
    %4102 = vmatprep.subr.bf16.mxu0 %v2983
    %4103 = vmatpush1.bf16.msra.mxu0 %v2982
    %4104 = vmatprep.subr.bf16.mxu0 %v2987
    %4105 = vmatpush1.bf16.msra.mxu0 %v2986
    %4106 = vmatprep.subr.bf16.mxu0 %v2991
    %4107 = vmatpush1.bf16.msra.mxu0 %v2990
    %4108 = vmatprep.subr.bf16.mxu0 %v2995
    %4109 = vmatpush1.bf16.msra.mxu0 %v2994
    %4110 = vmatprep.subr.bf16.mxu0 %v2999
    %4111 = vmatpush1.bf16.msra.mxu0 %v2998
    %4112 = vmatprep.subr.bf16.mxu0 %v3003
    %4113 = vmatpush1.bf16.msra.mxu0 %v3002
    %4114 = vmatprep.subr.bf16.mxu0 %v3007
    %4115 = vmatpush1.bf16.msra.mxu0 %v3006
    %4116 = vmatprep.subr.bf16.mxu0 %v3011
    %4117 = vmatpush1.bf16.msra.mxu0 %v3010
    %4118 = vmatprep.subr.bf16.mxu0 %v3015
    %4119 = vmatpush1.bf16.msra.mxu0 %v3014
    %4120 = vmatprep.subr.bf16.mxu0 %v3019
    %4121 = vmatpush1.bf16.msra.mxu0 %v3018
    %4122 = vmatprep.subr.bf16.mxu0 %v3023
    %4123 = vmatpush1.bf16.msra.mxu0 %v3022
    %4124 = vmatprep.subr.bf16.mxu0 %v3027
    %4125 = vmatpush1.bf16.msra.mxu0 %v3026
    %4126 = vmatprep.subr.bf16.mxu0 %v3031
    %4127 = vmatpush1.bf16.msra.mxu0 %v3030
    %4128 = vmatprep.subr.bf16.mxu0 %v3035
    %4129 = vmatpush1.bf16.msra.mxu0 %v3034
    %4130 = vmatprep.mubr.bf16.mxu0 %v254
    %4131 = vmatmul.mubr.bf16.gmra.mrb[0].mxu0 %v253
    %v4132 = vpop.f32.mrb[0].mxu0
    %v4133 = vadd.f32 %v4092, %v4132
    %v4134 = vpop.f32.mrb[0].mxu0
    %v4135 = vadd.f32 %v4094, %v4134
    %v4136 = vpop.f32.mrb[0].mxu0
    %v4137 = vpop.f32.mrb[0].mxu0
    %4138 = vdwg.mxu0
    %4139 = vmatprep.subr.bf16.mxu0 %v3039
    %4140 = vmatpush1.bf16.msra.mxu0 %v3038
    %4141 = vmatprep.subr.bf16.mxu0 %v3043
    %4142 = vmatpush1.bf16.msra.mxu0 %v3042
    %4143 = vmatprep.subr.bf16.mxu0 %v3047
    %4144 = vmatpush1.bf16.msra.mxu0 %v3046
    %4145 = vmatprep.subr.bf16.mxu0 %v3051
    %4146 = vmatpush1.bf16.msra.mxu0 %v3050
    %4147 = vmatprep.subr.bf16.mxu0 %v3055
    %4148 = vmatpush1.bf16.msra.mxu0 %v3054
    %4149 = vmatprep.subr.bf16.mxu0 %v3059
    %4150 = vmatpush1.bf16.msra.mxu0 %v3058
    %4151 = vmatprep.subr.bf16.mxu0 %v3063
    %4152 = vmatpush1.bf16.msra.mxu0 %v3062
    %4153 = vmatprep.subr.bf16.mxu0 %v3067
    %4154 = vmatpush1.bf16.msra.mxu0 %v3066
    %4155 = vmatprep.subr.bf16.mxu0 %v3071
    %4156 = vmatpush1.bf16.msra.mxu0 %v3070
    %4157 = vmatprep.subr.bf16.mxu0 %v3075
    %4158 = vmatpush1.bf16.msra.mxu0 %v3074
    %4159 = vmatprep.subr.bf16.mxu0 %v3079
    %4160 = vmatpush1.bf16.msra.mxu0 %v3078
    %4161 = vmatprep.subr.bf16.mxu0 %v3083
    %4162 = vmatpush1.bf16.msra.mxu0 %v3082
    %4163 = vmatprep.subr.bf16.mxu0 %v3087
    %4164 = vmatpush1.bf16.msra.mxu0 %v3086
    %4165 = vmatprep.subr.bf16.mxu0 %v3091
    %4166 = vmatpush1.bf16.msra.mxu0 %v3090
    %4167 = vmatprep.subr.bf16.mxu0 %v3095
    %4168 = vmatpush1.bf16.msra.mxu0 %v3094
    %4169 = vmatprep.subr.bf16.mxu0 %v3099
    %4170 = vmatpush1.bf16.msra.mxu0 %v3098
    %4171 = vmatprep.mubr.bf16.mxu0 %v256
    %4172 = vmatmul.mubr.bf16.gmra.mrb[0].mxu0 %v255
    %v4173 = vpop.f32.mrb[0].mxu0
    %v4174 = vadd.f32 %v4133, %v4173
    %v4175 = vpop.f32.mrb[0].mxu0
    %v4176 = vadd.f32 %v4135, %v4175
    %v4177 = vpop.f32.mrb[0].mxu0
    %v4178 = vpop.f32.mrb[0].mxu0
    %4179 = vdwg.mxu0
    %4180 = vmatprep.subr.bf16.mxu0 %v3103
    %4181 = vmatpush1.bf16.msra.mxu0 %v3102
    %4182 = vmatprep.subr.bf16.mxu0 %v3107
    %4183 = vmatpush1.bf16.msra.mxu0 %v3106
    %4184 = vmatprep.subr.bf16.mxu0 %v3111
    %4185 = vmatpush1.bf16.msra.mxu0 %v3110
    %4186 = vmatprep.subr.bf16.mxu0 %v3115
    %4187 = vmatpush1.bf16.msra.mxu0 %v3114
    %4188 = vmatprep.subr.bf16.mxu0 %v3119
    %4189 = vmatpush1.bf16.msra.mxu0 %v3118
    %4190 = vmatprep.subr.bf16.mxu0 %v3123
    %4191 = vmatpush1.bf16.msra.mxu0 %v3122
    %4192 = vmatprep.subr.bf16.mxu0 %v3127
    %4193 = vmatpush1.bf16.msra.mxu0 %v3126
    %4194 = vmatprep.subr.bf16.mxu0 %v3131
    %4195 = vmatpush1.bf16.msra.mxu0 %v3130
    %4196 = vmatprep.subr.bf16.mxu0 %v3135
    %4197 = vmatpush1.bf16.msra.mxu0 %v3134
    %4198 = vmatprep.subr.bf16.mxu0 %v3139
    %4199 = vmatpush1.bf16.msra.mxu0 %v3138
    %4200 = vmatprep.subr.bf16.mxu0 %v3143
    %4201 = vmatpush1.bf16.msra.mxu0 %v3142
    %4202 = vmatprep.subr.bf16.mxu0 %v3147
    %4203 = vmatpush1.bf16.msra.mxu0 %v3146
    %4204 = vmatprep.subr.bf16.mxu0 %v3151
    %4205 = vmatpush1.bf16.msra.mxu0 %v3150
    %4206 = vmatprep.subr.bf16.mxu0 %v3155
    %4207 = vmatpush1.bf16.msra.mxu0 %v3154
    %4208 = vmatprep.subr.bf16.mxu0 %v3159
    %4209 = vmatpush1.bf16.msra.mxu0 %v3158
    %4210 = vmatprep.subr.bf16.mxu0 %v3163
    %4211 = vmatpush1.bf16.msra.mxu0 %v3162
    %4212 = vmatprep.mubr.bf16.mxu0 %v258
    %4213 = vmatmul.mubr.bf16.gmra.mrb[0].mxu0 %v257
    %v4214 = vpop.f32.mrb[0].mxu0
    %v4215 = vadd.f32 %v4174, %v4214
    %v4216 = vpop.f32.mrb[0].mxu0
    %v4217 = vadd.f32 %v4176, %v4216
    %v4218 = vpop.f32.mrb[0].mxu0
    %v4219 = vpop.f32.mrb[0].mxu0
    %4220 = vdwg.mxu0
    %4221 = vmatprep.subr.bf16.mxu0 %v3167
    %4222 = vmatpush1.bf16.msra.mxu0 %v3166
    %4223 = vmatprep.subr.bf16.mxu0 %v3171
    %4224 = vmatpush1.bf16.msra.mxu0 %v3170
    %4225 = vmatprep.subr.bf16.mxu0 %v3175
    %4226 = vmatpush1.bf16.msra.mxu0 %v3174
    %4227 = vmatprep.subr.bf16.mxu0 %v3179
    %4228 = vmatpush1.bf16.msra.mxu0 %v3178
    %4229 = vmatprep.subr.bf16.mxu0 %v3183
    %4230 = vmatpush1.bf16.msra.mxu0 %v3182
    %4231 = vmatprep.subr.bf16.mxu0 %v3187
    %4232 = vmatpush1.bf16.msra.mxu0 %v3186
    %4233 = vmatprep.subr.bf16.mxu0 %v3191
    %4234 = vmatpush1.bf16.msra.mxu0 %v3190
    %4235 = vmatprep.subr.bf16.mxu0 %v3195
    %4236 = vmatpush1.bf16.msra.mxu0 %v3194
    %4237 = vmatprep.subr.bf16.mxu0 %v3199
    %4238 = vmatpush1.bf16.msra.mxu0 %v3198
    %4239 = vmatprep.subr.bf16.mxu0 %v3203
    %4240 = vmatpush1.bf16.msra.mxu0 %v3202
    %4241 = vmatprep.subr.bf16.mxu0 %v3207
    %4242 = vmatpush1.bf16.msra.mxu0 %v3206
    %4243 = vmatprep.subr.bf16.mxu0 %v3211
    %4244 = vmatpush1.bf16.msra.mxu0 %v3210
    %4245 = vmatprep.subr.bf16.mxu0 %v3215
    %4246 = vmatpush1.bf16.msra.mxu0 %v3214
    %4247 = vmatprep.subr.bf16.mxu0 %v3219
    %4248 = vmatpush1.bf16.msra.mxu0 %v3218
    %4249 = vmatprep.subr.bf16.mxu0 %v3223
    %4250 = vmatpush1.bf16.msra.mxu0 %v3222
    %4251 = vmatprep.subr.bf16.mxu0 %v3227
    %4252 = vmatpush1.bf16.msra.mxu0 %v3226
    %4253 = vmatprep.mubr.bf16.mxu0 %v260
    %4254 = vmatmul.mubr.bf16.gmra.mrb[0].mxu0 %v259
    %v4255 = vpop.f32.mrb[0].mxu0
    %v4256 = vadd.f32 %v4215, %v4255
    %v4257 = vpop.f32.mrb[0].mxu0
    %v4258 = vadd.f32 %v4217, %v4257
    %v4259 = vpop.f32.mrb[0].mxu0
    %v4260 = vpop.f32.mrb[0].mxu0
    %4261 = vdwg.mxu0
    %4262 = vmatprep.subr.bf16.mxu0 %v3231
    %4263 = vmatpush1.bf16.msra.mxu0 %v3230
    %4264 = vmatprep.subr.bf16.mxu0 %v3235
    %4265 = vmatpush1.bf16.msra.mxu0 %v3234
    %4266 = vmatprep.subr.bf16.mxu0 %v3239
    %4267 = vmatpush1.bf16.msra.mxu0 %v3238
    %4268 = vmatprep.subr.bf16.mxu0 %v3243
    %4269 = vmatpush1.bf16.msra.mxu0 %v3242
    %4270 = vmatprep.subr.bf16.mxu0 %v3247
    %4271 = vmatpush1.bf16.msra.mxu0 %v3246
    %4272 = vmatprep.subr.bf16.mxu0 %v3251
    %4273 = vmatpush1.bf16.msra.mxu0 %v3250
    %4274 = vmatprep.subr.bf16.mxu0 %v3255
    %4275 = vmatpush1.bf16.msra.mxu0 %v3254
    %4276 = vmatprep.subr.bf16.mxu0 %v3259
    %4277 = vmatpush1.bf16.msra.mxu0 %v3258
    %4278 = vmatprep.subr.bf16.mxu0 %v3263
    %4279 = vmatpush1.bf16.msra.mxu0 %v3262
    %4280 = vmatprep.subr.bf16.mxu0 %v3267
    %4281 = vmatpush1.bf16.msra.mxu0 %v3266
    %4282 = vmatprep.subr.bf16.mxu0 %v3271
    %4283 = vmatpush1.bf16.msra.mxu0 %v3270
    %4284 = vmatprep.subr.bf16.mxu0 %v3275
    %4285 = vmatpush1.bf16.msra.mxu0 %v3274
    %4286 = vmatprep.subr.bf16.mxu0 %v3279
    %4287 = vmatpush1.bf16.msra.mxu0 %v3278
    %4288 = vmatprep.subr.bf16.mxu0 %v3283
    %4289 = vmatpush1.bf16.msra.mxu0 %v3282
    %4290 = vmatprep.subr.bf16.mxu0 %v3287
    %4291 = vmatpush1.bf16.msra.mxu0 %v3286
    %4292 = vmatprep.subr.bf16.mxu0 %v3291
    %4293 = vmatpush1.bf16.msra.mxu0 %v3290
    %4294 = vmatprep.mubr.bf16.mxu0 %v262
    %4295 = vmatmul.mubr.bf16.gmra.mrb[0].mxu0 %v261
    %v4296 = vpop.f32.mrb[0].mxu0
    %v4297 = vadd.f32 %v4256, %v4296
    %v4298 = vpop.f32.mrb[0].mxu0
    %v4299 = vadd.f32 %v4258, %v4298
    %v4300 = vpop.f32.mrb[0].mxu0
    %v4301 = vpop.f32.mrb[0].mxu0
    %4302 = vdwg.mxu0
    %4303 = vmatprep.subr.bf16.mxu0 %v3295
    %4304 = vmatpush1.bf16.msra.mxu0 %v3294
    %4305 = vmatprep.subr.bf16.mxu0 %v3299
    %4306 = vmatpush1.bf16.msra.mxu0 %v3298
    %4307 = vmatprep.subr.bf16.mxu0 %v3303
    %4308 = vmatpush1.bf16.msra.mxu0 %v3302
    %4309 = vmatprep.subr.bf16.mxu0 %v3307
    %4310 = vmatpush1.bf16.msra.mxu0 %v3306
    %4311 = vmatprep.subr.bf16.mxu0 %v3311
    %4312 = vmatpush1.bf16.msra.mxu0 %v3310
    %4313 = vmatprep.subr.bf16.mxu0 %v3315
    %4314 = vmatpush1.bf16.msra.mxu0 %v3314
    %4315 = vmatprep.subr.bf16.mxu0 %v3319
    %4316 = vmatpush1.bf16.msra.mxu0 %v3318
    %4317 = vmatprep.subr.bf16.mxu0 %v3323
    %4318 = vmatpush1.bf16.msra.mxu0 %v3322
    %4319 = vmatprep.subr.bf16.mxu0 0
    %4320 = vmatpush1.bf16.msra.mxu0 0
    %4321 = vmatprep.subr.bf16.mxu0 0
    %4322 = vmatpush1.bf16.msra.mxu0 0
    %4323 = vmatprep.subr.bf16.mxu0 0
    %4324 = vmatpush1.bf16.msra.mxu0 0
    %4325 = vmatprep.subr.bf16.mxu0 0
    %4326 = vmatpush1.bf16.msra.mxu0 0
    %4327 = vmatprep.subr.bf16.mxu0 0
    %4328 = vmatpush1.bf16.msra.mxu0 0
    %4329 = vmatprep.subr.bf16.mxu0 0
    %4330 = vmatpush1.bf16.msra.mxu0 0
    %4331 = vmatprep.subr.bf16.mxu0 0
    %4332 = vmatpush1.bf16.msra.mxu0 0
    %4333 = vmatprep.subr.bf16.mxu0 0
    %4334 = vmatpush1.bf16.msra.mxu0 0
    %4335 = vmatprep.mubr.bf16.mxu0 0
    %4336 = vmatmul.mubr.bf16.gmra.mrb[0].mxu0 %v263
    %v4337 = vpop.f32.mrb[0].mxu0
    %v4338 = vadd.f32 %v4297, %v4337
    %v4339 = vpop.f32.mrb[0].mxu0
    %v4340 = vadd.f32 %v4299, %v4339
    %v4341 = vpop.f32.mrb[0].mxu0
    %v4342 = vpop.f32.mrb[0].mxu0
    %4343 = vdwg.mxu0
    %4344 = vmatprep.subr.bf16.mxu0 %v2721
    %4345 = vmatpush1.bf16.msra.mxu0 %v2720
    %4346 = vmatprep.subr.bf16.mxu0 %v2725
    %4347 = vmatpush1.bf16.msra.mxu0 %v2724
    %4348 = vmatprep.subr.bf16.mxu0 %v2729
    %4349 = vmatpush1.bf16.msra.mxu0 %v2728
    %4350 = vmatprep.subr.bf16.mxu0 %v2733
    %4351 = vmatpush1.bf16.msra.mxu0 %v2732
    %4352 = vmatprep.subr.bf16.mxu0 %v2737
    %4353 = vmatpush1.bf16.msra.mxu0 %v2736
    %4354 = vmatprep.subr.bf16.mxu0 %v2741
    %4355 = vmatpush1.bf16.msra.mxu0 %v2740
    %4356 = vmatprep.subr.bf16.mxu0 %v2745
    %4357 = vmatpush1.bf16.msra.mxu0 %v2744
    %4358 = vmatprep.subr.bf16.mxu0 %v2749
    %4359 = vmatpush1.bf16.msra.mxu0 %v2748
    %4360 = vmatprep.subr.bf16.mxu0 %v2753
    %4361 = vmatpush1.bf16.msra.mxu0 %v2752
    %4362 = vmatprep.subr.bf16.mxu0 %v2757
    %4363 = vmatpush1.bf16.msra.mxu0 %v2756
    %4364 = vmatprep.subr.bf16.mxu0 %v2761
    %4365 = vmatpush1.bf16.msra.mxu0 %v2760
    %4366 = vmatprep.subr.bf16.mxu0 %v2765
    %4367 = vmatpush1.bf16.msra.mxu0 %v2764
    %4368 = vmatprep.subr.bf16.mxu0 %v2769
    %4369 = vmatpush1.bf16.msra.mxu0 %v2768
    %4370 = vmatprep.subr.bf16.mxu0 %v2773
    %4371 = vmatpush1.bf16.msra.mxu0 %v2772
    %4372 = vmatprep.subr.bf16.mxu0 %v2777
    %4373 = vmatpush1.bf16.msra.mxu0 %v2776
    %4374 = vmatprep.subr.bf16.mxu0 %v2781
    %4375 = vmatpush1.bf16.msra.mxu0 %v2780
    %4376 = vmatprep.mubr.bf16.mxu0 %v246
    %4377 = vmatmul.mubr.bf16.gmra.mrb[0].mxu0 %v245
    %v4378 = vpop.f32.mrb[0].mxu0
    %v4379 = vadd.f32 %v885, %v4378
    %v4380 = vpop.f32.mrb[0].mxu0
    %v4381 = vadd.f32 %v889, %v4380
    %v4382 = vpop.f32.mrb[0].mxu0
    %v4383 = vpop.f32.mrb[0].mxu0
    %4384 = vdwg.mxu0
    %4385 = vmatprep.subr.bf16.mxu0 %v2785
    %4386 = vmatpush1.bf16.msra.mxu0 %v2784
    %4387 = vmatprep.subr.bf16.mxu0 %v2789
    %4388 = vmatpush1.bf16.msra.mxu0 %v2788
    %4389 = vmatprep.subr.bf16.mxu0 %v2793
    %4390 = vmatpush1.bf16.msra.mxu0 %v2792
    %4391 = vmatprep.subr.bf16.mxu0 %v2797
    %4392 = vmatpush1.bf16.msra.mxu0 %v2796
    %4393 = vmatprep.subr.bf16.mxu0 %v2801
    %4394 = vmatpush1.bf16.msra.mxu0 %v2800
    %4395 = vmatprep.subr.bf16.mxu0 %v2805
    %4396 = vmatpush1.bf16.msra.mxu0 %v2804
    %4397 = vmatprep.subr.bf16.mxu0 %v2809
    %4398 = vmatpush1.bf16.msra.mxu0 %v2808
    %4399 = vmatprep.subr.bf16.mxu0 %v2813
    %4400 = vmatpush1.bf16.msra.mxu0 %v2812
    %4401 = vmatprep.subr.bf16.mxu0 %v2817
    %4402 = vmatpush1.bf16.msra.mxu0 %v2816
    %4403 = vmatprep.subr.bf16.mxu0 %v2821
    %4404 = vmatpush1.bf16.msra.mxu0 %v2820
    %4405 = vmatprep.subr.bf16.mxu0 %v2825
    %4406 = vmatpush1.bf16.msra.mxu0 %v2824
    %4407 = vmatprep.subr.bf16.mxu0 %v2829
    %4408 = vmatpush1.bf16.msra.mxu0 %v2828
    %4409 = vmatprep.subr.bf16.mxu0 %v2833
    %4410 = vmatpush1.bf16.msra.mxu0 %v2832
    %4411 = vmatprep.subr.bf16.mxu0 %v2837
    %4412 = vmatpush1.bf16.msra.mxu0 %v2836
    %4413 = vmatprep.subr.bf16.mxu0 %v2841
    %4414 = vmatpush1.bf16.msra.mxu0 %v2840
    %4415 = vmatprep.subr.bf16.mxu0 %v2845
    %4416 = vmatpush1.bf16.msra.mxu0 %v2844
    %4417 = vmatprep.mubr.bf16.mxu0 %v248
    %4418 = vmatmul.mubr.bf16.gmra.mrb[0].mxu0 %v247
    %v4419 = vpop.f32.mrb[0].mxu0
    %v4420 = vadd.f32 %v4379, %v4419
    %v4421 = vpop.f32.mrb[0].mxu0
    %v4422 = vadd.f32 %v4381, %v4421
    %v4423 = vpop.f32.mrb[0].mxu0
    %v4424 = vpop.f32.mrb[0].mxu0
    %4425 = vdwg.mxu0
    %4426 = vmatprep.subr.bf16.mxu0 %v2849
    %4427 = vmatpush1.bf16.msra.mxu0 %v2848
    %4428 = vmatprep.subr.bf16.mxu0 %v2853
    %4429 = vmatpush1.bf16.msra.mxu0 %v2852
    %4430 = vmatprep.subr.bf16.mxu0 %v2857
    %4431 = vmatpush1.bf16.msra.mxu0 %v2856
    %4432 = vmatprep.subr.bf16.mxu0 %v2861
    %4433 = vmatpush1.bf16.msra.mxu0 %v2860
    %4434 = vmatprep.subr.bf16.mxu0 %v2865
    %4435 = vmatpush1.bf16.msra.mxu0 %v2864
    %4436 = vmatprep.subr.bf16.mxu0 %v2869
    %4437 = vmatpush1.bf16.msra.mxu0 %v2868
    %4438 = vmatprep.subr.bf16.mxu0 %v2873
    %4439 = vmatpush1.bf16.msra.mxu0 %v2872
    %4440 = vmatprep.subr.bf16.mxu0 %v2877
    %4441 = vmatpush1.bf16.msra.mxu0 %v2876
    %4442 = vmatprep.subr.bf16.mxu0 %v2881
    %4443 = vmatpush1.bf16.msra.mxu0 %v2880
    %4444 = vmatprep.subr.bf16.mxu0 %v2885
    %4445 = vmatpush1.bf16.msra.mxu0 %v2884
    %4446 = vmatprep.subr.bf16.mxu0 %v2889
    %4447 = vmatpush1.bf16.msra.mxu0 %v2888
    %4448 = vmatprep.subr.bf16.mxu0 %v2893
    %4449 = vmatpush1.bf16.msra.mxu0 %v2892
    %4450 = vmatprep.subr.bf16.mxu0 %v2897
    %4451 = vmatpush1.bf16.msra.mxu0 %v2896
    %4452 = vmatprep.subr.bf16.mxu0 %v2901
    %4453 = vmatpush1.bf16.msra.mxu0 %v2900
    %4454 = vmatprep.subr.bf16.mxu0 %v2905
    %4455 = vmatpush1.bf16.msra.mxu0 %v2904
    %4456 = vmatprep.subr.bf16.mxu0 %v2909
    %4457 = vmatpush1.bf16.msra.mxu0 %v2908
    %4458 = vmatprep.mubr.bf16.mxu0 %v250
    %4459 = vmatmul.mubr.bf16.gmra.mrb[0].mxu0 %v249
    %v4460 = vpop.f32.mrb[0].mxu0
    %v4461 = vadd.f32 %v4420, %v4460
    %v4462 = vpop.f32.mrb[0].mxu0
    %v4463 = vadd.f32 %v4422, %v4462
    %v4464 = vpop.f32.mrb[0].mxu0
    %v4465 = vpop.f32.mrb[0].mxu0
    %4466 = vdwg.mxu0
    %4467 = vmatprep.subr.bf16.mxu0 %v2913
    %4468 = vmatpush1.bf16.msra.mxu0 %v2912
    %4469 = vmatprep.subr.bf16.mxu0 %v2917
    %4470 = vmatpush1.bf16.msra.mxu0 %v2916
    %4471 = vmatprep.subr.bf16.mxu0 %v2921
    %4472 = vmatpush1.bf16.msra.mxu0 %v2920
    %4473 = vmatprep.subr.bf16.mxu0 %v2925
    %4474 = vmatpush1.bf16.msra.mxu0 %v2924
    %4475 = vmatprep.subr.bf16.mxu0 %v2929
    %4476 = vmatpush1.bf16.msra.mxu0 %v2928
    %4477 = vmatprep.subr.bf16.mxu0 %v2933
    %4478 = vmatpush1.bf16.msra.mxu0 %v2932
    %4479 = vmatprep.subr.bf16.mxu0 %v2937
    %4480 = vmatpush1.bf16.msra.mxu0 %v2936
    %4481 = vmatprep.subr.bf16.mxu0 %v2941
    %4482 = vmatpush1.bf16.msra.mxu0 %v2940
    %4483 = vmatprep.subr.bf16.mxu0 %v2945
    %4484 = vmatpush1.bf16.msra.mxu0 %v2944
    %4485 = vmatprep.subr.bf16.mxu0 %v2949
    %4486 = vmatpush1.bf16.msra.mxu0 %v2948
    %4487 = vmatprep.subr.bf16.mxu0 %v2953
    %4488 = vmatpush1.bf16.msra.mxu0 %v2952
    %4489 = vmatprep.subr.bf16.mxu0 %v2957
    %4490 = vmatpush1.bf16.msra.mxu0 %v2956
    %4491 = vmatprep.subr.bf16.mxu0 %v2961
    %4492 = vmatpush1.bf16.msra.mxu0 %v2960
    %4493 = vmatprep.subr.bf16.mxu0 %v2965
    %4494 = vmatpush1.bf16.msra.mxu0 %v2964
    %4495 = vmatprep.subr.bf16.mxu0 %v2969
    %4496 = vmatpush1.bf16.msra.mxu0 %v2968
    %4497 = vmatprep.subr.bf16.mxu0 %v2973
    %4498 = vmatpush1.bf16.msra.mxu0 %v2972
    %4499 = vmatprep.mubr.bf16.mxu0 %v252
    %4500 = vmatmul.mubr.bf16.gmra.mrb[0].mxu0 %v251
    %v4501 = vpop.f32.mrb[0].mxu0
    %v4502 = vadd.f32 %v4461, %v4501
    %v4503 = vpop.f32.mrb[0].mxu0
    %v4504 = vadd.f32 %v4463, %v4503
    %v4505 = vpop.f32.mrb[0].mxu0
    %v4506 = vpop.f32.mrb[0].mxu0
    %4507 = vdwg.mxu0
    %4508 = vmatprep.subr.bf16.mxu0 %v2977
    %4509 = vmatpush1.bf16.msra.mxu0 %v2976
    %4510 = vmatprep.subr.bf16.mxu0 %v2981
    %4511 = vmatpush1.bf16.msra.mxu0 %v2980
    %4512 = vmatprep.subr.bf16.mxu0 %v2985
    %4513 = vmatpush1.bf16.msra.mxu0 %v2984
    %4514 = vmatprep.subr.bf16.mxu0 %v2989
    %4515 = vmatpush1.bf16.msra.mxu0 %v2988
    %4516 = vmatprep.subr.bf16.mxu0 %v2993
    %4517 = vmatpush1.bf16.msra.mxu0 %v2992
    %4518 = vmatprep.subr.bf16.mxu0 %v2997
    %4519 = vmatpush1.bf16.msra.mxu0 %v2996
    %4520 = vmatprep.subr.bf16.mxu0 %v3001
    %4521 = vmatpush1.bf16.msra.mxu0 %v3000
    %4522 = vmatprep.subr.bf16.mxu0 %v3005
    %4523 = vmatpush1.bf16.msra.mxu0 %v3004
    %4524 = vmatprep.subr.bf16.mxu0 %v3009
    %4525 = vmatpush1.bf16.msra.mxu0 %v3008
    %4526 = vmatprep.subr.bf16.mxu0 %v3013
    %4527 = vmatpush1.bf16.msra.mxu0 %v3012
    %4528 = vmatprep.subr.bf16.mxu0 %v3017
    %4529 = vmatpush1.bf16.msra.mxu0 %v3016
    %4530 = vmatprep.subr.bf16.mxu0 %v3021
    %4531 = vmatpush1.bf16.msra.mxu0 %v3020
    %4532 = vmatprep.subr.bf16.mxu0 %v3025
    %4533 = vmatpush1.bf16.msra.mxu0 %v3024
    %4534 = vmatprep.subr.bf16.mxu0 %v3029
    %4535 = vmatpush1.bf16.msra.mxu0 %v3028
    %4536 = vmatprep.subr.bf16.mxu0 %v3033
    %4537 = vmatpush1.bf16.msra.mxu0 %v3032
    %4538 = vmatprep.subr.bf16.mxu0 %v3037
    %4539 = vmatpush1.bf16.msra.mxu0 %v3036
    %4540 = vmatprep.mubr.bf16.mxu0 %v254
    %4541 = vmatmul.mubr.bf16.gmra.mrb[0].mxu0 %v253
    %v4542 = vpop.f32.mrb[0].mxu0
    %v4543 = vadd.f32 %v4502, %v4542
    %v4544 = vpop.f32.mrb[0].mxu0
    %v4545 = vadd.f32 %v4504, %v4544
    %v4546 = vpop.f32.mrb[0].mxu0
    %v4547 = vpop.f32.mrb[0].mxu0
    %4548 = vdwg.mxu0
    %4549 = vmatprep.subr.bf16.mxu0 %v3041
    %4550 = vmatpush1.bf16.msra.mxu0 %v3040
    %4551 = vmatprep.subr.bf16.mxu0 %v3045
    %4552 = vmatpush1.bf16.msra.mxu0 %v3044
    %4553 = vmatprep.subr.bf16.mxu0 %v3049
    %4554 = vmatpush1.bf16.msra.mxu0 %v3048
    %4555 = vmatprep.subr.bf16.mxu0 %v3053
    %4556 = vmatpush1.bf16.msra.mxu0 %v3052
    %4557 = vmatprep.subr.bf16.mxu0 %v3057
    %4558 = vmatpush1.bf16.msra.mxu0 %v3056
    %4559 = vmatprep.subr.bf16.mxu0 %v3061
    %4560 = vmatpush1.bf16.msra.mxu0 %v3060
    %4561 = vmatprep.subr.bf16.mxu0 %v3065
    %4562 = vmatpush1.bf16.msra.mxu0 %v3064
    %4563 = vmatprep.subr.bf16.mxu0 %v3069
    %4564 = vmatpush1.bf16.msra.mxu0 %v3068
    %4565 = vmatprep.subr.bf16.mxu0 %v3073
    %4566 = vmatpush1.bf16.msra.mxu0 %v3072
    %4567 = vmatprep.subr.bf16.mxu0 %v3077
    %4568 = vmatpush1.bf16.msra.mxu0 %v3076
    %4569 = vmatprep.subr.bf16.mxu0 %v3081
    %4570 = vmatpush1.bf16.msra.mxu0 %v3080
    %4571 = vmatprep.subr.bf16.mxu0 %v3085
    %4572 = vmatpush1.bf16.msra.mxu0 %v3084
    %4573 = vmatprep.subr.bf16.mxu0 %v3089
    %4574 = vmatpush1.bf16.msra.mxu0 %v3088
    %4575 = vmatprep.subr.bf16.mxu0 %v3093
    %4576 = vmatpush1.bf16.msra.mxu0 %v3092
    %4577 = vmatprep.subr.bf16.mxu0 %v3097
    %4578 = vmatpush1.bf16.msra.mxu0 %v3096
    %4579 = vmatprep.subr.bf16.mxu0 %v3101
    %4580 = vmatpush1.bf16.msra.mxu0 %v3100
    %4581 = vmatprep.mubr.bf16.mxu0 %v256
    %4582 = vmatmul.mubr.bf16.gmra.mrb[0].mxu0 %v255
    %v4583 = vpop.f32.mrb[0].mxu0
    %v4584 = vadd.f32 %v4543, %v4583
    %v4585 = vpop.f32.mrb[0].mxu0
    %v4586 = vadd.f32 %v4545, %v4585
    %v4587 = vpop.f32.mrb[0].mxu0
    %v4588 = vpop.f32.mrb[0].mxu0
    %4589 = vdwg.mxu0
    %4590 = vmatprep.subr.bf16.mxu0 %v3105
    %4591 = vmatpush1.bf16.msra.mxu0 %v3104
    %4592 = vmatprep.subr.bf16.mxu0 %v3109
    %4593 = vmatpush1.bf16.msra.mxu0 %v3108
    %4594 = vmatprep.subr.bf16.mxu0 %v3113
    %4595 = vmatpush1.bf16.msra.mxu0 %v3112
    %4596 = vmatprep.subr.bf16.mxu0 %v3117
    %4597 = vmatpush1.bf16.msra.mxu0 %v3116
    %4598 = vmatprep.subr.bf16.mxu0 %v3121
    %4599 = vmatpush1.bf16.msra.mxu0 %v3120
    %4600 = vmatprep.subr.bf16.mxu0 %v3125
    %4601 = vmatpush1.bf16.msra.mxu0 %v3124
    %4602 = vmatprep.subr.bf16.mxu0 %v3129
    %4603 = vmatpush1.bf16.msra.mxu0 %v3128
    %4604 = vmatprep.subr.bf16.mxu0 %v3133
    %4605 = vmatpush1.bf16.msra.mxu0 %v3132
    %4606 = vmatprep.subr.bf16.mxu0 %v3137
    %4607 = vmatpush1.bf16.msra.mxu0 %v3136
    %4608 = vmatprep.subr.bf16.mxu0 %v3141
    %4609 = vmatpush1.bf16.msra.mxu0 %v3140
    %4610 = vmatprep.subr.bf16.mxu0 %v3145
    %4611 = vmatpush1.bf16.msra.mxu0 %v3144
    %4612 = vmatprep.subr.bf16.mxu0 %v3149
    %4613 = vmatpush1.bf16.msra.mxu0 %v3148
    %4614 = vmatprep.subr.bf16.mxu0 %v3153
    %4615 = vmatpush1.bf16.msra.mxu0 %v3152
    %4616 = vmatprep.subr.bf16.mxu0 %v3157
    %4617 = vmatpush1.bf16.msra.mxu0 %v3156
    %4618 = vmatprep.subr.bf16.mxu0 %v3161
    %4619 = vmatpush1.bf16.msra.mxu0 %v3160
    %4620 = vmatprep.subr.bf16.mxu0 %v3165
    %4621 = vmatpush1.bf16.msra.mxu0 %v3164
    %4622 = vmatprep.mubr.bf16.mxu0 %v258
    %4623 = vmatmul.mubr.bf16.gmra.mrb[0].mxu0 %v257
    %v4624 = vpop.f32.mrb[0].mxu0
    %v4625 = vadd.f32 %v4584, %v4624
    %v4626 = vpop.f32.mrb[0].mxu0
    %v4627 = vadd.f32 %v4586, %v4626
    %v4628 = vpop.f32.mrb[0].mxu0
    %v4629 = vpop.f32.mrb[0].mxu0
    %4630 = vdwg.mxu0
    %4631 = vmatprep.subr.bf16.mxu0 %v3169
    %4632 = vmatpush1.bf16.msra.mxu0 %v3168
    %4633 = vmatprep.subr.bf16.mxu0 %v3173
    %4634 = vmatpush1.bf16.msra.mxu0 %v3172
    %4635 = vmatprep.subr.bf16.mxu0 %v3177
    %4636 = vmatpush1.bf16.msra.mxu0 %v3176
    %4637 = vmatprep.subr.bf16.mxu0 %v3181
    %4638 = vmatpush1.bf16.msra.mxu0 %v3180
    %4639 = vmatprep.subr.bf16.mxu0 %v3185
    %4640 = vmatpush1.bf16.msra.mxu0 %v3184
    %4641 = vmatprep.subr.bf16.mxu0 %v3189
    %4642 = vmatpush1.bf16.msra.mxu0 %v3188
    %4643 = vmatprep.subr.bf16.mxu0 %v3193
    %4644 = vmatpush1.bf16.msra.mxu0 %v3192
    %4645 = vmatprep.subr.bf16.mxu0 %v3197
    %4646 = vmatpush1.bf16.msra.mxu0 %v3196
    %4647 = vmatprep.subr.bf16.mxu0 %v3201
    %4648 = vmatpush1.bf16.msra.mxu0 %v3200
    %4649 = vmatprep.subr.bf16.mxu0 %v3205
    %4650 = vmatpush1.bf16.msra.mxu0 %v3204
    %4651 = vmatprep.subr.bf16.mxu0 %v3209
    %4652 = vmatpush1.bf16.msra.mxu0 %v3208
    %4653 = vmatprep.subr.bf16.mxu0 %v3213
    %4654 = vmatpush1.bf16.msra.mxu0 %v3212
    %4655 = vmatprep.subr.bf16.mxu0 %v3217
    %4656 = vmatpush1.bf16.msra.mxu0 %v3216
    %4657 = vmatprep.subr.bf16.mxu0 %v3221
    %4658 = vmatpush1.bf16.msra.mxu0 %v3220
    %4659 = vmatprep.subr.bf16.mxu0 %v3225
    %4660 = vmatpush1.bf16.msra.mxu0 %v3224
    %4661 = vmatprep.subr.bf16.mxu0 %v3229
    %4662 = vmatpush1.bf16.msra.mxu0 %v3228
    %4663 = vmatprep.mubr.bf16.mxu0 %v260
    %4664 = vmatmul.mubr.bf16.gmra.mrb[0].mxu0 %v259
    %v4665 = vpop.f32.mrb[0].mxu0
    %v4666 = vadd.f32 %v4625, %v4665
    %v4667 = vpop.f32.mrb[0].mxu0
    %v4668 = vadd.f32 %v4627, %v4667
    %v4669 = vpop.f32.mrb[0].mxu0
    %v4670 = vpop.f32.mrb[0].mxu0
    %4671 = vdwg.mxu0
    %4672 = vmatprep.subr.bf16.mxu0 %v3233
    %4673 = vmatpush1.bf16.msra.mxu0 %v3232
    %4674 = vmatprep.subr.bf16.mxu0 %v3237
    %4675 = vmatpush1.bf16.msra.mxu0 %v3236
    %4676 = vmatprep.subr.bf16.mxu0 %v3241
    %4677 = vmatpush1.bf16.msra.mxu0 %v3240
    %4678 = vmatprep.subr.bf16.mxu0 %v3245
    %4679 = vmatpush1.bf16.msra.mxu0 %v3244
    %4680 = vmatprep.subr.bf16.mxu0 %v3249
    %4681 = vmatpush1.bf16.msra.mxu0 %v3248
    %4682 = vmatprep.subr.bf16.mxu0 %v3253
    %4683 = vmatpush1.bf16.msra.mxu0 %v3252
    %4684 = vmatprep.subr.bf16.mxu0 %v3257
    %4685 = vmatpush1.bf16.msra.mxu0 %v3256
    %4686 = vmatprep.subr.bf16.mxu0 %v3261
    %4687 = vmatpush1.bf16.msra.mxu0 %v3260
    %4688 = vmatprep.subr.bf16.mxu0 %v3265
    %4689 = vmatpush1.bf16.msra.mxu0 %v3264
    %4690 = vmatprep.subr.bf16.mxu0 %v3269
    %4691 = vmatpush1.bf16.msra.mxu0 %v3268
    %4692 = vmatprep.subr.bf16.mxu0 %v3273
    %4693 = vmatpush1.bf16.msra.mxu0 %v3272
    %4694 = vmatprep.subr.bf16.mxu0 %v3277
    %4695 = vmatpush1.bf16.msra.mxu0 %v3276
    %4696 = vmatprep.subr.bf16.mxu0 %v3281
    %4697 = vmatpush1.bf16.msra.mxu0 %v3280
    %4698 = vmatprep.subr.bf16.mxu0 %v3285
    %4699 = vmatpush1.bf16.msra.mxu0 %v3284
    %4700 = vmatprep.subr.bf16.mxu0 %v3289
    %4701 = vmatpush1.bf16.msra.mxu0 %v3288
    %4702 = vmatprep.subr.bf16.mxu0 %v3293
    %4703 = vmatpush1.bf16.msra.mxu0 %v3292
    %4704 = vmatprep.mubr.bf16.mxu0 %v262
    %4705 = vmatmul.mubr.bf16.gmra.mrb[0].mxu0 %v261
    %v4706 = vpop.f32.mrb[0].mxu0
    %v4707 = vadd.f32 %v4666, %v4706
    %v4708 = vpop.f32.mrb[0].mxu0
    %v4709 = vadd.f32 %v4668, %v4708
    %v4710 = vpop.f32.mrb[0].mxu0
    %v4711 = vpop.f32.mrb[0].mxu0
    %4712 = vdwg.mxu0
    %4713 = vmatprep.subr.bf16.mxu0 %v3297
    %4714 = vmatpush1.bf16.msra.mxu0 %v3296
    %4715 = vmatprep.subr.bf16.mxu0 %v3301
    %4716 = vmatpush1.bf16.msra.mxu0 %v3300
    %4717 = vmatprep.subr.bf16.mxu0 %v3305
    %4718 = vmatpush1.bf16.msra.mxu0 %v3304
    %4719 = vmatprep.subr.bf16.mxu0 %v3309
    %4720 = vmatpush1.bf16.msra.mxu0 %v3308
    %4721 = vmatprep.subr.bf16.mxu0 %v3313
    %4722 = vmatpush1.bf16.msra.mxu0 %v3312
    %4723 = vmatprep.subr.bf16.mxu0 %v3317
    %4724 = vmatpush1.bf16.msra.mxu0 %v3316
    %4725 = vmatprep.subr.bf16.mxu0 %v3321
    %4726 = vmatpush1.bf16.msra.mxu0 %v3320
    %4727 = vmatprep.subr.bf16.mxu0 %v3325
    %4728 = vmatpush1.bf16.msra.mxu0 %v3324
    %4729 = vmatprep.subr.bf16.mxu0 0
    %4730 = vmatpush1.bf16.msra.mxu0 0
    %4731 = vmatprep.subr.bf16.mxu0 0
    %4732 = vmatpush1.bf16.msra.mxu0 0
    %4733 = vmatprep.subr.bf16.mxu0 0
    %4734 = vmatpush1.bf16.msra.mxu0 0
    %4735 = vmatprep.subr.bf16.mxu0 0
    %4736 = vmatpush1.bf16.msra.mxu0 0
    %4737 = vmatprep.subr.bf16.mxu0 0
    %4738 = vmatpush1.bf16.msra.mxu0 0
    %4739 = vmatprep.subr.bf16.mxu0 0
    %4740 = vmatpush1.bf16.msra.mxu0 0
    %4741 = vmatprep.subr.bf16.mxu0 0
    %4742 = vmatpush1.bf16.msra.mxu0 0
    %4743 = vmatprep.subr.bf16.mxu0 0
    %4744 = vmatpush1.bf16.msra.mxu0 0
    %4745 = vmatprep.mubr.bf16.mxu0 0
    %4746 = vmatmul.mubr.bf16.gmra.mrb[0].mxu0 %v263
    %v4747 = vpop.f32.mrb[0].mxu0
    %v4748 = vadd.f32 %v4707, %v4747
    %v4749 = vpop.f32.mrb[0].mxu0
    %v4750 = vadd.f32 %v4709, %v4749
    %v4751 = vpop.f32.mrb[0].mxu0
    %v4752 = vpop.f32.mrb[0].mxu0
    %4753 = vdwg.mxu0
    %v4754 = vmax.f32 %v4338, 0.0
    %v4755 = vmax.f32 %v4340, 0.0
    %v4756 = vmax.f32 %v4748, 0.0
    %v4757 = vmax.f32 %v4750, 0.0
    %v4758 = vld [vmem:[#allocation10] sm:$0xff]
    %v4759 = vld [vmem:[#allocation10 + $0x8] sm:$0xff]
    %v4760 = vld [vmem:[#allocation10 + $0x10] sm:$0xff]
    %v4761 = vld [vmem:[#allocation10 + $0x18] sm:$0xff]
    %v4762 = vld [vmem:[#allocation10 + $0x20] sm:$0xff]
    %v4763 = vld [vmem:[#allocation10 + $0x28] sm:$0xff]
    %v4764 = vld [vmem:[#allocation10 + $0x30] sm:$0xff]
    %v4765 = vld [vmem:[#allocation10 + $0x38] sm:$0xff]
    %v4766 = vld [vmem:[#allocation10 + $0x40] sm:$0xff]
    %v4767 = vld [vmem:[#allocation10 + $0x48] sm:$0xff]
    %v4768 = vld [vmem:[#allocation10 + $0x50] sm:$0xff]
    %v4769 = vld [vmem:[#allocation10 + $0x58] sm:$0xff]
    %v4770 = vld [vmem:[#allocation10 + $0x60] sm:$0xff]
    %v4771 = vld [vmem:[#allocation10 + $0x68] sm:$0xff]
    %v4772 = vld [vmem:[#allocation10 + $0x70] sm:$0xff]
    %v4773 = vld [vmem:[#allocation10 + $0x78] sm:$0xff]
    %v4774 = vld [vmem:[#allocation10 + $0x80] sm:$0xff]
    %v4775 = vld [vmem:[#allocation10 + $0x88] sm:$0xff]
    %v4776 = vld [vmem:[#allocation10 + $0x90] sm:$0xff]
    %v4777 = vld [vmem:[#allocation10 + $0x98] sm:$0xff]
    %v4778 = vld [vmem:[#allocation10 + $0xa0] sm:$0xff]
    %v4779 = vld [vmem:[#allocation10 + $0xa8] sm:$0xff]
    %v4780 = vld [vmem:[#allocation10 + $0xb0] sm:$0xff]
    %v4781 = vld [vmem:[#allocation10 + $0xb8] sm:$0xff]
    %v4782 = vld [vmem:[#allocation10 + $0xc0] sm:$0xff]
    %v4783 = vld [vmem:[#allocation10 + $0xc8] sm:$0xff]
    %v4784 = vld [vmem:[#allocation10 + $0xd0] sm:$0xff]
    %v4785 = vld [vmem:[#allocation10 + $0xd8] sm:$0xff]
    %v4786 = vld [vmem:[#allocation10 + $0xe0] sm:$0xff]
    %v4787 = vld [vmem:[#allocation10 + $0xe8] sm:$0xff]
    %v4788 = vld [vmem:[#allocation10 + $0xf0] sm:$0xff]
    %v4789 = vld [vmem:[#allocation10 + $0xf8] sm:$0xff]
    %v4790 = vld [vmem:[#allocation10 + $0x100] sm:$0xff]
    %v4791 = vld [vmem:[#allocation10 + $0x108] sm:$0xff]
    %v4792 = vld [vmem:[#allocation10 + $0x110] sm:$0xff]
    %v4793 = vld [vmem:[#allocation10 + $0x118] sm:$0xff]
    %v4794 = vld [vmem:[#allocation10 + $0x120] sm:$0xff]
    %v4795 = vld [vmem:[#allocation10 + $0x128] sm:$0xff]
    %v4796 = vld [vmem:[#allocation10 + $0x130] sm:$0xff]
    %v4797 = vld [vmem:[#allocation10 + $0x138] sm:$0xff]
    %v4798 = vld [vmem:[#allocation10 + $0x140] sm:$0xff]
    %v4799 = vld [vmem:[#allocation10 + $0x148] sm:$0xff]
    %v4800 = vld [vmem:[#allocation10 + $0x150] sm:$0xff]
    %v4801 = vld [vmem:[#allocation10 + $0x158] sm:$0xff]
    %v4802 = vld [vmem:[#allocation10 + $0x160] sm:$0xff]
    %v4803 = vld [vmem:[#allocation10 + $0x168] sm:$0xff]
    %v4804 = vld [vmem:[#allocation10 + $0x170] sm:$0xff]
    %v4805 = vld [vmem:[#allocation10 + $0x178] sm:$0xff]
    %v4806 = vld [vmem:[#allocation10 + $0x180] sm:$0xff]
    %v4807 = vld [vmem:[#allocation10 + $0x188] sm:$0xff]
    %v4808 = vld [vmem:[#allocation10 + $0x190] sm:$0xff]
    %v4809 = vld [vmem:[#allocation10 + $0x198] sm:$0xff]
    %v4810 = vld [vmem:[#allocation10 + $0x1a0] sm:$0xff]
    %v4811 = vld [vmem:[#allocation10 + $0x1a8] sm:$0xff]
    %v4812 = vld [vmem:[#allocation10 + $0x1b0] sm:$0xff]
    %v4813 = vld [vmem:[#allocation10 + $0x1b8] sm:$0xff]
    %v4814 = vld [vmem:[#allocation10 + $0x1c0] sm:$0xff]
    %v4815 = vld [vmem:[#allocation10 + $0x1c8] sm:$0xff]
    %v4816 = vld [vmem:[#allocation10 + $0x1d0] sm:$0xff]
    %v4817 = vld [vmem:[#allocation10 + $0x1d8] sm:$0xff]
    %v4818 = vld [vmem:[#allocation10 + $0x1e0] sm:$0xff]
    %v4819 = vld [vmem:[#allocation10 + $0x1e8] sm:$0xff]
    %v4820 = vld [vmem:[#allocation10 + $0x1f0] sm:$0xff]
    %v4821 = vld [vmem:[#allocation10 + $0x1f8] sm:$0xff]
    %v4822 = vld [vmem:[#allocation10 + $0x200] sm:$0xff]
    %v4823 = vld [vmem:[#allocation10 + $0x208] sm:$0xff]
    %v4824 = vld [vmem:[#allocation10 + $0x210] sm:$0xff]
    %v4825 = vld [vmem:[#allocation10 + $0x218] sm:$0xff]
    %v4826 = vld [vmem:[#allocation10 + $0x220] sm:$0xff]
    %v4827 = vld [vmem:[#allocation10 + $0x228] sm:$0xff]
    %v4828 = vld [vmem:[#allocation10 + $0x230] sm:$0xff]
    %v4829 = vld [vmem:[#allocation10 + $0x238] sm:$0xff]
    %v4830 = vld [vmem:[#allocation10 + $0x240] sm:$0xff]
    %v4831 = vld [vmem:[#allocation10 + $0x248] sm:$0xff]
    %v4832 = vld [vmem:[#allocation10 + $0x250] sm:$0xff]
    %v4833 = vld [vmem:[#allocation10 + $0x258] sm:$0xff]
    %v4834 = vld [vmem:[#allocation10 + $0x260] sm:$0xff]
    %v4835 = vld [vmem:[#allocation10 + $0x268] sm:$0xff]
    %v4836 = vld [vmem:[#allocation10 + $0x270] sm:$0xff]
    %v4837 = vld [vmem:[#allocation10 + $0x278] sm:$0xff]
    %v4838 = vld [vmem:[#allocation10 + $0x280] sm:$0xff]
    %v4839 = vld [vmem:[#allocation10 + $0x288] sm:$0xff]
    %v4840 = vld [vmem:[#allocation10 + $0x290] sm:$0xff]
    %v4841 = vld [vmem:[#allocation10 + $0x298] sm:$0xff]
    %v4842 = vld [vmem:[#allocation10 + $0x2a0] sm:$0xff]
    %v4843 = vld [vmem:[#allocation10 + $0x2a8] sm:$0xff]
    %v4844 = vld [vmem:[#allocation10 + $0x2b0] sm:$0xff]
    %v4845 = vld [vmem:[#allocation10 + $0x2b8] sm:$0xff]
    %v4846 = vld [vmem:[#allocation10 + $0x2c0] sm:$0xff]
    %v4847 = vld [vmem:[#allocation10 + $0x2c8] sm:$0xff]
    %v4848 = vld [vmem:[#allocation10 + $0x2d0] sm:$0xff]
    %v4849 = vld [vmem:[#allocation10 + $0x2d8] sm:$0xff]
    %v4850 = vld [vmem:[#allocation10 + $0x2e0] sm:$0xff]
    %v4851 = vld [vmem:[#allocation10 + $0x2e8] sm:$0xff]
    %v4852 = vld [vmem:[#allocation10 + $0x2f0] sm:$0xff]
    %v4853 = vld [vmem:[#allocation10 + $0x2f8] sm:$0xff]
    %v4854 = vld [vmem:[#allocation10 + $0x300] sm:$0xff]
    %v4855 = vld [vmem:[#allocation10 + $0x308] sm:$0xff]
    %v4856 = vld [vmem:[#allocation10 + $0x310] sm:$0xff]
    %v4857 = vld [vmem:[#allocation10 + $0x318] sm:$0xff]
    %v4858 = vld [vmem:[#allocation10 + $0x320] sm:$0xff]
    %v4859 = vld [vmem:[#allocation10 + $0x328] sm:$0xff]
    %v4860 = vld [vmem:[#allocation10 + $0x330] sm:$0xff]
    %v4861 = vld [vmem:[#allocation10 + $0x338] sm:$0xff]
    %v4862 = vld [vmem:[#allocation10 + $0x340] sm:$0xff]
    %v4863 = vld [vmem:[#allocation10 + $0x348] sm:$0xff]
    %v4864 = vld [vmem:[#allocation10 + $0x350] sm:$0xff]
    %v4865 = vld [vmem:[#allocation10 + $0x358] sm:$0xff]
    %v4866 = vld [vmem:[#allocation10 + $0x360] sm:$0xff]
    %v4867 = vld [vmem:[#allocation10 + $0x368] sm:$0xff]
    %v4868 = vld [vmem:[#allocation10 + $0x370] sm:$0xff]
    %v4869 = vld [vmem:[#allocation10 + $0x378] sm:$0xff]
    %v4870 = vld [vmem:[#allocation10 + $0x380] sm:$0xff]
    %v4871 = vld [vmem:[#allocation10 + $0x388] sm:$0xff]
    %v4872 = vld [vmem:[#allocation10 + $0x390] sm:$0xff]
    %v4873 = vld [vmem:[#allocation10 + $0x398] sm:$0xff]
    %v4874 = vld [vmem:[#allocation10 + $0x3a0] sm:$0xff]
    %v4875 = vld [vmem:[#allocation10 + $0x3a8] sm:$0xff]
    %v4876 = vld [vmem:[#allocation10 + $0x3b0] sm:$0xff]
    %v4877 = vld [vmem:[#allocation10 + $0x3b8] sm:$0xff]
    %v4878 = vld [vmem:[#allocation10 + $0x3c0] sm:$0xff]
    %v4879 = vld [vmem:[#allocation10 + $0x3c8] sm:$0xff]
    %v4880 = vld [vmem:[#allocation10 + $0x3d0] sm:$0xff]
    %v4881 = vld [vmem:[#allocation10 + $0x3d8] sm:$0xff]
    %v4882 = vld [vmem:[#allocation10 + $0x3e0] sm:$0xff]
    %v4883 = vld [vmem:[#allocation10 + $0x3e8] sm:$0xff]
    %v4884 = vld [vmem:[#allocation10 + $0x3f0] sm:$0xff]
    %v4885 = vld [vmem:[#allocation10 + $0x3f8] sm:$0xff]
    %v4886 = vld [vmem:[#allocation11] sm:$0x3]
    %v4888 = vlaneseq
    %v4889 = vshrl.u32 %v4888, 7
    %v4890 = vsub.s32 0, %v4889
    %v4891 = vrot.slane %v4886, %v4890
    %v4892 = vlaneseq
    %v4893 = vshrl.u32 %v4892, 7
    %v4894 = vsub.s32 1, %v4893
    %v4895 = vrot.slane %v4886, %v4894
    %4898 = vmatprep.subr.mxu0 %v4759
    %4899 = vmatpush1.msra.mxu0 %v4758
    %4900 = vmatprep.subr.mxu0 %v4761
    %4901 = vmatpush1.msra.mxu0 %v4760
    %4902 = vmatprep.subr.mxu0 %v4763
    %4903 = vmatpush1.msra.mxu0 %v4762
    %4904 = vmatprep.subr.mxu0 %v4765
    %4905 = vmatpush1.msra.mxu0 %v4764
    %4906 = vmatprep.subr.mxu0 %v4767
    %4907 = vmatpush1.msra.mxu0 %v4766
    %4908 = vmatprep.subr.mxu0 %v4769
    %4909 = vmatpush1.msra.mxu0 %v4768
    %4910 = vmatprep.subr.mxu0 %v4771
    %4911 = vmatpush1.msra.mxu0 %v4770
    %4912 = vmatprep.subr.mxu0 %v4773
    %4913 = vmatpush1.msra.mxu0 %v4772
    %4914 = vmatprep.subr.mxu0 %v4775
    %4915 = vmatpush1.msra.mxu0 %v4774
    %4916 = vmatprep.subr.mxu0 %v4777
    %4917 = vmatpush1.msra.mxu0 %v4776
    %4918 = vmatprep.subr.mxu0 %v4779
    %4919 = vmatpush1.msra.mxu0 %v4778
    %4920 = vmatprep.subr.mxu0 %v4781
    %4921 = vmatpush1.msra.mxu0 %v4780
    %4922 = vmatprep.subr.mxu0 %v4783
    %4923 = vmatpush1.msra.mxu0 %v4782
    %4924 = vmatprep.subr.mxu0 %v4785
    %4925 = vmatpush1.msra.mxu0 %v4784
    %4926 = vmatprep.subr.mxu0 %v4787
    %4927 = vmatpush1.msra.mxu0 %v4786
    %4928 = vmatprep.subr.mxu0 %v4789
    %4929 = vmatpush1.msra.mxu0 %v4788
    %4930 = vmatprep.subr.mxu0 %v4791
    %4931 = vmatpush1.msra.mxu0 %v4790
    %4932 = vmatprep.subr.mxu0 %v4793
    %4933 = vmatpush1.msra.mxu0 %v4792
    %4934 = vmatprep.subr.mxu0 %v4795
    %4935 = vmatpush1.msra.mxu0 %v4794
    %4936 = vmatprep.subr.mxu0 %v4797
    %4937 = vmatpush1.msra.mxu0 %v4796
    %4938 = vmatprep.subr.mxu0 %v4799
    %4939 = vmatpush1.msra.mxu0 %v4798
    %4940 = vmatprep.subr.mxu0 %v4801
    %4941 = vmatpush1.msra.mxu0 %v4800
    %4942 = vmatprep.subr.mxu0 %v4803
    %4943 = vmatpush1.msra.mxu0 %v4802
    %4944 = vmatprep.subr.mxu0 %v4805
    %4945 = vmatpush1.msra.mxu0 %v4804
    %4946 = vmatprep.subr.mxu0 %v4807
    %4947 = vmatpush1.msra.mxu0 %v4806
    %4948 = vmatprep.subr.mxu0 %v4809
    %4949 = vmatpush1.msra.mxu0 %v4808
    %4950 = vmatprep.subr.mxu0 %v4811
    %4951 = vmatpush1.msra.mxu0 %v4810
    %4952 = vmatprep.subr.mxu0 %v4813
    %4953 = vmatpush1.msra.mxu0 %v4812
    %4954 = vmatprep.subr.mxu0 %v4815
    %4955 = vmatpush1.msra.mxu0 %v4814
    %4956 = vmatprep.subr.mxu0 %v4817
    %4957 = vmatpush1.msra.mxu0 %v4816
    %4958 = vmatprep.subr.mxu0 %v4819
    %4959 = vmatpush1.msra.mxu0 %v4818
    %4960 = vmatprep.subr.mxu0 %v4821
    %4961 = vmatpush1.msra.mxu0 %v4820
    %4962 = vmatprep.mubr.f32.mxu0 %v4755
    %4963 = vmatmul.mubr.f32.gmra.mrb[0].mxu0 %v4754
    %v4964 = vpop.f32.mrb[0].mxu0
    %v4965 = vadd.f32 %v4891, %v4964
    %v4966 = vpop.f32.mrb[0].mxu0
    %v4967 = vadd.f32 %v4895, %v4966
    %4968 = vdwg.mxu0
    %4969 = vmatprep.subr.mxu0 %v4823
    %4970 = vmatpush1.msra.mxu0 %v4822
    %4971 = vmatprep.subr.mxu0 %v4825
    %4972 = vmatpush1.msra.mxu0 %v4824
    %4973 = vmatprep.subr.mxu0 %v4827
    %4974 = vmatpush1.msra.mxu0 %v4826
    %4975 = vmatprep.subr.mxu0 %v4829
    %4976 = vmatpush1.msra.mxu0 %v4828
    %4977 = vmatprep.subr.mxu0 %v4831
    %4978 = vmatpush1.msra.mxu0 %v4830
    %4979 = vmatprep.subr.mxu0 %v4833
    %4980 = vmatpush1.msra.mxu0 %v4832
    %4981 = vmatprep.subr.mxu0 %v4835
    %4982 = vmatpush1.msra.mxu0 %v4834
    %4983 = vmatprep.subr.mxu0 %v4837
    %4984 = vmatpush1.msra.mxu0 %v4836
    %4985 = vmatprep.subr.mxu0 %v4839
    %4986 = vmatpush1.msra.mxu0 %v4838
    %4987 = vmatprep.subr.mxu0 %v4841
    %4988 = vmatpush1.msra.mxu0 %v4840
    %4989 = vmatprep.subr.mxu0 %v4843
    %4990 = vmatpush1.msra.mxu0 %v4842
    %4991 = vmatprep.subr.mxu0 %v4845
    %4992 = vmatpush1.msra.mxu0 %v4844
    %4993 = vmatprep.subr.mxu0 %v4847
    %4994 = vmatpush1.msra.mxu0 %v4846
    %4995 = vmatprep.subr.mxu0 %v4849
    %4996 = vmatpush1.msra.mxu0 %v4848
    %4997 = vmatprep.subr.mxu0 %v4851
    %4998 = vmatpush1.msra.mxu0 %v4850
    %4999 = vmatprep.subr.mxu0 %v4853
    %5000 = vmatpush1.msra.mxu0 %v4852
    %5001 = vmatprep.subr.mxu0 %v4855
    %5002 = vmatpush1.msra.mxu0 %v4854
    %5003 = vmatprep.subr.mxu0 %v4857
    %5004 = vmatpush1.msra.mxu0 %v4856
    %5005 = vmatprep.subr.mxu0 %v4859
    %5006 = vmatpush1.msra.mxu0 %v4858
    %5007 = vmatprep.subr.mxu0 %v4861
    %5008 = vmatpush1.msra.mxu0 %v4860
    %5009 = vmatprep.subr.mxu0 %v4863
    %5010 = vmatpush1.msra.mxu0 %v4862
    %5011 = vmatprep.subr.mxu0 %v4865
    %5012 = vmatpush1.msra.mxu0 %v4864
    %5013 = vmatprep.subr.mxu0 %v4867
    %5014 = vmatpush1.msra.mxu0 %v4866
    %5015 = vmatprep.subr.mxu0 %v4869
    %5016 = vmatpush1.msra.mxu0 %v4868
    %5017 = vmatprep.subr.mxu0 %v4871
    %5018 = vmatpush1.msra.mxu0 %v4870
    %5019 = vmatprep.subr.mxu0 %v4873
    %5020 = vmatpush1.msra.mxu0 %v4872
    %5021 = vmatprep.subr.mxu0 %v4875
    %5022 = vmatpush1.msra.mxu0 %v4874
    %5023 = vmatprep.subr.mxu0 %v4877
    %5024 = vmatpush1.msra.mxu0 %v4876
    %5025 = vmatprep.subr.mxu0 %v4879
    %5026 = vmatpush1.msra.mxu0 %v4878
    %5027 = vmatprep.subr.mxu0 %v4881
    %5028 = vmatpush1.msra.mxu0 %v4880
    %5029 = vmatprep.subr.mxu0 %v4883
    %5030 = vmatpush1.msra.mxu0 %v4882
    %5031 = vmatprep.subr.mxu0 %v4885
    %5032 = vmatpush1.msra.mxu0 %v4884
    %5033 = vmatprep.mubr.f32.mxu0 %v4757
    %5034 = vmatmul.mubr.f32.gmra.mrb[0].mxu0 %v4756
    %v5035 = vpop.f32.mrb[0].mxu0
    %v5036 = vadd.f32 %v4965, %v5035
    %v5037 = vpop.f32.mrb[0].mxu0
    %v5038 = vadd.f32 %v4967, %v5037
    %5039 = vdwg.mxu0
    %v5040 = vmax.f32 %v5036, 0.0
    %v5041 = vmax.f32 %v5038, 0.0
    %v5042 = vld [vmem:[#allocation13] sm:$0xff]
    %v5043 = vld [vmem:[#allocation13 + $0x8] sm:$0xff]
    %v5044 = vld [vmem:[#allocation13 + $0x10] sm:$0xff]
    %v5045 = vld [vmem:[#allocation13 + $0x18] sm:$0xff]
    %v5046 = vld [vmem:[#allocation13 + $0x20] sm:$0xff]
    %v5047 = vld [vmem:[#allocation13 + $0x28] sm:$0xff]
    %v5048 = vld [vmem:[#allocation13 + $0x30] sm:$0xff]
    %v5049 = vld [vmem:[#allocation13 + $0x38] sm:$0xff]
    %v5050 = vld [vmem:[#allocation13 + $0x40] sm:$0xff]
    %v5051 = vld [vmem:[#allocation13 + $0x48] sm:$0xff]
    %v5052 = vld [vmem:[#allocation13 + $0x50] sm:$0xff]
    %v5053 = vld [vmem:[#allocation13 + $0x58] sm:$0xff]
    %v5054 = vld [vmem:[#allocation13 + $0x60] sm:$0xff]
    %v5055 = vld [vmem:[#allocation13 + $0x68] sm:$0xff]
    %v5056 = vld [vmem:[#allocation13 + $0x70] sm:$0xff]
    %v5057 = vld [vmem:[#allocation13 + $0x78] sm:$0xff]
    %v5058 = vld [vmem:[#allocation13 + $0x80] sm:$0xff]
    %v5059 = vld [vmem:[#allocation13 + $0x88] sm:$0xff]
    %v5060 = vld [vmem:[#allocation13 + $0x90] sm:$0xff]
    %v5061 = vld [vmem:[#allocation13 + $0x98] sm:$0xff]
    %v5062 = vld [vmem:[#allocation13 + $0xa0] sm:$0xff]
    %v5063 = vld [vmem:[#allocation13 + $0xa8] sm:$0xff]
    %v5064 = vld [vmem:[#allocation13 + $0xb0] sm:$0xff]
    %v5065 = vld [vmem:[#allocation13 + $0xb8] sm:$0xff]
    %v5066 = vld [vmem:[#allocation13 + $0xc0] sm:$0xff]
    %v5067 = vld [vmem:[#allocation13 + $0xc8] sm:$0xff]
    %v5068 = vld [vmem:[#allocation13 + $0xd0] sm:$0xff]
    %v5069 = vld [vmem:[#allocation13 + $0xd8] sm:$0xff]
    %v5070 = vld [vmem:[#allocation13 + $0xe0] sm:$0xff]
    %v5071 = vld [vmem:[#allocation13 + $0xe8] sm:$0xff]
    %v5072 = vld [vmem:[#allocation13 + $0xf0] sm:$0xff]
    %v5073 = vld [vmem:[#allocation13 + $0xf8] sm:$0xff]
    %v5074 = vld [vmem:[#allocation14] sm:$0x1]
    %v5076 = vlaneseq
    %v5077 = vshrl.u32 %v5076, 7
    %v5078 = vsub.s32 0, %v5077
    %v5079 = vrot.slane %v5074, %v5078
    %5081 = vmatprep.subr.mxu0 0.0
    %5082 = vmatpush1.msra.mxu0 %v5042
    %5083 = vmatprep.subr.mxu0 0.0
    %5084 = vmatpush1.msra.mxu0 %v5043
    %5085 = vmatprep.subr.mxu0 0.0
    %5086 = vmatpush1.msra.mxu0 %v5044
    %5087 = vmatprep.subr.mxu0 0.0
    %5088 = vmatpush1.msra.mxu0 %v5045
    %5089 = vmatprep.subr.mxu0 0.0
    %5090 = vmatpush1.msra.mxu0 %v5046
    %5091 = vmatprep.subr.mxu0 0.0
    %5092 = vmatpush1.msra.mxu0 %v5047
    %5093 = vmatprep.subr.mxu0 0.0
    %5094 = vmatpush1.msra.mxu0 %v5048
    %5095 = vmatprep.subr.mxu0 0.0
    %5096 = vmatpush1.msra.mxu0 %v5049
    %5097 = vmatprep.subr.mxu0 0.0
    %5098 = vmatpush1.msra.mxu0 %v5050
    %5099 = vmatprep.subr.mxu0 0.0
    %5100 = vmatpush1.msra.mxu0 %v5051
    %5101 = vmatprep.subr.mxu0 0.0
    %5102 = vmatpush1.msra.mxu0 %v5052
    %5103 = vmatprep.subr.mxu0 0.0
    %5104 = vmatpush1.msra.mxu0 %v5053
    %5105 = vmatprep.subr.mxu0 0.0
    %5106 = vmatpush1.msra.mxu0 %v5054
    %5107 = vmatprep.subr.mxu0 0.0
    %5108 = vmatpush1.msra.mxu0 %v5055
    %5109 = vmatprep.subr.mxu0 0.0
    %5110 = vmatpush1.msra.mxu0 %v5056
    %5111 = vmatprep.subr.mxu0 0.0
    %5112 = vmatpush1.msra.mxu0 %v5057
    %5113 = vmatprep.subr.mxu0 0.0
    %5114 = vmatpush1.msra.mxu0 %v5058
    %5115 = vmatprep.subr.mxu0 0.0
    %5116 = vmatpush1.msra.mxu0 %v5059
    %5117 = vmatprep.subr.mxu0 0.0
    %5118 = vmatpush1.msra.mxu0 %v5060
    %5119 = vmatprep.subr.mxu0 0.0
    %5120 = vmatpush1.msra.mxu0 %v5061
    %5121 = vmatprep.subr.mxu0 0.0
    %5122 = vmatpush1.msra.mxu0 %v5062
    %5123 = vmatprep.subr.mxu0 0.0
    %5124 = vmatpush1.msra.mxu0 %v5063
    %5125 = vmatprep.subr.mxu0 0.0
    %5126 = vmatpush1.msra.mxu0 %v5064
    %5127 = vmatprep.subr.mxu0 0.0
    %5128 = vmatpush1.msra.mxu0 %v5065
    %5129 = vmatprep.subr.mxu0 0.0
    %5130 = vmatpush1.msra.mxu0 %v5066
    %5131 = vmatprep.subr.mxu0 0.0
    %5132 = vmatpush1.msra.mxu0 %v5067
    %5133 = vmatprep.subr.mxu0 0.0
    %5134 = vmatpush1.msra.mxu0 %v5068
    %5135 = vmatprep.subr.mxu0 0.0
    %5136 = vmatpush1.msra.mxu0 %v5069
    %5137 = vmatprep.subr.mxu0 0.0
    %5138 = vmatpush1.msra.mxu0 %v5070
    %5139 = vmatprep.subr.mxu0 0.0
    %5140 = vmatpush1.msra.mxu0 %v5071
    %5141 = vmatprep.subr.mxu0 0.0
    %5142 = vmatpush1.msra.mxu0 %v5072
    %5143 = vmatprep.subr.mxu0 0.0
    %5144 = vmatpush1.msra.mxu0 %v5073
    %5145 = vmatprep.mubr.f32.mxu0 %v5041
    %5146 = vmatmul.mubr.f32.gmra.mrb[0].mxu0 %v5040
    %v5147 = vpop.f32.mrb[0].mxu0
    %v5148 = vadd.f32 %v5079, %v5147
    %v5149 = vpop.f32.mrb[0].mxu0
    %5150 = vdwg.mxu0
    %v5151 = vmax.f32 %v5148, 0.0
    %v5152 = vlaneseq
    %v5153 = vand.u32 %v5152, 127
    %v5154 = vld [vmem:[#allocation5] sm:$0xff]
    %v5155 = vadd.f32 %v5151, %v5154
    %vm5156 = vcmp.ge.s32.totalorder %v5153, 0
    %vm5157 = vcmp.lt.s32.totalorder %v5153, 20
    %vm5158 = vmand %vm5156, %vm5157
    %v5159 = vsel %vm5158, %v5155, -inf
    %5160 = vmax.xlane.f32.xlu0 %v5159
    %v5161 = vpop.xlane.xlu0 %5160
    %v5162 = vsub.f32 %v5155, %v5161
    %v5163 = vmul.f32 %v5162, 1.442695
    %v5164 = vpow.pop %v5163
    %v5165 = vsel %vm5158, %v5164, 0.0
    %5166 = vadd.xlane.f32.xlu0 %v5165
    %v5167 = vpop.xlane.xlu0 %5166
    %v5168 = vrcp.pop %v5167
    %v5169 = vmul.f32 %v5165, %v5168
    %v5170 = vsel %vm5158, %v5169, 0.0
    %v5171 = vadd.f32 %v5170, 0.0
    %vm5172 = vcmp.ge.s32.totalorder %v5153, 20
    %vm5173 = vcmp.lt.s32.totalorder %v5153, 40
    %vm5174 = vmand %vm5172, %vm5173
    %v5175 = vsel %vm5174, %v5155, -inf
    %5176 = vmax.xlane.f32.xlu0 %v5175
    %v5177 = vpop.xlane.xlu0 %5176
    %v5178 = vsub.f32 %v5155, %v5177
    %v5179 = vmul.f32 %v5178, 1.442695
    %v5180 = vpow.pop %v5179
    %v5181 = vsel %vm5174, %v5180, 0.0
    %5182 = vadd.xlane.f32.xlu0 %v5181
    %v5183 = vpop.xlane.xlu0 %5182
    %v5184 = vrcp.pop %v5183
    %v5185 = vmul.f32 %v5181, %v5184
    %v5186 = vsel %vm5174, %v5185, 0.0
    %v5187 = vadd.f32 %v5171, %v5186
    %vm5188 = vcmp.ge.s32.totalorder %v5153, 40
    %vm5189 = vcmp.lt.s32.totalorder %v5153, 60
    %vm5190 = vmand %vm5188, %vm5189
    %v5191 = vsel %vm5190, %v5155, -inf
    %5192 = vmax.xlane.f32.xlu0 %v5191
    %v5193 = vpop.xlane.xlu0 %5192
    %v5194 = vsub.f32 %v5155, %v5193
    %v5195 = vmul.f32 %v5194, 1.442695
    %v5196 = vpow.pop %v5195
    %v5197 = vsel %vm5190, %v5196, 0.0
    %5198 = vadd.xlane.f32.xlu0 %v5197
    %v5199 = vpop.xlane.xlu0 %5198
    %v5200 = vrcp.pop %v5199
    %v5201 = vmul.f32 %v5197, %v5200
    %v5202 = vsel %vm5190, %v5201, 0.0
    %v5203 = vadd.f32 %v5187, %v5202
    %v5204 = vsel %vm5158, %v5151, -inf
    %5205 = vmax.xlane.f32.xlu0 %v5204
    %v5206 = vpop.xlane.xlu0 %5205
    %v5207 = vsub.f32 %v5151, %v5206
    %v5208 = vmul.f32 %v5207, 1.442695
    %v5209 = vpow.pop %v5208
    %v5210 = vsel %vm5158, %v5209, 0.0
    %5211 = vadd.xlane.f32.xlu0 %v5210
    %v5212 = vpop.xlane.xlu0 %5211
    %v5213 = vrcp.pop %v5212
    %v5214 = vmul.f32 %v5210, %v5213
    %v5215 = vsel %vm5158, %v5214, 0.0
    %v5216 = vadd.f32 %v5215, 0.0
    %v5217 = vsel %vm5174, %v5151, -inf
    %5218 = vmax.xlane.f32.xlu0 %v5217
    %v5219 = vpop.xlane.xlu0 %5218
    %v5220 = vsub.f32 %v5151, %v5219
    %v5221 = vmul.f32 %v5220, 1.442695
    %v5222 = vpow.pop %v5221
    %v5223 = vsel %vm5174, %v5222, 0.0
    %5224 = vadd.xlane.f32.xlu0 %v5223
    %v5225 = vpop.xlane.xlu0 %5224
    %v5226 = vrcp.pop %v5225
    %v5227 = vmul.f32 %v5223, %v5226
    %v5228 = vsel %vm5174, %v5227, 0.0
    %v5229 = vadd.f32 %v5216, %v5228
    %v5230 = vsel %vm5190, %v5151, -inf
    %5231 = vmax.xlane.f32.xlu0 %v5230
    %v5232 = vpop.xlane.xlu0 %5231
    %v5233 = vsub.f32 %v5151, %v5232
    %v5234 = vmul.f32 %v5233, 1.442695
    %v5235 = vpow.pop %v5234
    %v5236 = vsel %vm5190, %v5235, 0.0
    %5237 = vadd.xlane.f32.xlu0 %v5236
    %v5238 = vpop.xlane.xlu0 %5237
    %v5239 = vrcp.pop %v5238
    %v5240 = vmul.f32 %v5236, %v5239
    %v5241 = vsel %vm5190, %v5240, 0.0
    %v5242 = vadd.f32 %v5229, %v5241
    %5243 = vst [vmem:[#allocation26] sm:$0xff] %v5242
    %v5244 = vld [vmem:[#allocation16] sm:$0xff]
    %v5245 = vld [vmem:[#allocation16 + $0x8] sm:$0xff]
    %v5246 = vld [vmem:[#allocation16 + $0x10] sm:$0xff]
    %v5247 = vld [vmem:[#allocation16 + $0x18] sm:$0xff]
    %v5248 = vld [vmem:[#allocation16 + $0x20] sm:$0xff]
    %v5249 = vld [vmem:[#allocation16 + $0x28] sm:$0xff]
    %v5250 = vld [vmem:[#allocation16 + $0x30] sm:$0xff]
    %v5251 = vld [vmem:[#allocation16 + $0x38] sm:$0xff]
    %v5252 = vld [vmem:[#allocation16 + $0x40] sm:$0xff]
    %v5253 = vld [vmem:[#allocation16 + $0x48] sm:$0xff]
    %v5254 = vld [vmem:[#allocation16 + $0x50] sm:$0xff]
    %v5255 = vld [vmem:[#allocation16 + $0x58] sm:$0xff]
    %v5256 = vld [vmem:[#allocation16 + $0x60] sm:$0xff]
    %v5257 = vld [vmem:[#allocation16 + $0x68] sm:$0xff]
    %v5258 = vld [vmem:[#allocation16 + $0x70] sm:$0xff]
    %v5259 = vld [vmem:[#allocation16 + $0x78] sm:$0xff]
    %v5260 = vld [vmem:[#allocation16 + $0x80] sm:$0xff]
    %v5261 = vld [vmem:[#allocation16 + $0x88] sm:$0xff]
    %v5262 = vld [vmem:[#allocation16 + $0x90] sm:$0xff]
    %v5263 = vld [vmem:[#allocation16 + $0x98] sm:$0xff]
    %v5264 = vld [vmem:[#allocation16 + $0xa0] sm:$0xff]
    %v5265 = vld [vmem:[#allocation16 + $0xa8] sm:$0xff]
    %v5266 = vld [vmem:[#allocation16 + $0xb0] sm:$0xff]
    %v5267 = vld [vmem:[#allocation16 + $0xb8] sm:$0xff]
    %v5268 = vld [vmem:[#allocation16 + $0xc0] sm:$0xff]
    %v5269 = vld [vmem:[#allocation16 + $0xc8] sm:$0xff]
    %v5270 = vld [vmem:[#allocation16 + $0xd0] sm:$0xff]
    %v5271 = vld [vmem:[#allocation16 + $0xd8] sm:$0xff]
    %v5272 = vld [vmem:[#allocation16 + $0xe0] sm:$0xff]
    %v5273 = vld [vmem:[#allocation16 + $0xe8] sm:$0xff]
    %v5274 = vld [vmem:[#allocation16 + $0xf0] sm:$0xff]
    %v5275 = vld [vmem:[#allocation16 + $0xf8] sm:$0xff]
    %v5276 = vld [vmem:[#allocation17] sm:$0x3]
    %v5278 = vlaneseq
    %v5279 = vshrl.u32 %v5278, 7
    %v5280 = vsub.s32 0, %v5279
    %v5281 = vrot.slane %v5276, %v5280
    %v5282 = vlaneseq
    %v5283 = vshrl.u32 %v5282, 7
    %v5284 = vsub.s32 1, %v5283
    %v5285 = vrot.slane %v5276, %v5284
    %5288 = vmatprep.subr.mxu0 %v5245
    %5289 = vmatpush1.msra.mxu0 %v5244
    %5290 = vmatprep.subr.mxu0 %v5247
    %5291 = vmatpush1.msra.mxu0 %v5246
    %5292 = vmatprep.subr.mxu0 %v5249
    %5293 = vmatpush1.msra.mxu0 %v5248
    %5294 = vmatprep.subr.mxu0 %v5251
    %5295 = vmatpush1.msra.mxu0 %v5250
    %5296 = vmatprep.subr.mxu0 %v5253
    %5297 = vmatpush1.msra.mxu0 %v5252
    %5298 = vmatprep.subr.mxu0 %v5255
    %5299 = vmatpush1.msra.mxu0 %v5254
    %5300 = vmatprep.subr.mxu0 %v5257
    %5301 = vmatpush1.msra.mxu0 %v5256
    %5302 = vmatprep.subr.mxu0 %v5259
    %5303 = vmatpush1.msra.mxu0 %v5258
    %5304 = vmatprep.subr.mxu0 %v5261
    %5305 = vmatpush1.msra.mxu0 %v5260
    %5306 = vmatprep.subr.mxu0 %v5263
    %5307 = vmatpush1.msra.mxu0 %v5262
    %5308 = vmatprep.subr.mxu0 %v5265
    %5309 = vmatpush1.msra.mxu0 %v5264
    %5310 = vmatprep.subr.mxu0 %v5267
    %5311 = vmatpush1.msra.mxu0 %v5266
    %5312 = vmatprep.subr.mxu0 %v5269
    %5313 = vmatpush1.msra.mxu0 %v5268
    %5314 = vmatprep.subr.mxu0 %v5271
    %5315 = vmatpush1.msra.mxu0 %v5270
    %5316 = vmatprep.subr.mxu0 %v5273
    %5317 = vmatpush1.msra.mxu0 %v5272
    %5318 = vmatprep.subr.mxu0 %v5275
    %5319 = vmatpush1.msra.mxu0 %v5274
    %5320 = vmatprep.subr.mxu0 0.0
    %5321 = vmatpush1.msra.mxu0 0.0
    %5322 = vmatprep.subr.mxu0 0.0
    %5323 = vmatpush1.msra.mxu0 0.0
    %5324 = vmatprep.subr.mxu0 0.0
    %5325 = vmatpush1.msra.mxu0 0.0
    %5326 = vmatprep.subr.mxu0 0.0
    %5327 = vmatpush1.msra.mxu0 0.0
    %5328 = vmatprep.subr.mxu0 0.0
    %5329 = vmatpush1.msra.mxu0 0.0
    %5330 = vmatprep.subr.mxu0 0.0
    %5331 = vmatpush1.msra.mxu0 0.0
    %5332 = vmatprep.subr.mxu0 0.0
    %5333 = vmatpush1.msra.mxu0 0.0
    %5334 = vmatprep.subr.mxu0 0.0
    %5335 = vmatpush1.msra.mxu0 0.0
    %5336 = vmatprep.subr.mxu0 0.0
    %5337 = vmatpush1.msra.mxu0 0.0
    %5338 = vmatprep.subr.mxu0 0.0
    %5339 = vmatpush1.msra.mxu0 0.0
    %5340 = vmatprep.subr.mxu0 0.0
    %5341 = vmatpush1.msra.mxu0 0.0
    %5342 = vmatprep.subr.mxu0 0.0
    %5343 = vmatpush1.msra.mxu0 0.0
    %5344 = vmatprep.subr.mxu0 0.0
    %5345 = vmatpush1.msra.mxu0 0.0
    %5346 = vmatprep.subr.mxu0 0.0
    %5347 = vmatpush1.msra.mxu0 0.0
    %5348 = vmatprep.subr.mxu0 0.0
    %5349 = vmatpush1.msra.mxu0 0.0
    %5350 = vmatprep.subr.mxu0 0.0
    %5351 = vmatpush1.msra.mxu0 0.0
    %5352 = vmatprep.mubr.f32.mxu0 0.0
    %5353 = vmatmul.mubr.f32.gmra.mrb[0].mxu0 %v5203
    %v5354 = vpop.f32.mrb[0].mxu0
    %v5355 = vadd.f32 %v5281, %v5354
    %v5356 = vpop.f32.mrb[0].mxu0
    %v5357 = vadd.f32 %v5285, %v5356
    %5358 = vdwg.mxu0
    %v5359 = vmax.f32 %v5355, 0.0
    %v5360 = vmax.f32 %v5357, 0.0
    %v5361 = vld [vmem:[#allocation19] sm:$0xff]
    %v5362 = vld [vmem:[#allocation19 + $0x8] sm:$0xff]
    %v5363 = vld [vmem:[#allocation19 + $0x10] sm:$0xff]
    %v5364 = vld [vmem:[#allocation19 + $0x18] sm:$0xff]
    %v5365 = vld [vmem:[#allocation19 + $0x20] sm:$0xff]
    %v5366 = vld [vmem:[#allocation19 + $0x28] sm:$0xff]
    %v5367 = vld [vmem:[#allocation19 + $0x30] sm:$0xff]
    %v5368 = vld [vmem:[#allocation19 + $0x38] sm:$0xff]
    %v5369 = vld [vmem:[#allocation19 + $0x40] sm:$0xff]
    %v5370 = vld [vmem:[#allocation19 + $0x48] sm:$0xff]
    %v5371 = vld [vmem:[#allocation19 + $0x50] sm:$0xff]
    %v5372 = vld [vmem:[#allocation19 + $0x58] sm:$0xff]
    %v5373 = vld [vmem:[#allocation19 + $0x60] sm:$0xff]
    %v5374 = vld [vmem:[#allocation19 + $0x68] sm:$0xff]
    %v5375 = vld [vmem:[#allocation19 + $0x70] sm:$0xff]
    %v5376 = vld [vmem:[#allocation19 + $0x78] sm:$0xff]
    %v5377 = vld [vmem:[#allocation19 + $0x80] sm:$0xff]
    %v5378 = vld [vmem:[#allocation19 + $0x88] sm:$0xff]
    %v5379 = vld [vmem:[#allocation19 + $0x90] sm:$0xff]
    %v5380 = vld [vmem:[#allocation19 + $0x98] sm:$0xff]
    %v5381 = vld [vmem:[#allocation19 + $0xa0] sm:$0xff]
    %v5382 = vld [vmem:[#allocation19 + $0xa8] sm:$0xff]
    %v5383 = vld [vmem:[#allocation19 + $0xb0] sm:$0xff]
    %v5384 = vld [vmem:[#allocation19 + $0xb8] sm:$0xff]
    %v5385 = vld [vmem:[#allocation19 + $0xc0] sm:$0xff]
    %v5386 = vld [vmem:[#allocation19 + $0xc8] sm:$0xff]
    %v5387 = vld [vmem:[#allocation19 + $0xd0] sm:$0xff]
    %v5388 = vld [vmem:[#allocation19 + $0xd8] sm:$0xff]
    %v5389 = vld [vmem:[#allocation19 + $0xe0] sm:$0xff]
    %v5390 = vld [vmem:[#allocation19 + $0xe8] sm:$0xff]
    %v5391 = vld [vmem:[#allocation19 + $0xf0] sm:$0xff]
    %v5392 = vld [vmem:[#allocation19 + $0xf8] sm:$0xff]
    %v5393 = vld [vmem:[#allocation19 + $0x100] sm:$0xff]
    %v5394 = vld [vmem:[#allocation19 + $0x108] sm:$0xff]
    %v5395 = vld [vmem:[#allocation19 + $0x110] sm:$0xff]
    %v5396 = vld [vmem:[#allocation19 + $0x118] sm:$0xff]
    %v5397 = vld [vmem:[#allocation19 + $0x120] sm:$0xff]
    %v5398 = vld [vmem:[#allocation19 + $0x128] sm:$0xff]
    %v5399 = vld [vmem:[#allocation19 + $0x130] sm:$0xff]
    %v5400 = vld [vmem:[#allocation19 + $0x138] sm:$0xff]
    %v5401 = vld [vmem:[#allocation19 + $0x140] sm:$0xff]
    %v5402 = vld [vmem:[#allocation19 + $0x148] sm:$0xff]
    %v5403 = vld [vmem:[#allocation19 + $0x150] sm:$0xff]
    %v5404 = vld [vmem:[#allocation19 + $0x158] sm:$0xff]
    %v5405 = vld [vmem:[#allocation19 + $0x160] sm:$0xff]
    %v5406 = vld [vmem:[#allocation19 + $0x168] sm:$0xff]
    %v5407 = vld [vmem:[#allocation19 + $0x170] sm:$0xff]
    %v5408 = vld [vmem:[#allocation19 + $0x178] sm:$0xff]
    %v5409 = vld [vmem:[#allocation19 + $0x180] sm:$0xff]
    %v5410 = vld [vmem:[#allocation19 + $0x188] sm:$0xff]
    %v5411 = vld [vmem:[#allocation19 + $0x190] sm:$0xff]
    %v5412 = vld [vmem:[#allocation19 + $0x198] sm:$0xff]
    %v5413 = vld [vmem:[#allocation19 + $0x1a0] sm:$0xff]
    %v5414 = vld [vmem:[#allocation19 + $0x1a8] sm:$0xff]
    %v5415 = vld [vmem:[#allocation19 + $0x1b0] sm:$0xff]
    %v5416 = vld [vmem:[#allocation19 + $0x1b8] sm:$0xff]
    %v5417 = vld [vmem:[#allocation19 + $0x1c0] sm:$0xff]
    %v5418 = vld [vmem:[#allocation19 + $0x1c8] sm:$0xff]
    %v5419 = vld [vmem:[#allocation19 + $0x1d0] sm:$0xff]
    %v5420 = vld [vmem:[#allocation19 + $0x1d8] sm:$0xff]
    %v5421 = vld [vmem:[#allocation19 + $0x1e0] sm:$0xff]
    %v5422 = vld [vmem:[#allocation19 + $0x1e8] sm:$0xff]
    %v5423 = vld [vmem:[#allocation19 + $0x1f0] sm:$0xff]
    %v5424 = vld [vmem:[#allocation19 + $0x1f8] sm:$0xff]
    %v5425 = vld [vmem:[#allocation19 + $0x200] sm:$0xff]
    %v5426 = vld [vmem:[#allocation19 + $0x208] sm:$0xff]
    %v5427 = vld [vmem:[#allocation19 + $0x210] sm:$0xff]
    %v5428 = vld [vmem:[#allocation19 + $0x218] sm:$0xff]
    %v5429 = vld [vmem:[#allocation19 + $0x220] sm:$0xff]
    %v5430 = vld [vmem:[#allocation19 + $0x228] sm:$0xff]
    %v5431 = vld [vmem:[#allocation19 + $0x230] sm:$0xff]
    %v5432 = vld [vmem:[#allocation19 + $0x238] sm:$0xff]
    %v5433 = vld [vmem:[#allocation19 + $0x240] sm:$0xff]
    %v5434 = vld [vmem:[#allocation19 + $0x248] sm:$0xff]
    %v5435 = vld [vmem:[#allocation19 + $0x250] sm:$0xff]
    %v5436 = vld [vmem:[#allocation19 + $0x258] sm:$0xff]
    %v5437 = vld [vmem:[#allocation19 + $0x260] sm:$0xff]
    %v5438 = vld [vmem:[#allocation19 + $0x268] sm:$0xff]
    %v5439 = vld [vmem:[#allocation19 + $0x270] sm:$0xff]
    %v5440 = vld [vmem:[#allocation19 + $0x278] sm:$0xff]
    %v5441 = vld [vmem:[#allocation19 + $0x280] sm:$0xff]
    %v5442 = vld [vmem:[#allocation19 + $0x288] sm:$0xff]
    %v5443 = vld [vmem:[#allocation19 + $0x290] sm:$0xff]
    %v5444 = vld [vmem:[#allocation19 + $0x298] sm:$0xff]
    %v5445 = vld [vmem:[#allocation19 + $0x2a0] sm:$0xff]
    %v5446 = vld [vmem:[#allocation19 + $0x2a8] sm:$0xff]
    %v5447 = vld [vmem:[#allocation19 + $0x2b0] sm:$0xff]
    %v5448 = vld [vmem:[#allocation19 + $0x2b8] sm:$0xff]
    %v5449 = vld [vmem:[#allocation19 + $0x2c0] sm:$0xff]
    %v5450 = vld [vmem:[#allocation19 + $0x2c8] sm:$0xff]
    %v5451 = vld [vmem:[#allocation19 + $0x2d0] sm:$0xff]
    %v5452 = vld [vmem:[#allocation19 + $0x2d8] sm:$0xff]
    %v5453 = vld [vmem:[#allocation19 + $0x2e0] sm:$0xff]
    %v5454 = vld [vmem:[#allocation19 + $0x2e8] sm:$0xff]
    %v5455 = vld [vmem:[#allocation19 + $0x2f0] sm:$0xff]
    %v5456 = vld [vmem:[#allocation19 + $0x2f8] sm:$0xff]
    %v5457 = vld [vmem:[#allocation19 + $0x300] sm:$0xff]
    %v5458 = vld [vmem:[#allocation19 + $0x308] sm:$0xff]
    %v5459 = vld [vmem:[#allocation19 + $0x310] sm:$0xff]
    %v5460 = vld [vmem:[#allocation19 + $0x318] sm:$0xff]
    %v5461 = vld [vmem:[#allocation19 + $0x320] sm:$0xff]
    %v5462 = vld [vmem:[#allocation19 + $0x328] sm:$0xff]
    %v5463 = vld [vmem:[#allocation19 + $0x330] sm:$0xff]
    %v5464 = vld [vmem:[#allocation19 + $0x338] sm:$0xff]
    %v5465 = vld [vmem:[#allocation19 + $0x340] sm:$0xff]
    %v5466 = vld [vmem:[#allocation19 + $0x348] sm:$0xff]
    %v5467 = vld [vmem:[#allocation19 + $0x350] sm:$0xff]
    %v5468 = vld [vmem:[#allocation19 + $0x358] sm:$0xff]
    %v5469 = vld [vmem:[#allocation19 + $0x360] sm:$0xff]
    %v5470 = vld [vmem:[#allocation19 + $0x368] sm:$0xff]
    %v5471 = vld [vmem:[#allocation19 + $0x370] sm:$0xff]
    %v5472 = vld [vmem:[#allocation19 + $0x378] sm:$0xff]
    %v5473 = vld [vmem:[#allocation19 + $0x380] sm:$0xff]
    %v5474 = vld [vmem:[#allocation19 + $0x388] sm:$0xff]
    %v5475 = vld [vmem:[#allocation19 + $0x390] sm:$0xff]
    %v5476 = vld [vmem:[#allocation19 + $0x398] sm:$0xff]
    %v5477 = vld [vmem:[#allocation19 + $0x3a0] sm:$0xff]
    %v5478 = vld [vmem:[#allocation19 + $0x3a8] sm:$0xff]
    %v5479 = vld [vmem:[#allocation19 + $0x3b0] sm:$0xff]
    %v5480 = vld [vmem:[#allocation19 + $0x3b8] sm:$0xff]
    %v5481 = vld [vmem:[#allocation19 + $0x3c0] sm:$0xff]
    %v5482 = vld [vmem:[#allocation19 + $0x3c8] sm:$0xff]
    %v5483 = vld [vmem:[#allocation19 + $0x3d0] sm:$0xff]
    %v5484 = vld [vmem:[#allocation19 + $0x3d8] sm:$0xff]
    %v5485 = vld [vmem:[#allocation19 + $0x3e0] sm:$0xff]
    %v5486 = vld [vmem:[#allocation19 + $0x3e8] sm:$0xff]
    %v5487 = vld [vmem:[#allocation19 + $0x3f0] sm:$0xff]
    %v5488 = vld [vmem:[#allocation19 + $0x3f8] sm:$0xff]
    %v5489 = vld [vmem:[#allocation20] sm:$0xf]
    %v5491 = vlaneseq
    %v5492 = vshrl.u32 %v5491, 7
    %v5493 = vsub.s32 0, %v5492
    %v5494 = vrot.slane %v5489, %v5493
    %v5495 = vlaneseq
    %v5496 = vshrl.u32 %v5495, 7
    %v5497 = vsub.s32 1, %v5496
    %v5498 = vrot.slane %v5489, %v5497
    %v5499 = vlaneseq
    %v5500 = vshrl.u32 %v5499, 7
    %v5501 = vsub.s32 2, %v5500
    %v5502 = vrot.slane %v5489, %v5501
    %v5503 = vlaneseq
    %v5504 = vshrl.u32 %v5503, 7
    %v5505 = vsub.s32 3, %v5504
    %v5506 = vrot.slane %v5489, %v5505
    %5511 = vmatprep.subr.mxu0 %v5362
    %5512 = vmatpush1.msra.mxu0 %v5361
    %5513 = vmatprep.subr.mxu0 %v5366
    %5514 = vmatpush1.msra.mxu0 %v5365
    %5515 = vmatprep.subr.mxu0 %v5370
    %5516 = vmatpush1.msra.mxu0 %v5369
    %5517 = vmatprep.subr.mxu0 %v5374
    %5518 = vmatpush1.msra.mxu0 %v5373
    %5519 = vmatprep.subr.mxu0 %v5378
    %5520 = vmatpush1.msra.mxu0 %v5377
    %5521 = vmatprep.subr.mxu0 %v5382
    %5522 = vmatpush1.msra.mxu0 %v5381
    %5523 = vmatprep.subr.mxu0 %v5386
    %5524 = vmatpush1.msra.mxu0 %v5385
    %5525 = vmatprep.subr.mxu0 %v5390
    %5526 = vmatpush1.msra.mxu0 %v5389
    %5527 = vmatprep.subr.mxu0 %v5394
    %5528 = vmatpush1.msra.mxu0 %v5393
    %5529 = vmatprep.subr.mxu0 %v5398
    %5530 = vmatpush1.msra.mxu0 %v5397
    %5531 = vmatprep.subr.mxu0 %v5402
    %5532 = vmatpush1.msra.mxu0 %v5401
    %5533 = vmatprep.subr.mxu0 %v5406
    %5534 = vmatpush1.msra.mxu0 %v5405
    %5535 = vmatprep.subr.mxu0 %v5410
    %5536 = vmatpush1.msra.mxu0 %v5409
    %5537 = vmatprep.subr.mxu0 %v5414
    %5538 = vmatpush1.msra.mxu0 %v5413
    %5539 = vmatprep.subr.mxu0 %v5418
    %5540 = vmatpush1.msra.mxu0 %v5417
    %5541 = vmatprep.subr.mxu0 %v5422
    %5542 = vmatpush1.msra.mxu0 %v5421
    %5543 = vmatprep.subr.mxu0 %v5426
    %5544 = vmatpush1.msra.mxu0 %v5425
    %5545 = vmatprep.subr.mxu0 %v5430
    %5546 = vmatpush1.msra.mxu0 %v5429
    %5547 = vmatprep.subr.mxu0 %v5434
    %5548 = vmatpush1.msra.mxu0 %v5433
    %5549 = vmatprep.subr.mxu0 %v5438
    %5550 = vmatpush1.msra.mxu0 %v5437
    %5551 = vmatprep.subr.mxu0 %v5442
    %5552 = vmatpush1.msra.mxu0 %v5441
    %5553 = vmatprep.subr.mxu0 %v5446
    %5554 = vmatpush1.msra.mxu0 %v5445
    %5555 = vmatprep.subr.mxu0 %v5450
    %5556 = vmatpush1.msra.mxu0 %v5449
    %5557 = vmatprep.subr.mxu0 %v5454
    %5558 = vmatpush1.msra.mxu0 %v5453
    %5559 = vmatprep.subr.mxu0 %v5458
    %5560 = vmatpush1.msra.mxu0 %v5457
    %5561 = vmatprep.subr.mxu0 %v5462
    %5562 = vmatpush1.msra.mxu0 %v5461
    %5563 = vmatprep.subr.mxu0 %v5466
    %5564 = vmatpush1.msra.mxu0 %v5465
    %5565 = vmatprep.subr.mxu0 %v5470
    %5566 = vmatpush1.msra.mxu0 %v5469
    %5567 = vmatprep.subr.mxu0 %v5474
    %5568 = vmatpush1.msra.mxu0 %v5473
    %5569 = vmatprep.subr.mxu0 %v5478
    %5570 = vmatpush1.msra.mxu0 %v5477
    %5571 = vmatprep.subr.mxu0 %v5482
    %5572 = vmatpush1.msra.mxu0 %v5481
    %5573 = vmatprep.subr.mxu0 %v5486
    %5574 = vmatpush1.msra.mxu0 %v5485
    %5575 = vmatprep.mubr.f32.mxu0 %v5360
    %5576 = vmatmul.mubr.f32.gmra.mrb[0].mxu0 %v5359
    %v5577 = vpop.f32.mrb[0].mxu0
    %v5578 = vadd.f32 %v5494, %v5577
    %v5579 = vpop.f32.mrb[0].mxu0
    %v5580 = vadd.f32 %v5498, %v5579
    %5581 = vdwg.mxu0
    %5582 = vmatprep.subr.mxu0 %v5364
    %5583 = vmatpush1.msra.mxu0 %v5363
    %5584 = vmatprep.subr.mxu0 %v5368
    %5585 = vmatpush1.msra.mxu0 %v5367
    %5586 = vmatprep.subr.mxu0 %v5372
    %5587 = vmatpush1.msra.mxu0 %v5371
    %5588 = vmatprep.subr.mxu0 %v5376
    %5589 = vmatpush1.msra.mxu0 %v5375
    %5590 = vmatprep.subr.mxu0 %v5380
    %5591 = vmatpush1.msra.mxu0 %v5379
    %5592 = vmatprep.subr.mxu0 %v5384
    %5593 = vmatpush1.msra.mxu0 %v5383
    %5594 = vmatprep.subr.mxu0 %v5388
    %5595 = vmatpush1.msra.mxu0 %v5387
    %5596 = vmatprep.subr.mxu0 %v5392
    %5597 = vmatpush1.msra.mxu0 %v5391
    %5598 = vmatprep.subr.mxu0 %v5396
    %5599 = vmatpush1.msra.mxu0 %v5395
    %5600 = vmatprep.subr.mxu0 %v5400
    %5601 = vmatpush1.msra.mxu0 %v5399
    %5602 = vmatprep.subr.mxu0 %v5404
    %5603 = vmatpush1.msra.mxu0 %v5403
    %5604 = vmatprep.subr.mxu0 %v5408
    %5605 = vmatpush1.msra.mxu0 %v5407
    %5606 = vmatprep.subr.mxu0 %v5412
    %5607 = vmatpush1.msra.mxu0 %v5411
    %5608 = vmatprep.subr.mxu0 %v5416
    %5609 = vmatpush1.msra.mxu0 %v5415
    %5610 = vmatprep.subr.mxu0 %v5420
    %5611 = vmatpush1.msra.mxu0 %v5419
    %5612 = vmatprep.subr.mxu0 %v5424
    %5613 = vmatpush1.msra.mxu0 %v5423
    %5614 = vmatprep.subr.mxu0 %v5428
    %5615 = vmatpush1.msra.mxu0 %v5427
    %5616 = vmatprep.subr.mxu0 %v5432
    %5617 = vmatpush1.msra.mxu0 %v5431
    %5618 = vmatprep.subr.mxu0 %v5436
    %5619 = vmatpush1.msra.mxu0 %v5435
    %5620 = vmatprep.subr.mxu0 %v5440
    %5621 = vmatpush1.msra.mxu0 %v5439
    %5622 = vmatprep.subr.mxu0 %v5444
    %5623 = vmatpush1.msra.mxu0 %v5443
    %5624 = vmatprep.subr.mxu0 %v5448
    %5625 = vmatpush1.msra.mxu0 %v5447
    %5626 = vmatprep.subr.mxu0 %v5452
    %5627 = vmatpush1.msra.mxu0 %v5451
    %5628 = vmatprep.subr.mxu0 %v5456
    %5629 = vmatpush1.msra.mxu0 %v5455
    %5630 = vmatprep.subr.mxu0 %v5460
    %5631 = vmatpush1.msra.mxu0 %v5459
    %5632 = vmatprep.subr.mxu0 %v5464
    %5633 = vmatpush1.msra.mxu0 %v5463
    %5634 = vmatprep.subr.mxu0 %v5468
    %5635 = vmatpush1.msra.mxu0 %v5467
    %5636 = vmatprep.subr.mxu0 %v5472
    %5637 = vmatpush1.msra.mxu0 %v5471
    %5638 = vmatprep.subr.mxu0 %v5476
    %5639 = vmatpush1.msra.mxu0 %v5475
    %5640 = vmatprep.subr.mxu0 %v5480
    %5641 = vmatpush1.msra.mxu0 %v5479
    %5642 = vmatprep.subr.mxu0 %v5484
    %5643 = vmatpush1.msra.mxu0 %v5483
    %5644 = vmatprep.subr.mxu0 %v5488
    %5645 = vmatpush1.msra.mxu0 %v5487
    %5646 = vmatprep.mubr.f32.mxu0 %v5360
    %5647 = vmatmul.mubr.f32.gmra.mrb[0].mxu0 %v5359
    %v5648 = vpop.f32.mrb[0].mxu0
    %v5649 = vadd.f32 %v5502, %v5648
    %v5650 = vpop.f32.mrb[0].mxu0
    %v5651 = vadd.f32 %v5506, %v5650
    %5652 = vdwg.mxu0
    %v5653 = vmax.f32 %v5578, 0.0
    %v5654 = vmax.f32 %v5580, 0.0
    %v5655 = vmax.f32 %v5649, 0.0
    %v5656 = vmax.f32 %v5651, 0.0
    %v5657 = vpack.c.bf16 %v5653, %v5653
    %v5658 = vpack.c.bf16 %v5654, %v5654
    %v5659 = vpack.c.bf16 %v5655, %v5655
    %v5660 = vpack.c.bf16 %v5656, %v5656
    %v5661 = vld [vmem:[#allocation22] sm:$0xff]
    %v5662 = vld [vmem:[#allocation22 + $0x8] sm:$0xff]
    %v5663 = vld [vmem:[#allocation22 + $0x10] sm:$0xff]
    %v5664 = vld [vmem:[#allocation22 + $0x18] sm:$0xff]
    %v5665 = vld [vmem:[#allocation22 + $0x20] sm:$0xff]
    %v5666 = vld [vmem:[#allocation22 + $0x28] sm:$0xff]
    %v5667 = vld [vmem:[#allocation22 + $0x30] sm:$0xff]
    %v5668 = vld [vmem:[#allocation22 + $0x38] sm:$0xff]
    %v5669 = vld [vmem:[#allocation22 + $0x40] sm:$0xff]
    %v5670 = vld [vmem:[#allocation22 + $0x48] sm:$0xf]
    %v5671 = vld [vmem:[#allocation22 + $0x4c] sm:$0xff]
    %v5672 = vld [vmem:[#allocation22 + $0x54] sm:$0xff]
    %v5673 = vld [vmem:[#allocation22 + $0x5c] sm:$0xff]
    %v5674 = vld [vmem:[#allocation22 + $0x64] sm:$0xff]
    %v5675 = vld [vmem:[#allocation22 + $0x6c] sm:$0xff]
    %v5676 = vld [vmem:[#allocation22 + $0x74] sm:$0xff]
    %v5677 = vld [vmem:[#allocation22 + $0x7c] sm:$0xff]
    %v5678 = vld [vmem:[#allocation22 + $0x84] sm:$0xff]
    %v5679 = vld [vmem:[#allocation22 + $0x8c] sm:$0xff]
    %v5680 = vld [vmem:[#allocation22 + $0x94] sm:$0xf]
    %v5681 = vld [vmem:[#allocation22 + $0x98] sm:$0xff]
    %v5682 = vld [vmem:[#allocation22 + $0xa0] sm:$0xff]
    %v5683 = vld [vmem:[#allocation22 + $0xa8] sm:$0xff]
    %v5684 = vld [vmem:[#allocation22 + $0xb0] sm:$0xff]
    %v5685 = vld [vmem:[#allocation22 + $0xb8] sm:$0xff]
    %v5686 = vld [vmem:[#allocation22 + $0xc0] sm:$0xff]
    %v5687 = vld [vmem:[#allocation22 + $0xc8] sm:$0xff]
    %v5688 = vld [vmem:[#allocation22 + $0xd0] sm:$0xff]
    %v5689 = vld [vmem:[#allocation22 + $0xd8] sm:$0xff]
    %v5690 = vld [vmem:[#allocation22 + $0xe0] sm:$0xf]
    %v5691 = vld [vmem:[#allocation22 + $0xe4] sm:$0xff]
    %v5692 = vld [vmem:[#allocation22 + $0xec] sm:$0xff]
    %v5693 = vld [vmem:[#allocation22 + $0xf4] sm:$0xff]
    %v5694 = vld [vmem:[#allocation22 + $0xfc] sm:$0xff]
    %v5695 = vld [vmem:[#allocation22 + $0x104] sm:$0xff]
    %v5696 = vld [vmem:[#allocation22 + $0x10c] sm:$0xff]
    %v5697 = vld [vmem:[#allocation22 + $0x114] sm:$0xff]
    %v5698 = vld [vmem:[#allocation22 + $0x11c] sm:$0xff]
    %v5699 = vld [vmem:[#allocation22 + $0x124] sm:$0xff]
    %v5700 = vld [vmem:[#allocation22 + $0x12c] sm:$0xf]
    %v5701 = vld [vmem:[#allocation22 + $0x130] sm:$0xff]
    %v5702 = vld [vmem:[#allocation22 + $0x138] sm:$0xff]
    %v5703 = vld [vmem:[#allocation22 + $0x140] sm:$0xff]
    %v5704 = vld [vmem:[#allocation22 + $0x148] sm:$0xff]
    %v5705 = vld [vmem:[#allocation22 + $0x150] sm:$0xff]
    %v5706 = vld [vmem:[#allocation22 + $0x158] sm:$0xff]
    %v5707 = vld [vmem:[#allocation22 + $0x160] sm:$0xff]
    %v5708 = vld [vmem:[#allocation22 + $0x168] sm:$0xff]
    %v5709 = vld [vmem:[#allocation22 + $0x170] sm:$0xff]
    %v5710 = vld [vmem:[#allocation22 + $0x178] sm:$0xf]
    %v5711 = vld [vmem:[#allocation22 + $0x17c] sm:$0xff]
    %v5712 = vld [vmem:[#allocation22 + $0x184] sm:$0xff]
    %v5713 = vld [vmem:[#allocation22 + $0x18c] sm:$0xff]
    %v5714 = vld [vmem:[#allocation22 + $0x194] sm:$0xff]
    %v5715 = vld [vmem:[#allocation22 + $0x19c] sm:$0xff]
    %v5716 = vld [vmem:[#allocation22 + $0x1a4] sm:$0xff]
    %v5717 = vld [vmem:[#allocation22 + $0x1ac] sm:$0xff]
    %v5718 = vld [vmem:[#allocation22 + $0x1b4] sm:$0xff]
    %v5719 = vld [vmem:[#allocation22 + $0x1bc] sm:$0xff]
    %v5720 = vld [vmem:[#allocation22 + $0x1c4] sm:$0xf]
    %v5721 = vld [vmem:[#allocation22 + $0x1c8] sm:$0xff]
    %v5722 = vld [vmem:[#allocation22 + $0x1d0] sm:$0xff]
    %v5723 = vld [vmem:[#allocation22 + $0x1d8] sm:$0xff]
    %v5724 = vld [vmem:[#allocation22 + $0x1e0] sm:$0xff]
    %v5725 = vld [vmem:[#allocation22 + $0x1e8] sm:$0xff]
    %v5726 = vld [vmem:[#allocation22 + $0x1f0] sm:$0xff]
    %v5727 = vld [vmem:[#allocation22 + $0x1f8] sm:$0xff]
    %v5728 = vld [vmem:[#allocation22 + $0x200] sm:$0xff]
    %v5729 = vld [vmem:[#allocation22 + $0x208] sm:$0xff]
    %v5730 = vld [vmem:[#allocation22 + $0x210] sm:$0xf]
    %v5731 = vld [vmem:[#allocation22 + $0x214] sm:$0xff]
    %v5732 = vld [vmem:[#allocation22 + $0x21c] sm:$0xff]
    %v5733 = vld [vmem:[#allocation22 + $0x224] sm:$0xff]
    %v5734 = vld [vmem:[#allocation22 + $0x22c] sm:$0xff]
    %v5735 = vld [vmem:[#allocation22 + $0x234] sm:$0xff]
    %v5736 = vld [vmem:[#allocation22 + $0x23c] sm:$0xff]
    %v5737 = vld [vmem:[#allocation22 + $0x244] sm:$0xff]
    %v5738 = vld [vmem:[#allocation22 + $0x24c] sm:$0xff]
    %v5739 = vld [vmem:[#allocation22 + $0x254] sm:$0xff]
    %v5740 = vld [vmem:[#allocation22 + $0x25c] sm:$0xf]
    %v5741 = vld [vmem:[#allocation22 + $0x260] sm:$0xff]
    %v5742 = vld [vmem:[#allocation22 + $0x268] sm:$0xff]
    %v5743 = vld [vmem:[#allocation22 + $0x270] sm:$0xff]
    %v5744 = vld [vmem:[#allocation22 + $0x278] sm:$0xff]
    %v5745 = vld [vmem:[#allocation22 + $0x280] sm:$0xff]
    %v5746 = vld [vmem:[#allocation22 + $0x288] sm:$0xff]
    %v5747 = vld [vmem:[#allocation22 + $0x290] sm:$0xff]
    %v5748 = vld [vmem:[#allocation22 + $0x298] sm:$0xff]
    %v5749 = vld [vmem:[#allocation22 + $0x2a0] sm:$0xff]
    %v5750 = vld [vmem:[#allocation22 + $0x2a8] sm:$0xf]
    %v5751 = vld [vmem:[#allocation22 + $0x2ac] sm:$0xff]
    %v5752 = vld [vmem:[#allocation22 + $0x2b4] sm:$0xff]
    %v5753 = vld [vmem:[#allocation22 + $0x2bc] sm:$0xff]
    %v5754 = vld [vmem:[#allocation22 + $0x2c4] sm:$0xff]
    %v5755 = vld [vmem:[#allocation22 + $0x2cc] sm:$0xff]
    %v5756 = vld [vmem:[#allocation22 + $0x2d4] sm:$0xff]
    %v5757 = vld [vmem:[#allocation22 + $0x2dc] sm:$0xff]
    %v5758 = vld [vmem:[#allocation22 + $0x2e4] sm:$0xff]
    %v5759 = vld [vmem:[#allocation22 + $0x2ec] sm:$0xff]
    %v5760 = vld [vmem:[#allocation22 + $0x2f4] sm:$0xf]
    %v5761 = vld [vmem:[#allocation22 + $0x2f8] sm:$0xff]
    %v5762 = vld [vmem:[#allocation22 + $0x300] sm:$0xff]
    %v5763 = vld [vmem:[#allocation22 + $0x308] sm:$0xff]
    %v5764 = vld [vmem:[#allocation22 + $0x310] sm:$0xff]
    %v5765 = vld [vmem:[#allocation22 + $0x318] sm:$0xff]
    %v5766 = vld [vmem:[#allocation22 + $0x320] sm:$0xff]
    %v5767 = vld [vmem:[#allocation22 + $0x328] sm:$0xff]
    %v5768 = vld [vmem:[#allocation22 + $0x330] sm:$0xff]
    %v5769 = vld [vmem:[#allocation22 + $0x338] sm:$0xff]
    %v5770 = vld [vmem:[#allocation22 + $0x340] sm:$0xf]
    %v5771 = vld [vmem:[#allocation22 + $0x344] sm:$0xff]
    %v5772 = vld [vmem:[#allocation22 + $0x34c] sm:$0xff]
    %v5773 = vld [vmem:[#allocation22 + $0x354] sm:$0xff]
    %v5774 = vld [vmem:[#allocation22 + $0x35c] sm:$0xff]
    %v5775 = vld [vmem:[#allocation22 + $0x364] sm:$0xff]
    %v5776 = vld [vmem:[#allocation22 + $0x36c] sm:$0xff]
    %v5777 = vld [vmem:[#allocation22 + $0x374] sm:$0xff]
    %v5778 = vld [vmem:[#allocation22 + $0x37c] sm:$0xff]
    %v5779 = vld [vmem:[#allocation22 + $0x384] sm:$0xff]
    %v5780 = vld [vmem:[#allocation22 + $0x38c] sm:$0xf]
    %v5781 = vld [vmem:[#allocation22 + $0x390] sm:$0xff]
    %v5782 = vld [vmem:[#allocation22 + $0x398] sm:$0xff]
    %v5783 = vld [vmem:[#allocation22 + $0x3a0] sm:$0xff]
    %v5784 = vld [vmem:[#allocation22 + $0x3a8] sm:$0xff]
    %v5785 = vld [vmem:[#allocation22 + $0x3b0] sm:$0xff]
    %v5786 = vld [vmem:[#allocation22 + $0x3b8] sm:$0xff]
    %v5787 = vld [vmem:[#allocation22 + $0x3c0] sm:$0xff]
    %v5788 = vld [vmem:[#allocation22 + $0x3c8] sm:$0xff]
    %v5789 = vld [vmem:[#allocation22 + $0x3d0] sm:$0xff]
    %v5790 = vld [vmem:[#allocation22 + $0x3d8] sm:$0xf]
    %v5791 = vld [vmem:[#allocation22 + $0x3dc] sm:$0xff]
    %v5792 = vld [vmem:[#allocation22 + $0x3e4] sm:$0xff]
    %v5793 = vld [vmem:[#allocation22 + $0x3ec] sm:$0xff]
    %v5794 = vld [vmem:[#allocation22 + $0x3f4] sm:$0xff]
    %v5795 = vld [vmem:[#allocation22 + $0x3fc] sm:$0xff]
    %v5796 = vld [vmem:[#allocation22 + $0x404] sm:$0xff]
    %v5797 = vld [vmem:[#allocation22 + $0x40c] sm:$0xff]
    %v5798 = vld [vmem:[#allocation22 + $0x414] sm:$0xff]
    %v5799 = vld [vmem:[#allocation22 + $0x41c] sm:$0xff]
    %v5800 = vld [vmem:[#allocation22 + $0x424] sm:$0xf]
    %v5801 = vld [vmem:[#allocation22 + $0x428] sm:$0xff]
    %v5802 = vld [vmem:[#allocation22 + $0x430] sm:$0xff]
    %v5803 = vld [vmem:[#allocation22 + $0x438] sm:$0xff]
    %v5804 = vld [vmem:[#allocation22 + $0x440] sm:$0xff]
    %v5805 = vld [vmem:[#allocation22 + $0x448] sm:$0xff]
    %v5806 = vld [vmem:[#allocation22 + $0x450] sm:$0xff]
    %v5807 = vld [vmem:[#allocation22 + $0x458] sm:$0xff]
    %v5808 = vld [vmem:[#allocation22 + $0x460] sm:$0xff]
    %v5809 = vld [vmem:[#allocation22 + $0x468] sm:$0xff]
    %v5810 = vld [vmem:[#allocation22 + $0x470] sm:$0xf]
    %v5811 = vld [vmem:[#allocation22 + $0x474] sm:$0xff]
    %v5812 = vld [vmem:[#allocation22 + $0x47c] sm:$0xff]
    %v5813 = vld [vmem:[#allocation22 + $0x484] sm:$0xff]
    %v5814 = vld [vmem:[#allocation22 + $0x48c] sm:$0xff]
    %v5815 = vld [vmem:[#allocation22 + $0x494] sm:$0xff]
    %v5816 = vld [vmem:[#allocation22 + $0x49c] sm:$0xff]
    %v5817 = vld [vmem:[#allocation22 + $0x4a4] sm:$0xff]
    %v5818 = vld [vmem:[#allocation22 + $0x4ac] sm:$0xff]
    %v5819 = vld [vmem:[#allocation22 + $0x4b4] sm:$0xff]
    %v5820 = vld [vmem:[#allocation22 + $0x4bc] sm:$0xf]
    %v5821 = vld [vmem:[#allocation22 + $0x4c0] sm:$0xff]
    %v5822 = vld [vmem:[#allocation22 + $0x4c8] sm:$0xff]
    %v5823 = vld [vmem:[#allocation22 + $0x4d0] sm:$0xff]
    %v5824 = vld [vmem:[#allocation22 + $0x4d8] sm:$0xff]
    %v5825 = vld [vmem:[#allocation22 + $0x4e0] sm:$0xff]
    %v5826 = vld [vmem:[#allocation22 + $0x4e8] sm:$0xff]
    %v5827 = vld [vmem:[#allocation22 + $0x4f0] sm:$0xff]
    %v5828 = vld [vmem:[#allocation22 + $0x4f8] sm:$0xff]
    %v5829 = vld [vmem:[#allocation22 + $0x500] sm:$0xff]
    %v5830 = vld [vmem:[#allocation22 + $0x508] sm:$0xf]
    %v5831 = vld [vmem:[#allocation22 + $0x50c] sm:$0xff]
    %v5832 = vld [vmem:[#allocation22 + $0x514] sm:$0xff]
    %v5833 = vld [vmem:[#allocation22 + $0x51c] sm:$0xff]
    %v5834 = vld [vmem:[#allocation22 + $0x524] sm:$0xff]
    %v5835 = vld [vmem:[#allocation22 + $0x52c] sm:$0xff]
    %v5836 = vld [vmem:[#allocation22 + $0x534] sm:$0xff]
    %v5837 = vld [vmem:[#allocation22 + $0x53c] sm:$0xff]
    %v5838 = vld [vmem:[#allocation22 + $0x544] sm:$0xff]
    %v5839 = vld [vmem:[#allocation22 + $0x54c] sm:$0xff]
    %v5840 = vld [vmem:[#allocation22 + $0x554] sm:$0xf]
    %v5841 = vld [vmem:[#allocation22 + $0x558] sm:$0xff]
    %v5842 = vld [vmem:[#allocation22 + $0x560] sm:$0xff]
    %v5843 = vld [vmem:[#allocation22 + $0x568] sm:$0xff]
    %v5844 = vld [vmem:[#allocation22 + $0x570] sm:$0xff]
    %v5845 = vld [vmem:[#allocation22 + $0x578] sm:$0xff]
    %v5846 = vld [vmem:[#allocation22 + $0x580] sm:$0xff]
    %v5847 = vld [vmem:[#allocation22 + $0x588] sm:$0xff]
    %v5848 = vld [vmem:[#allocation22 + $0x590] sm:$0xff]
    %v5849 = vld [vmem:[#allocation22 + $0x598] sm:$0xff]
    %v5850 = vld [vmem:[#allocation22 + $0x5a0] sm:$0xf]
    %v5851 = vld [vmem:[#allocation22 + $0x5a4] sm:$0xff]
    %v5852 = vld [vmem:[#allocation22 + $0x5ac] sm:$0xff]
    %v5853 = vld [vmem:[#allocation22 + $0x5b4] sm:$0xff]
    %v5854 = vld [vmem:[#allocation22 + $0x5bc] sm:$0xff]
    %v5855 = vld [vmem:[#allocation22 + $0x5c4] sm:$0xff]
    %v5856 = vld [vmem:[#allocation22 + $0x5cc] sm:$0xff]
    %v5857 = vld [vmem:[#allocation22 + $0x5d4] sm:$0xff]
    %v5858 = vld [vmem:[#allocation22 + $0x5dc] sm:$0xff]
    %v5859 = vld [vmem:[#allocation22 + $0x5e4] sm:$0xff]
    %v5860 = vld [vmem:[#allocation22 + $0x5ec] sm:$0xf]
    %v5861 = vld [vmem:[#allocation22 + $0x5f0] sm:$0xff]
    %v5862 = vld [vmem:[#allocation22 + $0x5f8] sm:$0xff]
    %v5863 = vld [vmem:[#allocation22 + $0x600] sm:$0xff]
    %v5864 = vld [vmem:[#allocation22 + $0x608] sm:$0xff]
    %v5865 = vld [vmem:[#allocation22 + $0x610] sm:$0xff]
    %v5866 = vld [vmem:[#allocation22 + $0x618] sm:$0xff]
    %v5867 = vld [vmem:[#allocation22 + $0x620] sm:$0xff]
    %v5868 = vld [vmem:[#allocation22 + $0x628] sm:$0xff]
    %v5869 = vld [vmem:[#allocation22 + $0x630] sm:$0xff]
    %v5870 = vld [vmem:[#allocation22 + $0x638] sm:$0xf]
    %v5871 = vld [vmem:[#allocation22 + $0x63c] sm:$0xff]
    %v5872 = vld [vmem:[#allocation22 + $0x644] sm:$0xff]
    %v5873 = vld [vmem:[#allocation22 + $0x64c] sm:$0xff]
    %v5874 = vld [vmem:[#allocation22 + $0x654] sm:$0xff]
    %v5875 = vld [vmem:[#allocation22 + $0x65c] sm:$0xff]
    %v5876 = vld [vmem:[#allocation22 + $0x664] sm:$0xff]
    %v5877 = vld [vmem:[#allocation22 + $0x66c] sm:$0xff]
    %v5878 = vld [vmem:[#allocation22 + $0x674] sm:$0xff]
    %v5879 = vld [vmem:[#allocation22 + $0x67c] sm:$0xff]
    %v5880 = vld [vmem:[#allocation22 + $0x684] sm:$0xf]
    %v5881 = vld [vmem:[#allocation22 + $0x688] sm:$0xff]
    %v5882 = vld [vmem:[#allocation22 + $0x690] sm:$0xff]
    %v5883 = vld [vmem:[#allocation22 + $0x698] sm:$0xff]
    %v5884 = vld [vmem:[#allocation22 + $0x6a0] sm:$0xff]
    %v5885 = vld [vmem:[#allocation22 + $0x6a8] sm:$0xff]
    %v5886 = vld [vmem:[#allocation22 + $0x6b0] sm:$0xff]
    %v5887 = vld [vmem:[#allocation22 + $0x6b8] sm:$0xff]
    %v5888 = vld [vmem:[#allocation22 + $0x6c0] sm:$0xff]
    %v5889 = vld [vmem:[#allocation22 + $0x6c8] sm:$0xff]
    %v5890 = vld [vmem:[#allocation22 + $0x6d0] sm:$0xf]
    %v5891 = vld [vmem:[#allocation22 + $0x6d4] sm:$0xff]
    %v5892 = vld [vmem:[#allocation22 + $0x6dc] sm:$0xff]
    %v5893 = vld [vmem:[#allocation22 + $0x6e4] sm:$0xff]
    %v5894 = vld [vmem:[#allocation22 + $0x6ec] sm:$0xff]
    %v5895 = vld [vmem:[#allocation22 + $0x6f4] sm:$0xff]
    %v5896 = vld [vmem:[#allocation22 + $0x6fc] sm:$0xff]
    %v5897 = vld [vmem:[#allocation22 + $0x704] sm:$0xff]
    %v5898 = vld [vmem:[#allocation22 + $0x70c] sm:$0xff]
    %v5899 = vld [vmem:[#allocation22 + $0x714] sm:$0xff]
    %v5900 = vld [vmem:[#allocation22 + $0x71c] sm:$0xf]
    %v5901 = vld [vmem:[#allocation22 + $0x720] sm:$0xff]
    %v5902 = vld [vmem:[#allocation22 + $0x728] sm:$0xff]
    %v5903 = vld [vmem:[#allocation22 + $0x730] sm:$0xff]
    %v5904 = vld [vmem:[#allocation22 + $0x738] sm:$0xff]
    %v5905 = vld [vmem:[#allocation22 + $0x740] sm:$0xff]
    %v5906 = vld [vmem:[#allocation22 + $0x748] sm:$0xff]
    %v5907 = vld [vmem:[#allocation22 + $0x750] sm:$0xff]
    %v5908 = vld [vmem:[#allocation22 + $0x758] sm:$0xff]
    %v5909 = vld [vmem:[#allocation22 + $0x760] sm:$0xff]
    %v5910 = vld [vmem:[#allocation22 + $0x768] sm:$0xf]
    %v5911 = vld [vmem:[#allocation22 + $0x76c] sm:$0xff]
    %v5912 = vld [vmem:[#allocation22 + $0x774] sm:$0xff]
    %v5913 = vld [vmem:[#allocation22 + $0x77c] sm:$0xff]
    %v5914 = vld [vmem:[#allocation22 + $0x784] sm:$0xff]
    %v5915 = vld [vmem:[#allocation22 + $0x78c] sm:$0xff]
    %v5916 = vld [vmem:[#allocation22 + $0x794] sm:$0xff]
    %v5917 = vld [vmem:[#allocation22 + $0x79c] sm:$0xff]
    %v5918 = vld [vmem:[#allocation22 + $0x7a4] sm:$0xff]
    %v5919 = vld [vmem:[#allocation22 + $0x7ac] sm:$0xff]
    %v5920 = vld [vmem:[#allocation22 + $0x7b4] sm:$0xf]
    %v5921 = vld [vmem:[#allocation22 + $0x7b8] sm:$0xff]
    %v5922 = vld [vmem:[#allocation22 + $0x7c0] sm:$0xff]
    %v5923 = vld [vmem:[#allocation22 + $0x7c8] sm:$0xff]
    %v5924 = vld [vmem:[#allocation22 + $0x7d0] sm:$0xff]
    %v5925 = vld [vmem:[#allocation22 + $0x7d8] sm:$0xff]
    %v5926 = vld [vmem:[#allocation22 + $0x7e0] sm:$0xff]
    %v5927 = vld [vmem:[#allocation22 + $0x7e8] sm:$0xff]
    %v5928 = vld [vmem:[#allocation22 + $0x7f0] sm:$0xff]
    %v5929 = vld [vmem:[#allocation22 + $0x7f8] sm:$0xff]
    %v5930 = vld [vmem:[#allocation22 + $0x800] sm:$0xf]
    %v5931 = vld [vmem:[#allocation22 + $0x804] sm:$0xff]
    %v5932 = vld [vmem:[#allocation22 + $0x80c] sm:$0xff]
    %v5933 = vld [vmem:[#allocation22 + $0x814] sm:$0xff]
    %v5934 = vld [vmem:[#allocation22 + $0x81c] sm:$0xff]
    %v5935 = vld [vmem:[#allocation22 + $0x824] sm:$0xff]
    %v5936 = vld [vmem:[#allocation22 + $0x82c] sm:$0xff]
    %v5937 = vld [vmem:[#allocation22 + $0x834] sm:$0xff]
    %v5938 = vld [vmem:[#allocation22 + $0x83c] sm:$0xff]
    %v5939 = vld [vmem:[#allocation22 + $0x844] sm:$0xff]
    %v5940 = vld [vmem:[#allocation22 + $0x84c] sm:$0xf]
    %v5941 = vld [vmem:[#allocation22 + $0x850] sm:$0xff]
    %v5942 = vld [vmem:[#allocation22 + $0x858] sm:$0xff]
    %v5943 = vld [vmem:[#allocation22 + $0x860] sm:$0xff]
    %v5944 = vld [vmem:[#allocation22 + $0x868] sm:$0xff]
    %v5945 = vld [vmem:[#allocation22 + $0x870] sm:$0xff]
    %v5946 = vld [vmem:[#allocation22 + $0x878] sm:$0xff]
    %v5947 = vld [vmem:[#allocation22 + $0x880] sm:$0xff]
    %v5948 = vld [vmem:[#allocation22 + $0x888] sm:$0xff]
    %v5949 = vld [vmem:[#allocation22 + $0x890] sm:$0xff]
    %v5950 = vld [vmem:[#allocation22 + $0x898] sm:$0xf]
    %v5951 = vld [vmem:[#allocation22 + $0x89c] sm:$0xff]
    %v5952 = vld [vmem:[#allocation22 + $0x8a4] sm:$0xff]
    %v5953 = vld [vmem:[#allocation22 + $0x8ac] sm:$0xff]
    %v5954 = vld [vmem:[#allocation22 + $0x8b4] sm:$0xff]
    %v5955 = vld [vmem:[#allocation22 + $0x8bc] sm:$0xff]
    %v5956 = vld [vmem:[#allocation22 + $0x8c4] sm:$0xff]
    %v5957 = vld [vmem:[#allocation22 + $0x8cc] sm:$0xff]
    %v5958 = vld [vmem:[#allocation22 + $0x8d4] sm:$0xff]
    %v5959 = vld [vmem:[#allocation22 + $0x8dc] sm:$0xff]
    %v5960 = vld [vmem:[#allocation22 + $0x8e4] sm:$0xf]
    %v5961 = vld [vmem:[#allocation22 + $0x8e8] sm:$0xff]
    %v5962 = vld [vmem:[#allocation22 + $0x8f0] sm:$0xff]
    %v5963 = vld [vmem:[#allocation22 + $0x8f8] sm:$0xff]
    %v5964 = vld [vmem:[#allocation22 + $0x900] sm:$0xff]
    %v5965 = vld [vmem:[#allocation22 + $0x908] sm:$0xff]
    %v5966 = vld [vmem:[#allocation22 + $0x910] sm:$0xff]
    %v5967 = vld [vmem:[#allocation22 + $0x918] sm:$0xff]
    %v5968 = vld [vmem:[#allocation22 + $0x920] sm:$0xff]
    %v5969 = vld [vmem:[#allocation22 + $0x928] sm:$0xff]
    %v5970 = vld [vmem:[#allocation22 + $0x930] sm:$0xf]
    %v5971 = vld [vmem:[#allocation22 + $0x934] sm:$0xff]
    %v5972 = vld [vmem:[#allocation22 + $0x93c] sm:$0xff]
    %v5973 = vld [vmem:[#allocation22 + $0x944] sm:$0xff]
    %v5974 = vld [vmem:[#allocation22 + $0x94c] sm:$0xff]
    %v5975 = vld [vmem:[#allocation22 + $0x954] sm:$0xff]
    %v5976 = vld [vmem:[#allocation22 + $0x95c] sm:$0xff]
    %v5977 = vld [vmem:[#allocation22 + $0x964] sm:$0xff]
    %v5978 = vld [vmem:[#allocation22 + $0x96c] sm:$0xff]
    %v5979 = vld [vmem:[#allocation22 + $0x974] sm:$0xff]
    %v5980 = vld [vmem:[#allocation22 + $0x97c] sm:$0xf]
    %v5981 = vld [vmem:[#allocation22 + $0x980] sm:$0xff]
    %v5982 = vld [vmem:[#allocation22 + $0x988] sm:$0xff]
    %v5983 = vld [vmem:[#allocation22 + $0x990] sm:$0xff]
    %v5984 = vld [vmem:[#allocation22 + $0x998] sm:$0xff]
    %v5985 = vld [vmem:[#allocation22 + $0x9a0] sm:$0xff]
    %v5986 = vld [vmem:[#allocation22 + $0x9a8] sm:$0xff]
    %v5987 = vld [vmem:[#allocation22 + $0x9b0] sm:$0xff]
    %v5988 = vld [vmem:[#allocation22 + $0x9b8] sm:$0xff]
    %v5989 = vld [vmem:[#allocation22 + $0x9c0] sm:$0xff]
    %v5990 = vld [vmem:[#allocation22 + $0x9c8] sm:$0xf]
    %v5991 = vld [vmem:[#allocation22 + $0x9cc] sm:$0xff]
    %v5992 = vld [vmem:[#allocation22 + $0x9d4] sm:$0xff]
    %v5993 = vld [vmem:[#allocation22 + $0x9dc] sm:$0xff]
    %v5994 = vld [vmem:[#allocation22 + $0x9e4] sm:$0xff]
    %v5995 = vld [vmem:[#allocation22 + $0x9ec] sm:$0xff]
    %v5996 = vld [vmem:[#allocation22 + $0x9f4] sm:$0xff]
    %v5997 = vld [vmem:[#allocation22 + $0x9fc] sm:$0xff]
    %v5998 = vld [vmem:[#allocation22 + $0xa04] sm:$0xff]
    %v5999 = vld [vmem:[#allocation22 + $0xa0c] sm:$0xff]
    %v6000 = vld [vmem:[#allocation22 + $0xa14] sm:$0xf]
    %v6001 = vld [vmem:[#allocation22 + $0xa18] sm:$0xff]
    %v6002 = vld [vmem:[#allocation22 + $0xa20] sm:$0xff]
    %v6003 = vld [vmem:[#allocation22 + $0xa28] sm:$0xff]
    %v6004 = vld [vmem:[#allocation22 + $0xa30] sm:$0xff]
    %v6005 = vld [vmem:[#allocation22 + $0xa38] sm:$0xff]
    %v6006 = vld [vmem:[#allocation22 + $0xa40] sm:$0xff]
    %v6007 = vld [vmem:[#allocation22 + $0xa48] sm:$0xff]
    %v6008 = vld [vmem:[#allocation22 + $0xa50] sm:$0xff]
    %v6009 = vld [vmem:[#allocation22 + $0xa58] sm:$0xff]
    %v6010 = vld [vmem:[#allocation22 + $0xa60] sm:$0xf]
    %v6011 = vld [vmem:[#allocation22 + $0xa64] sm:$0xff]
    %v6012 = vld [vmem:[#allocation22 + $0xa6c] sm:$0xff]
    %v6013 = vld [vmem:[#allocation22 + $0xa74] sm:$0xff]
    %v6014 = vld [vmem:[#allocation22 + $0xa7c] sm:$0xff]
    %v6015 = vld [vmem:[#allocation22 + $0xa84] sm:$0xff]
    %v6016 = vld [vmem:[#allocation22 + $0xa8c] sm:$0xff]
    %v6017 = vld [vmem:[#allocation22 + $0xa94] sm:$0xff]
    %v6018 = vld [vmem:[#allocation22 + $0xa9c] sm:$0xff]
    %v6019 = vld [vmem:[#allocation22 + $0xaa4] sm:$0xff]
    %v6020 = vld [vmem:[#allocation22 + $0xaac] sm:$0xf]
    %v6021 = vld [vmem:[#allocation22 + $0xab0] sm:$0xff]
    %v6022 = vld [vmem:[#allocation22 + $0xab8] sm:$0xff]
    %v6023 = vld [vmem:[#allocation22 + $0xac0] sm:$0xff]
    %v6024 = vld [vmem:[#allocation22 + $0xac8] sm:$0xff]
    %v6025 = vld [vmem:[#allocation22 + $0xad0] sm:$0xff]
    %v6026 = vld [vmem:[#allocation22 + $0xad8] sm:$0xff]
    %v6027 = vld [vmem:[#allocation22 + $0xae0] sm:$0xff]
    %v6028 = vld [vmem:[#allocation22 + $0xae8] sm:$0xff]
    %v6029 = vld [vmem:[#allocation22 + $0xaf0] sm:$0xff]
    %v6030 = vld [vmem:[#allocation22 + $0xaf8] sm:$0xf]
    %v6031 = vld [vmem:[#allocation22 + $0xafc] sm:$0xff]
    %v6032 = vld [vmem:[#allocation22 + $0xb04] sm:$0xff]
    %v6033 = vld [vmem:[#allocation22 + $0xb0c] sm:$0xff]
    %v6034 = vld [vmem:[#allocation22 + $0xb14] sm:$0xff]
    %v6035 = vld [vmem:[#allocation22 + $0xb1c] sm:$0xff]
    %v6036 = vld [vmem:[#allocation22 + $0xb24] sm:$0xff]
    %v6037 = vld [vmem:[#allocation22 + $0xb2c] sm:$0xff]
    %v6038 = vld [vmem:[#allocation22 + $0xb34] sm:$0xff]
    %v6039 = vld [vmem:[#allocation22 + $0xb3c] sm:$0xff]
    %v6040 = vld [vmem:[#allocation22 + $0xb44] sm:$0xf]
    %v6041 = vld [vmem:[#allocation22 + $0xb48] sm:$0xff]
    %v6042 = vld [vmem:[#allocation22 + $0xb50] sm:$0xff]
    %v6043 = vld [vmem:[#allocation22 + $0xb58] sm:$0xff]
    %v6044 = vld [vmem:[#allocation22 + $0xb60] sm:$0xff]
    %v6045 = vld [vmem:[#allocation22 + $0xb68] sm:$0xff]
    %v6046 = vld [vmem:[#allocation22 + $0xb70] sm:$0xff]
    %v6047 = vld [vmem:[#allocation22 + $0xb78] sm:$0xff]
    %v6048 = vld [vmem:[#allocation22 + $0xb80] sm:$0xff]
    %v6049 = vld [vmem:[#allocation22 + $0xb88] sm:$0xff]
    %v6050 = vld [vmem:[#allocation22 + $0xb90] sm:$0xf]
    %v6051 = vld [vmem:[#allocation22 + $0xb94] sm:$0xff]
    %v6052 = vld [vmem:[#allocation22 + $0xb9c] sm:$0xff]
    %v6053 = vld [vmem:[#allocation22 + $0xba4] sm:$0xff]
    %v6054 = vld [vmem:[#allocation22 + $0xbac] sm:$0xff]
    %v6055 = vld [vmem:[#allocation22 + $0xbb4] sm:$0xff]
    %v6056 = vld [vmem:[#allocation22 + $0xbbc] sm:$0xff]
    %v6057 = vld [vmem:[#allocation22 + $0xbc4] sm:$0xff]
    %v6058 = vld [vmem:[#allocation22 + $0xbcc] sm:$0xff]
    %v6059 = vld [vmem:[#allocation22 + $0xbd4] sm:$0xff]
    %v6060 = vld [vmem:[#allocation22 + $0xbdc] sm:$0xf]
    %v6061 = vld [vmem:[#allocation22 + $0xbe0] sm:$0xff]
    %v6062 = vld [vmem:[#allocation22 + $0xbe8] sm:$0xff]
    %v6063 = vld [vmem:[#allocation22 + $0xbf0] sm:$0xff]
    %v6064 = vld [vmem:[#allocation22 + $0xbf8] sm:$0xff]
    %v6065 = vld [vmem:[#allocation22 + $0xc00] sm:$0xff]
    %v6066 = vld [vmem:[#allocation22 + $0xc08] sm:$0xff]
    %v6067 = vld [vmem:[#allocation22 + $0xc10] sm:$0xff]
    %v6068 = vld [vmem:[#allocation22 + $0xc18] sm:$0xff]
    %v6069 = vld [vmem:[#allocation22 + $0xc20] sm:$0xff]
    %v6070 = vld [vmem:[#allocation22 + $0xc28] sm:$0xf]
    %v6071 = vld [vmem:[#allocation22 + $0xc2c] sm:$0xff]
    %v6072 = vld [vmem:[#allocation22 + $0xc34] sm:$0xff]
    %v6073 = vld [vmem:[#allocation22 + $0xc3c] sm:$0xff]
    %v6074 = vld [vmem:[#allocation22 + $0xc44] sm:$0xff]
    %v6075 = vld [vmem:[#allocation22 + $0xc4c] sm:$0xff]
    %v6076 = vld [vmem:[#allocation22 + $0xc54] sm:$0xff]
    %v6077 = vld [vmem:[#allocation22 + $0xc5c] sm:$0xff]
    %v6078 = vld [vmem:[#allocation22 + $0xc64] sm:$0xff]
    %v6079 = vld [vmem:[#allocation22 + $0xc6c] sm:$0xff]
    %v6080 = vld [vmem:[#allocation22 + $0xc74] sm:$0xf]
    %v6081 = vld [vmem:[#allocation22 + $0xc78] sm:$0xff]
    %v6082 = vld [vmem:[#allocation22 + $0xc80] sm:$0xff]
    %v6083 = vld [vmem:[#allocation22 + $0xc88] sm:$0xff]
    %v6084 = vld [vmem:[#allocation22 + $0xc90] sm:$0xff]
    %v6085 = vld [vmem:[#allocation22 + $0xc98] sm:$0xff]
    %v6086 = vld [vmem:[#allocation22 + $0xca0] sm:$0xff]
    %v6087 = vld [vmem:[#allocation22 + $0xca8] sm:$0xff]
    %v6088 = vld [vmem:[#allocation22 + $0xcb0] sm:$0xff]
    %v6089 = vld [vmem:[#allocation22 + $0xcb8] sm:$0xff]
    %v6090 = vld [vmem:[#allocation22 + $0xcc0] sm:$0xf]
    %v6091 = vld [vmem:[#allocation22 + $0xcc4] sm:$0xff]
    %v6092 = vld [vmem:[#allocation22 + $0xccc] sm:$0xff]
    %v6093 = vld [vmem:[#allocation22 + $0xcd4] sm:$0xff]
    %v6094 = vld [vmem:[#allocation22 + $0xcdc] sm:$0xff]
    %v6095 = vld [vmem:[#allocation22 + $0xce4] sm:$0xff]
    %v6096 = vld [vmem:[#allocation22 + $0xcec] sm:$0xff]
    %v6097 = vld [vmem:[#allocation22 + $0xcf4] sm:$0xff]
    %v6098 = vld [vmem:[#allocation22 + $0xcfc] sm:$0xff]
    %v6099 = vld [vmem:[#allocation22 + $0xd04] sm:$0xff]
    %v6100 = vld [vmem:[#allocation22 + $0xd0c] sm:$0xf]
    %v6101 = vld [vmem:[#allocation22 + $0xd10] sm:$0xff]
    %v6102 = vld [vmem:[#allocation22 + $0xd18] sm:$0xff]
    %v6103 = vld [vmem:[#allocation22 + $0xd20] sm:$0xff]
    %v6104 = vld [vmem:[#allocation22 + $0xd28] sm:$0xff]
    %v6105 = vld [vmem:[#allocation22 + $0xd30] sm:$0xff]
    %v6106 = vld [vmem:[#allocation22 + $0xd38] sm:$0xff]
    %v6107 = vld [vmem:[#allocation22 + $0xd40] sm:$0xff]
    %v6108 = vld [vmem:[#allocation22 + $0xd48] sm:$0xff]
    %v6109 = vld [vmem:[#allocation22 + $0xd50] sm:$0xff]
    %v6110 = vld [vmem:[#allocation22 + $0xd58] sm:$0xf]
    %v6111 = vld [vmem:[#allocation22 + $0xd5c] sm:$0xff]
    %v6112 = vld [vmem:[#allocation22 + $0xd64] sm:$0xff]
    %v6113 = vld [vmem:[#allocation22 + $0xd6c] sm:$0xff]
    %v6114 = vld [vmem:[#allocation22 + $0xd74] sm:$0xff]
    %v6115 = vld [vmem:[#allocation22 + $0xd7c] sm:$0xff]
    %v6116 = vld [vmem:[#allocation22 + $0xd84] sm:$0xff]
    %v6117 = vld [vmem:[#allocation22 + $0xd8c] sm:$0xff]
    %v6118 = vld [vmem:[#allocation22 + $0xd94] sm:$0xff]
    %v6119 = vld [vmem:[#allocation22 + $0xd9c] sm:$0xff]
    %v6120 = vld [vmem:[#allocation22 + $0xda4] sm:$0xf]
    %v6121 = vld [vmem:[#allocation22 + $0xda8] sm:$0xff]
    %v6122 = vld [vmem:[#allocation22 + $0xdb0] sm:$0xff]
    %v6123 = vld [vmem:[#allocation22 + $0xdb8] sm:$0xff]
    %v6124 = vld [vmem:[#allocation22 + $0xdc0] sm:$0xff]
    %v6125 = vld [vmem:[#allocation22 + $0xdc8] sm:$0xff]
    %v6126 = vld [vmem:[#allocation22 + $0xdd0] sm:$0xff]
    %v6127 = vld [vmem:[#allocation22 + $0xdd8] sm:$0xff]
    %v6128 = vld [vmem:[#allocation22 + $0xde0] sm:$0xff]
    %v6129 = vld [vmem:[#allocation22 + $0xde8] sm:$0xff]
    %v6130 = vld [vmem:[#allocation22 + $0xdf0] sm:$0xf]
    %v6131 = vld [vmem:[#allocation22 + $0xdf4] sm:$0xff]
    %v6132 = vld [vmem:[#allocation22 + $0xdfc] sm:$0xff]
    %v6133 = vld [vmem:[#allocation22 + $0xe04] sm:$0xff]
    %v6134 = vld [vmem:[#allocation22 + $0xe0c] sm:$0xff]
    %v6135 = vld [vmem:[#allocation22 + $0xe14] sm:$0xff]
    %v6136 = vld [vmem:[#allocation22 + $0xe1c] sm:$0xff]
    %v6137 = vld [vmem:[#allocation22 + $0xe24] sm:$0xff]
    %v6138 = vld [vmem:[#allocation22 + $0xe2c] sm:$0xff]
    %v6139 = vld [vmem:[#allocation22 + $0xe34] sm:$0xff]
    %v6140 = vld [vmem:[#allocation22 + $0xe3c] sm:$0xf]
    %v6141 = vld [vmem:[#allocation22 + $0xe40] sm:$0xff]
    %v6142 = vld [vmem:[#allocation22 + $0xe48] sm:$0xff]
    %v6143 = vld [vmem:[#allocation22 + $0xe50] sm:$0xff]
    %v6144 = vld [vmem:[#allocation22 + $0xe58] sm:$0xff]
    %v6145 = vld [vmem:[#allocation22 + $0xe60] sm:$0xff]
    %v6146 = vld [vmem:[#allocation22 + $0xe68] sm:$0xff]
    %v6147 = vld [vmem:[#allocation22 + $0xe70] sm:$0xff]
    %v6148 = vld [vmem:[#allocation22 + $0xe78] sm:$0xff]
    %v6149 = vld [vmem:[#allocation22 + $0xe80] sm:$0xff]
    %v6150 = vld [vmem:[#allocation22 + $0xe88] sm:$0xf]
    %v6151 = vld [vmem:[#allocation22 + $0xe8c] sm:$0xff]
    %v6152 = vld [vmem:[#allocation22 + $0xe94] sm:$0xff]
    %v6153 = vld [vmem:[#allocation22 + $0xe9c] sm:$0xff]
    %v6154 = vld [vmem:[#allocation22 + $0xea4] sm:$0xff]
    %v6155 = vld [vmem:[#allocation22 + $0xeac] sm:$0xff]
    %v6156 = vld [vmem:[#allocation22 + $0xeb4] sm:$0xff]
    %v6157 = vld [vmem:[#allocation22 + $0xebc] sm:$0xff]
    %v6158 = vld [vmem:[#allocation22 + $0xec4] sm:$0xff]
    %v6159 = vld [vmem:[#allocation22 + $0xecc] sm:$0xff]
    %v6160 = vld [vmem:[#allocation22 + $0xed4] sm:$0xf]
    %v6161 = vld [vmem:[#allocation22 + $0xed8] sm:$0xff]
    %v6162 = vld [vmem:[#allocation22 + $0xee0] sm:$0xff]
    %v6163 = vld [vmem:[#allocation22 + $0xee8] sm:$0xff]
    %v6164 = vld [vmem:[#allocation22 + $0xef0] sm:$0xff]
    %v6165 = vld [vmem:[#allocation22 + $0xef8] sm:$0xff]
    %v6166 = vld [vmem:[#allocation22 + $0xf00] sm:$0xff]
    %v6167 = vld [vmem:[#allocation22 + $0xf08] sm:$0xff]
    %v6168 = vld [vmem:[#allocation22 + $0xf10] sm:$0xff]
    %v6169 = vld [vmem:[#allocation22 + $0xf18] sm:$0xff]
    %v6170 = vld [vmem:[#allocation22 + $0xf20] sm:$0xf]
    %v6171 = vld [vmem:[#allocation22 + $0xf24] sm:$0xff]
    %v6172 = vld [vmem:[#allocation22 + $0xf2c] sm:$0xff]
    %v6173 = vld [vmem:[#allocation22 + $0xf34] sm:$0xff]
    %v6174 = vld [vmem:[#allocation22 + $0xf3c] sm:$0xff]
    %v6175 = vld [vmem:[#allocation22 + $0xf44] sm:$0xff]
    %v6176 = vld [vmem:[#allocation22 + $0xf4c] sm:$0xff]
    %v6177 = vld [vmem:[#allocation22 + $0xf54] sm:$0xff]
    %v6178 = vld [vmem:[#allocation22 + $0xf5c] sm:$0xff]
    %v6179 = vld [vmem:[#allocation22 + $0xf64] sm:$0xff]
    %v6180 = vld [vmem:[#allocation22 + $0xf6c] sm:$0xf]
    %v6181 = vld [vmem:[#allocation22 + $0xf70] sm:$0xff]
    %v6182 = vld [vmem:[#allocation22 + $0xf78] sm:$0xff]
    %v6183 = vld [vmem:[#allocation22 + $0xf80] sm:$0xff]
    %v6184 = vld [vmem:[#allocation22 + $0xf88] sm:$0xff]
    %v6185 = vld [vmem:[#allocation22 + $0xf90] sm:$0xff]
    %v6186 = vld [vmem:[#allocation22 + $0xf98] sm:$0xff]
    %v6187 = vld [vmem:[#allocation22 + $0xfa0] sm:$0xff]
    %v6188 = vld [vmem:[#allocation22 + $0xfa8] sm:$0xff]
    %v6189 = vld [vmem:[#allocation22 + $0xfb0] sm:$0xff]
    %v6190 = vld [vmem:[#allocation22 + $0xfb8] sm:$0xf]
    %v6191 = vld [vmem:[#allocation22 + $0xfbc] sm:$0xff]
    %v6192 = vld [vmem:[#allocation22 + $0xfc4] sm:$0xff]
    %v6193 = vld [vmem:[#allocation22 + $0xfcc] sm:$0xff]
    %v6194 = vld [vmem:[#allocation22 + $0xfd4] sm:$0xff]
    %v6195 = vld [vmem:[#allocation22 + $0xfdc] sm:$0xff]
    %v6196 = vld [vmem:[#allocation22 + $0xfe4] sm:$0xff]
    %v6197 = vld [vmem:[#allocation22 + $0xfec] sm:$0xff]
    %v6198 = vld [vmem:[#allocation22 + $0xff4] sm:$0xff]
    %v6199 = vld [vmem:[#allocation22 + $0xffc] sm:$0xff]
    %v6200 = vld [vmem:[#allocation22 + $0x1004] sm:$0xf]
    %v6201 = vld [vmem:[#allocation22 + $0x1008] sm:$0xff]
    %v6202 = vld [vmem:[#allocation22 + $0x1010] sm:$0xff]
    %v6203 = vld [vmem:[#allocation22 + $0x1018] sm:$0xff]
    %v6204 = vld [vmem:[#allocation22 + $0x1020] sm:$0xff]
    %v6205 = vld [vmem:[#allocation22 + $0x1028] sm:$0xff]
    %v6206 = vld [vmem:[#allocation22 + $0x1030] sm:$0xff]
    %v6207 = vld [vmem:[#allocation22 + $0x1038] sm:$0xff]
    %v6208 = vld [vmem:[#allocation22 + $0x1040] sm:$0xff]
    %v6209 = vld [vmem:[#allocation22 + $0x1048] sm:$0xff]
    %v6210 = vld [vmem:[#allocation22 + $0x1050] sm:$0xf]
    %v6211 = vld [vmem:[#allocation22 + $0x1054] sm:$0xff]
    %v6212 = vld [vmem:[#allocation22 + $0x105c] sm:$0xff]
    %v6213 = vld [vmem:[#allocation22 + $0x1064] sm:$0xff]
    %v6214 = vld [vmem:[#allocation22 + $0x106c] sm:$0xff]
    %v6215 = vld [vmem:[#allocation22 + $0x1074] sm:$0xff]
    %v6216 = vld [vmem:[#allocation22 + $0x107c] sm:$0xff]
    %v6217 = vld [vmem:[#allocation22 + $0x1084] sm:$0xff]
    %v6218 = vld [vmem:[#allocation22 + $0x108c] sm:$0xff]
    %v6219 = vld [vmem:[#allocation22 + $0x1094] sm:$0xff]
    %v6220 = vld [vmem:[#allocation22 + $0x109c] sm:$0xf]
    %v6221 = vld [vmem:[#allocation22 + $0x10a0] sm:$0xff]
    %v6222 = vld [vmem:[#allocation22 + $0x10a8] sm:$0xff]
    %v6223 = vld [vmem:[#allocation22 + $0x10b0] sm:$0xff]
    %v6224 = vld [vmem:[#allocation22 + $0x10b8] sm:$0xff]
    %v6225 = vld [vmem:[#allocation22 + $0x10c0] sm:$0xff]
    %v6226 = vld [vmem:[#allocation22 + $0x10c8] sm:$0xff]
    %v6227 = vld [vmem:[#allocation22 + $0x10d0] sm:$0xff]
    %v6228 = vld [vmem:[#allocation22 + $0x10d8] sm:$0xff]
    %v6229 = vld [vmem:[#allocation22 + $0x10e0] sm:$0xff]
    %v6230 = vld [vmem:[#allocation22 + $0x10e8] sm:$0xf]
    %v6231 = vld [vmem:[#allocation22 + $0x10ec] sm:$0xff]
    %v6232 = vld [vmem:[#allocation22 + $0x10f4] sm:$0xff]
    %v6233 = vld [vmem:[#allocation22 + $0x10fc] sm:$0xff]
    %v6234 = vld [vmem:[#allocation22 + $0x1104] sm:$0xff]
    %v6235 = vld [vmem:[#allocation22 + $0x110c] sm:$0xff]
    %v6236 = vld [vmem:[#allocation22 + $0x1114] sm:$0xff]
    %v6237 = vld [vmem:[#allocation22 + $0x111c] sm:$0xff]
    %v6238 = vld [vmem:[#allocation22 + $0x1124] sm:$0xff]
    %v6239 = vld [vmem:[#allocation22 + $0x112c] sm:$0xff]
    %v6240 = vld [vmem:[#allocation22 + $0x1134] sm:$0xf]
    %v6241 = vld [vmem:[#allocation22 + $0x1138] sm:$0xff]
    %v6242 = vld [vmem:[#allocation22 + $0x1140] sm:$0xff]
    %v6243 = vld [vmem:[#allocation22 + $0x1148] sm:$0xff]
    %v6244 = vld [vmem:[#allocation22 + $0x1150] sm:$0xff]
    %v6245 = vld [vmem:[#allocation22 + $0x1158] sm:$0xff]
    %v6246 = vld [vmem:[#allocation22 + $0x1160] sm:$0xff]
    %v6247 = vld [vmem:[#allocation22 + $0x1168] sm:$0xff]
    %v6248 = vld [vmem:[#allocation22 + $0x1170] sm:$0xff]
    %v6249 = vld [vmem:[#allocation22 + $0x1178] sm:$0xff]
    %v6250 = vld [vmem:[#allocation22 + $0x1180] sm:$0xf]
    %v6251 = vld [vmem:[#allocation22 + $0x1184] sm:$0xff]
    %v6252 = vld [vmem:[#allocation22 + $0x118c] sm:$0xff]
    %v6253 = vld [vmem:[#allocation22 + $0x1194] sm:$0xff]
    %v6254 = vld [vmem:[#allocation22 + $0x119c] sm:$0xff]
    %v6255 = vld [vmem:[#allocation22 + $0x11a4] sm:$0xff]
    %v6256 = vld [vmem:[#allocation22 + $0x11ac] sm:$0xff]
    %v6257 = vld [vmem:[#allocation22 + $0x11b4] sm:$0xff]
    %v6258 = vld [vmem:[#allocation22 + $0x11bc] sm:$0xff]
    %v6259 = vld [vmem:[#allocation22 + $0x11c4] sm:$0xff]
    %v6260 = vld [vmem:[#allocation22 + $0x11cc] sm:$0xf]
    %v6261 = vld [vmem:[#allocation22 + $0x11d0] sm:$0xff]
    %v6262 = vld [vmem:[#allocation22 + $0x11d8] sm:$0xff]
    %v6263 = vld [vmem:[#allocation22 + $0x11e0] sm:$0xff]
    %v6264 = vld [vmem:[#allocation22 + $0x11e8] sm:$0xff]
    %v6265 = vld [vmem:[#allocation22 + $0x11f0] sm:$0xff]
    %v6266 = vld [vmem:[#allocation22 + $0x11f8] sm:$0xff]
    %v6267 = vld [vmem:[#allocation22 + $0x1200] sm:$0xff]
    %v6268 = vld [vmem:[#allocation22 + $0x1208] sm:$0xff]
    %v6269 = vld [vmem:[#allocation22 + $0x1210] sm:$0xff]
    %v6270 = vld [vmem:[#allocation22 + $0x1218] sm:$0xf]
    %v6271 = vld [vmem:[#allocation22 + $0x121c] sm:$0xff]
    %v6272 = vld [vmem:[#allocation22 + $0x1224] sm:$0xff]
    %v6273 = vld [vmem:[#allocation22 + $0x122c] sm:$0xff]
    %v6274 = vld [vmem:[#allocation22 + $0x1234] sm:$0xff]
    %v6275 = vld [vmem:[#allocation22 + $0x123c] sm:$0xff]
    %v6276 = vld [vmem:[#allocation22 + $0x1244] sm:$0xff]
    %v6277 = vld [vmem:[#allocation22 + $0x124c] sm:$0xff]
    %v6278 = vld [vmem:[#allocation22 + $0x1254] sm:$0xff]
    %v6279 = vld [vmem:[#allocation22 + $0x125c] sm:$0xff]
    %v6280 = vld [vmem:[#allocation22 + $0x1264] sm:$0xf]
    %v6281 = vld [vmem:[#allocation22 + $0x1268] sm:$0xff]
    %v6282 = vld [vmem:[#allocation22 + $0x1270] sm:$0xff]
    %v6283 = vld [vmem:[#allocation22 + $0x1278] sm:$0xff]
    %v6284 = vld [vmem:[#allocation22 + $0x1280] sm:$0xff]
    %v6285 = vld [vmem:[#allocation22 + $0x1288] sm:$0xff]
    %v6286 = vld [vmem:[#allocation22 + $0x1290] sm:$0xff]
    %v6287 = vld [vmem:[#allocation22 + $0x1298] sm:$0xff]
    %v6288 = vld [vmem:[#allocation22 + $0x12a0] sm:$0xff]
    %v6289 = vld [vmem:[#allocation22 + $0x12a8] sm:$0xff]
    %v6290 = vld [vmem:[#allocation22 + $0x12b0] sm:$0xf]
    %v6291 = vld [vmem:[#allocation22 + $0x12b4] sm:$0xff]
    %v6292 = vld [vmem:[#allocation22 + $0x12bc] sm:$0xff]
    %v6293 = vld [vmem:[#allocation22 + $0x12c4] sm:$0xff]
    %v6294 = vld [vmem:[#allocation22 + $0x12cc] sm:$0xff]
    %v6295 = vld [vmem:[#allocation22 + $0x12d4] sm:$0xff]
    %v6296 = vld [vmem:[#allocation22 + $0x12dc] sm:$0xff]
    %v6297 = vld [vmem:[#allocation22 + $0x12e4] sm:$0xff]
    %v6298 = vld [vmem:[#allocation22 + $0x12ec] sm:$0xff]
    %v6299 = vld [vmem:[#allocation22 + $0x12f4] sm:$0xff]
    %v6300 = vld [vmem:[#allocation22 + $0x12fc] sm:$0xf]
    %v6301 = vld [vmem:[#allocation23] sm:$0xff]
    %v6302 = vld [vmem:[#allocation23 + $0x8] sm:$0xff]
    %v6303 = vld [vmem:[#allocation23 + $0x10] sm:$0x7]
    %v6307 = vlaneseq
    %v6308 = vshrl.u32 %v6307, 7
    %v6309 = vsub.s32 0, %v6308
    %v6310 = vrot.slane %v6301, %v6309
    %v6311 = vlaneseq
    %v6312 = vshrl.u32 %v6311, 7
    %v6313 = vsub.s32 1, %v6312
    %v6314 = vrot.slane %v6301, %v6313
    %v6315 = vlaneseq
    %v6316 = vshrl.u32 %v6315, 7
    %v6317 = vsub.s32 2, %v6316
    %v6318 = vrot.slane %v6301, %v6317
    %v6319 = vlaneseq
    %v6320 = vshrl.u32 %v6319, 7
    %v6321 = vsub.s32 3, %v6320
    %v6322 = vrot.slane %v6301, %v6321
    %v6323 = vlaneseq
    %v6324 = vshrl.u32 %v6323, 7
    %v6325 = vsub.s32 4, %v6324
    %v6326 = vrot.slane %v6301, %v6325
    %v6327 = vlaneseq
    %v6328 = vshrl.u32 %v6327, 7
    %v6329 = vsub.s32 5, %v6328
    %v6330 = vrot.slane %v6301, %v6329
    %v6331 = vlaneseq
    %v6332 = vshrl.u32 %v6331, 7
    %v6333 = vsub.s32 6, %v6332
    %v6334 = vrot.slane %v6301, %v6333
    %v6335 = vlaneseq
    %v6336 = vshrl.u32 %v6335, 7
    %v6337 = vsub.s32 7, %v6336
    %v6338 = vrot.slane %v6301, %v6337
    %v6339 = vlaneseq
    %v6340 = vshrl.u32 %v6339, 7
    %v6341 = vsub.s32 0, %v6340
    %v6342 = vrot.slane %v6302, %v6341
    %v6343 = vlaneseq
    %v6344 = vshrl.u32 %v6343, 7
    %v6345 = vsub.s32 1, %v6344
    %v6346 = vrot.slane %v6302, %v6345
    %v6347 = vlaneseq
    %v6348 = vshrl.u32 %v6347, 7
    %v6349 = vsub.s32 2, %v6348
    %v6350 = vrot.slane %v6302, %v6349
    %v6351 = vlaneseq
    %v6352 = vshrl.u32 %v6351, 7
    %v6353 = vsub.s32 3, %v6352
    %v6354 = vrot.slane %v6302, %v6353
    %v6355 = vlaneseq
    %v6356 = vshrl.u32 %v6355, 7
    %v6357 = vsub.s32 4, %v6356
    %v6358 = vrot.slane %v6302, %v6357
    %v6359 = vlaneseq
    %v6360 = vshrl.u32 %v6359, 7
    %v6361 = vsub.s32 5, %v6360
    %v6362 = vrot.slane %v6302, %v6361
    %v6363 = vlaneseq
    %v6364 = vshrl.u32 %v6363, 7
    %v6365 = vsub.s32 6, %v6364
    %v6366 = vrot.slane %v6302, %v6365
    %v6367 = vlaneseq
    %v6368 = vshrl.u32 %v6367, 7
    %v6369 = vsub.s32 7, %v6368
    %v6370 = vrot.slane %v6302, %v6369
    %v6371 = vlaneseq
    %v6372 = vshrl.u32 %v6371, 7
    %v6373 = vsub.s32 0, %v6372
    %v6374 = vrot.slane %v6303, %v6373
    %v6375 = vlaneseq
    %v6376 = vshrl.u32 %v6375, 7
    %v6377 = vsub.s32 1, %v6376
    %v6378 = vrot.slane %v6303, %v6377
    %v6379 = vlaneseq
    %v6380 = vshrl.u32 %v6379, 7
    %v6381 = vsub.s32 2, %v6380
    %v6382 = vrot.slane %v6303, %v6381
    %v7042 = vunpack.c.l.b16 %v5661
    %v7043 = vunpack.c.h.b16 %v5661
    %v7044 = vunpack.c.l.b16 %v5662
    %v7045 = vunpack.c.h.b16 %v5662
    %v7046 = vunpack.c.l.b16 %v5663
    %v7047 = vunpack.c.h.b16 %v5663
    %v7048 = vunpack.c.l.b16 %v5664
    %v7049 = vunpack.c.h.b16 %v5664
    %v7050 = vunpack.c.l.b16 %v5665
    %v7051 = vunpack.c.h.b16 %v5665
    %v7052 = vunpack.c.l.b16 %v5666
    %v7053 = vunpack.c.h.b16 %v5666
    %v7054 = vunpack.c.l.b16 %v5667
    %v7055 = vunpack.c.h.b16 %v5667
    %v7056 = vunpack.c.l.b16 %v5668
    %v7057 = vunpack.c.h.b16 %v5668
    %v7058 = vunpack.c.l.b16 %v5669
    %v7059 = vunpack.c.h.b16 %v5669
    %v7060 = vunpack.c.l.b16 %v5670
    %v7061 = vunpack.c.l.b16 %v5671
    %v7062 = vunpack.c.h.b16 %v5671
    %v7063 = vunpack.c.l.b16 %v5672
    %v7064 = vunpack.c.h.b16 %v5672
    %v7065 = vunpack.c.l.b16 %v5673
    %v7066 = vunpack.c.h.b16 %v5673
    %v7067 = vunpack.c.l.b16 %v5674
    %v7068 = vunpack.c.h.b16 %v5674
    %v7069 = vunpack.c.l.b16 %v5675
    %v7070 = vunpack.c.h.b16 %v5675
    %v7071 = vunpack.c.l.b16 %v5676
    %v7072 = vunpack.c.h.b16 %v5676
    %v7073 = vunpack.c.l.b16 %v5677
    %v7074 = vunpack.c.h.b16 %v5677
    %v7075 = vunpack.c.l.b16 %v5678
    %v7076 = vunpack.c.h.b16 %v5678
    %v7077 = vunpack.c.l.b16 %v5679
    %v7078 = vunpack.c.h.b16 %v5679
    %v7079 = vunpack.c.l.b16 %v5680
    %v7080 = vunpack.c.l.b16 %v5681
    %v7081 = vunpack.c.h.b16 %v5681
    %v7082 = vunpack.c.l.b16 %v5682
    %v7083 = vunpack.c.h.b16 %v5682
    %v7084 = vunpack.c.l.b16 %v5683
    %v7085 = vunpack.c.h.b16 %v5683
    %v7086 = vunpack.c.l.b16 %v5684
    %v7087 = vunpack.c.h.b16 %v5684
    %v7088 = vunpack.c.l.b16 %v5685
    %v7089 = vunpack.c.h.b16 %v5685
    %v7090 = vunpack.c.l.b16 %v5686
    %v7091 = vunpack.c.h.b16 %v5686
    %v7092 = vunpack.c.l.b16 %v5687
    %v7093 = vunpack.c.h.b16 %v5687
    %v7094 = vunpack.c.l.b16 %v5688
    %v7095 = vunpack.c.h.b16 %v5688
    %v7096 = vunpack.c.l.b16 %v5689
    %v7097 = vunpack.c.h.b16 %v5689
    %v7098 = vunpack.c.l.b16 %v5690
    %v7099 = vunpack.c.l.b16 %v5691
    %v7100 = vunpack.c.h.b16 %v5691
    %v7101 = vunpack.c.l.b16 %v5692
    %v7102 = vunpack.c.h.b16 %v5692
    %v7103 = vunpack.c.l.b16 %v5693
    %v7104 = vunpack.c.h.b16 %v5693
    %v7105 = vunpack.c.l.b16 %v5694
    %v7106 = vunpack.c.h.b16 %v5694
    %v7107 = vunpack.c.l.b16 %v5695
    %v7108 = vunpack.c.h.b16 %v5695
    %v7109 = vunpack.c.l.b16 %v5696
    %v7110 = vunpack.c.h.b16 %v5696
    %v7111 = vunpack.c.l.b16 %v5697
    %v7112 = vunpack.c.h.b16 %v5697
    %v7113 = vunpack.c.l.b16 %v5698
    %v7114 = vunpack.c.h.b16 %v5698
    %v7115 = vunpack.c.l.b16 %v5699
    %v7116 = vunpack.c.h.b16 %v5699
    %v7117 = vunpack.c.l.b16 %v5700
    %v7118 = vunpack.c.l.b16 %v5701
    %v7119 = vunpack.c.h.b16 %v5701
    %v7120 = vunpack.c.l.b16 %v5702
    %v7121 = vunpack.c.h.b16 %v5702
    %v7122 = vunpack.c.l.b16 %v5703
    %v7123 = vunpack.c.h.b16 %v5703
    %v7124 = vunpack.c.l.b16 %v5704
    %v7125 = vunpack.c.h.b16 %v5704
    %v7126 = vunpack.c.l.b16 %v5705
    %v7127 = vunpack.c.h.b16 %v5705
    %v7128 = vunpack.c.l.b16 %v5706
    %v7129 = vunpack.c.h.b16 %v5706
    %v7130 = vunpack.c.l.b16 %v5707
    %v7131 = vunpack.c.h.b16 %v5707
    %v7132 = vunpack.c.l.b16 %v5708
    %v7133 = vunpack.c.h.b16 %v5708
    %v7134 = vunpack.c.l.b16 %v5709
    %v7135 = vunpack.c.h.b16 %v5709
    %v7136 = vunpack.c.l.b16 %v5710
    %v7137 = vunpack.c.l.b16 %v5711
    %v7138 = vunpack.c.h.b16 %v5711
    %v7139 = vunpack.c.l.b16 %v5712
    %v7140 = vunpack.c.h.b16 %v5712
    %v7141 = vunpack.c.l.b16 %v5713
    %v7142 = vunpack.c.h.b16 %v5713
    %v7143 = vunpack.c.l.b16 %v5714
    %v7144 = vunpack.c.h.b16 %v5714
    %v7145 = vunpack.c.l.b16 %v5715
    %v7146 = vunpack.c.h.b16 %v5715
    %v7147 = vunpack.c.l.b16 %v5716
    %v7148 = vunpack.c.h.b16 %v5716
    %v7149 = vunpack.c.l.b16 %v5717
    %v7150 = vunpack.c.h.b16 %v5717
    %v7151 = vunpack.c.l.b16 %v5718
    %v7152 = vunpack.c.h.b16 %v5718
    %v7153 = vunpack.c.l.b16 %v5719
    %v7154 = vunpack.c.h.b16 %v5719
    %v7155 = vunpack.c.l.b16 %v5720
    %v7156 = vunpack.c.l.b16 %v5721
    %v7157 = vunpack.c.h.b16 %v5721
    %v7158 = vunpack.c.l.b16 %v5722
    %v7159 = vunpack.c.h.b16 %v5722
    %v7160 = vunpack.c.l.b16 %v5723
    %v7161 = vunpack.c.h.b16 %v5723
    %v7162 = vunpack.c.l.b16 %v5724
    %v7163 = vunpack.c.h.b16 %v5724
    %v7164 = vunpack.c.l.b16 %v5725
    %v7165 = vunpack.c.h.b16 %v5725
    %v7166 = vunpack.c.l.b16 %v5726
    %v7167 = vunpack.c.h.b16 %v5726
    %v7168 = vunpack.c.l.b16 %v5727
    %v7169 = vunpack.c.h.b16 %v5727
    %v7170 = vunpack.c.l.b16 %v5728
    %v7171 = vunpack.c.h.b16 %v5728
    %v7172 = vunpack.c.l.b16 %v5729
    %v7173 = vunpack.c.h.b16 %v5729
    %v7174 = vunpack.c.l.b16 %v5730
    %v7175 = vunpack.c.l.b16 %v5731
    %v7176 = vunpack.c.h.b16 %v5731
    %v7177 = vunpack.c.l.b16 %v5732
    %v7178 = vunpack.c.h.b16 %v5732
    %v7179 = vunpack.c.l.b16 %v5733
    %v7180 = vunpack.c.h.b16 %v5733
    %v7181 = vunpack.c.l.b16 %v5734
    %v7182 = vunpack.c.h.b16 %v5734
    %v7183 = vunpack.c.l.b16 %v5735
    %v7184 = vunpack.c.h.b16 %v5735
    %v7185 = vunpack.c.l.b16 %v5736
    %v7186 = vunpack.c.h.b16 %v5736
    %v7187 = vunpack.c.l.b16 %v5737
    %v7188 = vunpack.c.h.b16 %v5737
    %v7189 = vunpack.c.l.b16 %v5738
    %v7190 = vunpack.c.h.b16 %v5738
    %v7191 = vunpack.c.l.b16 %v5739
    %v7192 = vunpack.c.h.b16 %v5739
    %v7193 = vunpack.c.l.b16 %v5740
    %v7194 = vunpack.c.l.b16 %v5741
    %v7195 = vunpack.c.h.b16 %v5741
    %v7196 = vunpack.c.l.b16 %v5742
    %v7197 = vunpack.c.h.b16 %v5742
    %v7198 = vunpack.c.l.b16 %v5743
    %v7199 = vunpack.c.h.b16 %v5743
    %v7200 = vunpack.c.l.b16 %v5744
    %v7201 = vunpack.c.h.b16 %v5744
    %v7202 = vunpack.c.l.b16 %v5745
    %v7203 = vunpack.c.h.b16 %v5745
    %v7204 = vunpack.c.l.b16 %v5746
    %v7205 = vunpack.c.h.b16 %v5746
    %v7206 = vunpack.c.l.b16 %v5747
    %v7207 = vunpack.c.h.b16 %v5747
    %v7208 = vunpack.c.l.b16 %v5748
    %v7209 = vunpack.c.h.b16 %v5748
    %v7210 = vunpack.c.l.b16 %v5749
    %v7211 = vunpack.c.h.b16 %v5749
    %v7212 = vunpack.c.l.b16 %v5750
    %v7213 = vunpack.c.l.b16 %v5751
    %v7214 = vunpack.c.h.b16 %v5751
    %v7215 = vunpack.c.l.b16 %v5752
    %v7216 = vunpack.c.h.b16 %v5752
    %v7217 = vunpack.c.l.b16 %v5753
    %v7218 = vunpack.c.h.b16 %v5753
    %v7219 = vunpack.c.l.b16 %v5754
    %v7220 = vunpack.c.h.b16 %v5754
    %v7221 = vunpack.c.l.b16 %v5755
    %v7222 = vunpack.c.h.b16 %v5755
    %v7223 = vunpack.c.l.b16 %v5756
    %v7224 = vunpack.c.h.b16 %v5756
    %v7225 = vunpack.c.l.b16 %v5757
    %v7226 = vunpack.c.h.b16 %v5757
    %v7227 = vunpack.c.l.b16 %v5758
    %v7228 = vunpack.c.h.b16 %v5758
    %v7229 = vunpack.c.l.b16 %v5759
    %v7230 = vunpack.c.h.b16 %v5759
    %v7231 = vunpack.c.l.b16 %v5760
    %v7232 = vunpack.c.l.b16 %v5761
    %v7233 = vunpack.c.h.b16 %v5761
    %v7234 = vunpack.c.l.b16 %v5762
    %v7235 = vunpack.c.h.b16 %v5762
    %v7236 = vunpack.c.l.b16 %v5763
    %v7237 = vunpack.c.h.b16 %v5763
    %v7238 = vunpack.c.l.b16 %v5764
    %v7239 = vunpack.c.h.b16 %v5764
    %v7240 = vunpack.c.l.b16 %v5765
    %v7241 = vunpack.c.h.b16 %v5765
    %v7242 = vunpack.c.l.b16 %v5766
    %v7243 = vunpack.c.h.b16 %v5766
    %v7244 = vunpack.c.l.b16 %v5767
    %v7245 = vunpack.c.h.b16 %v5767
    %v7246 = vunpack.c.l.b16 %v5768
    %v7247 = vunpack.c.h.b16 %v5768
    %v7248 = vunpack.c.l.b16 %v5769
    %v7249 = vunpack.c.h.b16 %v5769
    %v7250 = vunpack.c.l.b16 %v5770
    %v7251 = vunpack.c.l.b16 %v5771
    %v7252 = vunpack.c.h.b16 %v5771
    %v7253 = vunpack.c.l.b16 %v5772
    %v7254 = vunpack.c.h.b16 %v5772
    %v7255 = vunpack.c.l.b16 %v5773
    %v7256 = vunpack.c.h.b16 %v5773
    %v7257 = vunpack.c.l.b16 %v5774
    %v7258 = vunpack.c.h.b16 %v5774
    %v7259 = vunpack.c.l.b16 %v5775
    %v7260 = vunpack.c.h.b16 %v5775
    %v7261 = vunpack.c.l.b16 %v5776
    %v7262 = vunpack.c.h.b16 %v5776
    %v7263 = vunpack.c.l.b16 %v5777
    %v7264 = vunpack.c.h.b16 %v5777
    %v7265 = vunpack.c.l.b16 %v5778
    %v7266 = vunpack.c.h.b16 %v5778
    %v7267 = vunpack.c.l.b16 %v5779
    %v7268 = vunpack.c.h.b16 %v5779
    %v7269 = vunpack.c.l.b16 %v5780
    %v7270 = vunpack.c.l.b16 %v5781
    %v7271 = vunpack.c.h.b16 %v5781
    %v7272 = vunpack.c.l.b16 %v5782
    %v7273 = vunpack.c.h.b16 %v5782
    %v7274 = vunpack.c.l.b16 %v5783
    %v7275 = vunpack.c.h.b16 %v5783
    %v7276 = vunpack.c.l.b16 %v5784
    %v7277 = vunpack.c.h.b16 %v5784
    %v7278 = vunpack.c.l.b16 %v5785
    %v7279 = vunpack.c.h.b16 %v5785
    %v7280 = vunpack.c.l.b16 %v5786
    %v7281 = vunpack.c.h.b16 %v5786
    %v7282 = vunpack.c.l.b16 %v5787
    %v7283 = vunpack.c.h.b16 %v5787
    %v7284 = vunpack.c.l.b16 %v5788
    %v7285 = vunpack.c.h.b16 %v5788
    %v7286 = vunpack.c.l.b16 %v5789
    %v7287 = vunpack.c.h.b16 %v5789
    %v7288 = vunpack.c.l.b16 %v5790
    %v7289 = vunpack.c.l.b16 %v5791
    %v7290 = vunpack.c.h.b16 %v5791
    %v7291 = vunpack.c.l.b16 %v5792
    %v7292 = vunpack.c.h.b16 %v5792
    %v7293 = vunpack.c.l.b16 %v5793
    %v7294 = vunpack.c.h.b16 %v5793
    %v7295 = vunpack.c.l.b16 %v5794
    %v7296 = vunpack.c.h.b16 %v5794
    %v7297 = vunpack.c.l.b16 %v5795
    %v7298 = vunpack.c.h.b16 %v5795
    %v7299 = vunpack.c.l.b16 %v5796
    %v7300 = vunpack.c.h.b16 %v5796
    %v7301 = vunpack.c.l.b16 %v5797
    %v7302 = vunpack.c.h.b16 %v5797
    %v7303 = vunpack.c.l.b16 %v5798
    %v7304 = vunpack.c.h.b16 %v5798
    %v7305 = vunpack.c.l.b16 %v5799
    %v7306 = vunpack.c.h.b16 %v5799
    %v7307 = vunpack.c.l.b16 %v5800
    %v7308 = vunpack.c.l.b16 %v5801
    %v7309 = vunpack.c.h.b16 %v5801
    %v7310 = vunpack.c.l.b16 %v5802
    %v7311 = vunpack.c.h.b16 %v5802
    %v7312 = vunpack.c.l.b16 %v5803
    %v7313 = vunpack.c.h.b16 %v5803
    %v7314 = vunpack.c.l.b16 %v5804
    %v7315 = vunpack.c.h.b16 %v5804
    %v7316 = vunpack.c.l.b16 %v5805
    %v7317 = vunpack.c.h.b16 %v5805
    %v7318 = vunpack.c.l.b16 %v5806
    %v7319 = vunpack.c.h.b16 %v5806
    %v7320 = vunpack.c.l.b16 %v5807
    %v7321 = vunpack.c.h.b16 %v5807
    %v7322 = vunpack.c.l.b16 %v5808
    %v7323 = vunpack.c.h.b16 %v5808
    %v7324 = vunpack.c.l.b16 %v5809
    %v7325 = vunpack.c.h.b16 %v5809
    %v7326 = vunpack.c.l.b16 %v5810
    %v7327 = vunpack.c.l.b16 %v5811
    %v7328 = vunpack.c.h.b16 %v5811
    %v7329 = vunpack.c.l.b16 %v5812
    %v7330 = vunpack.c.h.b16 %v5812
    %v7331 = vunpack.c.l.b16 %v5813
    %v7332 = vunpack.c.h.b16 %v5813
    %v7333 = vunpack.c.l.b16 %v5814
    %v7334 = vunpack.c.h.b16 %v5814
    %v7335 = vunpack.c.l.b16 %v5815
    %v7336 = vunpack.c.h.b16 %v5815
    %v7337 = vunpack.c.l.b16 %v5816
    %v7338 = vunpack.c.h.b16 %v5816
    %v7339 = vunpack.c.l.b16 %v5817
    %v7340 = vunpack.c.h.b16 %v5817
    %v7341 = vunpack.c.l.b16 %v5818
    %v7342 = vunpack.c.h.b16 %v5818
    %v7343 = vunpack.c.l.b16 %v5819
    %v7344 = vunpack.c.h.b16 %v5819
    %v7345 = vunpack.c.l.b16 %v5820
    %v7346 = vunpack.c.l.b16 %v5821
    %v7347 = vunpack.c.h.b16 %v5821
    %v7348 = vunpack.c.l.b16 %v5822
    %v7349 = vunpack.c.h.b16 %v5822
    %v7350 = vunpack.c.l.b16 %v5823
    %v7351 = vunpack.c.h.b16 %v5823
    %v7352 = vunpack.c.l.b16 %v5824
    %v7353 = vunpack.c.h.b16 %v5824
    %v7354 = vunpack.c.l.b16 %v5825
    %v7355 = vunpack.c.h.b16 %v5825
    %v7356 = vunpack.c.l.b16 %v5826
    %v7357 = vunpack.c.h.b16 %v5826
    %v7358 = vunpack.c.l.b16 %v5827
    %v7359 = vunpack.c.h.b16 %v5827
    %v7360 = vunpack.c.l.b16 %v5828
    %v7361 = vunpack.c.h.b16 %v5828
    %v7362 = vunpack.c.l.b16 %v5829
    %v7363 = vunpack.c.h.b16 %v5829
    %v7364 = vunpack.c.l.b16 %v5830
    %v7365 = vunpack.c.l.b16 %v5831
    %v7366 = vunpack.c.h.b16 %v5831
    %v7367 = vunpack.c.l.b16 %v5832
    %v7368 = vunpack.c.h.b16 %v5832
    %v7369 = vunpack.c.l.b16 %v5833
    %v7370 = vunpack.c.h.b16 %v5833
    %v7371 = vunpack.c.l.b16 %v5834
    %v7372 = vunpack.c.h.b16 %v5834
    %v7373 = vunpack.c.l.b16 %v5835
    %v7374 = vunpack.c.h.b16 %v5835
    %v7375 = vunpack.c.l.b16 %v5836
    %v7376 = vunpack.c.h.b16 %v5836
    %v7377 = vunpack.c.l.b16 %v5837
    %v7378 = vunpack.c.h.b16 %v5837
    %v7379 = vunpack.c.l.b16 %v5838
    %v7380 = vunpack.c.h.b16 %v5838
    %v7381 = vunpack.c.l.b16 %v5839
    %v7382 = vunpack.c.h.b16 %v5839
    %v7383 = vunpack.c.l.b16 %v5840
    %v7384 = vunpack.c.l.b16 %v5841
    %v7385 = vunpack.c.h.b16 %v5841
    %v7386 = vunpack.c.l.b16 %v5842
    %v7387 = vunpack.c.h.b16 %v5842
    %v7388 = vunpack.c.l.b16 %v5843
    %v7389 = vunpack.c.h.b16 %v5843
    %v7390 = vunpack.c.l.b16 %v5844
    %v7391 = vunpack.c.h.b16 %v5844
    %v7392 = vunpack.c.l.b16 %v5845
    %v7393 = vunpack.c.h.b16 %v5845
    %v7394 = vunpack.c.l.b16 %v5846
    %v7395 = vunpack.c.h.b16 %v5846
    %v7396 = vunpack.c.l.b16 %v5847
    %v7397 = vunpack.c.h.b16 %v5847
    %v7398 = vunpack.c.l.b16 %v5848
    %v7399 = vunpack.c.h.b16 %v5848
    %v7400 = vunpack.c.l.b16 %v5849
    %v7401 = vunpack.c.h.b16 %v5849
    %v7402 = vunpack.c.l.b16 %v5850
    %v7403 = vunpack.c.l.b16 %v5851
    %v7404 = vunpack.c.h.b16 %v5851
    %v7405 = vunpack.c.l.b16 %v5852
    %v7406 = vunpack.c.h.b16 %v5852
    %v7407 = vunpack.c.l.b16 %v5853
    %v7408 = vunpack.c.h.b16 %v5853
    %v7409 = vunpack.c.l.b16 %v5854
    %v7410 = vunpack.c.h.b16 %v5854
    %v7411 = vunpack.c.l.b16 %v5855
    %v7412 = vunpack.c.h.b16 %v5855
    %v7413 = vunpack.c.l.b16 %v5856
    %v7414 = vunpack.c.h.b16 %v5856
    %v7415 = vunpack.c.l.b16 %v5857
    %v7416 = vunpack.c.h.b16 %v5857
    %v7417 = vunpack.c.l.b16 %v5858
    %v7418 = vunpack.c.h.b16 %v5858
    %v7419 = vunpack.c.l.b16 %v5859
    %v7420 = vunpack.c.h.b16 %v5859
    %v7421 = vunpack.c.l.b16 %v5860
    %v7422 = vunpack.c.l.b16 %v5861
    %v7423 = vunpack.c.h.b16 %v5861
    %v7424 = vunpack.c.l.b16 %v5862
    %v7425 = vunpack.c.h.b16 %v5862
    %v7426 = vunpack.c.l.b16 %v5863
    %v7427 = vunpack.c.h.b16 %v5863
    %v7428 = vunpack.c.l.b16 %v5864
    %v7429 = vunpack.c.h.b16 %v5864
    %v7430 = vunpack.c.l.b16 %v5865
    %v7431 = vunpack.c.h.b16 %v5865
    %v7432 = vunpack.c.l.b16 %v5866
    %v7433 = vunpack.c.h.b16 %v5866
    %v7434 = vunpack.c.l.b16 %v5867
    %v7435 = vunpack.c.h.b16 %v5867
    %v7436 = vunpack.c.l.b16 %v5868
    %v7437 = vunpack.c.h.b16 %v5868
    %v7438 = vunpack.c.l.b16 %v5869
    %v7439 = vunpack.c.h.b16 %v5869
    %v7440 = vunpack.c.l.b16 %v5870
    %v7441 = vunpack.c.l.b16 %v5871
    %v7442 = vunpack.c.h.b16 %v5871
    %v7443 = vunpack.c.l.b16 %v5872
    %v7444 = vunpack.c.h.b16 %v5872
    %v7445 = vunpack.c.l.b16 %v5873
    %v7446 = vunpack.c.h.b16 %v5873
    %v7447 = vunpack.c.l.b16 %v5874
    %v7448 = vunpack.c.h.b16 %v5874
    %v7449 = vunpack.c.l.b16 %v5875
    %v7450 = vunpack.c.h.b16 %v5875
    %v7451 = vunpack.c.l.b16 %v5876
    %v7452 = vunpack.c.h.b16 %v5876
    %v7453 = vunpack.c.l.b16 %v5877
    %v7454 = vunpack.c.h.b16 %v5877
    %v7455 = vunpack.c.l.b16 %v5878
    %v7456 = vunpack.c.h.b16 %v5878
    %v7457 = vunpack.c.l.b16 %v5879
    %v7458 = vunpack.c.h.b16 %v5879
    %v7459 = vunpack.c.l.b16 %v5880
    %v7460 = vunpack.c.l.b16 %v5881
    %v7461 = vunpack.c.h.b16 %v5881
    %v7462 = vunpack.c.l.b16 %v5882
    %v7463 = vunpack.c.h.b16 %v5882
    %v7464 = vunpack.c.l.b16 %v5883
    %v7465 = vunpack.c.h.b16 %v5883
    %v7466 = vunpack.c.l.b16 %v5884
    %v7467 = vunpack.c.h.b16 %v5884
    %v7468 = vunpack.c.l.b16 %v5885
    %v7469 = vunpack.c.h.b16 %v5885
    %v7470 = vunpack.c.l.b16 %v5886
    %v7471 = vunpack.c.h.b16 %v5886
    %v7472 = vunpack.c.l.b16 %v5887
    %v7473 = vunpack.c.h.b16 %v5887
    %v7474 = vunpack.c.l.b16 %v5888
    %v7475 = vunpack.c.h.b16 %v5888
    %v7476 = vunpack.c.l.b16 %v5889
    %v7477 = vunpack.c.h.b16 %v5889
    %v7478 = vunpack.c.l.b16 %v5890
    %v7479 = vunpack.c.l.b16 %v5891
    %v7480 = vunpack.c.h.b16 %v5891
    %v7481 = vunpack.c.l.b16 %v5892
    %v7482 = vunpack.c.h.b16 %v5892
    %v7483 = vunpack.c.l.b16 %v5893
    %v7484 = vunpack.c.h.b16 %v5893
    %v7485 = vunpack.c.l.b16 %v5894
    %v7486 = vunpack.c.h.b16 %v5894
    %v7487 = vunpack.c.l.b16 %v5895
    %v7488 = vunpack.c.h.b16 %v5895
    %v7489 = vunpack.c.l.b16 %v5896
    %v7490 = vunpack.c.h.b16 %v5896
    %v7491 = vunpack.c.l.b16 %v5897
    %v7492 = vunpack.c.h.b16 %v5897
    %v7493 = vunpack.c.l.b16 %v5898
    %v7494 = vunpack.c.h.b16 %v5898
    %v7495 = vunpack.c.l.b16 %v5899
    %v7496 = vunpack.c.h.b16 %v5899
    %v7497 = vunpack.c.l.b16 %v5900
    %v7498 = vunpack.c.l.b16 %v5901
    %v7499 = vunpack.c.h.b16 %v5901
    %v7500 = vunpack.c.l.b16 %v5902
    %v7501 = vunpack.c.h.b16 %v5902
    %v7502 = vunpack.c.l.b16 %v5903
    %v7503 = vunpack.c.h.b16 %v5903
    %v7504 = vunpack.c.l.b16 %v5904
    %v7505 = vunpack.c.h.b16 %v5904
    %v7506 = vunpack.c.l.b16 %v5905
    %v7507 = vunpack.c.h.b16 %v5905
    %v7508 = vunpack.c.l.b16 %v5906
    %v7509 = vunpack.c.h.b16 %v5906
    %v7510 = vunpack.c.l.b16 %v5907
    %v7511 = vunpack.c.h.b16 %v5907
    %v7512 = vunpack.c.l.b16 %v5908
    %v7513 = vunpack.c.h.b16 %v5908
    %v7514 = vunpack.c.l.b16 %v5909
    %v7515 = vunpack.c.h.b16 %v5909
    %v7516 = vunpack.c.l.b16 %v5910
    %v7517 = vunpack.c.l.b16 %v5911
    %v7518 = vunpack.c.h.b16 %v5911
    %v7519 = vunpack.c.l.b16 %v5912
    %v7520 = vunpack.c.h.b16 %v5912
    %v7521 = vunpack.c.l.b16 %v5913
    %v7522 = vunpack.c.h.b16 %v5913
    %v7523 = vunpack.c.l.b16 %v5914
    %v7524 = vunpack.c.h.b16 %v5914
    %v7525 = vunpack.c.l.b16 %v5915
    %v7526 = vunpack.c.h.b16 %v5915
    %v7527 = vunpack.c.l.b16 %v5916
    %v7528 = vunpack.c.h.b16 %v5916
    %v7529 = vunpack.c.l.b16 %v5917
    %v7530 = vunpack.c.h.b16 %v5917
    %v7531 = vunpack.c.l.b16 %v5918
    %v7532 = vunpack.c.h.b16 %v5918
    %v7533 = vunpack.c.l.b16 %v5919
    %v7534 = vunpack.c.h.b16 %v5919
    %v7535 = vunpack.c.l.b16 %v5920
    %v7536 = vunpack.c.l.b16 %v5921
    %v7537 = vunpack.c.h.b16 %v5921
    %v7538 = vunpack.c.l.b16 %v5922
    %v7539 = vunpack.c.h.b16 %v5922
    %v7540 = vunpack.c.l.b16 %v5923
    %v7541 = vunpack.c.h.b16 %v5923
    %v7542 = vunpack.c.l.b16 %v5924
    %v7543 = vunpack.c.h.b16 %v5924
    %v7544 = vunpack.c.l.b16 %v5925
    %v7545 = vunpack.c.h.b16 %v5925
    %v7546 = vunpack.c.l.b16 %v5926
    %v7547 = vunpack.c.h.b16 %v5926
    %v7548 = vunpack.c.l.b16 %v5927
    %v7549 = vunpack.c.h.b16 %v5927
    %v7550 = vunpack.c.l.b16 %v5928
    %v7551 = vunpack.c.h.b16 %v5928
    %v7552 = vunpack.c.l.b16 %v5929
    %v7553 = vunpack.c.h.b16 %v5929
    %v7554 = vunpack.c.l.b16 %v5930
    %v7555 = vunpack.c.l.b16 %v5931
    %v7556 = vunpack.c.h.b16 %v5931
    %v7557 = vunpack.c.l.b16 %v5932
    %v7558 = vunpack.c.h.b16 %v5932
    %v7559 = vunpack.c.l.b16 %v5933
    %v7560 = vunpack.c.h.b16 %v5933
    %v7561 = vunpack.c.l.b16 %v5934
    %v7562 = vunpack.c.h.b16 %v5934
    %v7563 = vunpack.c.l.b16 %v5935
    %v7564 = vunpack.c.h.b16 %v5935
    %v7565 = vunpack.c.l.b16 %v5936
    %v7566 = vunpack.c.h.b16 %v5936
    %v7567 = vunpack.c.l.b16 %v5937
    %v7568 = vunpack.c.h.b16 %v5937
    %v7569 = vunpack.c.l.b16 %v5938
    %v7570 = vunpack.c.h.b16 %v5938
    %v7571 = vunpack.c.l.b16 %v5939
    %v7572 = vunpack.c.h.b16 %v5939
    %v7573 = vunpack.c.l.b16 %v5940
    %v7574 = vunpack.c.l.b16 %v5941
    %v7575 = vunpack.c.h.b16 %v5941
    %v7576 = vunpack.c.l.b16 %v5942
    %v7577 = vunpack.c.h.b16 %v5942
    %v7578 = vunpack.c.l.b16 %v5943
    %v7579 = vunpack.c.h.b16 %v5943
    %v7580 = vunpack.c.l.b16 %v5944
    %v7581 = vunpack.c.h.b16 %v5944
    %v7582 = vunpack.c.l.b16 %v5945
    %v7583 = vunpack.c.h.b16 %v5945
    %v7584 = vunpack.c.l.b16 %v5946
    %v7585 = vunpack.c.h.b16 %v5946
    %v7586 = vunpack.c.l.b16 %v5947
    %v7587 = vunpack.c.h.b16 %v5947
    %v7588 = vunpack.c.l.b16 %v5948
    %v7589 = vunpack.c.h.b16 %v5948
    %v7590 = vunpack.c.l.b16 %v5949
    %v7591 = vunpack.c.h.b16 %v5949
    %v7592 = vunpack.c.l.b16 %v5950
    %v7593 = vunpack.c.l.b16 %v5951
    %v7594 = vunpack.c.h.b16 %v5951
    %v7595 = vunpack.c.l.b16 %v5952
    %v7596 = vunpack.c.h.b16 %v5952
    %v7597 = vunpack.c.l.b16 %v5953
    %v7598 = vunpack.c.h.b16 %v5953
    %v7599 = vunpack.c.l.b16 %v5954
    %v7600 = vunpack.c.h.b16 %v5954
    %v7601 = vunpack.c.l.b16 %v5955
    %v7602 = vunpack.c.h.b16 %v5955
    %v7603 = vunpack.c.l.b16 %v5956
    %v7604 = vunpack.c.h.b16 %v5956
    %v7605 = vunpack.c.l.b16 %v5957
    %v7606 = vunpack.c.h.b16 %v5957
    %v7607 = vunpack.c.l.b16 %v5958
    %v7608 = vunpack.c.h.b16 %v5958
    %v7609 = vunpack.c.l.b16 %v5959
    %v7610 = vunpack.c.h.b16 %v5959
    %v7611 = vunpack.c.l.b16 %v5960
    %v7612 = vunpack.c.l.b16 %v5961
    %v7613 = vunpack.c.h.b16 %v5961
    %v7614 = vunpack.c.l.b16 %v5962
    %v7615 = vunpack.c.h.b16 %v5962
    %v7616 = vunpack.c.l.b16 %v5963
    %v7617 = vunpack.c.h.b16 %v5963
    %v7618 = vunpack.c.l.b16 %v5964
    %v7619 = vunpack.c.h.b16 %v5964
    %v7620 = vunpack.c.l.b16 %v5965
    %v7621 = vunpack.c.h.b16 %v5965
    %v7622 = vunpack.c.l.b16 %v5966
    %v7623 = vunpack.c.h.b16 %v5966
    %v7624 = vunpack.c.l.b16 %v5967
    %v7625 = vunpack.c.h.b16 %v5967
    %v7626 = vunpack.c.l.b16 %v5968
    %v7627 = vunpack.c.h.b16 %v5968
    %v7628 = vunpack.c.l.b16 %v5969
    %v7629 = vunpack.c.h.b16 %v5969
    %v7630 = vunpack.c.l.b16 %v5970
    %v7631 = vunpack.c.l.b16 %v5971
    %v7632 = vunpack.c.h.b16 %v5971
    %v7633 = vunpack.c.l.b16 %v5972
    %v7634 = vunpack.c.h.b16 %v5972
    %v7635 = vunpack.c.l.b16 %v5973
    %v7636 = vunpack.c.h.b16 %v5973
    %v7637 = vunpack.c.l.b16 %v5974
    %v7638 = vunpack.c.h.b16 %v5974
    %v7639 = vunpack.c.l.b16 %v5975
    %v7640 = vunpack.c.h.b16 %v5975
    %v7641 = vunpack.c.l.b16 %v5976
    %v7642 = vunpack.c.h.b16 %v5976
    %v7643 = vunpack.c.l.b16 %v5977
    %v7644 = vunpack.c.h.b16 %v5977
    %v7645 = vunpack.c.l.b16 %v5978
    %v7646 = vunpack.c.h.b16 %v5978
    %v7647 = vunpack.c.l.b16 %v5979
    %v7648 = vunpack.c.h.b16 %v5979
    %v7649 = vunpack.c.l.b16 %v5980
    %v7650 = vunpack.c.l.b16 %v5981
    %v7651 = vunpack.c.h.b16 %v5981
    %v7652 = vunpack.c.l.b16 %v5982
    %v7653 = vunpack.c.h.b16 %v5982
    %v7654 = vunpack.c.l.b16 %v5983
    %v7655 = vunpack.c.h.b16 %v5983
    %v7656 = vunpack.c.l.b16 %v5984
    %v7657 = vunpack.c.h.b16 %v5984
    %v7658 = vunpack.c.l.b16 %v5985
    %v7659 = vunpack.c.h.b16 %v5985
    %v7660 = vunpack.c.l.b16 %v5986
    %v7661 = vunpack.c.h.b16 %v5986
    %v7662 = vunpack.c.l.b16 %v5987
    %v7663 = vunpack.c.h.b16 %v5987
    %v7664 = vunpack.c.l.b16 %v5988
    %v7665 = vunpack.c.h.b16 %v5988
    %v7666 = vunpack.c.l.b16 %v5989
    %v7667 = vunpack.c.h.b16 %v5989
    %v7668 = vunpack.c.l.b16 %v5990
    %v7669 = vunpack.c.l.b16 %v5991
    %v7670 = vunpack.c.h.b16 %v5991
    %v7671 = vunpack.c.l.b16 %v5992
    %v7672 = vunpack.c.h.b16 %v5992
    %v7673 = vunpack.c.l.b16 %v5993
    %v7674 = vunpack.c.h.b16 %v5993
    %v7675 = vunpack.c.l.b16 %v5994
    %v7676 = vunpack.c.h.b16 %v5994
    %v7677 = vunpack.c.l.b16 %v5995
    %v7678 = vunpack.c.h.b16 %v5995
    %v7679 = vunpack.c.l.b16 %v5996
    %v7680 = vunpack.c.h.b16 %v5996
    %v7681 = vunpack.c.l.b16 %v5997
    %v7682 = vunpack.c.h.b16 %v5997
    %v7683 = vunpack.c.l.b16 %v5998
    %v7684 = vunpack.c.h.b16 %v5998
    %v7685 = vunpack.c.l.b16 %v5999
    %v7686 = vunpack.c.h.b16 %v5999
    %v7687 = vunpack.c.l.b16 %v6000
    %v7688 = vunpack.c.l.b16 %v6001
    %v7689 = vunpack.c.h.b16 %v6001
    %v7690 = vunpack.c.l.b16 %v6002
    %v7691 = vunpack.c.h.b16 %v6002
    %v7692 = vunpack.c.l.b16 %v6003
    %v7693 = vunpack.c.h.b16 %v6003
    %v7694 = vunpack.c.l.b16 %v6004
    %v7695 = vunpack.c.h.b16 %v6004
    %v7696 = vunpack.c.l.b16 %v6005
    %v7697 = vunpack.c.h.b16 %v6005
    %v7698 = vunpack.c.l.b16 %v6006
    %v7699 = vunpack.c.h.b16 %v6006
    %v7700 = vunpack.c.l.b16 %v6007
    %v7701 = vunpack.c.h.b16 %v6007
    %v7702 = vunpack.c.l.b16 %v6008
    %v7703 = vunpack.c.h.b16 %v6008
    %v7704 = vunpack.c.l.b16 %v6009
    %v7705 = vunpack.c.h.b16 %v6009
    %v7706 = vunpack.c.l.b16 %v6010
    %v7707 = vunpack.c.l.b16 %v6011
    %v7708 = vunpack.c.h.b16 %v6011
    %v7709 = vunpack.c.l.b16 %v6012
    %v7710 = vunpack.c.h.b16 %v6012
    %v7711 = vunpack.c.l.b16 %v6013
    %v7712 = vunpack.c.h.b16 %v6013
    %v7713 = vunpack.c.l.b16 %v6014
    %v7714 = vunpack.c.h.b16 %v6014
    %v7715 = vunpack.c.l.b16 %v6015
    %v7716 = vunpack.c.h.b16 %v6015
    %v7717 = vunpack.c.l.b16 %v6016
    %v7718 = vunpack.c.h.b16 %v6016
    %v7719 = vunpack.c.l.b16 %v6017
    %v7720 = vunpack.c.h.b16 %v6017
    %v7721 = vunpack.c.l.b16 %v6018
    %v7722 = vunpack.c.h.b16 %v6018
    %v7723 = vunpack.c.l.b16 %v6019
    %v7724 = vunpack.c.h.b16 %v6019
    %v7725 = vunpack.c.l.b16 %v6020
    %v7726 = vunpack.c.l.b16 %v6021
    %v7727 = vunpack.c.h.b16 %v6021
    %v7728 = vunpack.c.l.b16 %v6022
    %v7729 = vunpack.c.h.b16 %v6022
    %v7730 = vunpack.c.l.b16 %v6023
    %v7731 = vunpack.c.h.b16 %v6023
    %v7732 = vunpack.c.l.b16 %v6024
    %v7733 = vunpack.c.h.b16 %v6024
    %v7734 = vunpack.c.l.b16 %v6025
    %v7735 = vunpack.c.h.b16 %v6025
    %v7736 = vunpack.c.l.b16 %v6026
    %v7737 = vunpack.c.h.b16 %v6026
    %v7738 = vunpack.c.l.b16 %v6027
    %v7739 = vunpack.c.h.b16 %v6027
    %v7740 = vunpack.c.l.b16 %v6028
    %v7741 = vunpack.c.h.b16 %v6028
    %v7742 = vunpack.c.l.b16 %v6029
    %v7743 = vunpack.c.h.b16 %v6029
    %v7744 = vunpack.c.l.b16 %v6030
    %v7745 = vunpack.c.l.b16 %v6031
    %v7746 = vunpack.c.h.b16 %v6031
    %v7747 = vunpack.c.l.b16 %v6032
    %v7748 = vunpack.c.h.b16 %v6032
    %v7749 = vunpack.c.l.b16 %v6033
    %v7750 = vunpack.c.h.b16 %v6033
    %v7751 = vunpack.c.l.b16 %v6034
    %v7752 = vunpack.c.h.b16 %v6034
    %v7753 = vunpack.c.l.b16 %v6035
    %v7754 = vunpack.c.h.b16 %v6035
    %v7755 = vunpack.c.l.b16 %v6036
    %v7756 = vunpack.c.h.b16 %v6036
    %v7757 = vunpack.c.l.b16 %v6037
    %v7758 = vunpack.c.h.b16 %v6037
    %v7759 = vunpack.c.l.b16 %v6038
    %v7760 = vunpack.c.h.b16 %v6038
    %v7761 = vunpack.c.l.b16 %v6039
    %v7762 = vunpack.c.h.b16 %v6039
    %v7763 = vunpack.c.l.b16 %v6040
    %v7764 = vunpack.c.l.b16 %v6041
    %v7765 = vunpack.c.h.b16 %v6041
    %v7766 = vunpack.c.l.b16 %v6042
    %v7767 = vunpack.c.h.b16 %v6042
    %v7768 = vunpack.c.l.b16 %v6043
    %v7769 = vunpack.c.h.b16 %v6043
    %v7770 = vunpack.c.l.b16 %v6044
    %v7771 = vunpack.c.h.b16 %v6044
    %v7772 = vunpack.c.l.b16 %v6045
    %v7773 = vunpack.c.h.b16 %v6045
    %v7774 = vunpack.c.l.b16 %v6046
    %v7775 = vunpack.c.h.b16 %v6046
    %v7776 = vunpack.c.l.b16 %v6047
    %v7777 = vunpack.c.h.b16 %v6047
    %v7778 = vunpack.c.l.b16 %v6048
    %v7779 = vunpack.c.h.b16 %v6048
    %v7780 = vunpack.c.l.b16 %v6049
    %v7781 = vunpack.c.h.b16 %v6049
    %v7782 = vunpack.c.l.b16 %v6050
    %v7783 = vunpack.c.l.b16 %v6051
    %v7784 = vunpack.c.h.b16 %v6051
    %v7785 = vunpack.c.l.b16 %v6052
    %v7786 = vunpack.c.h.b16 %v6052
    %v7787 = vunpack.c.l.b16 %v6053
    %v7788 = vunpack.c.h.b16 %v6053
    %v7789 = vunpack.c.l.b16 %v6054
    %v7790 = vunpack.c.h.b16 %v6054
    %v7791 = vunpack.c.l.b16 %v6055
    %v7792 = vunpack.c.h.b16 %v6055
    %v7793 = vunpack.c.l.b16 %v6056
    %v7794 = vunpack.c.h.b16 %v6056
    %v7795 = vunpack.c.l.b16 %v6057
    %v7796 = vunpack.c.h.b16 %v6057
    %v7797 = vunpack.c.l.b16 %v6058
    %v7798 = vunpack.c.h.b16 %v6058
    %v7799 = vunpack.c.l.b16 %v6059
    %v7800 = vunpack.c.h.b16 %v6059
    %v7801 = vunpack.c.l.b16 %v6060
    %v7802 = vunpack.c.l.b16 %v6061
    %v7803 = vunpack.c.h.b16 %v6061
    %v7804 = vunpack.c.l.b16 %v6062
    %v7805 = vunpack.c.h.b16 %v6062
    %v7806 = vunpack.c.l.b16 %v6063
    %v7807 = vunpack.c.h.b16 %v6063
    %v7808 = vunpack.c.l.b16 %v6064
    %v7809 = vunpack.c.h.b16 %v6064
    %v7810 = vunpack.c.l.b16 %v6065
    %v7811 = vunpack.c.h.b16 %v6065
    %v7812 = vunpack.c.l.b16 %v6066
    %v7813 = vunpack.c.h.b16 %v6066
    %v7814 = vunpack.c.l.b16 %v6067
    %v7815 = vunpack.c.h.b16 %v6067
    %v7816 = vunpack.c.l.b16 %v6068
    %v7817 = vunpack.c.h.b16 %v6068
    %v7818 = vunpack.c.l.b16 %v6069
    %v7819 = vunpack.c.h.b16 %v6069
    %v7820 = vunpack.c.l.b16 %v6070
    %v7821 = vunpack.c.l.b16 %v6071
    %v7822 = vunpack.c.h.b16 %v6071
    %v7823 = vunpack.c.l.b16 %v6072
    %v7824 = vunpack.c.h.b16 %v6072
    %v7825 = vunpack.c.l.b16 %v6073
    %v7826 = vunpack.c.h.b16 %v6073
    %v7827 = vunpack.c.l.b16 %v6074
    %v7828 = vunpack.c.h.b16 %v6074
    %v7829 = vunpack.c.l.b16 %v6075
    %v7830 = vunpack.c.h.b16 %v6075
    %v7831 = vunpack.c.l.b16 %v6076
    %v7832 = vunpack.c.h.b16 %v6076
    %v7833 = vunpack.c.l.b16 %v6077
    %v7834 = vunpack.c.h.b16 %v6077
    %v7835 = vunpack.c.l.b16 %v6078
    %v7836 = vunpack.c.h.b16 %v6078
    %v7837 = vunpack.c.l.b16 %v6079
    %v7838 = vunpack.c.h.b16 %v6079
    %v7839 = vunpack.c.l.b16 %v6080
    %v7840 = vunpack.c.l.b16 %v6081
    %v7841 = vunpack.c.h.b16 %v6081
    %v7842 = vunpack.c.l.b16 %v6082
    %v7843 = vunpack.c.h.b16 %v6082
    %v7844 = vunpack.c.l.b16 %v6083
    %v7845 = vunpack.c.h.b16 %v6083
    %v7846 = vunpack.c.l.b16 %v6084
    %v7847 = vunpack.c.h.b16 %v6084
    %v7848 = vunpack.c.l.b16 %v6085
    %v7849 = vunpack.c.h.b16 %v6085
    %v7850 = vunpack.c.l.b16 %v6086
    %v7851 = vunpack.c.h.b16 %v6086
    %v7852 = vunpack.c.l.b16 %v6087
    %v7853 = vunpack.c.h.b16 %v6087
    %v7854 = vunpack.c.l.b16 %v6088
    %v7855 = vunpack.c.h.b16 %v6088
    %v7856 = vunpack.c.l.b16 %v6089
    %v7857 = vunpack.c.h.b16 %v6089
    %v7858 = vunpack.c.l.b16 %v6090
    %v7859 = vunpack.c.l.b16 %v6091
    %v7860 = vunpack.c.h.b16 %v6091
    %v7861 = vunpack.c.l.b16 %v6092
    %v7862 = vunpack.c.h.b16 %v6092
    %v7863 = vunpack.c.l.b16 %v6093
    %v7864 = vunpack.c.h.b16 %v6093
    %v7865 = vunpack.c.l.b16 %v6094
    %v7866 = vunpack.c.h.b16 %v6094
    %v7867 = vunpack.c.l.b16 %v6095
    %v7868 = vunpack.c.h.b16 %v6095
    %v7869 = vunpack.c.l.b16 %v6096
    %v7870 = vunpack.c.h.b16 %v6096
    %v7871 = vunpack.c.l.b16 %v6097
    %v7872 = vunpack.c.h.b16 %v6097
    %v7873 = vunpack.c.l.b16 %v6098
    %v7874 = vunpack.c.h.b16 %v6098
    %v7875 = vunpack.c.l.b16 %v6099
    %v7876 = vunpack.c.h.b16 %v6099
    %v7877 = vunpack.c.l.b16 %v6100
    %v7878 = vunpack.c.l.b16 %v6101
    %v7879 = vunpack.c.h.b16 %v6101
    %v7880 = vunpack.c.l.b16 %v6102
    %v7881 = vunpack.c.h.b16 %v6102
    %v7882 = vunpack.c.l.b16 %v6103
    %v7883 = vunpack.c.h.b16 %v6103
    %v7884 = vunpack.c.l.b16 %v6104
    %v7885 = vunpack.c.h.b16 %v6104
    %v7886 = vunpack.c.l.b16 %v6105
    %v7887 = vunpack.c.h.b16 %v6105
    %v7888 = vunpack.c.l.b16 %v6106
    %v7889 = vunpack.c.h.b16 %v6106
    %v7890 = vunpack.c.l.b16 %v6107
    %v7891 = vunpack.c.h.b16 %v6107
    %v7892 = vunpack.c.l.b16 %v6108
    %v7893 = vunpack.c.h.b16 %v6108
    %v7894 = vunpack.c.l.b16 %v6109
    %v7895 = vunpack.c.h.b16 %v6109
    %v7896 = vunpack.c.l.b16 %v6110
    %v7897 = vunpack.c.l.b16 %v6111
    %v7898 = vunpack.c.h.b16 %v6111
    %v7899 = vunpack.c.l.b16 %v6112
    %v7900 = vunpack.c.h.b16 %v6112
    %v7901 = vunpack.c.l.b16 %v6113
    %v7902 = vunpack.c.h.b16 %v6113
    %v7903 = vunpack.c.l.b16 %v6114
    %v7904 = vunpack.c.h.b16 %v6114
    %v7905 = vunpack.c.l.b16 %v6115
    %v7906 = vunpack.c.h.b16 %v6115
    %v7907 = vunpack.c.l.b16 %v6116
    %v7908 = vunpack.c.h.b16 %v6116
    %v7909 = vunpack.c.l.b16 %v6117
    %v7910 = vunpack.c.h.b16 %v6117
    %v7911 = vunpack.c.l.b16 %v6118
    %v7912 = vunpack.c.h.b16 %v6118
    %v7913 = vunpack.c.l.b16 %v6119
    %v7914 = vunpack.c.h.b16 %v6119
    %v7915 = vunpack.c.l.b16 %v6120
    %v7916 = vunpack.c.l.b16 %v6121
    %v7917 = vunpack.c.h.b16 %v6121
    %v7918 = vunpack.c.l.b16 %v6122
    %v7919 = vunpack.c.h.b16 %v6122
    %v7920 = vunpack.c.l.b16 %v6123
    %v7921 = vunpack.c.h.b16 %v6123
    %v7922 = vunpack.c.l.b16 %v6124
    %v7923 = vunpack.c.h.b16 %v6124
    %v7924 = vunpack.c.l.b16 %v6125
    %v7925 = vunpack.c.h.b16 %v6125
    %v7926 = vunpack.c.l.b16 %v6126
    %v7927 = vunpack.c.h.b16 %v6126
    %v7928 = vunpack.c.l.b16 %v6127
    %v7929 = vunpack.c.h.b16 %v6127
    %v7930 = vunpack.c.l.b16 %v6128
    %v7931 = vunpack.c.h.b16 %v6128
    %v7932 = vunpack.c.l.b16 %v6129
    %v7933 = vunpack.c.h.b16 %v6129
    %v7934 = vunpack.c.l.b16 %v6130
    %v7935 = vunpack.c.l.b16 %v6131
    %v7936 = vunpack.c.h.b16 %v6131
    %v7937 = vunpack.c.l.b16 %v6132
    %v7938 = vunpack.c.h.b16 %v6132
    %v7939 = vunpack.c.l.b16 %v6133
    %v7940 = vunpack.c.h.b16 %v6133
    %v7941 = vunpack.c.l.b16 %v6134
    %v7942 = vunpack.c.h.b16 %v6134
    %v7943 = vunpack.c.l.b16 %v6135
    %v7944 = vunpack.c.h.b16 %v6135
    %v7945 = vunpack.c.l.b16 %v6136
    %v7946 = vunpack.c.h.b16 %v6136
    %v7947 = vunpack.c.l.b16 %v6137
    %v7948 = vunpack.c.h.b16 %v6137
    %v7949 = vunpack.c.l.b16 %v6138
    %v7950 = vunpack.c.h.b16 %v6138
    %v7951 = vunpack.c.l.b16 %v6139
    %v7952 = vunpack.c.h.b16 %v6139
    %v7953 = vunpack.c.l.b16 %v6140
    %v7954 = vunpack.c.l.b16 %v6141
    %v7955 = vunpack.c.h.b16 %v6141
    %v7956 = vunpack.c.l.b16 %v6142
    %v7957 = vunpack.c.h.b16 %v6142
    %v7958 = vunpack.c.l.b16 %v6143
    %v7959 = vunpack.c.h.b16 %v6143
    %v7960 = vunpack.c.l.b16 %v6144
    %v7961 = vunpack.c.h.b16 %v6144
    %v7962 = vunpack.c.l.b16 %v6145
    %v7963 = vunpack.c.h.b16 %v6145
    %v7964 = vunpack.c.l.b16 %v6146
    %v7965 = vunpack.c.h.b16 %v6146
    %v7966 = vunpack.c.l.b16 %v6147
    %v7967 = vunpack.c.h.b16 %v6147
    %v7968 = vunpack.c.l.b16 %v6148
    %v7969 = vunpack.c.h.b16 %v6148
    %v7970 = vunpack.c.l.b16 %v6149
    %v7971 = vunpack.c.h.b16 %v6149
    %v7972 = vunpack.c.l.b16 %v6150
    %v7973 = vunpack.c.l.b16 %v6151
    %v7974 = vunpack.c.h.b16 %v6151
    %v7975 = vunpack.c.l.b16 %v6152
    %v7976 = vunpack.c.h.b16 %v6152
    %v7977 = vunpack.c.l.b16 %v6153
    %v7978 = vunpack.c.h.b16 %v6153
    %v7979 = vunpack.c.l.b16 %v6154
    %v7980 = vunpack.c.h.b16 %v6154
    %v7981 = vunpack.c.l.b16 %v6155
    %v7982 = vunpack.c.h.b16 %v6155
    %v7983 = vunpack.c.l.b16 %v6156
    %v7984 = vunpack.c.h.b16 %v6156
    %v7985 = vunpack.c.l.b16 %v6157
    %v7986 = vunpack.c.h.b16 %v6157
    %v7987 = vunpack.c.l.b16 %v6158
    %v7988 = vunpack.c.h.b16 %v6158
    %v7989 = vunpack.c.l.b16 %v6159
    %v7990 = vunpack.c.h.b16 %v6159
    %v7991 = vunpack.c.l.b16 %v6160
    %v7992 = vunpack.c.l.b16 %v6161
    %v7993 = vunpack.c.h.b16 %v6161
    %v7994 = vunpack.c.l.b16 %v6162
    %v7995 = vunpack.c.h.b16 %v6162
    %v7996 = vunpack.c.l.b16 %v6163
    %v7997 = vunpack.c.h.b16 %v6163
    %v7998 = vunpack.c.l.b16 %v6164
    %v7999 = vunpack.c.h.b16 %v6164
    %v8000 = vunpack.c.l.b16 %v6165
    %v8001 = vunpack.c.h.b16 %v6165
    %v8002 = vunpack.c.l.b16 %v6166
    %v8003 = vunpack.c.h.b16 %v6166
    %v8004 = vunpack.c.l.b16 %v6167
    %v8005 = vunpack.c.h.b16 %v6167
    %v8006 = vunpack.c.l.b16 %v6168
    %v8007 = vunpack.c.h.b16 %v6168
    %v8008 = vunpack.c.l.b16 %v6169
    %v8009 = vunpack.c.h.b16 %v6169
    %v8010 = vunpack.c.l.b16 %v6170
    %v8011 = vunpack.c.l.b16 %v6171
    %v8012 = vunpack.c.h.b16 %v6171
    %v8013 = vunpack.c.l.b16 %v6172
    %v8014 = vunpack.c.h.b16 %v6172
    %v8015 = vunpack.c.l.b16 %v6173
    %v8016 = vunpack.c.h.b16 %v6173
    %v8017 = vunpack.c.l.b16 %v6174
    %v8018 = vunpack.c.h.b16 %v6174
    %v8019 = vunpack.c.l.b16 %v6175
    %v8020 = vunpack.c.h.b16 %v6175
    %v8021 = vunpack.c.l.b16 %v6176
    %v8022 = vunpack.c.h.b16 %v6176
    %v8023 = vunpack.c.l.b16 %v6177
    %v8024 = vunpack.c.h.b16 %v6177
    %v8025 = vunpack.c.l.b16 %v6178
    %v8026 = vunpack.c.h.b16 %v6178
    %v8027 = vunpack.c.l.b16 %v6179
    %v8028 = vunpack.c.h.b16 %v6179
    %v8029 = vunpack.c.l.b16 %v6180
    %v8030 = vunpack.c.l.b16 %v6181
    %v8031 = vunpack.c.h.b16 %v6181
    %v8032 = vunpack.c.l.b16 %v6182
    %v8033 = vunpack.c.h.b16 %v6182
    %v8034 = vunpack.c.l.b16 %v6183
    %v8035 = vunpack.c.h.b16 %v6183
    %v8036 = vunpack.c.l.b16 %v6184
    %v8037 = vunpack.c.h.b16 %v6184
    %v8038 = vunpack.c.l.b16 %v6185
    %v8039 = vunpack.c.h.b16 %v6185
    %v8040 = vunpack.c.l.b16 %v6186
    %v8041 = vunpack.c.h.b16 %v6186
    %v8042 = vunpack.c.l.b16 %v6187
    %v8043 = vunpack.c.h.b16 %v6187
    %v8044 = vunpack.c.l.b16 %v6188
    %v8045 = vunpack.c.h.b16 %v6188
    %v8046 = vunpack.c.l.b16 %v6189
    %v8047 = vunpack.c.h.b16 %v6189
    %v8048 = vunpack.c.l.b16 %v6190
    %v8049 = vunpack.c.l.b16 %v6191
    %v8050 = vunpack.c.h.b16 %v6191
    %v8051 = vunpack.c.l.b16 %v6192
    %v8052 = vunpack.c.h.b16 %v6192
    %v8053 = vunpack.c.l.b16 %v6193
    %v8054 = vunpack.c.h.b16 %v6193
    %v8055 = vunpack.c.l.b16 %v6194
    %v8056 = vunpack.c.h.b16 %v6194
    %v8057 = vunpack.c.l.b16 %v6195
    %v8058 = vunpack.c.h.b16 %v6195
    %v8059 = vunpack.c.l.b16 %v6196
    %v8060 = vunpack.c.h.b16 %v6196
    %v8061 = vunpack.c.l.b16 %v6197
    %v8062 = vunpack.c.h.b16 %v6197
    %v8063 = vunpack.c.l.b16 %v6198
    %v8064 = vunpack.c.h.b16 %v6198
    %v8065 = vunpack.c.l.b16 %v6199
    %v8066 = vunpack.c.h.b16 %v6199
    %v8067 = vunpack.c.l.b16 %v6200
    %v8068 = vunpack.c.l.b16 %v6201
    %v8069 = vunpack.c.h.b16 %v6201
    %v8070 = vunpack.c.l.b16 %v6202
    %v8071 = vunpack.c.h.b16 %v6202
    %v8072 = vunpack.c.l.b16 %v6203
    %v8073 = vunpack.c.h.b16 %v6203
    %v8074 = vunpack.c.l.b16 %v6204
    %v8075 = vunpack.c.h.b16 %v6204
    %v8076 = vunpack.c.l.b16 %v6205
    %v8077 = vunpack.c.h.b16 %v6205
    %v8078 = vunpack.c.l.b16 %v6206
    %v8079 = vunpack.c.h.b16 %v6206
    %v8080 = vunpack.c.l.b16 %v6207
    %v8081 = vunpack.c.h.b16 %v6207
    %v8082 = vunpack.c.l.b16 %v6208
    %v8083 = vunpack.c.h.b16 %v6208
    %v8084 = vunpack.c.l.b16 %v6209
    %v8085 = vunpack.c.h.b16 %v6209
    %v8086 = vunpack.c.l.b16 %v6210
    %v8087 = vunpack.c.l.b16 %v6211
    %v8088 = vunpack.c.h.b16 %v6211
    %v8089 = vunpack.c.l.b16 %v6212
    %v8090 = vunpack.c.h.b16 %v6212
    %v8091 = vunpack.c.l.b16 %v6213
    %v8092 = vunpack.c.h.b16 %v6213
    %v8093 = vunpack.c.l.b16 %v6214
    %v8094 = vunpack.c.h.b16 %v6214
    %v8095 = vunpack.c.l.b16 %v6215
    %v8096 = vunpack.c.h.b16 %v6215
    %v8097 = vunpack.c.l.b16 %v6216
    %v8098 = vunpack.c.h.b16 %v6216
    %v8099 = vunpack.c.l.b16 %v6217
    %v8100 = vunpack.c.h.b16 %v6217
    %v8101 = vunpack.c.l.b16 %v6218
    %v8102 = vunpack.c.h.b16 %v6218
    %v8103 = vunpack.c.l.b16 %v6219
    %v8104 = vunpack.c.h.b16 %v6219
    %v8105 = vunpack.c.l.b16 %v6220
    %v8106 = vunpack.c.l.b16 %v6221
    %v8107 = vunpack.c.h.b16 %v6221
    %v8108 = vunpack.c.l.b16 %v6222
    %v8109 = vunpack.c.h.b16 %v6222
    %v8110 = vunpack.c.l.b16 %v6223
    %v8111 = vunpack.c.h.b16 %v6223
    %v8112 = vunpack.c.l.b16 %v6224
    %v8113 = vunpack.c.h.b16 %v6224
    %v8114 = vunpack.c.l.b16 %v6225
    %v8115 = vunpack.c.h.b16 %v6225
    %v8116 = vunpack.c.l.b16 %v6226
    %v8117 = vunpack.c.h.b16 %v6226
    %v8118 = vunpack.c.l.b16 %v6227
    %v8119 = vunpack.c.h.b16 %v6227
    %v8120 = vunpack.c.l.b16 %v6228
    %v8121 = vunpack.c.h.b16 %v6228
    %v8122 = vunpack.c.l.b16 %v6229
    %v8123 = vunpack.c.h.b16 %v6229
    %v8124 = vunpack.c.l.b16 %v6230
    %v8125 = vunpack.c.l.b16 %v6231
    %v8126 = vunpack.c.h.b16 %v6231
    %v8127 = vunpack.c.l.b16 %v6232
    %v8128 = vunpack.c.h.b16 %v6232
    %v8129 = vunpack.c.l.b16 %v6233
    %v8130 = vunpack.c.h.b16 %v6233
    %v8131 = vunpack.c.l.b16 %v6234
    %v8132 = vunpack.c.h.b16 %v6234
    %v8133 = vunpack.c.l.b16 %v6235
    %v8134 = vunpack.c.h.b16 %v6235
    %v8135 = vunpack.c.l.b16 %v6236
    %v8136 = vunpack.c.h.b16 %v6236
    %v8137 = vunpack.c.l.b16 %v6237
    %v8138 = vunpack.c.h.b16 %v6237
    %v8139 = vunpack.c.l.b16 %v6238
    %v8140 = vunpack.c.h.b16 %v6238
    %v8141 = vunpack.c.l.b16 %v6239
    %v8142 = vunpack.c.h.b16 %v6239
    %v8143 = vunpack.c.l.b16 %v6240
    %v8144 = vunpack.c.l.b16 %v6241
    %v8145 = vunpack.c.h.b16 %v6241
    %v8146 = vunpack.c.l.b16 %v6242
    %v8147 = vunpack.c.h.b16 %v6242
    %v8148 = vunpack.c.l.b16 %v6243
    %v8149 = vunpack.c.h.b16 %v6243
    %v8150 = vunpack.c.l.b16 %v6244
    %v8151 = vunpack.c.h.b16 %v6244
    %v8152 = vunpack.c.l.b16 %v6245
    %v8153 = vunpack.c.h.b16 %v6245
    %v8154 = vunpack.c.l.b16 %v6246
    %v8155 = vunpack.c.h.b16 %v6246
    %v8156 = vunpack.c.l.b16 %v6247
    %v8157 = vunpack.c.h.b16 %v6247
    %v8158 = vunpack.c.l.b16 %v6248
    %v8159 = vunpack.c.h.b16 %v6248
    %v8160 = vunpack.c.l.b16 %v6249
    %v8161 = vunpack.c.h.b16 %v6249
    %v8162 = vunpack.c.l.b16 %v6250
    %v8163 = vunpack.c.l.b16 %v6251
    %v8164 = vunpack.c.h.b16 %v6251
    %v8165 = vunpack.c.l.b16 %v6252
    %v8166 = vunpack.c.h.b16 %v6252
    %v8167 = vunpack.c.l.b16 %v6253
    %v8168 = vunpack.c.h.b16 %v6253
    %v8169 = vunpack.c.l.b16 %v6254
    %v8170 = vunpack.c.h.b16 %v6254
    %v8171 = vunpack.c.l.b16 %v6255
    %v8172 = vunpack.c.h.b16 %v6255
    %v8173 = vunpack.c.l.b16 %v6256
    %v8174 = vunpack.c.h.b16 %v6256
    %v8175 = vunpack.c.l.b16 %v6257
    %v8176 = vunpack.c.h.b16 %v6257
    %v8177 = vunpack.c.l.b16 %v6258
    %v8178 = vunpack.c.h.b16 %v6258
    %v8179 = vunpack.c.l.b16 %v6259
    %v8180 = vunpack.c.h.b16 %v6259
    %v8181 = vunpack.c.l.b16 %v6260
    %v8182 = vunpack.c.l.b16 %v6261
    %v8183 = vunpack.c.h.b16 %v6261
    %v8184 = vunpack.c.l.b16 %v6262
    %v8185 = vunpack.c.h.b16 %v6262
    %v8186 = vunpack.c.l.b16 %v6263
    %v8187 = vunpack.c.h.b16 %v6263
    %v8188 = vunpack.c.l.b16 %v6264
    %v8189 = vunpack.c.h.b16 %v6264
    %v8190 = vunpack.c.l.b16 %v6265
    %v8191 = vunpack.c.h.b16 %v6265
    %v8192 = vunpack.c.l.b16 %v6266
    %v8193 = vunpack.c.h.b16 %v6266
    %v8194 = vunpack.c.l.b16 %v6267
    %v8195 = vunpack.c.h.b16 %v6267
    %v8196 = vunpack.c.l.b16 %v6268
    %v8197 = vunpack.c.h.b16 %v6268
    %v8198 = vunpack.c.l.b16 %v6269
    %v8199 = vunpack.c.h.b16 %v6269
    %v8200 = vunpack.c.l.b16 %v6270
    %v8201 = vunpack.c.l.b16 %v6271
    %v8202 = vunpack.c.h.b16 %v6271
    %v8203 = vunpack.c.l.b16 %v6272
    %v8204 = vunpack.c.h.b16 %v6272
    %v8205 = vunpack.c.l.b16 %v6273
    %v8206 = vunpack.c.h.b16 %v6273
    %v8207 = vunpack.c.l.b16 %v6274
    %v8208 = vunpack.c.h.b16 %v6274
    %v8209 = vunpack.c.l.b16 %v6275
    %v8210 = vunpack.c.h.b16 %v6275
    %v8211 = vunpack.c.l.b16 %v6276
    %v8212 = vunpack.c.h.b16 %v6276
    %v8213 = vunpack.c.l.b16 %v6277
    %v8214 = vunpack.c.h.b16 %v6277
    %v8215 = vunpack.c.l.b16 %v6278
    %v8216 = vunpack.c.h.b16 %v6278
    %v8217 = vunpack.c.l.b16 %v6279
    %v8218 = vunpack.c.h.b16 %v6279
    %v8219 = vunpack.c.l.b16 %v6280
    %v8220 = vunpack.c.l.b16 %v6281
    %v8221 = vunpack.c.h.b16 %v6281
    %v8222 = vunpack.c.l.b16 %v6282
    %v8223 = vunpack.c.h.b16 %v6282
    %v8224 = vunpack.c.l.b16 %v6283
    %v8225 = vunpack.c.h.b16 %v6283
    %v8226 = vunpack.c.l.b16 %v6284
    %v8227 = vunpack.c.h.b16 %v6284
    %v8228 = vunpack.c.l.b16 %v6285
    %v8229 = vunpack.c.h.b16 %v6285
    %v8230 = vunpack.c.l.b16 %v6286
    %v8231 = vunpack.c.h.b16 %v6286
    %v8232 = vunpack.c.l.b16 %v6287
    %v8233 = vunpack.c.h.b16 %v6287
    %v8234 = vunpack.c.l.b16 %v6288
    %v8235 = vunpack.c.h.b16 %v6288
    %v8236 = vunpack.c.l.b16 %v6289
    %v8237 = vunpack.c.h.b16 %v6289
    %v8238 = vunpack.c.l.b16 %v6290
    %v8239 = vunpack.c.l.b16 %v6291
    %v8240 = vunpack.c.h.b16 %v6291
    %v8241 = vunpack.c.l.b16 %v6292
    %v8242 = vunpack.c.h.b16 %v6292
    %v8243 = vunpack.c.l.b16 %v6293
    %v8244 = vunpack.c.h.b16 %v6293
    %v8245 = vunpack.c.l.b16 %v6294
    %v8246 = vunpack.c.h.b16 %v6294
    %v8247 = vunpack.c.l.b16 %v6295
    %v8248 = vunpack.c.h.b16 %v6295
    %v8249 = vunpack.c.l.b16 %v6296
    %v8250 = vunpack.c.h.b16 %v6296
    %v8251 = vunpack.c.l.b16 %v6297
    %v8252 = vunpack.c.h.b16 %v6297
    %v8253 = vunpack.c.l.b16 %v6298
    %v8254 = vunpack.c.h.b16 %v6298
    %v8255 = vunpack.c.l.b16 %v6299
    %v8256 = vunpack.c.h.b16 %v6299
    %v8257 = vunpack.c.l.b16 %v6300
    %v8258 = vpack.c.b16 %v7061, %v7042
    %v8259 = vpack.c.b16 %v7062, %v7043
    %v8260 = vpack.c.b16 %v7063, %v7044
    %v8261 = vpack.c.b16 %v7064, %v7045
    %v8262 = vpack.c.b16 %v7065, %v7046
    %v8263 = vpack.c.b16 %v7066, %v7047
    %v8264 = vpack.c.b16 %v7067, %v7048
    %v8265 = vpack.c.b16 %v7068, %v7049
    %v8266 = vpack.c.b16 %v7069, %v7050
    %v8267 = vpack.c.b16 %v7070, %v7051
    %v8268 = vpack.c.b16 %v7071, %v7052
    %v8269 = vpack.c.b16 %v7072, %v7053
    %v8270 = vpack.c.b16 %v7073, %v7054
    %v8271 = vpack.c.b16 %v7074, %v7055
    %v8272 = vpack.c.b16 %v7075, %v7056
    %v8273 = vpack.c.b16 %v7076, %v7057
    %v8274 = vpack.c.b16 %v7077, %v7058
    %v8275 = vpack.c.b16 %v7078, %v7059
    %v8276 = vpack.c.b16 %v7079, %v7060
    %v8277 = vpack.c.b16 %v7099, %v7080
    %v8278 = vpack.c.b16 %v7100, %v7081
    %v8279 = vpack.c.b16 %v7101, %v7082
    %v8280 = vpack.c.b16 %v7102, %v7083
    %v8281 = vpack.c.b16 %v7103, %v7084
    %v8282 = vpack.c.b16 %v7104, %v7085
    %v8283 = vpack.c.b16 %v7105, %v7086
    %v8284 = vpack.c.b16 %v7106, %v7087
    %v8285 = vpack.c.b16 %v7107, %v7088
    %v8286 = vpack.c.b16 %v7108, %v7089
    %v8287 = vpack.c.b16 %v7109, %v7090
    %v8288 = vpack.c.b16 %v7110, %v7091
    %v8289 = vpack.c.b16 %v7111, %v7092
    %v8290 = vpack.c.b16 %v7112, %v7093
    %v8291 = vpack.c.b16 %v7113, %v7094
    %v8292 = vpack.c.b16 %v7114, %v7095
    %v8293 = vpack.c.b16 %v7115, %v7096
    %v8294 = vpack.c.b16 %v7116, %v7097
    %v8295 = vpack.c.b16 %v7117, %v7098
    %v8296 = vpack.c.b16 %v7137, %v7118
    %v8297 = vpack.c.b16 %v7138, %v7119
    %v8298 = vpack.c.b16 %v7139, %v7120
    %v8299 = vpack.c.b16 %v7140, %v7121
    %v8300 = vpack.c.b16 %v7141, %v7122
    %v8301 = vpack.c.b16 %v7142, %v7123
    %v8302 = vpack.c.b16 %v7143, %v7124
    %v8303 = vpack.c.b16 %v7144, %v7125
    %v8304 = vpack.c.b16 %v7145, %v7126
    %v8305 = vpack.c.b16 %v7146, %v7127
    %v8306 = vpack.c.b16 %v7147, %v7128
    %v8307 = vpack.c.b16 %v7148, %v7129
    %v8308 = vpack.c.b16 %v7149, %v7130
    %v8309 = vpack.c.b16 %v7150, %v7131
    %v8310 = vpack.c.b16 %v7151, %v7132
    %v8311 = vpack.c.b16 %v7152, %v7133
    %v8312 = vpack.c.b16 %v7153, %v7134
    %v8313 = vpack.c.b16 %v7154, %v7135
    %v8314 = vpack.c.b16 %v7155, %v7136
    %v8315 = vpack.c.b16 %v7175, %v7156
    %v8316 = vpack.c.b16 %v7176, %v7157
    %v8317 = vpack.c.b16 %v7177, %v7158
    %v8318 = vpack.c.b16 %v7178, %v7159
    %v8319 = vpack.c.b16 %v7179, %v7160
    %v8320 = vpack.c.b16 %v7180, %v7161
    %v8321 = vpack.c.b16 %v7181, %v7162
    %v8322 = vpack.c.b16 %v7182, %v7163
    %v8323 = vpack.c.b16 %v7183, %v7164
    %v8324 = vpack.c.b16 %v7184, %v7165
    %v8325 = vpack.c.b16 %v7185, %v7166
    %v8326 = vpack.c.b16 %v7186, %v7167
    %v8327 = vpack.c.b16 %v7187, %v7168
    %v8328 = vpack.c.b16 %v7188, %v7169
    %v8329 = vpack.c.b16 %v7189, %v7170
    %v8330 = vpack.c.b16 %v7190, %v7171
    %v8331 = vpack.c.b16 %v7191, %v7172
    %v8332 = vpack.c.b16 %v7192, %v7173
    %v8333 = vpack.c.b16 %v7193, %v7174
    %v8334 = vpack.c.b16 %v7213, %v7194
    %v8335 = vpack.c.b16 %v7214, %v7195
    %v8336 = vpack.c.b16 %v7215, %v7196
    %v8337 = vpack.c.b16 %v7216, %v7197
    %v8338 = vpack.c.b16 %v7217, %v7198
    %v8339 = vpack.c.b16 %v7218, %v7199
    %v8340 = vpack.c.b16 %v7219, %v7200
    %v8341 = vpack.c.b16 %v7220, %v7201
    %v8342 = vpack.c.b16 %v7221, %v7202
    %v8343 = vpack.c.b16 %v7222, %v7203
    %v8344 = vpack.c.b16 %v7223, %v7204
    %v8345 = vpack.c.b16 %v7224, %v7205
    %v8346 = vpack.c.b16 %v7225, %v7206
    %v8347 = vpack.c.b16 %v7226, %v7207
    %v8348 = vpack.c.b16 %v7227, %v7208
    %v8349 = vpack.c.b16 %v7228, %v7209
    %v8350 = vpack.c.b16 %v7229, %v7210
    %v8351 = vpack.c.b16 %v7230, %v7211
    %v8352 = vpack.c.b16 %v7231, %v7212
    %v8353 = vpack.c.b16 %v7251, %v7232
    %v8354 = vpack.c.b16 %v7252, %v7233
    %v8355 = vpack.c.b16 %v7253, %v7234
    %v8356 = vpack.c.b16 %v7254, %v7235
    %v8357 = vpack.c.b16 %v7255, %v7236
    %v8358 = vpack.c.b16 %v7256, %v7237
    %v8359 = vpack.c.b16 %v7257, %v7238
    %v8360 = vpack.c.b16 %v7258, %v7239
    %v8361 = vpack.c.b16 %v7259, %v7240
    %v8362 = vpack.c.b16 %v7260, %v7241
    %v8363 = vpack.c.b16 %v7261, %v7242
    %v8364 = vpack.c.b16 %v7262, %v7243
    %v8365 = vpack.c.b16 %v7263, %v7244
    %v8366 = vpack.c.b16 %v7264, %v7245
    %v8367 = vpack.c.b16 %v7265, %v7246
    %v8368 = vpack.c.b16 %v7266, %v7247
    %v8369 = vpack.c.b16 %v7267, %v7248
    %v8370 = vpack.c.b16 %v7268, %v7249
    %v8371 = vpack.c.b16 %v7269, %v7250
    %v8372 = vpack.c.b16 %v7289, %v7270
    %v8373 = vpack.c.b16 %v7290, %v7271
    %v8374 = vpack.c.b16 %v7291, %v7272
    %v8375 = vpack.c.b16 %v7292, %v7273
    %v8376 = vpack.c.b16 %v7293, %v7274
    %v8377 = vpack.c.b16 %v7294, %v7275
    %v8378 = vpack.c.b16 %v7295, %v7276
    %v8379 = vpack.c.b16 %v7296, %v7277
    %v8380 = vpack.c.b16 %v7297, %v7278
    %v8381 = vpack.c.b16 %v7298, %v7279
    %v8382 = vpack.c.b16 %v7299, %v7280
    %v8383 = vpack.c.b16 %v7300, %v7281
    %v8384 = vpack.c.b16 %v7301, %v7282
    %v8385 = vpack.c.b16 %v7302, %v7283
    %v8386 = vpack.c.b16 %v7303, %v7284
    %v8387 = vpack.c.b16 %v7304, %v7285
    %v8388 = vpack.c.b16 %v7305, %v7286
    %v8389 = vpack.c.b16 %v7306, %v7287
    %v8390 = vpack.c.b16 %v7307, %v7288
    %v8391 = vpack.c.b16 %v7327, %v7308
    %v8392 = vpack.c.b16 %v7328, %v7309
    %v8393 = vpack.c.b16 %v7329, %v7310
    %v8394 = vpack.c.b16 %v7330, %v7311
    %v8395 = vpack.c.b16 %v7331, %v7312
    %v8396 = vpack.c.b16 %v7332, %v7313
    %v8397 = vpack.c.b16 %v7333, %v7314
    %v8398 = vpack.c.b16 %v7334, %v7315
    %v8399 = vpack.c.b16 %v7335, %v7316
    %v8400 = vpack.c.b16 %v7336, %v7317
    %v8401 = vpack.c.b16 %v7337, %v7318
    %v8402 = vpack.c.b16 %v7338, %v7319
    %v8403 = vpack.c.b16 %v7339, %v7320
    %v8404 = vpack.c.b16 %v7340, %v7321
    %v8405 = vpack.c.b16 %v7341, %v7322
    %v8406 = vpack.c.b16 %v7342, %v7323
    %v8407 = vpack.c.b16 %v7343, %v7324
    %v8408 = vpack.c.b16 %v7344, %v7325
    %v8409 = vpack.c.b16 %v7345, %v7326
    %v8410 = vpack.c.b16 %v7365, %v7346
    %v8411 = vpack.c.b16 %v7366, %v7347
    %v8412 = vpack.c.b16 %v7367, %v7348
    %v8413 = vpack.c.b16 %v7368, %v7349
    %v8414 = vpack.c.b16 %v7369, %v7350
    %v8415 = vpack.c.b16 %v7370, %v7351
    %v8416 = vpack.c.b16 %v7371, %v7352
    %v8417 = vpack.c.b16 %v7372, %v7353
    %v8418 = vpack.c.b16 %v7373, %v7354
    %v8419 = vpack.c.b16 %v7374, %v7355
    %v8420 = vpack.c.b16 %v7375, %v7356
    %v8421 = vpack.c.b16 %v7376, %v7357
    %v8422 = vpack.c.b16 %v7377, %v7358
    %v8423 = vpack.c.b16 %v7378, %v7359
    %v8424 = vpack.c.b16 %v7379, %v7360
    %v8425 = vpack.c.b16 %v7380, %v7361
    %v8426 = vpack.c.b16 %v7381, %v7362
    %v8427 = vpack.c.b16 %v7382, %v7363
    %v8428 = vpack.c.b16 %v7383, %v7364
    %v8429 = vpack.c.b16 %v7403, %v7384
    %v8430 = vpack.c.b16 %v7404, %v7385
    %v8431 = vpack.c.b16 %v7405, %v7386
    %v8432 = vpack.c.b16 %v7406, %v7387
    %v8433 = vpack.c.b16 %v7407, %v7388
    %v8434 = vpack.c.b16 %v7408, %v7389
    %v8435 = vpack.c.b16 %v7409, %v7390
    %v8436 = vpack.c.b16 %v7410, %v7391
    %v8437 = vpack.c.b16 %v7411, %v7392
    %v8438 = vpack.c.b16 %v7412, %v7393
    %v8439 = vpack.c.b16 %v7413, %v7394
    %v8440 = vpack.c.b16 %v7414, %v7395
    %v8441 = vpack.c.b16 %v7415, %v7396
    %v8442 = vpack.c.b16 %v7416, %v7397
    %v8443 = vpack.c.b16 %v7417, %v7398
    %v8444 = vpack.c.b16 %v7418, %v7399
    %v8445 = vpack.c.b16 %v7419, %v7400
    %v8446 = vpack.c.b16 %v7420, %v7401
    %v8447 = vpack.c.b16 %v7421, %v7402
    %v8448 = vpack.c.b16 %v7441, %v7422
    %v8449 = vpack.c.b16 %v7442, %v7423
    %v8450 = vpack.c.b16 %v7443, %v7424
    %v8451 = vpack.c.b16 %v7444, %v7425
    %v8452 = vpack.c.b16 %v7445, %v7426
    %v8453 = vpack.c.b16 %v7446, %v7427
    %v8454 = vpack.c.b16 %v7447, %v7428
    %v8455 = vpack.c.b16 %v7448, %v7429
    %v8456 = vpack.c.b16 %v7449, %v7430
    %v8457 = vpack.c.b16 %v7450, %v7431
    %v8458 = vpack.c.b16 %v7451, %v7432
    %v8459 = vpack.c.b16 %v7452, %v7433
    %v8460 = vpack.c.b16 %v7453, %v7434
    %v8461 = vpack.c.b16 %v7454, %v7435
    %v8462 = vpack.c.b16 %v7455, %v7436
    %v8463 = vpack.c.b16 %v7456, %v7437
    %v8464 = vpack.c.b16 %v7457, %v7438
    %v8465 = vpack.c.b16 %v7458, %v7439
    %v8466 = vpack.c.b16 %v7459, %v7440
    %v8467 = vpack.c.b16 %v7479, %v7460
    %v8468 = vpack.c.b16 %v7480, %v7461
    %v8469 = vpack.c.b16 %v7481, %v7462
    %v8470 = vpack.c.b16 %v7482, %v7463
    %v8471 = vpack.c.b16 %v7483, %v7464
    %v8472 = vpack.c.b16 %v7484, %v7465
    %v8473 = vpack.c.b16 %v7485, %v7466
    %v8474 = vpack.c.b16 %v7486, %v7467
    %v8475 = vpack.c.b16 %v7487, %v7468
    %v8476 = vpack.c.b16 %v7488, %v7469
    %v8477 = vpack.c.b16 %v7489, %v7470
    %v8478 = vpack.c.b16 %v7490, %v7471
    %v8479 = vpack.c.b16 %v7491, %v7472
    %v8480 = vpack.c.b16 %v7492, %v7473
    %v8481 = vpack.c.b16 %v7493, %v7474
    %v8482 = vpack.c.b16 %v7494, %v7475
    %v8483 = vpack.c.b16 %v7495, %v7476
    %v8484 = vpack.c.b16 %v7496, %v7477
    %v8485 = vpack.c.b16 %v7497, %v7478
    %v8486 = vpack.c.b16 %v7517, %v7498
    %v8487 = vpack.c.b16 %v7518, %v7499
    %v8488 = vpack.c.b16 %v7519, %v7500
    %v8489 = vpack.c.b16 %v7520, %v7501
    %v8490 = vpack.c.b16 %v7521, %v7502
    %v8491 = vpack.c.b16 %v7522, %v7503
    %v8492 = vpack.c.b16 %v7523, %v7504
    %v8493 = vpack.c.b16 %v7524, %v7505
    %v8494 = vpack.c.b16 %v7525, %v7506
    %v8495 = vpack.c.b16 %v7526, %v7507
    %v8496 = vpack.c.b16 %v7527, %v7508
    %v8497 = vpack.c.b16 %v7528, %v7509
    %v8498 = vpack.c.b16 %v7529, %v7510
    %v8499 = vpack.c.b16 %v7530, %v7511
    %v8500 = vpack.c.b16 %v7531, %v7512
    %v8501 = vpack.c.b16 %v7532, %v7513
    %v8502 = vpack.c.b16 %v7533, %v7514
    %v8503 = vpack.c.b16 %v7534, %v7515
    %v8504 = vpack.c.b16 %v7535, %v7516
    %v8505 = vpack.c.b16 %v7555, %v7536
    %v8506 = vpack.c.b16 %v7556, %v7537
    %v8507 = vpack.c.b16 %v7557, %v7538
    %v8508 = vpack.c.b16 %v7558, %v7539
    %v8509 = vpack.c.b16 %v7559, %v7540
    %v8510 = vpack.c.b16 %v7560, %v7541
    %v8511 = vpack.c.b16 %v7561, %v7542
    %v8512 = vpack.c.b16 %v7562, %v7543
    %v8513 = vpack.c.b16 %v7563, %v7544
    %v8514 = vpack.c.b16 %v7564, %v7545
    %v8515 = vpack.c.b16 %v7565, %v7546
    %v8516 = vpack.c.b16 %v7566, %v7547
    %v8517 = vpack.c.b16 %v7567, %v7548
    %v8518 = vpack.c.b16 %v7568, %v7549
    %v8519 = vpack.c.b16 %v7569, %v7550
    %v8520 = vpack.c.b16 %v7570, %v7551
    %v8521 = vpack.c.b16 %v7571, %v7552
    %v8522 = vpack.c.b16 %v7572, %v7553
    %v8523 = vpack.c.b16 %v7573, %v7554
    %v8524 = vpack.c.b16 %v7593, %v7574
    %v8525 = vpack.c.b16 %v7594, %v7575
    %v8526 = vpack.c.b16 %v7595, %v7576
    %v8527 = vpack.c.b16 %v7596, %v7577
    %v8528 = vpack.c.b16 %v7597, %v7578
    %v8529 = vpack.c.b16 %v7598, %v7579
    %v8530 = vpack.c.b16 %v7599, %v7580
    %v8531 = vpack.c.b16 %v7600, %v7581
    %v8532 = vpack.c.b16 %v7601, %v7582
    %v8533 = vpack.c.b16 %v7602, %v7583
    %v8534 = vpack.c.b16 %v7603, %v7584
    %v8535 = vpack.c.b16 %v7604, %v7585
    %v8536 = vpack.c.b16 %v7605, %v7586
    %v8537 = vpack.c.b16 %v7606, %v7587
    %v8538 = vpack.c.b16 %v7607, %v7588
    %v8539 = vpack.c.b16 %v7608, %v7589
    %v8540 = vpack.c.b16 %v7609, %v7590
    %v8541 = vpack.c.b16 %v7610, %v7591
    %v8542 = vpack.c.b16 %v7611, %v7592
    %v8543 = vpack.c.b16 %v7631, %v7612
    %v8544 = vpack.c.b16 %v7632, %v7613
    %v8545 = vpack.c.b16 %v7633, %v7614
    %v8546 = vpack.c.b16 %v7634, %v7615
    %v8547 = vpack.c.b16 %v7635, %v7616
    %v8548 = vpack.c.b16 %v7636, %v7617
    %v8549 = vpack.c.b16 %v7637, %v7618
    %v8550 = vpack.c.b16 %v7638, %v7619
    %v8551 = vpack.c.b16 %v7639, %v7620
    %v8552 = vpack.c.b16 %v7640, %v7621
    %v8553 = vpack.c.b16 %v7641, %v7622
    %v8554 = vpack.c.b16 %v7642, %v7623
    %v8555 = vpack.c.b16 %v7643, %v7624
    %v8556 = vpack.c.b16 %v7644, %v7625
    %v8557 = vpack.c.b16 %v7645, %v7626
    %v8558 = vpack.c.b16 %v7646, %v7627
    %v8559 = vpack.c.b16 %v7647, %v7628
    %v8560 = vpack.c.b16 %v7648, %v7629
    %v8561 = vpack.c.b16 %v7649, %v7630
    %v8562 = vpack.c.b16 %v7669, %v7650
    %v8563 = vpack.c.b16 %v7670, %v7651
    %v8564 = vpack.c.b16 %v7671, %v7652
    %v8565 = vpack.c.b16 %v7672, %v7653
    %v8566 = vpack.c.b16 %v7673, %v7654
    %v8567 = vpack.c.b16 %v7674, %v7655
    %v8568 = vpack.c.b16 %v7675, %v7656
    %v8569 = vpack.c.b16 %v7676, %v7657
    %v8570 = vpack.c.b16 %v7677, %v7658
    %v8571 = vpack.c.b16 %v7678, %v7659
    %v8572 = vpack.c.b16 %v7679, %v7660
    %v8573 = vpack.c.b16 %v7680, %v7661
    %v8574 = vpack.c.b16 %v7681, %v7662
    %v8575 = vpack.c.b16 %v7682, %v7663
    %v8576 = vpack.c.b16 %v7683, %v7664
    %v8577 = vpack.c.b16 %v7684, %v7665
    %v8578 = vpack.c.b16 %v7685, %v7666
    %v8579 = vpack.c.b16 %v7686, %v7667
    %v8580 = vpack.c.b16 %v7687, %v7668
    %v8581 = vpack.c.b16 %v7707, %v7688
    %v8582 = vpack.c.b16 %v7708, %v7689
    %v8583 = vpack.c.b16 %v7709, %v7690
    %v8584 = vpack.c.b16 %v7710, %v7691
    %v8585 = vpack.c.b16 %v7711, %v7692
    %v8586 = vpack.c.b16 %v7712, %v7693
    %v8587 = vpack.c.b16 %v7713, %v7694
    %v8588 = vpack.c.b16 %v7714, %v7695
    %v8589 = vpack.c.b16 %v7715, %v7696
    %v8590 = vpack.c.b16 %v7716, %v7697
    %v8591 = vpack.c.b16 %v7717, %v7698
    %v8592 = vpack.c.b16 %v7718, %v7699
    %v8593 = vpack.c.b16 %v7719, %v7700
    %v8594 = vpack.c.b16 %v7720, %v7701
    %v8595 = vpack.c.b16 %v7721, %v7702
    %v8596 = vpack.c.b16 %v7722, %v7703
    %v8597 = vpack.c.b16 %v7723, %v7704
    %v8598 = vpack.c.b16 %v7724, %v7705
    %v8599 = vpack.c.b16 %v7725, %v7706
    %v8600 = vpack.c.b16 %v7745, %v7726
    %v8601 = vpack.c.b16 %v7746, %v7727
    %v8602 = vpack.c.b16 %v7747, %v7728
    %v8603 = vpack.c.b16 %v7748, %v7729
    %v8604 = vpack.c.b16 %v7749, %v7730
    %v8605 = vpack.c.b16 %v7750, %v7731
    %v8606 = vpack.c.b16 %v7751, %v7732
    %v8607 = vpack.c.b16 %v7752, %v7733
    %v8608 = vpack.c.b16 %v7753, %v7734
    %v8609 = vpack.c.b16 %v7754, %v7735
    %v8610 = vpack.c.b16 %v7755, %v7736
    %v8611 = vpack.c.b16 %v7756, %v7737
    %v8612 = vpack.c.b16 %v7757, %v7738
    %v8613 = vpack.c.b16 %v7758, %v7739
    %v8614 = vpack.c.b16 %v7759, %v7740
    %v8615 = vpack.c.b16 %v7760, %v7741
    %v8616 = vpack.c.b16 %v7761, %v7742
    %v8617 = vpack.c.b16 %v7762, %v7743
    %v8618 = vpack.c.b16 %v7763, %v7744
    %v8619 = vpack.c.b16 %v7783, %v7764
    %v8620 = vpack.c.b16 %v7784, %v7765
    %v8621 = vpack.c.b16 %v7785, %v7766
    %v8622 = vpack.c.b16 %v7786, %v7767
    %v8623 = vpack.c.b16 %v7787, %v7768
    %v8624 = vpack.c.b16 %v7788, %v7769
    %v8625 = vpack.c.b16 %v7789, %v7770
    %v8626 = vpack.c.b16 %v7790, %v7771
    %v8627 = vpack.c.b16 %v7791, %v7772
    %v8628 = vpack.c.b16 %v7792, %v7773
    %v8629 = vpack.c.b16 %v7793, %v7774
    %v8630 = vpack.c.b16 %v7794, %v7775
    %v8631 = vpack.c.b16 %v7795, %v7776
    %v8632 = vpack.c.b16 %v7796, %v7777
    %v8633 = vpack.c.b16 %v7797, %v7778
    %v8634 = vpack.c.b16 %v7798, %v7779
    %v8635 = vpack.c.b16 %v7799, %v7780
    %v8636 = vpack.c.b16 %v7800, %v7781
    %v8637 = vpack.c.b16 %v7801, %v7782
    %v8638 = vpack.c.b16 %v7821, %v7802
    %v8639 = vpack.c.b16 %v7822, %v7803
    %v8640 = vpack.c.b16 %v7823, %v7804
    %v8641 = vpack.c.b16 %v7824, %v7805
    %v8642 = vpack.c.b16 %v7825, %v7806
    %v8643 = vpack.c.b16 %v7826, %v7807
    %v8644 = vpack.c.b16 %v7827, %v7808
    %v8645 = vpack.c.b16 %v7828, %v7809
    %v8646 = vpack.c.b16 %v7829, %v7810
    %v8647 = vpack.c.b16 %v7830, %v7811
    %v8648 = vpack.c.b16 %v7831, %v7812
    %v8649 = vpack.c.b16 %v7832, %v7813
    %v8650 = vpack.c.b16 %v7833, %v7814
    %v8651 = vpack.c.b16 %v7834, %v7815
    %v8652 = vpack.c.b16 %v7835, %v7816
    %v8653 = vpack.c.b16 %v7836, %v7817
    %v8654 = vpack.c.b16 %v7837, %v7818
    %v8655 = vpack.c.b16 %v7838, %v7819
    %v8656 = vpack.c.b16 %v7839, %v7820
    %v8657 = vpack.c.b16 %v7859, %v7840
    %v8658 = vpack.c.b16 %v7860, %v7841
    %v8659 = vpack.c.b16 %v7861, %v7842
    %v8660 = vpack.c.b16 %v7862, %v7843
    %v8661 = vpack.c.b16 %v7863, %v7844
    %v8662 = vpack.c.b16 %v7864, %v7845
    %v8663 = vpack.c.b16 %v7865, %v7846
    %v8664 = vpack.c.b16 %v7866, %v7847
    %v8665 = vpack.c.b16 %v7867, %v7848
    %v8666 = vpack.c.b16 %v7868, %v7849
    %v8667 = vpack.c.b16 %v7869, %v7850
    %v8668 = vpack.c.b16 %v7870, %v7851
    %v8669 = vpack.c.b16 %v7871, %v7852
    %v8670 = vpack.c.b16 %v7872, %v7853
    %v8671 = vpack.c.b16 %v7873, %v7854
    %v8672 = vpack.c.b16 %v7874, %v7855
    %v8673 = vpack.c.b16 %v7875, %v7856
    %v8674 = vpack.c.b16 %v7876, %v7857
    %v8675 = vpack.c.b16 %v7877, %v7858
    %v8676 = vpack.c.b16 %v7897, %v7878
    %v8677 = vpack.c.b16 %v7898, %v7879
    %v8678 = vpack.c.b16 %v7899, %v7880
    %v8679 = vpack.c.b16 %v7900, %v7881
    %v8680 = vpack.c.b16 %v7901, %v7882
    %v8681 = vpack.c.b16 %v7902, %v7883
    %v8682 = vpack.c.b16 %v7903, %v7884
    %v8683 = vpack.c.b16 %v7904, %v7885
    %v8684 = vpack.c.b16 %v7905, %v7886
    %v8685 = vpack.c.b16 %v7906, %v7887
    %v8686 = vpack.c.b16 %v7907, %v7888
    %v8687 = vpack.c.b16 %v7908, %v7889
    %v8688 = vpack.c.b16 %v7909, %v7890
    %v8689 = vpack.c.b16 %v7910, %v7891
    %v8690 = vpack.c.b16 %v7911, %v7892
    %v8691 = vpack.c.b16 %v7912, %v7893
    %v8692 = vpack.c.b16 %v7913, %v7894
    %v8693 = vpack.c.b16 %v7914, %v7895
    %v8694 = vpack.c.b16 %v7915, %v7896
    %v8695 = vpack.c.b16 %v7935, %v7916
    %v8696 = vpack.c.b16 %v7936, %v7917
    %v8697 = vpack.c.b16 %v7937, %v7918
    %v8698 = vpack.c.b16 %v7938, %v7919
    %v8699 = vpack.c.b16 %v7939, %v7920
    %v8700 = vpack.c.b16 %v7940, %v7921
    %v8701 = vpack.c.b16 %v7941, %v7922
    %v8702 = vpack.c.b16 %v7942, %v7923
    %v8703 = vpack.c.b16 %v7943, %v7924
    %v8704 = vpack.c.b16 %v7944, %v7925
    %v8705 = vpack.c.b16 %v7945, %v7926
    %v8706 = vpack.c.b16 %v7946, %v7927
    %v8707 = vpack.c.b16 %v7947, %v7928
    %v8708 = vpack.c.b16 %v7948, %v7929
    %v8709 = vpack.c.b16 %v7949, %v7930
    %v8710 = vpack.c.b16 %v7950, %v7931
    %v8711 = vpack.c.b16 %v7951, %v7932
    %v8712 = vpack.c.b16 %v7952, %v7933
    %v8713 = vpack.c.b16 %v7953, %v7934
    %v8714 = vpack.c.b16 %v7973, %v7954
    %v8715 = vpack.c.b16 %v7974, %v7955
    %v8716 = vpack.c.b16 %v7975, %v7956
    %v8717 = vpack.c.b16 %v7976, %v7957
    %v8718 = vpack.c.b16 %v7977, %v7958
    %v8719 = vpack.c.b16 %v7978, %v7959
    %v8720 = vpack.c.b16 %v7979, %v7960
    %v8721 = vpack.c.b16 %v7980, %v7961
    %v8722 = vpack.c.b16 %v7981, %v7962
    %v8723 = vpack.c.b16 %v7982, %v7963
    %v8724 = vpack.c.b16 %v7983, %v7964
    %v8725 = vpack.c.b16 %v7984, %v7965
    %v8726 = vpack.c.b16 %v7985, %v7966
    %v8727 = vpack.c.b16 %v7986, %v7967
    %v8728 = vpack.c.b16 %v7987, %v7968
    %v8729 = vpack.c.b16 %v7988, %v7969
    %v8730 = vpack.c.b16 %v7989, %v7970
    %v8731 = vpack.c.b16 %v7990, %v7971
    %v8732 = vpack.c.b16 %v7991, %v7972
    %v8733 = vpack.c.b16 %v8011, %v7992
    %v8734 = vpack.c.b16 %v8012, %v7993
    %v8735 = vpack.c.b16 %v8013, %v7994
    %v8736 = vpack.c.b16 %v8014, %v7995
    %v8737 = vpack.c.b16 %v8015, %v7996
    %v8738 = vpack.c.b16 %v8016, %v7997
    %v8739 = vpack.c.b16 %v8017, %v7998
    %v8740 = vpack.c.b16 %v8018, %v7999
    %v8741 = vpack.c.b16 %v8019, %v8000
    %v8742 = vpack.c.b16 %v8020, %v8001
    %v8743 = vpack.c.b16 %v8021, %v8002
    %v8744 = vpack.c.b16 %v8022, %v8003
    %v8745 = vpack.c.b16 %v8023, %v8004
    %v8746 = vpack.c.b16 %v8024, %v8005
    %v8747 = vpack.c.b16 %v8025, %v8006
    %v8748 = vpack.c.b16 %v8026, %v8007
    %v8749 = vpack.c.b16 %v8027, %v8008
    %v8750 = vpack.c.b16 %v8028, %v8009
    %v8751 = vpack.c.b16 %v8029, %v8010
    %v8752 = vpack.c.b16 %v8049, %v8030
    %v8753 = vpack.c.b16 %v8050, %v8031
    %v8754 = vpack.c.b16 %v8051, %v8032
    %v8755 = vpack.c.b16 %v8052, %v8033
    %v8756 = vpack.c.b16 %v8053, %v8034
    %v8757 = vpack.c.b16 %v8054, %v8035
    %v8758 = vpack.c.b16 %v8055, %v8036
    %v8759 = vpack.c.b16 %v8056, %v8037
    %v8760 = vpack.c.b16 %v8057, %v8038
    %v8761 = vpack.c.b16 %v8058, %v8039
    %v8762 = vpack.c.b16 %v8059, %v8040
    %v8763 = vpack.c.b16 %v8060, %v8041
    %v8764 = vpack.c.b16 %v8061, %v8042
    %v8765 = vpack.c.b16 %v8062, %v8043
    %v8766 = vpack.c.b16 %v8063, %v8044
    %v8767 = vpack.c.b16 %v8064, %v8045
    %v8768 = vpack.c.b16 %v8065, %v8046
    %v8769 = vpack.c.b16 %v8066, %v8047
    %v8770 = vpack.c.b16 %v8067, %v8048
    %v8771 = vpack.c.b16 %v8087, %v8068
    %v8772 = vpack.c.b16 %v8088, %v8069
    %v8773 = vpack.c.b16 %v8089, %v8070
    %v8774 = vpack.c.b16 %v8090, %v8071
    %v8775 = vpack.c.b16 %v8091, %v8072
    %v8776 = vpack.c.b16 %v8092, %v8073
    %v8777 = vpack.c.b16 %v8093, %v8074
    %v8778 = vpack.c.b16 %v8094, %v8075
    %v8779 = vpack.c.b16 %v8095, %v8076
    %v8780 = vpack.c.b16 %v8096, %v8077
    %v8781 = vpack.c.b16 %v8097, %v8078
    %v8782 = vpack.c.b16 %v8098, %v8079
    %v8783 = vpack.c.b16 %v8099, %v8080
    %v8784 = vpack.c.b16 %v8100, %v8081
    %v8785 = vpack.c.b16 %v8101, %v8082
    %v8786 = vpack.c.b16 %v8102, %v8083
    %v8787 = vpack.c.b16 %v8103, %v8084
    %v8788 = vpack.c.b16 %v8104, %v8085
    %v8789 = vpack.c.b16 %v8105, %v8086
    %v8790 = vpack.c.b16 %v8125, %v8106
    %v8791 = vpack.c.b16 %v8126, %v8107
    %v8792 = vpack.c.b16 %v8127, %v8108
    %v8793 = vpack.c.b16 %v8128, %v8109
    %v8794 = vpack.c.b16 %v8129, %v8110
    %v8795 = vpack.c.b16 %v8130, %v8111
    %v8796 = vpack.c.b16 %v8131, %v8112
    %v8797 = vpack.c.b16 %v8132, %v8113
    %v8798 = vpack.c.b16 %v8133, %v8114
    %v8799 = vpack.c.b16 %v8134, %v8115
    %v8800 = vpack.c.b16 %v8135, %v8116
    %v8801 = vpack.c.b16 %v8136, %v8117
    %v8802 = vpack.c.b16 %v8137, %v8118
    %v8803 = vpack.c.b16 %v8138, %v8119
    %v8804 = vpack.c.b16 %v8139, %v8120
    %v8805 = vpack.c.b16 %v8140, %v8121
    %v8806 = vpack.c.b16 %v8141, %v8122
    %v8807 = vpack.c.b16 %v8142, %v8123
    %v8808 = vpack.c.b16 %v8143, %v8124
    %v8809 = vpack.c.b16 %v8163, %v8144
    %v8810 = vpack.c.b16 %v8164, %v8145
    %v8811 = vpack.c.b16 %v8165, %v8146
    %v8812 = vpack.c.b16 %v8166, %v8147
    %v8813 = vpack.c.b16 %v8167, %v8148
    %v8814 = vpack.c.b16 %v8168, %v8149
    %v8815 = vpack.c.b16 %v8169, %v8150
    %v8816 = vpack.c.b16 %v8170, %v8151
    %v8817 = vpack.c.b16 %v8171, %v8152
    %v8818 = vpack.c.b16 %v8172, %v8153
    %v8819 = vpack.c.b16 %v8173, %v8154
    %v8820 = vpack.c.b16 %v8174, %v8155
    %v8821 = vpack.c.b16 %v8175, %v8156
    %v8822 = vpack.c.b16 %v8176, %v8157
    %v8823 = vpack.c.b16 %v8177, %v8158
    %v8824 = vpack.c.b16 %v8178, %v8159
    %v8825 = vpack.c.b16 %v8179, %v8160
    %v8826 = vpack.c.b16 %v8180, %v8161
    %v8827 = vpack.c.b16 %v8181, %v8162
    %v8828 = vpack.c.b16 %v8201, %v8182
    %v8829 = vpack.c.b16 %v8202, %v8183
    %v8830 = vpack.c.b16 %v8203, %v8184
    %v8831 = vpack.c.b16 %v8204, %v8185
    %v8832 = vpack.c.b16 %v8205, %v8186
    %v8833 = vpack.c.b16 %v8206, %v8187
    %v8834 = vpack.c.b16 %v8207, %v8188
    %v8835 = vpack.c.b16 %v8208, %v8189
    %v8836 = vpack.c.b16 %v8209, %v8190
    %v8837 = vpack.c.b16 %v8210, %v8191
    %v8838 = vpack.c.b16 %v8211, %v8192
    %v8839 = vpack.c.b16 %v8212, %v8193
    %v8840 = vpack.c.b16 %v8213, %v8194
    %v8841 = vpack.c.b16 %v8214, %v8195
    %v8842 = vpack.c.b16 %v8215, %v8196
    %v8843 = vpack.c.b16 %v8216, %v8197
    %v8844 = vpack.c.b16 %v8217, %v8198
    %v8845 = vpack.c.b16 %v8218, %v8199
    %v8846 = vpack.c.b16 %v8219, %v8200
    %v8847 = vpack.c.b16 %v8239, %v8220
    %v8848 = vpack.c.b16 %v8240, %v8221
    %v8849 = vpack.c.b16 %v8241, %v8222
    %v8850 = vpack.c.b16 %v8242, %v8223
    %v8851 = vpack.c.b16 %v8243, %v8224
    %v8852 = vpack.c.b16 %v8244, %v8225
    %v8853 = vpack.c.b16 %v8245, %v8226
    %v8854 = vpack.c.b16 %v8246, %v8227
    %v8855 = vpack.c.b16 %v8247, %v8228
    %v8856 = vpack.c.b16 %v8248, %v8229
    %v8857 = vpack.c.b16 %v8249, %v8230
    %v8858 = vpack.c.b16 %v8250, %v8231
    %v8859 = vpack.c.b16 %v8251, %v8232
    %v8860 = vpack.c.b16 %v8252, %v8233
    %v8861 = vpack.c.b16 %v8253, %v8234
    %v8862 = vpack.c.b16 %v8254, %v8235
    %v8863 = vpack.c.b16 %v8255, %v8236
    %v8864 = vpack.c.b16 %v8256, %v8237
    %v8865 = vpack.c.b16 %v8257, %v8238
    %9474 = vmatprep.subr.bf16.mxu0 %v8259
    %9475 = vmatpush1.bf16.msra.mxu0 %v8258
    %9476 = vmatprep.subr.bf16.mxu0 %v8278
    %9477 = vmatpush1.bf16.msra.mxu0 %v8277
    %9478 = vmatprep.subr.bf16.mxu0 %v8297
    %9479 = vmatpush1.bf16.msra.mxu0 %v8296
    %9480 = vmatprep.subr.bf16.mxu0 %v8316
    %9481 = vmatpush1.bf16.msra.mxu0 %v8315
    %9482 = vmatprep.subr.bf16.mxu0 %v8335
    %9483 = vmatpush1.bf16.msra.mxu0 %v8334
    %9484 = vmatprep.subr.bf16.mxu0 %v8354
    %9485 = vmatpush1.bf16.msra.mxu0 %v8353
    %9486 = vmatprep.subr.bf16.mxu0 %v8373
    %9487 = vmatpush1.bf16.msra.mxu0 %v8372
    %9488 = vmatprep.subr.bf16.mxu0 %v8392
    %9489 = vmatpush1.bf16.msra.mxu0 %v8391
    %9490 = vmatprep.subr.bf16.mxu0 %v8411
    %9491 = vmatpush1.bf16.msra.mxu0 %v8410
    %9492 = vmatprep.subr.bf16.mxu0 %v8430
    %9493 = vmatpush1.bf16.msra.mxu0 %v8429
    %9494 = vmatprep.subr.bf16.mxu0 %v8449
    %9495 = vmatpush1.bf16.msra.mxu0 %v8448
    %9496 = vmatprep.subr.bf16.mxu0 %v8468
    %9497 = vmatpush1.bf16.msra.mxu0 %v8467
    %9498 = vmatprep.subr.bf16.mxu0 %v8487
    %9499 = vmatpush1.bf16.msra.mxu0 %v8486
    %9500 = vmatprep.subr.bf16.mxu0 %v8506
    %9501 = vmatpush1.bf16.msra.mxu0 %v8505
    %9502 = vmatprep.subr.bf16.mxu0 %v8525
    %9503 = vmatpush1.bf16.msra.mxu0 %v8524
    %9504 = vmatprep.subr.bf16.mxu0 %v8544
    %9505 = vmatpush1.bf16.msra.mxu0 %v8543
    %9506 = vmatprep.mubr.bf16.mxu0 %v5658
    %9507 = vmatmul.mubr.bf16.gmra.mrb[0].mxu0 %v5657
    %v9508 = vpop.f32.mrb[0].mxu0
    %v9509 = vadd.f32 %v6310, %v9508
    %v9510 = vpop.f32.mrb[0].mxu0
    %v9511 = vadd.f32 %v6314, %v9510
    %v9512 = vpop.f32.mrb[0].mxu0
    %v9513 = vpop.f32.mrb[0].mxu0
    %9514 = vdwg.mxu0
    %9515 = vmatprep.subr.bf16.mxu0 %v8563
    %9516 = vmatpush1.bf16.msra.mxu0 %v8562
    %9517 = vmatprep.subr.bf16.mxu0 %v8582
    %9518 = vmatpush1.bf16.msra.mxu0 %v8581
    %9519 = vmatprep.subr.bf16.mxu0 %v8601
    %9520 = vmatpush1.bf16.msra.mxu0 %v8600
    %9521 = vmatprep.subr.bf16.mxu0 %v8620
    %9522 = vmatpush1.bf16.msra.mxu0 %v8619
    %9523 = vmatprep.subr.bf16.mxu0 %v8639
    %9524 = vmatpush1.bf16.msra.mxu0 %v8638
    %9525 = vmatprep.subr.bf16.mxu0 %v8658
    %9526 = vmatpush1.bf16.msra.mxu0 %v8657
    %9527 = vmatprep.subr.bf16.mxu0 %v8677
    %9528 = vmatpush1.bf16.msra.mxu0 %v8676
    %9529 = vmatprep.subr.bf16.mxu0 %v8696
    %9530 = vmatpush1.bf16.msra.mxu0 %v8695
    %9531 = vmatprep.subr.bf16.mxu0 %v8715
    %9532 = vmatpush1.bf16.msra.mxu0 %v8714
    %9533 = vmatprep.subr.bf16.mxu0 %v8734
    %9534 = vmatpush1.bf16.msra.mxu0 %v8733
    %9535 = vmatprep.subr.bf16.mxu0 %v8753
    %9536 = vmatpush1.bf16.msra.mxu0 %v8752
    %9537 = vmatprep.subr.bf16.mxu0 %v8772
    %9538 = vmatpush1.bf16.msra.mxu0 %v8771
    %9539 = vmatprep.subr.bf16.mxu0 %v8791
    %9540 = vmatpush1.bf16.msra.mxu0 %v8790
    %9541 = vmatprep.subr.bf16.mxu0 %v8810
    %9542 = vmatpush1.bf16.msra.mxu0 %v8809
    %9543 = vmatprep.subr.bf16.mxu0 %v8829
    %9544 = vmatpush1.bf16.msra.mxu0 %v8828
    %9545 = vmatprep.subr.bf16.mxu0 %v8848
    %9546 = vmatpush1.bf16.msra.mxu0 %v8847
    %9547 = vmatprep.mubr.bf16.mxu0 %v5660
    %9548 = vmatmul.mubr.bf16.gmra.mrb[0].mxu0 %v5659
    %v9549 = vpop.f32.mrb[0].mxu0
    %v9550 = vadd.f32 %v9509, %v9549
    %v9551 = vpop.f32.mrb[0].mxu0
    %v9552 = vadd.f32 %v9511, %v9551
    %v9553 = vpop.f32.mrb[0].mxu0
    %v9554 = vpop.f32.mrb[0].mxu0
    %9555 = vdwg.mxu0
    %9556 = vmatprep.subr.bf16.mxu0 %v8261
    %9557 = vmatpush1.bf16.msra.mxu0 %v8260
    %9558 = vmatprep.subr.bf16.mxu0 %v8280
    %9559 = vmatpush1.bf16.msra.mxu0 %v8279
    %9560 = vmatprep.subr.bf16.mxu0 %v8299
    %9561 = vmatpush1.bf16.msra.mxu0 %v8298
    %9562 = vmatprep.subr.bf16.mxu0 %v8318
    %9563 = vmatpush1.bf16.msra.mxu0 %v8317
    %9564 = vmatprep.subr.bf16.mxu0 %v8337
    %9565 = vmatpush1.bf16.msra.mxu0 %v8336
    %9566 = vmatprep.subr.bf16.mxu0 %v8356
    %9567 = vmatpush1.bf16.msra.mxu0 %v8355
    %9568 = vmatprep.subr.bf16.mxu0 %v8375
    %9569 = vmatpush1.bf16.msra.mxu0 %v8374
    %9570 = vmatprep.subr.bf16.mxu0 %v8394
    %9571 = vmatpush1.bf16.msra.mxu0 %v8393
    %9572 = vmatprep.subr.bf16.mxu0 %v8413
    %9573 = vmatpush1.bf16.msra.mxu0 %v8412
    %9574 = vmatprep.subr.bf16.mxu0 %v8432
    %9575 = vmatpush1.bf16.msra.mxu0 %v8431
    %9576 = vmatprep.subr.bf16.mxu0 %v8451
    %9577 = vmatpush1.bf16.msra.mxu0 %v8450
    %9578 = vmatprep.subr.bf16.mxu0 %v8470
    %9579 = vmatpush1.bf16.msra.mxu0 %v8469
    %9580 = vmatprep.subr.bf16.mxu0 %v8489
    %9581 = vmatpush1.bf16.msra.mxu0 %v8488
    %9582 = vmatprep.subr.bf16.mxu0 %v8508
    %9583 = vmatpush1.bf16.msra.mxu0 %v8507
    %9584 = vmatprep.subr.bf16.mxu0 %v8527
    %9585 = vmatpush1.bf16.msra.mxu0 %v8526
    %9586 = vmatprep.subr.bf16.mxu0 %v8546
    %9587 = vmatpush1.bf16.msra.mxu0 %v8545
    %9588 = vmatprep.mubr.bf16.mxu0 %v5658
    %9589 = vmatmul.mubr.bf16.gmra.mrb[0].mxu0 %v5657
    %v9590 = vpop.f32.mrb[0].mxu0
    %v9591 = vadd.f32 %v6318, %v9590
    %v9592 = vpop.f32.mrb[0].mxu0
    %v9593 = vadd.f32 %v6322, %v9592
    %v9594 = vpop.f32.mrb[0].mxu0
    %v9595 = vpop.f32.mrb[0].mxu0
    %9596 = vdwg.mxu0
    %9597 = vmatprep.subr.bf16.mxu0 %v8565
    %9598 = vmatpush1.bf16.msra.mxu0 %v8564
    %9599 = vmatprep.subr.bf16.mxu0 %v8584
    %9600 = vmatpush1.bf16.msra.mxu0 %v8583
    %9601 = vmatprep.subr.bf16.mxu0 %v8603
    %9602 = vmatpush1.bf16.msra.mxu0 %v8602
    %9603 = vmatprep.subr.bf16.mxu0 %v8622
    %9604 = vmatpush1.bf16.msra.mxu0 %v8621
    %9605 = vmatprep.subr.bf16.mxu0 %v8641
    %9606 = vmatpush1.bf16.msra.mxu0 %v8640
    %9607 = vmatprep.subr.bf16.mxu0 %v8660
    %9608 = vmatpush1.bf16.msra.mxu0 %v8659
    %9609 = vmatprep.subr.bf16.mxu0 %v8679
    %9610 = vmatpush1.bf16.msra.mxu0 %v8678
    %9611 = vmatprep.subr.bf16.mxu0 %v8698
    %9612 = vmatpush1.bf16.msra.mxu0 %v8697
    %9613 = vmatprep.subr.bf16.mxu0 %v8717
    %9614 = vmatpush1.bf16.msra.mxu0 %v8716
    %9615 = vmatprep.subr.bf16.mxu0 %v8736
    %9616 = vmatpush1.bf16.msra.mxu0 %v8735
    %9617 = vmatprep.subr.bf16.mxu0 %v8755
    %9618 = vmatpush1.bf16.msra.mxu0 %v8754
    %9619 = vmatprep.subr.bf16.mxu0 %v8774
    %9620 = vmatpush1.bf16.msra.mxu0 %v8773
    %9621 = vmatprep.subr.bf16.mxu0 %v8793
    %9622 = vmatpush1.bf16.msra.mxu0 %v8792
    %9623 = vmatprep.subr.bf16.mxu0 %v8812
    %9624 = vmatpush1.bf16.msra.mxu0 %v8811
    %9625 = vmatprep.subr.bf16.mxu0 %v8831
    %9626 = vmatpush1.bf16.msra.mxu0 %v8830
    %9627 = vmatprep.subr.bf16.mxu0 %v8850
    %9628 = vmatpush1.bf16.msra.mxu0 %v8849
    %9629 = vmatprep.mubr.bf16.mxu0 %v5660
    %9630 = vmatmul.mubr.bf16.gmra.mrb[0].mxu0 %v5659
    %v9631 = vpop.f32.mrb[0].mxu0
    %v9632 = vadd.f32 %v9591, %v9631
    %v9633 = vpop.f32.mrb[0].mxu0
    %v9634 = vadd.f32 %v9593, %v9633
    %v9635 = vpop.f32.mrb[0].mxu0
    %v9636 = vpop.f32.mrb[0].mxu0
    %9637 = vdwg.mxu0
    %9638 = vmatprep.subr.bf16.mxu0 %v8263
    %9639 = vmatpush1.bf16.msra.mxu0 %v8262
    %9640 = vmatprep.subr.bf16.mxu0 %v8282
    %9641 = vmatpush1.bf16.msra.mxu0 %v8281
    %9642 = vmatprep.subr.bf16.mxu0 %v8301
    %9643 = vmatpush1.bf16.msra.mxu0 %v8300
    %9644 = vmatprep.subr.bf16.mxu0 %v8320
    %9645 = vmatpush1.bf16.msra.mxu0 %v8319
    %9646 = vmatprep.subr.bf16.mxu0 %v8339
    %9647 = vmatpush1.bf16.msra.mxu0 %v8338
    %9648 = vmatprep.subr.bf16.mxu0 %v8358
    %9649 = vmatpush1.bf16.msra.mxu0 %v8357
    %9650 = vmatprep.subr.bf16.mxu0 %v8377
    %9651 = vmatpush1.bf16.msra.mxu0 %v8376
    %9652 = vmatprep.subr.bf16.mxu0 %v8396
    %9653 = vmatpush1.bf16.msra.mxu0 %v8395
    %9654 = vmatprep.subr.bf16.mxu0 %v8415
    %9655 = vmatpush1.bf16.msra.mxu0 %v8414
    %9656 = vmatprep.subr.bf16.mxu0 %v8434
    %9657 = vmatpush1.bf16.msra.mxu0 %v8433
    %9658 = vmatprep.subr.bf16.mxu0 %v8453
    %9659 = vmatpush1.bf16.msra.mxu0 %v8452
    %9660 = vmatprep.subr.bf16.mxu0 %v8472
    %9661 = vmatpush1.bf16.msra.mxu0 %v8471
    %9662 = vmatprep.subr.bf16.mxu0 %v8491
    %9663 = vmatpush1.bf16.msra.mxu0 %v8490
    %9664 = vmatprep.subr.bf16.mxu0 %v8510
    %9665 = vmatpush1.bf16.msra.mxu0 %v8509
    %9666 = vmatprep.subr.bf16.mxu0 %v8529
    %9667 = vmatpush1.bf16.msra.mxu0 %v8528
    %9668 = vmatprep.subr.bf16.mxu0 %v8548
    %9669 = vmatpush1.bf16.msra.mxu0 %v8547
    %9670 = vmatprep.mubr.bf16.mxu0 %v5658
    %9671 = vmatmul.mubr.bf16.gmra.mrb[0].mxu0 %v5657
    %v9672 = vpop.f32.mrb[0].mxu0
    %v9673 = vadd.f32 %v6326, %v9672
    %v9674 = vpop.f32.mrb[0].mxu0
    %v9675 = vadd.f32 %v6330, %v9674
    %v9676 = vpop.f32.mrb[0].mxu0
    %v9677 = vpop.f32.mrb[0].mxu0
    %9678 = vdwg.mxu0
    %9679 = vmatprep.subr.bf16.mxu0 %v8567
    %9680 = vmatpush1.bf16.msra.mxu0 %v8566
    %9681 = vmatprep.subr.bf16.mxu0 %v8586
    %9682 = vmatpush1.bf16.msra.mxu0 %v8585
    %9683 = vmatprep.subr.bf16.mxu0 %v8605
    %9684 = vmatpush1.bf16.msra.mxu0 %v8604
    %9685 = vmatprep.subr.bf16.mxu0 %v8624
    %9686 = vmatpush1.bf16.msra.mxu0 %v8623
    %9687 = vmatprep.subr.bf16.mxu0 %v8643
    %9688 = vmatpush1.bf16.msra.mxu0 %v8642
    %9689 = vmatprep.subr.bf16.mxu0 %v8662
    %9690 = vmatpush1.bf16.msra.mxu0 %v8661
    %9691 = vmatprep.subr.bf16.mxu0 %v8681
    %9692 = vmatpush1.bf16.msra.mxu0 %v8680
    %9693 = vmatprep.subr.bf16.mxu0 %v8700
    %9694 = vmatpush1.bf16.msra.mxu0 %v8699
    %9695 = vmatprep.subr.bf16.mxu0 %v8719
    %9696 = vmatpush1.bf16.msra.mxu0 %v8718
    %9697 = vmatprep.subr.bf16.mxu0 %v8738
    %9698 = vmatpush1.bf16.msra.mxu0 %v8737
    %9699 = vmatprep.subr.bf16.mxu0 %v8757
    %9700 = vmatpush1.bf16.msra.mxu0 %v8756
    %9701 = vmatprep.subr.bf16.mxu0 %v8776
    %9702 = vmatpush1.bf16.msra.mxu0 %v8775
    %9703 = vmatprep.subr.bf16.mxu0 %v8795
    %9704 = vmatpush1.bf16.msra.mxu0 %v8794
    %9705 = vmatprep.subr.bf16.mxu0 %v8814
    %9706 = vmatpush1.bf16.msra.mxu0 %v8813
    %9707 = vmatprep.subr.bf16.mxu0 %v8833
    %9708 = vmatpush1.bf16.msra.mxu0 %v8832
    %9709 = vmatprep.subr.bf16.mxu0 %v8852
    %9710 = vmatpush1.bf16.msra.mxu0 %v8851
    %9711 = vmatprep.mubr.bf16.mxu0 %v5660
    %9712 = vmatmul.mubr.bf16.gmra.mrb[0].mxu0 %v5659
    %v9713 = vpop.f32.mrb[0].mxu0
    %v9714 = vadd.f32 %v9673, %v9713
    %v9715 = vpop.f32.mrb[0].mxu0
    %v9716 = vadd.f32 %v9675, %v9715
    %v9717 = vpop.f32.mrb[0].mxu0
    %v9718 = vpop.f32.mrb[0].mxu0
    %9719 = vdwg.mxu0
    %9720 = vmatprep.subr.bf16.mxu0 %v8265
    %9721 = vmatpush1.bf16.msra.mxu0 %v8264
    %9722 = vmatprep.subr.bf16.mxu0 %v8284
    %9723 = vmatpush1.bf16.msra.mxu0 %v8283
    %9724 = vmatprep.subr.bf16.mxu0 %v8303
    %9725 = vmatpush1.bf16.msra.mxu0 %v8302
    %9726 = vmatprep.subr.bf16.mxu0 %v8322
    %9727 = vmatpush1.bf16.msra.mxu0 %v8321
    %9728 = vmatprep.subr.bf16.mxu0 %v8341
    %9729 = vmatpush1.bf16.msra.mxu0 %v8340
    %9730 = vmatprep.subr.bf16.mxu0 %v8360
    %9731 = vmatpush1.bf16.msra.mxu0 %v8359
    %9732 = vmatprep.subr.bf16.mxu0 %v8379
    %9733 = vmatpush1.bf16.msra.mxu0 %v8378
    %9734 = vmatprep.subr.bf16.mxu0 %v8398
    %9735 = vmatpush1.bf16.msra.mxu0 %v8397
    %9736 = vmatprep.subr.bf16.mxu0 %v8417
    %9737 = vmatpush1.bf16.msra.mxu0 %v8416
    %9738 = vmatprep.subr.bf16.mxu0 %v8436
    %9739 = vmatpush1.bf16.msra.mxu0 %v8435
    %9740 = vmatprep.subr.bf16.mxu0 %v8455
    %9741 = vmatpush1.bf16.msra.mxu0 %v8454
    %9742 = vmatprep.subr.bf16.mxu0 %v8474
    %9743 = vmatpush1.bf16.msra.mxu0 %v8473
    %9744 = vmatprep.subr.bf16.mxu0 %v8493
    %9745 = vmatpush1.bf16.msra.mxu0 %v8492
    %9746 = vmatprep.subr.bf16.mxu0 %v8512
    %9747 = vmatpush1.bf16.msra.mxu0 %v8511
    %9748 = vmatprep.subr.bf16.mxu0 %v8531
    %9749 = vmatpush1.bf16.msra.mxu0 %v8530
    %9750 = vmatprep.subr.bf16.mxu0 %v8550
    %9751 = vmatpush1.bf16.msra.mxu0 %v8549
    %9752 = vmatprep.mubr.bf16.mxu0 %v5658
    %9753 = vmatmul.mubr.bf16.gmra.mrb[0].mxu0 %v5657
    %v9754 = vpop.f32.mrb[0].mxu0
    %v9755 = vadd.f32 %v6334, %v9754
    %v9756 = vpop.f32.mrb[0].mxu0
    %v9757 = vadd.f32 %v6338, %v9756
    %v9758 = vpop.f32.mrb[0].mxu0
    %v9759 = vpop.f32.mrb[0].mxu0
    %9760 = vdwg.mxu0
    %9761 = vmatprep.subr.bf16.mxu0 %v8569
    %9762 = vmatpush1.bf16.msra.mxu0 %v8568
    %9763 = vmatprep.subr.bf16.mxu0 %v8588
    %9764 = vmatpush1.bf16.msra.mxu0 %v8587
    %9765 = vmatprep.subr.bf16.mxu0 %v8607
    %9766 = vmatpush1.bf16.msra.mxu0 %v8606
    %9767 = vmatprep.subr.bf16.mxu0 %v8626
    %9768 = vmatpush1.bf16.msra.mxu0 %v8625
    %9769 = vmatprep.subr.bf16.mxu0 %v8645
    %9770 = vmatpush1.bf16.msra.mxu0 %v8644
    %9771 = vmatprep.subr.bf16.mxu0 %v8664
    %9772 = vmatpush1.bf16.msra.mxu0 %v8663
    %9773 = vmatprep.subr.bf16.mxu0 %v8683
    %9774 = vmatpush1.bf16.msra.mxu0 %v8682
    %9775 = vmatprep.subr.bf16.mxu0 %v8702
    %9776 = vmatpush1.bf16.msra.mxu0 %v8701
    %9777 = vmatprep.subr.bf16.mxu0 %v8721
    %9778 = vmatpush1.bf16.msra.mxu0 %v8720
    %9779 = vmatprep.subr.bf16.mxu0 %v8740
    %9780 = vmatpush1.bf16.msra.mxu0 %v8739
    %9781 = vmatprep.subr.bf16.mxu0 %v8759
    %9782 = vmatpush1.bf16.msra.mxu0 %v8758
    %9783 = vmatprep.subr.bf16.mxu0 %v8778
    %9784 = vmatpush1.bf16.msra.mxu0 %v8777
    %9785 = vmatprep.subr.bf16.mxu0 %v8797
    %9786 = vmatpush1.bf16.msra.mxu0 %v8796
    %9787 = vmatprep.subr.bf16.mxu0 %v8816
    %9788 = vmatpush1.bf16.msra.mxu0 %v8815
    %9789 = vmatprep.subr.bf16.mxu0 %v8835
    %9790 = vmatpush1.bf16.msra.mxu0 %v8834
    %9791 = vmatprep.subr.bf16.mxu0 %v8854
    %9792 = vmatpush1.bf16.msra.mxu0 %v8853
    %9793 = vmatprep.mubr.bf16.mxu0 %v5660
    %9794 = vmatmul.mubr.bf16.gmra.mrb[0].mxu0 %v5659
    %v9795 = vpop.f32.mrb[0].mxu0
    %v9796 = vadd.f32 %v9755, %v9795
    %v9797 = vpop.f32.mrb[0].mxu0
    %v9798 = vadd.f32 %v9757, %v9797
    %v9799 = vpop.f32.mrb[0].mxu0
    %v9800 = vpop.f32.mrb[0].mxu0
    %9801 = vdwg.mxu0
    %9802 = vmatprep.subr.bf16.mxu0 %v8267
    %9803 = vmatpush1.bf16.msra.mxu0 %v8266
    %9804 = vmatprep.subr.bf16.mxu0 %v8286
    %9805 = vmatpush1.bf16.msra.mxu0 %v8285
    %9806 = vmatprep.subr.bf16.mxu0 %v8305
    %9807 = vmatpush1.bf16.msra.mxu0 %v8304
    %9808 = vmatprep.subr.bf16.mxu0 %v8324
    %9809 = vmatpush1.bf16.msra.mxu0 %v8323
    %9810 = vmatprep.subr.bf16.mxu0 %v8343
    %9811 = vmatpush1.bf16.msra.mxu0 %v8342
    %9812 = vmatprep.subr.bf16.mxu0 %v8362
    %9813 = vmatpush1.bf16.msra.mxu0 %v8361
    %9814 = vmatprep.subr.bf16.mxu0 %v8381
    %9815 = vmatpush1.bf16.msra.mxu0 %v8380
    %9816 = vmatprep.subr.bf16.mxu0 %v8400
    %9817 = vmatpush1.bf16.msra.mxu0 %v8399
    %9818 = vmatprep.subr.bf16.mxu0 %v8419
    %9819 = vmatpush1.bf16.msra.mxu0 %v8418
    %9820 = vmatprep.subr.bf16.mxu0 %v8438
    %9821 = vmatpush1.bf16.msra.mxu0 %v8437
    %9822 = vmatprep.subr.bf16.mxu0 %v8457
    %9823 = vmatpush1.bf16.msra.mxu0 %v8456
    %9824 = vmatprep.subr.bf16.mxu0 %v8476
    %9825 = vmatpush1.bf16.msra.mxu0 %v8475
    %9826 = vmatprep.subr.bf16.mxu0 %v8495
    %9827 = vmatpush1.bf16.msra.mxu0 %v8494
    %9828 = vmatprep.subr.bf16.mxu0 %v8514
    %9829 = vmatpush1.bf16.msra.mxu0 %v8513
    %9830 = vmatprep.subr.bf16.mxu0 %v8533
    %9831 = vmatpush1.bf16.msra.mxu0 %v8532
    %9832 = vmatprep.subr.bf16.mxu0 %v8552
    %9833 = vmatpush1.bf16.msra.mxu0 %v8551
    %9834 = vmatprep.mubr.bf16.mxu0 %v5658
    %9835 = vmatmul.mubr.bf16.gmra.mrb[0].mxu0 %v5657
    %v9836 = vpop.f32.mrb[0].mxu0
    %v9837 = vadd.f32 %v6342, %v9836
    %v9838 = vpop.f32.mrb[0].mxu0
    %v9839 = vadd.f32 %v6346, %v9838
    %v9840 = vpop.f32.mrb[0].mxu0
    %v9841 = vpop.f32.mrb[0].mxu0
    %9842 = vdwg.mxu0
    %9843 = vmatprep.subr.bf16.mxu0 %v8571
    %9844 = vmatpush1.bf16.msra.mxu0 %v8570
    %9845 = vmatprep.subr.bf16.mxu0 %v8590
    %9846 = vmatpush1.bf16.msra.mxu0 %v8589
    %9847 = vmatprep.subr.bf16.mxu0 %v8609
    %9848 = vmatpush1.bf16.msra.mxu0 %v8608
    %9849 = vmatprep.subr.bf16.mxu0 %v8628
    %9850 = vmatpush1.bf16.msra.mxu0 %v8627
    %9851 = vmatprep.subr.bf16.mxu0 %v8647
    %9852 = vmatpush1.bf16.msra.mxu0 %v8646
    %9853 = vmatprep.subr.bf16.mxu0 %v8666
    %9854 = vmatpush1.bf16.msra.mxu0 %v8665
    %9855 = vmatprep.subr.bf16.mxu0 %v8685
    %9856 = vmatpush1.bf16.msra.mxu0 %v8684
    %9857 = vmatprep.subr.bf16.mxu0 %v8704
    %9858 = vmatpush1.bf16.msra.mxu0 %v8703
    %9859 = vmatprep.subr.bf16.mxu0 %v8723
    %9860 = vmatpush1.bf16.msra.mxu0 %v8722
    %9861 = vmatprep.subr.bf16.mxu0 %v8742
    %9862 = vmatpush1.bf16.msra.mxu0 %v8741
    %9863 = vmatprep.subr.bf16.mxu0 %v8761
    %9864 = vmatpush1.bf16.msra.mxu0 %v8760
    %9865 = vmatprep.subr.bf16.mxu0 %v8780
    %9866 = vmatpush1.bf16.msra.mxu0 %v8779
    %9867 = vmatprep.subr.bf16.mxu0 %v8799
    %9868 = vmatpush1.bf16.msra.mxu0 %v8798
    %9869 = vmatprep.subr.bf16.mxu0 %v8818
    %9870 = vmatpush1.bf16.msra.mxu0 %v8817
    %9871 = vmatprep.subr.bf16.mxu0 %v8837
    %9872 = vmatpush1.bf16.msra.mxu0 %v8836
    %9873 = vmatprep.subr.bf16.mxu0 %v8856
    %9874 = vmatpush1.bf16.msra.mxu0 %v8855
    %9875 = vmatprep.mubr.bf16.mxu0 %v5660
    %9876 = vmatmul.mubr.bf16.gmra.mrb[0].mxu0 %v5659
    %v9877 = vpop.f32.mrb[0].mxu0
    %v9878 = vadd.f32 %v9837, %v9877
    %v9879 = vpop.f32.mrb[0].mxu0
    %v9880 = vadd.f32 %v9839, %v9879
    %v9881 = vpop.f32.mrb[0].mxu0
    %v9882 = vpop.f32.mrb[0].mxu0
    %9883 = vdwg.mxu0
    %9884 = vmatprep.subr.bf16.mxu0 %v8269
    %9885 = vmatpush1.bf16.msra.mxu0 %v8268
    %9886 = vmatprep.subr.bf16.mxu0 %v8288
    %9887 = vmatpush1.bf16.msra.mxu0 %v8287
    %9888 = vmatprep.subr.bf16.mxu0 %v8307
    %9889 = vmatpush1.bf16.msra.mxu0 %v8306
    %9890 = vmatprep.subr.bf16.mxu0 %v8326
    %9891 = vmatpush1.bf16.msra.mxu0 %v8325
    %9892 = vmatprep.subr.bf16.mxu0 %v8345
    %9893 = vmatpush1.bf16.msra.mxu0 %v8344
    %9894 = vmatprep.subr.bf16.mxu0 %v8364
    %9895 = vmatpush1.bf16.msra.mxu0 %v8363
    %9896 = vmatprep.subr.bf16.mxu0 %v8383
    %9897 = vmatpush1.bf16.msra.mxu0 %v8382
    %9898 = vmatprep.subr.bf16.mxu0 %v8402
    %9899 = vmatpush1.bf16.msra.mxu0 %v8401
    %9900 = vmatprep.subr.bf16.mxu0 %v8421
    %9901 = vmatpush1.bf16.msra.mxu0 %v8420
    %9902 = vmatprep.subr.bf16.mxu0 %v8440
    %9903 = vmatpush1.bf16.msra.mxu0 %v8439
    %9904 = vmatprep.subr.bf16.mxu0 %v8459
    %9905 = vmatpush1.bf16.msra.mxu0 %v8458
    %9906 = vmatprep.subr.bf16.mxu0 %v8478
    %9907 = vmatpush1.bf16.msra.mxu0 %v8477
    %9908 = vmatprep.subr.bf16.mxu0 %v8497
    %9909 = vmatpush1.bf16.msra.mxu0 %v8496
    %9910 = vmatprep.subr.bf16.mxu0 %v8516
    %9911 = vmatpush1.bf16.msra.mxu0 %v8515
    %9912 = vmatprep.subr.bf16.mxu0 %v8535
    %9913 = vmatpush1.bf16.msra.mxu0 %v8534
    %9914 = vmatprep.subr.bf16.mxu0 %v8554
    %9915 = vmatpush1.bf16.msra.mxu0 %v8553
    %9916 = vmatprep.mubr.bf16.mxu0 %v5658
    %9917 = vmatmul.mubr.bf16.gmra.mrb[0].mxu0 %v5657
    %v9918 = vpop.f32.mrb[0].mxu0
    %v9919 = vadd.f32 %v6350, %v9918
    %v9920 = vpop.f32.mrb[0].mxu0
    %v9921 = vadd.f32 %v6354, %v9920
    %v9922 = vpop.f32.mrb[0].mxu0
    %v9923 = vpop.f32.mrb[0].mxu0
    %9924 = vdwg.mxu0
    %9925 = vmatprep.subr.bf16.mxu0 %v8573
    %9926 = vmatpush1.bf16.msra.mxu0 %v8572
    %9927 = vmatprep.subr.bf16.mxu0 %v8592
    %9928 = vmatpush1.bf16.msra.mxu0 %v8591
    %9929 = vmatprep.subr.bf16.mxu0 %v8611
    %9930 = vmatpush1.bf16.msra.mxu0 %v8610
    %9931 = vmatprep.subr.bf16.mxu0 %v8630
    %9932 = vmatpush1.bf16.msra.mxu0 %v8629
    %9933 = vmatprep.subr.bf16.mxu0 %v8649
    %9934 = vmatpush1.bf16.msra.mxu0 %v8648
    %9935 = vmatprep.subr.bf16.mxu0 %v8668
    %9936 = vmatpush1.bf16.msra.mxu0 %v8667
    %9937 = vmatprep.subr.bf16.mxu0 %v8687
    %9938 = vmatpush1.bf16.msra.mxu0 %v8686
    %9939 = vmatprep.subr.bf16.mxu0 %v8706
    %9940 = vmatpush1.bf16.msra.mxu0 %v8705
    %9941 = vmatprep.subr.bf16.mxu0 %v8725
    %9942 = vmatpush1.bf16.msra.mxu0 %v8724
    %9943 = vmatprep.subr.bf16.mxu0 %v8744
    %9944 = vmatpush1.bf16.msra.mxu0 %v8743
    %9945 = vmatprep.subr.bf16.mxu0 %v8763
    %9946 = vmatpush1.bf16.msra.mxu0 %v8762
    %9947 = vmatprep.subr.bf16.mxu0 %v8782
    %9948 = vmatpush1.bf16.msra.mxu0 %v8781
    %9949 = vmatprep.subr.bf16.mxu0 %v8801
    %9950 = vmatpush1.bf16.msra.mxu0 %v8800
    %9951 = vmatprep.subr.bf16.mxu0 %v8820
    %9952 = vmatpush1.bf16.msra.mxu0 %v8819
    %9953 = vmatprep.subr.bf16.mxu0 %v8839
    %9954 = vmatpush1.bf16.msra.mxu0 %v8838
    %9955 = vmatprep.subr.bf16.mxu0 %v8858
    %9956 = vmatpush1.bf16.msra.mxu0 %v8857
    %9957 = vmatprep.mubr.bf16.mxu0 %v5660
    %9958 = vmatmul.mubr.bf16.gmra.mrb[0].mxu0 %v5659
    %v9959 = vpop.f32.mrb[0].mxu0
    %v9960 = vadd.f32 %v9919, %v9959
    %v9961 = vpop.f32.mrb[0].mxu0
    %v9962 = vadd.f32 %v9921, %v9961
    %v9963 = vpop.f32.mrb[0].mxu0
    %v9964 = vpop.f32.mrb[0].mxu0
    %9965 = vdwg.mxu0
    %9966 = vmatprep.subr.bf16.mxu0 %v8271
    %9967 = vmatpush1.bf16.msra.mxu0 %v8270
    %9968 = vmatprep.subr.bf16.mxu0 %v8290
    %9969 = vmatpush1.bf16.msra.mxu0 %v8289
    %9970 = vmatprep.subr.bf16.mxu0 %v8309
    %9971 = vmatpush1.bf16.msra.mxu0 %v8308
    %9972 = vmatprep.subr.bf16.mxu0 %v8328
    %9973 = vmatpush1.bf16.msra.mxu0 %v8327
    %9974 = vmatprep.subr.bf16.mxu0 %v8347
    %9975 = vmatpush1.bf16.msra.mxu0 %v8346
    %9976 = vmatprep.subr.bf16.mxu0 %v8366
    %9977 = vmatpush1.bf16.msra.mxu0 %v8365
    %9978 = vmatprep.subr.bf16.mxu0 %v8385
    %9979 = vmatpush1.bf16.msra.mxu0 %v8384
    %9980 = vmatprep.subr.bf16.mxu0 %v8404
    %9981 = vmatpush1.bf16.msra.mxu0 %v8403
    %9982 = vmatprep.subr.bf16.mxu0 %v8423
    %9983 = vmatpush1.bf16.msra.mxu0 %v8422
    %9984 = vmatprep.subr.bf16.mxu0 %v8442
    %9985 = vmatpush1.bf16.msra.mxu0 %v8441
    %9986 = vmatprep.subr.bf16.mxu0 %v8461
    %9987 = vmatpush1.bf16.msra.mxu0 %v8460
    %9988 = vmatprep.subr.bf16.mxu0 %v8480
    %9989 = vmatpush1.bf16.msra.mxu0 %v8479
    %9990 = vmatprep.subr.bf16.mxu0 %v8499
    %9991 = vmatpush1.bf16.msra.mxu0 %v8498
    %9992 = vmatprep.subr.bf16.mxu0 %v8518
    %9993 = vmatpush1.bf16.msra.mxu0 %v8517
    %9994 = vmatprep.subr.bf16.mxu0 %v8537
    %9995 = vmatpush1.bf16.msra.mxu0 %v8536
    %9996 = vmatprep.subr.bf16.mxu0 %v8556
    %9997 = vmatpush1.bf16.msra.mxu0 %v8555
    %9998 = vmatprep.mubr.bf16.mxu0 %v5658
    %9999 = vmatmul.mubr.bf16.gmra.mrb[0].mxu0 %v5657
    %v10000 = vpop.f32.mrb[0].mxu0
    %v10001 = vadd.f32 %v6358, %v10000
    %v10002 = vpop.f32.mrb[0].mxu0
    %v10003 = vadd.f32 %v6362, %v10002
    %v10004 = vpop.f32.mrb[0].mxu0
    %v10005 = vpop.f32.mrb[0].mxu0
    %10006 = vdwg.mxu0
    %10007 = vmatprep.subr.bf16.mxu0 %v8575
    %10008 = vmatpush1.bf16.msra.mxu0 %v8574
    %10009 = vmatprep.subr.bf16.mxu0 %v8594
    %10010 = vmatpush1.bf16.msra.mxu0 %v8593
    %10011 = vmatprep.subr.bf16.mxu0 %v8613
    %10012 = vmatpush1.bf16.msra.mxu0 %v8612
    %10013 = vmatprep.subr.bf16.mxu0 %v8632
    %10014 = vmatpush1.bf16.msra.mxu0 %v8631
    %10015 = vmatprep.subr.bf16.mxu0 %v8651
    %10016 = vmatpush1.bf16.msra.mxu0 %v8650
    %10017 = vmatprep.subr.bf16.mxu0 %v8670
    %10018 = vmatpush1.bf16.msra.mxu0 %v8669
    %10019 = vmatprep.subr.bf16.mxu0 %v8689
    %10020 = vmatpush1.bf16.msra.mxu0 %v8688
    %10021 = vmatprep.subr.bf16.mxu0 %v8708
    %10022 = vmatpush1.bf16.msra.mxu0 %v8707
    %10023 = vmatprep.subr.bf16.mxu0 %v8727
    %10024 = vmatpush1.bf16.msra.mxu0 %v8726
    %10025 = vmatprep.subr.bf16.mxu0 %v8746
    %10026 = vmatpush1.bf16.msra.mxu0 %v8745
    %10027 = vmatprep.subr.bf16.mxu0 %v8765
    %10028 = vmatpush1.bf16.msra.mxu0 %v8764
    %10029 = vmatprep.subr.bf16.mxu0 %v8784
    %10030 = vmatpush1.bf16.msra.mxu0 %v8783
    %10031 = vmatprep.subr.bf16.mxu0 %v8803
    %10032 = vmatpush1.bf16.msra.mxu0 %v8802
    %10033 = vmatprep.subr.bf16.mxu0 %v8822
    %10034 = vmatpush1.bf16.msra.mxu0 %v8821
    %10035 = vmatprep.subr.bf16.mxu0 %v8841
    %10036 = vmatpush1.bf16.msra.mxu0 %v8840
    %10037 = vmatprep.subr.bf16.mxu0 %v8860
    %10038 = vmatpush1.bf16.msra.mxu0 %v8859
    %10039 = vmatprep.mubr.bf16.mxu0 %v5660
    %10040 = vmatmul.mubr.bf16.gmra.mrb[0].mxu0 %v5659
    %v10041 = vpop.f32.mrb[0].mxu0
    %v10042 = vadd.f32 %v10001, %v10041
    %v10043 = vpop.f32.mrb[0].mxu0
    %v10044 = vadd.f32 %v10003, %v10043
    %v10045 = vpop.f32.mrb[0].mxu0
    %v10046 = vpop.f32.mrb[0].mxu0
    %10047 = vdwg.mxu0
    %10048 = vmatprep.subr.bf16.mxu0 %v8273
    %10049 = vmatpush1.bf16.msra.mxu0 %v8272
    %10050 = vmatprep.subr.bf16.mxu0 %v8292
    %10051 = vmatpush1.bf16.msra.mxu0 %v8291
    %10052 = vmatprep.subr.bf16.mxu0 %v8311
    %10053 = vmatpush1.bf16.msra.mxu0 %v8310
    %10054 = vmatprep.subr.bf16.mxu0 %v8330
    %10055 = vmatpush1.bf16.msra.mxu0 %v8329
    %10056 = vmatprep.subr.bf16.mxu0 %v8349
    %10057 = vmatpush1.bf16.msra.mxu0 %v8348
    %10058 = vmatprep.subr.bf16.mxu0 %v8368
    %10059 = vmatpush1.bf16.msra.mxu0 %v8367
    %10060 = vmatprep.subr.bf16.mxu0 %v8387
    %10061 = vmatpush1.bf16.msra.mxu0 %v8386
    %10062 = vmatprep.subr.bf16.mxu0 %v8406
    %10063 = vmatpush1.bf16.msra.mxu0 %v8405
    %10064 = vmatprep.subr.bf16.mxu0 %v8425
    %10065 = vmatpush1.bf16.msra.mxu0 %v8424
    %10066 = vmatprep.subr.bf16.mxu0 %v8444
    %10067 = vmatpush1.bf16.msra.mxu0 %v8443
    %10068 = vmatprep.subr.bf16.mxu0 %v8463
    %10069 = vmatpush1.bf16.msra.mxu0 %v8462
    %10070 = vmatprep.subr.bf16.mxu0 %v8482
    %10071 = vmatpush1.bf16.msra.mxu0 %v8481
    %10072 = vmatprep.subr.bf16.mxu0 %v8501
    %10073 = vmatpush1.bf16.msra.mxu0 %v8500
    %10074 = vmatprep.subr.bf16.mxu0 %v8520
    %10075 = vmatpush1.bf16.msra.mxu0 %v8519
    %10076 = vmatprep.subr.bf16.mxu0 %v8539
    %10077 = vmatpush1.bf16.msra.mxu0 %v8538
    %10078 = vmatprep.subr.bf16.mxu0 %v8558
    %10079 = vmatpush1.bf16.msra.mxu0 %v8557
    %10080 = vmatprep.mubr.bf16.mxu0 %v5658
    %10081 = vmatmul.mubr.bf16.gmra.mrb[0].mxu0 %v5657
    %v10082 = vpop.f32.mrb[0].mxu0
    %v10083 = vadd.f32 %v6366, %v10082
    %v10084 = vpop.f32.mrb[0].mxu0
    %v10085 = vadd.f32 %v6370, %v10084
    %v10086 = vpop.f32.mrb[0].mxu0
    %v10087 = vpop.f32.mrb[0].mxu0
    %10088 = vdwg.mxu0
    %10089 = vmatprep.subr.bf16.mxu0 %v8577
    %10090 = vmatpush1.bf16.msra.mxu0 %v8576
    %10091 = vmatprep.subr.bf16.mxu0 %v8596
    %10092 = vmatpush1.bf16.msra.mxu0 %v8595
    %10093 = vmatprep.subr.bf16.mxu0 %v8615
    %10094 = vmatpush1.bf16.msra.mxu0 %v8614
    %10095 = vmatprep.subr.bf16.mxu0 %v8634
    %10096 = vmatpush1.bf16.msra.mxu0 %v8633
    %10097 = vmatprep.subr.bf16.mxu0 %v8653
    %10098 = vmatpush1.bf16.msra.mxu0 %v8652
    %10099 = vmatprep.subr.bf16.mxu0 %v8672
    %10100 = vmatpush1.bf16.msra.mxu0 %v8671
    %10101 = vmatprep.subr.bf16.mxu0 %v8691
    %10102 = vmatpush1.bf16.msra.mxu0 %v8690
    %10103 = vmatprep.subr.bf16.mxu0 %v8710
    %10104 = vmatpush1.bf16.msra.mxu0 %v8709
    %10105 = vmatprep.subr.bf16.mxu0 %v8729
    %10106 = vmatpush1.bf16.msra.mxu0 %v8728
    %10107 = vmatprep.subr.bf16.mxu0 %v8748
    %10108 = vmatpush1.bf16.msra.mxu0 %v8747
    %10109 = vmatprep.subr.bf16.mxu0 %v8767
    %10110 = vmatpush1.bf16.msra.mxu0 %v8766
    %10111 = vmatprep.subr.bf16.mxu0 %v8786
    %10112 = vmatpush1.bf16.msra.mxu0 %v8785
    %10113 = vmatprep.subr.bf16.mxu0 %v8805
    %10114 = vmatpush1.bf16.msra.mxu0 %v8804
    %10115 = vmatprep.subr.bf16.mxu0 %v8824
    %10116 = vmatpush1.bf16.msra.mxu0 %v8823
    %10117 = vmatprep.subr.bf16.mxu0 %v8843
    %10118 = vmatpush1.bf16.msra.mxu0 %v8842
    %10119 = vmatprep.subr.bf16.mxu0 %v8862
    %10120 = vmatpush1.bf16.msra.mxu0 %v8861
    %10121 = vmatprep.mubr.bf16.mxu0 %v5660
    %10122 = vmatmul.mubr.bf16.gmra.mrb[0].mxu0 %v5659
    %v10123 = vpop.f32.mrb[0].mxu0
    %v10124 = vadd.f32 %v10083, %v10123
    %v10125 = vpop.f32.mrb[0].mxu0
    %v10126 = vadd.f32 %v10085, %v10125
    %v10127 = vpop.f32.mrb[0].mxu0
    %v10128 = vpop.f32.mrb[0].mxu0
    %10129 = vdwg.mxu0
    %10130 = vmatprep.subr.bf16.mxu0 %v8275
    %10131 = vmatpush1.bf16.msra.mxu0 %v8274
    %10132 = vmatprep.subr.bf16.mxu0 %v8294
    %10133 = vmatpush1.bf16.msra.mxu0 %v8293
    %10134 = vmatprep.subr.bf16.mxu0 %v8313
    %10135 = vmatpush1.bf16.msra.mxu0 %v8312
    %10136 = vmatprep.subr.bf16.mxu0 %v8332
    %10137 = vmatpush1.bf16.msra.mxu0 %v8331
    %10138 = vmatprep.subr.bf16.mxu0 %v8351
    %10139 = vmatpush1.bf16.msra.mxu0 %v8350
    %10140 = vmatprep.subr.bf16.mxu0 %v8370
    %10141 = vmatpush1.bf16.msra.mxu0 %v8369
    %10142 = vmatprep.subr.bf16.mxu0 %v8389
    %10143 = vmatpush1.bf16.msra.mxu0 %v8388
    %10144 = vmatprep.subr.bf16.mxu0 %v8408
    %10145 = vmatpush1.bf16.msra.mxu0 %v8407
    %10146 = vmatprep.subr.bf16.mxu0 %v8427
    %10147 = vmatpush1.bf16.msra.mxu0 %v8426
    %10148 = vmatprep.subr.bf16.mxu0 %v8446
    %10149 = vmatpush1.bf16.msra.mxu0 %v8445
    %10150 = vmatprep.subr.bf16.mxu0 %v8465
    %10151 = vmatpush1.bf16.msra.mxu0 %v8464
    %10152 = vmatprep.subr.bf16.mxu0 %v8484
    %10153 = vmatpush1.bf16.msra.mxu0 %v8483
    %10154 = vmatprep.subr.bf16.mxu0 %v8503
    %10155 = vmatpush1.bf16.msra.mxu0 %v8502
    %10156 = vmatprep.subr.bf16.mxu0 %v8522
    %10157 = vmatpush1.bf16.msra.mxu0 %v8521
    %10158 = vmatprep.subr.bf16.mxu0 %v8541
    %10159 = vmatpush1.bf16.msra.mxu0 %v8540
    %10160 = vmatprep.subr.bf16.mxu0 %v8560
    %10161 = vmatpush1.bf16.msra.mxu0 %v8559
    %10162 = vmatprep.mubr.bf16.mxu0 %v5658
    %10163 = vmatmul.mubr.bf16.gmra.mrb[0].mxu0 %v5657
    %v10164 = vpop.f32.mrb[0].mxu0
    %v10165 = vadd.f32 %v6374, %v10164
    %v10166 = vpop.f32.mrb[0].mxu0
    %v10167 = vadd.f32 %v6378, %v10166
    %v10168 = vpop.f32.mrb[0].mxu0
    %v10169 = vpop.f32.mrb[0].mxu0
    %10170 = vdwg.mxu0
    %10171 = vmatprep.subr.bf16.mxu0 %v8579
    %10172 = vmatpush1.bf16.msra.mxu0 %v8578
    %10173 = vmatprep.subr.bf16.mxu0 %v8598
    %10174 = vmatpush1.bf16.msra.mxu0 %v8597
    %10175 = vmatprep.subr.bf16.mxu0 %v8617
    %10176 = vmatpush1.bf16.msra.mxu0 %v8616
    %10177 = vmatprep.subr.bf16.mxu0 %v8636
    %10178 = vmatpush1.bf16.msra.mxu0 %v8635
    %10179 = vmatprep.subr.bf16.mxu0 %v8655
    %10180 = vmatpush1.bf16.msra.mxu0 %v8654
    %10181 = vmatprep.subr.bf16.mxu0 %v8674
    %10182 = vmatpush1.bf16.msra.mxu0 %v8673
    %10183 = vmatprep.subr.bf16.mxu0 %v8693
    %10184 = vmatpush1.bf16.msra.mxu0 %v8692
    %10185 = vmatprep.subr.bf16.mxu0 %v8712
    %10186 = vmatpush1.bf16.msra.mxu0 %v8711
    %10187 = vmatprep.subr.bf16.mxu0 %v8731
    %10188 = vmatpush1.bf16.msra.mxu0 %v8730
    %10189 = vmatprep.subr.bf16.mxu0 %v8750
    %10190 = vmatpush1.bf16.msra.mxu0 %v8749
    %10191 = vmatprep.subr.bf16.mxu0 %v8769
    %10192 = vmatpush1.bf16.msra.mxu0 %v8768
    %10193 = vmatprep.subr.bf16.mxu0 %v8788
    %10194 = vmatpush1.bf16.msra.mxu0 %v8787
    %10195 = vmatprep.subr.bf16.mxu0 %v8807
    %10196 = vmatpush1.bf16.msra.mxu0 %v8806
    %10197 = vmatprep.subr.bf16.mxu0 %v8826
    %10198 = vmatpush1.bf16.msra.mxu0 %v8825
    %10199 = vmatprep.subr.bf16.mxu0 %v8845
    %10200 = vmatpush1.bf16.msra.mxu0 %v8844
    %10201 = vmatprep.subr.bf16.mxu0 %v8864
    %10202 = vmatpush1.bf16.msra.mxu0 %v8863
    %10203 = vmatprep.mubr.bf16.mxu0 %v5660
    %10204 = vmatmul.mubr.bf16.gmra.mrb[0].mxu0 %v5659
    %v10205 = vpop.f32.mrb[0].mxu0
    %v10206 = vadd.f32 %v10165, %v10205
    %v10207 = vpop.f32.mrb[0].mxu0
    %v10208 = vadd.f32 %v10167, %v10207
    %v10209 = vpop.f32.mrb[0].mxu0
    %v10210 = vpop.f32.mrb[0].mxu0
    %10211 = vdwg.mxu0
    %10212 = vmatprep.subr.bf16.mxu0 0
    %10213 = vmatpush1.bf16.msra.mxu0 %v8276
    %10214 = vmatprep.subr.bf16.mxu0 0
    %10215 = vmatpush1.bf16.msra.mxu0 %v8295
    %10216 = vmatprep.subr.bf16.mxu0 0
    %10217 = vmatpush1.bf16.msra.mxu0 %v8314
    %10218 = vmatprep.subr.bf16.mxu0 0
    %10219 = vmatpush1.bf16.msra.mxu0 %v8333
    %10220 = vmatprep.subr.bf16.mxu0 0
    %10221 = vmatpush1.bf16.msra.mxu0 %v8352
    %10222 = vmatprep.subr.bf16.mxu0 0
    %10223 = vmatpush1.bf16.msra.mxu0 %v8371
    %10224 = vmatprep.subr.bf16.mxu0 0
    %10225 = vmatpush1.bf16.msra.mxu0 %v8390
    %10226 = vmatprep.subr.bf16.mxu0 0
    %10227 = vmatpush1.bf16.msra.mxu0 %v8409
    %10228 = vmatprep.subr.bf16.mxu0 0
    %10229 = vmatpush1.bf16.msra.mxu0 %v8428
    %10230 = vmatprep.subr.bf16.mxu0 0
    %10231 = vmatpush1.bf16.msra.mxu0 %v8447
    %10232 = vmatprep.subr.bf16.mxu0 0
    %10233 = vmatpush1.bf16.msra.mxu0 %v8466
    %10234 = vmatprep.subr.bf16.mxu0 0
    %10235 = vmatpush1.bf16.msra.mxu0 %v8485
    %10236 = vmatprep.subr.bf16.mxu0 0
    %10237 = vmatpush1.bf16.msra.mxu0 %v8504
    %10238 = vmatprep.subr.bf16.mxu0 0
    %10239 = vmatpush1.bf16.msra.mxu0 %v8523
    %10240 = vmatprep.subr.bf16.mxu0 0
    %10241 = vmatpush1.bf16.msra.mxu0 %v8542
    %10242 = vmatprep.subr.bf16.mxu0 0
    %10243 = vmatpush1.bf16.msra.mxu0 %v8561
    %10244 = vmatprep.mubr.bf16.mxu0 %v5658
    %10245 = vmatmul.mubr.bf16.gmra.mrb[0].mxu0 %v5657
    %v10246 = vpop.f32.mrb[0].mxu0
    %v10247 = vadd.f32 %v6382, %v10246
    %v10248 = vpop.f32.mrb[0].mxu0
    %v10249 = vpop.f32.mrb[0].mxu0
    %v10250 = vpop.f32.mrb[0].mxu0
    %10251 = vdwg.mxu0
    %10252 = vmatprep.subr.bf16.mxu0 0
    %10253 = vmatpush1.bf16.msra.mxu0 %v8580
    %10254 = vmatprep.subr.bf16.mxu0 0
    %10255 = vmatpush1.bf16.msra.mxu0 %v8599
    %10256 = vmatprep.subr.bf16.mxu0 0
    %10257 = vmatpush1.bf16.msra.mxu0 %v8618
    %10258 = vmatprep.subr.bf16.mxu0 0
    %10259 = vmatpush1.bf16.msra.mxu0 %v8637
    %10260 = vmatprep.subr.bf16.mxu0 0
    %10261 = vmatpush1.bf16.msra.mxu0 %v8656
    %10262 = vmatprep.subr.bf16.mxu0 0
    %10263 = vmatpush1.bf16.msra.mxu0 %v8675
    %10264 = vmatprep.subr.bf16.mxu0 0
    %10265 = vmatpush1.bf16.msra.mxu0 %v8694
    %10266 = vmatprep.subr.bf16.mxu0 0
    %10267 = vmatpush1.bf16.msra.mxu0 %v8713
    %10268 = vmatprep.subr.bf16.mxu0 0
    %10269 = vmatpush1.bf16.msra.mxu0 %v8732
    %10270 = vmatprep.subr.bf16.mxu0 0
    %10271 = vmatpush1.bf16.msra.mxu0 %v8751
    %10272 = vmatprep.subr.bf16.mxu0 0
    %10273 = vmatpush1.bf16.msra.mxu0 %v8770
    %10274 = vmatprep.subr.bf16.mxu0 0
    %10275 = vmatpush1.bf16.msra.mxu0 %v8789
    %10276 = vmatprep.subr.bf16.mxu0 0
    %10277 = vmatpush1.bf16.msra.mxu0 %v8808
    %10278 = vmatprep.subr.bf16.mxu0 0
    %10279 = vmatpush1.bf16.msra.mxu0 %v8827
    %10280 = vmatprep.subr.bf16.mxu0 0
    %10281 = vmatpush1.bf16.msra.mxu0 %v8846
    %10282 = vmatprep.subr.bf16.mxu0 0
    %10283 = vmatpush1.bf16.msra.mxu0 %v8865
    %10284 = vmatprep.mubr.bf16.mxu0 %v5660
    %10285 = vmatmul.mubr.bf16.gmra.mrb[0].mxu0 %v5659
    %v10286 = vpop.f32.mrb[0].mxu0
    %v10287 = vadd.f32 %v10247, %v10286
    %v10288 = vpop.f32.mrb[0].mxu0
    %v10289 = vpop.f32.mrb[0].mxu0
    %v10290 = vpop.f32.mrb[0].mxu0
    %10291 = vdwg.mxu0
    %v10292 = vxor.u32 %v9550, 2147483648
    %v10293 = vxor.u32 %v9552, 2147483648
    %v10294 = vxor.u32 %v9632, 2147483648
    %v10295 = vxor.u32 %v9634, 2147483648
    %v10296 = vxor.u32 %v9714, 2147483648
    %v10297 = vxor.u32 %v9716, 2147483648
    %v10298 = vxor.u32 %v9796, 2147483648
    %v10299 = vxor.u32 %v9798, 2147483648
    %v10300 = vxor.u32 %v9878, 2147483648
    %v10301 = vxor.u32 %v9880, 2147483648
    %v10302 = vxor.u32 %v9960, 2147483648
    %v10303 = vxor.u32 %v9962, 2147483648
    %v10304 = vxor.u32 %v10042, 2147483648
    %v10305 = vxor.u32 %v10044, 2147483648
    %v10306 = vxor.u32 %v10124, 2147483648
    %v10307 = vxor.u32 %v10126, 2147483648
    %v10308 = vxor.u32 %v10206, 2147483648
    %v10309 = vxor.u32 %v10208, 2147483648
    %v10310 = vxor.u32 %v10287, 2147483648
    %v10311 = vmul.f32 %v10292, 1.442695
    %v10312 = vpow.pop %v10311
    %v10313 = vmul.f32 %v10293, 1.442695
    %v10314 = vpow.pop %v10313
    %v10315 = vmul.f32 %v10294, 1.442695
    %v10316 = vpow.pop %v10315
    %v10317 = vmul.f32 %v10295, 1.442695
    %v10318 = vpow.pop %v10317
    %v10319 = vmul.f32 %v10296, 1.442695
    %v10320 = vpow.pop %v10319
    %v10321 = vmul.f32 %v10297, 1.442695
    %v10322 = vpow.pop %v10321
    %v10323 = vmul.f32 %v10298, 1.442695
    %v10324 = vpow.pop %v10323
    %v10325 = vmul.f32 %v10299, 1.442695
    %v10326 = vpow.pop %v10325
    %v10327 = vmul.f32 %v10300, 1.442695
    %v10328 = vpow.pop %v10327
    %v10329 = vmul.f32 %v10301, 1.442695
    %v10330 = vpow.pop %v10329
    %v10331 = vmul.f32 %v10302, 1.442695
    %v10332 = vpow.pop %v10331
    %v10333 = vmul.f32 %v10303, 1.442695
    %v10334 = vpow.pop %v10333
    %v10335 = vmul.f32 %v10304, 1.442695
    %v10336 = vpow.pop %v10335
    %v10337 = vmul.f32 %v10305, 1.442695
    %v10338 = vpow.pop %v10337
    %v10339 = vmul.f32 %v10306, 1.442695
    %v10340 = vpow.pop %v10339
    %v10341 = vmul.f32 %v10307, 1.442695
    %v10342 = vpow.pop %v10341
    %v10343 = vmul.f32 %v10308, 1.442695
    %v10344 = vpow.pop %v10343
    %v10345 = vmul.f32 %v10309, 1.442695
    %v10346 = vpow.pop %v10345
    %v10347 = vmul.f32 %v10310, 1.442695
    %v10348 = vpow.pop %v10347
    %v10349 = vadd.f32 %v10312, 1.0
    %v10350 = vadd.f32 %v10314, 1.0
    %v10351 = vadd.f32 %v10316, 1.0
    %v10352 = vadd.f32 %v10318, 1.0
    %v10353 = vadd.f32 %v10320, 1.0
    %v10354 = vadd.f32 %v10322, 1.0
    %v10355 = vadd.f32 %v10324, 1.0
    %v10356 = vadd.f32 %v10326, 1.0
    %v10357 = vadd.f32 %v10328, 1.0
    %v10358 = vadd.f32 %v10330, 1.0
    %v10359 = vadd.f32 %v10332, 1.0
    %v10360 = vadd.f32 %v10334, 1.0
    %v10361 = vadd.f32 %v10336, 1.0
    %v10362 = vadd.f32 %v10338, 1.0
    %v10363 = vadd.f32 %v10340, 1.0
    %v10364 = vadd.f32 %v10342, 1.0
    %v10365 = vadd.f32 %v10344, 1.0
    %v10366 = vadd.f32 %v10346, 1.0
    %v10367 = vadd.f32 %v10348, 1.0
    %v10368 = vrcp.pop %v10349
    %v10369 = vmul.f32 1.0, %v10368
    %v10370 = vrcp.pop %v10350
    %v10371 = vmul.f32 1.0, %v10370
    %v10372 = vrcp.pop %v10351
    %v10373 = vmul.f32 1.0, %v10372
    %v10374 = vrcp.pop %v10352
    %v10375 = vmul.f32 1.0, %v10374
    %v10376 = vrcp.pop %v10353
    %v10377 = vmul.f32 1.0, %v10376
    %v10378 = vrcp.pop %v10354
    %v10379 = vmul.f32 1.0, %v10378
    %v10380 = vrcp.pop %v10355
    %v10381 = vmul.f32 1.0, %v10380
    %v10382 = vrcp.pop %v10356
    %v10383 = vmul.f32 1.0, %v10382
    %v10384 = vrcp.pop %v10357
    %v10385 = vmul.f32 1.0, %v10384
    %v10386 = vrcp.pop %v10358
    %v10387 = vmul.f32 1.0, %v10386
    %v10388 = vrcp.pop %v10359
    %v10389 = vmul.f32 1.0, %v10388
    %v10390 = vrcp.pop %v10360
    %v10391 = vmul.f32 1.0, %v10390
    %v10392 = vrcp.pop %v10361
    %v10393 = vmul.f32 1.0, %v10392
    %v10394 = vrcp.pop %v10362
    %v10395 = vmul.f32 1.0, %v10394
    %v10396 = vrcp.pop %v10363
    %v10397 = vmul.f32 1.0, %v10396
    %v10398 = vrcp.pop %v10364
    %v10399 = vmul.f32 1.0, %v10398
    %v10400 = vrcp.pop %v10365
    %v10401 = vmul.f32 1.0, %v10400
    %v10402 = vrcp.pop %v10366
    %v10403 = vmul.f32 1.0, %v10402
    %v10404 = vrcp.pop %v10367
    %v10405 = vmul.f32 1.0, %v10404
    %10406 = vst [vmem:[#allocation25] sm:$0xff] %v10369
    %10407 = vst [vmem:[#allocation25 + $0x8] sm:$0xff] %v10371
    %10408 = vst [vmem:[#allocation25 + $0x10] sm:$0xff] %v10373
    %10409 = vst [vmem:[#allocation25 + $0x18] sm:$0xff] %v10375
    %10410 = vst [vmem:[#allocation25 + $0x20] sm:$0xff] %v10377
    %10411 = vst [vmem:[#allocation25 + $0x28] sm:$0xff] %v10379
    %10412 = vst [vmem:[#allocation25 + $0x30] sm:$0xff] %v10381
    %10413 = vst [vmem:[#allocation25 + $0x38] sm:$0xff] %v10383
    %10414 = vst [vmem:[#allocation25 + $0x40] sm:$0xff] %v10385
    %10415 = vst [vmem:[#allocation25 + $0x48] sm:$0xff] %v10387
    %10416 = vst [vmem:[#allocation25 + $0x50] sm:$0xff] %v10389
    %10417 = vst [vmem:[#allocation25 + $0x58] sm:$0xff] %v10391
    %10418 = vst [vmem:[#allocation25 + $0x60] sm:$0xff] %v10393
    %10419 = vst [vmem:[#allocation25 + $0x68] sm:$0xff] %v10395
    %10420 = vst [vmem:[#allocation25 + $0x70] sm:$0xff] %v10397
    %10421 = vst [vmem:[#allocation25 + $0x78] sm:$0xff] %v10399
    %10422 = vst [vmem:[#allocation25 + $0x80] sm:$0xff] %v10401
    %10423 = vst [vmem:[#allocation25 + $0x88] sm:$0xff] %v10403
    %10424 = vst [vmem:[#allocation25 + $0x90] sm:$0xff] %v10405
    // Predicated region
    $region114: #{tpu_custom_call.1} parent=1 // pred_check
      _
    $region115: #{tpu_custom_call.1} parent=1 // pred_check_branch
      %10426 = sbr.rel (0) target = $region117
    $region116: #{tpu_custom_call.1} parent=1 // pred_region
      %s10428 = ssub.s32 2432, 2432
      %10429 = vsyncadd [#allocation4], %s10428
      %s10431 = sshll.u32 [#allocation25], 4
      %s10432 = int_to_ptr.vmem [resolvable:$true] %s10431
      %10434 = dma.vmem_to_hbm [thread:$0]  %s10432, 2432, %s14, [#allocation4]
    $region117: #{tpu_custom_call.1} parent=1 // pred_fallthru
      _
    // Predicated region
    $region118: #{tpu_custom_call.1} parent=1 // pred_check
      _
    $region119: #{tpu_custom_call.1} parent=1 // pred_check_branch
      %10436 = sbr.rel (0) target = $region121
    $region120: #{tpu_custom_call.1} parent=1 // pred_region
      %s10438 = ssub.s32 128, 128
      %10439 = vsyncadd [#allocation27], %s10438
      %s10441 = sshll.u32 [#allocation26], 4
      %s10442 = int_to_ptr.vmem [resolvable:$true] %s10441
      %10444 = dma.vmem_to_hbm [thread:$0]  %s10442, 128, %s15, [#allocation27]
    $region121: #{tpu_custom_call.1} parent=1 // pred_fallthru
      _
    // Predicated region
    $region122: #{tpu_custom_call.1} parent=1 // pred_check
      _
    $region123: #{tpu_custom_call.1} parent=1 // pred_check_branch
      %10446 = sbr.rel (0) target = $region125
    $region124: #{tpu_custom_call.1} parent=1 // pred_region
      %10447 = dma.done [#allocation4], 2432
    $region125: #{tpu_custom_call.1} parent=1 // pred_fallthru
      _
    // Predicated region
    $region126: #{tpu_custom_call.1} parent=1 // pred_check
      _
    $region127: #{tpu_custom_call.1} parent=1 // pred_check_branch
      %10449 = sbr.rel (0) target = $region129
    $region128: #{tpu_custom_call.1} parent=1 // pred_region
      %10450 = dma.done [#allocation27], 128
    $region129: #{tpu_custom_call.1} parent=1 // pred_fallthru
      _
    %10451 = vsyncpa [#allocation3], 1
    %10452 = vsyncpa [#allocation6], 1
    %10453 = vsyncpa [#allocation9], 1
    %10454 = vsyncpa [#allocation12], 1
    %10455 = vsyncpa [#allocation15], 1
    %10456 = vsyncpa [#allocation18], 1
    %10457 = vsyncpa [#allocation21], 1
    %10458 = vsyncpa [#allocation24], 1
    %10459 = vsyncpa [#allocation4], 1
    %10460 = vsyncpa [#allocation27], 1

</llo_original>
